<compile_context>
chip_gen: v7x
topology: tpu7x:2x2x1
jax: 0.10.0
libtpu: 0.0.40
codegen_flags: <defaults>
</compile_context>

<pallas_src>
import functools

import jax
import jax.numpy as jnp
import numpy as np
from jax import lax
from jax.experimental import pallas as pl
from jax.experimental.pallas import tpu as pltpu

HP = 128  # lane-padded width per gate / per hidden state (all H, D <= 128 here)

# PyTorch LSTM gate order is (i, f, g, o); we pack as (i, f, o, g) so the three
# sigmoid gates are one contiguous 3*128-lane slice and tanh gets the last one.
_GATE_PERM = (0, 1, 3, 2)


# ----------------------------- Pallas kernel --------------------------------

def _tae_encoder_kernel(x_ref,
                        wih1_ref, whh1_ref, b1_ref,
                        wih2_ref, whh2_ref, b2_ref,
                        wih3_ref, whh3_ref, b3_ref,
                        out_ref, hc_ref,
                        seq1_ref, seq2_ref):
    """Fused 3-layer LSTM + Tanh encoder, everything resident in VMEM.

    x_ref    : (T*B, HP)   lane-padded input, TIME-major (row t*B + b)
    wihK_ref : (HP, 4*HP)  W_ih^T, gate k in cols [k*HP, k*HP+H), padded cols 0
    whhK_ref : (HP, 4*HP)  W_hh^T, same column layout
    bK_ref   : (1, 4*HP)   b_ih + b_hh (zero in padded columns)
    out_ref  : (T*B, HP)   tanh(lstm_3 sequence), lane-dense (sliced in wrapper)
    hc_ref   : (2*B, HP)   rows [0,B)=h_n, rows [B,2B)=c_n of lstm_3 (pre-Tanh)
    seqK_ref : (T*B, HP)   VMEM scratch for intermediate layer outputs
    """
    TB = x_ref.shape[0]
    B = hc_ref.shape[0] // 2
    T = TB // B

    def run_layer(a_seq, wih_ref, whh_ref, b_ref, dst_ref):
        # (a) Batched input projection for ALL time steps at once, bias folded
        #     in: one (T*B,128)x(128,512) MXU matmul, off the serial chain.
        xproj = (jnp.dot(a_seq, wih_ref[...], preferred_element_type=jnp.float32)
                 + b_ref[...])                                   # (T*B, 4*HP)
        h = jnp.zeros((B, HP), jnp.float32)
        c = jnp.zeros((B, HP), jnp.float32)
        # (b) Serial recurrence: only h_{t-1} @ W_hh per step (static slices,
        #     whole-lane-group gate extraction, no concat, no bias broadcast).
        for t in range(T):
            r0 = t * B
            pre = xproj[r0:r0 + B, :] + jnp.dot(
                h, whh_ref[...], preferred_element_type=jnp.float32)  # (B, 4*HP)
            s = jax.nn.sigmoid(pre[:, 0:3 * HP])     # i | f | o, one EUP launch
            i = s[:, 0 * HP:1 * HP]
            f = s[:, 1 * HP:2 * HP]
            o = s[:, 2 * HP:3 * HP]
            g = jnp.tanh(pre[:, 3 * HP:4 * HP])
            c = f * c + i * g
            h = o * jnp.tanh(c)
            # Padded lanes: zero weight cols/bias -> pre-act 0 -> c stays 0,
            # h stays 0, so padded lanes never contaminate the next layer.
            dst_ref[r0:r0 + B, :] = jnp.tanh(h)      # nn.Tanh(), lane-dense row
        return h, c

    run_layer(x_ref[...], wih1_ref, whh1_ref, b1_ref, seq1_ref)
    run_layer(seq1_ref[...], wih2_ref, whh2_ref, b2_ref, seq2_ref)
    h3, c3 = run_layer(seq2_ref[...], wih3_ref, whh3_ref, b3_ref, out_ref)

    # PyTorch's `_` = (h_n, c_n) of lstm_3, WITHOUT the Tanh activation.
    hc_ref[0:B, :] = h3
    hc_ref[B:2 * B, :] = c3


# --------------------------- parameters / packing ----------------------------

def init_tae_encoder_params(key, filter_1, filter_lstm):
    """Deterministic init mirroring nn.LSTM shapes (uniform(-1/sqrt(H), 1/sqrt(H)))."""
    layer_dims = [(filter_1, filter_lstm[0]),
                  (filter_lstm[0], filter_lstm[1]),
                  (filter_lstm[1], filter_lstm[2])]
    params = []
    for (d_in, h) in layer_dims:
        key, k1, k2, k3, k4 = jax.random.split(key, 5)
        s = 1.0 / float(h) ** 0.5
        params.append(dict(
            w_ih=jax.random.uniform(k1, (4 * h, d_in), jnp.float32, -s, s),
            w_hh=jax.random.uniform(k2, (4 * h, h), jnp.float32, -s, s),
            b_ih=jax.random.uniform(k3, (4 * h,), jnp.float32, -s, s),
            b_hh=jax.random.uniform(k4, (4 * h,), jnp.float32, -s, s)))
    return params


def _pack_layer(p):
    """Host-side (numpy, once at init) repack of PyTorch-layout LSTM weights:
    W_ih^T and W_hh^T as separate (HP, 4*HP) matrices (gate order i,f,o,g,
    gate k in columns [k*HP, k*HP+H)), plus a (1, 4*HP) combined-bias row.
    Padded rows/columns are exactly zero."""
    w_ih = np.asarray(p["w_ih"], np.float32)              # (4H, D_in)
    w_hh = np.asarray(p["w_hh"], np.float32)              # (4H, H)
    b = np.asarray(p["b_ih"], np.float32) + np.asarray(p["b_hh"], np.float32)
    four_h, d_in = w_ih.shape
    h = four_h // 4
    assert h <= HP and d_in <= HP
    wih = np.zeros((HP, 4 * HP), np.float32)
    whh = np.zeros((HP, 4 * HP), np.float32)
    bias = np.zeros((1, 4 * HP), np.float32)
    for dst, src in enumerate(_GATE_PERM):
        wih[0:d_in, dst * HP:dst * HP + h] = w_ih[src * h:(src + 1) * h, :].T
        whh[0:h, dst * HP:dst * HP + h] = w_hh[src * h:(src + 1) * h, :].T
        bias[0, dst * HP:dst * HP + h] = b[src * h:(src + 1) * h]
    return jnp.asarray(wih), jnp.asarray(whh), jnp.asarray(bias)


def pack_tae_encoder_params(params):
    """Pack once at init (outside jit); pass the result to tae_encoder_forward."""
    packed = []
    for p in params:
        packed.extend(_pack_layer(p))
    return tuple(packed)


# ------------------------------- forward pass --------------------------------

_VMEM = pl.BlockSpec(memory_space=pltpu.MemorySpace.VMEM)


@functools.partial(jax.jit, static_argnames=("h3",))
def tae_encoder_forward(packed, x_btd, *, h3):
    """Matches TAE_encoder.forward: returns (tanh(lstm3 seq), (h_n, c_n) of lstm_3).

    `packed` comes from pack_tae_encoder_params (weight packing is hoisted out
    of the jitted path).  The in-jit pad/transpose below is a few KB of layout
    plumbing so the kernel sees a time-major, 128-lane-aligned input.
    """
    x = x_btd.astype(jnp.float32)
    B, T, D = x.shape
    assert D <= HP
    x_tm = jnp.transpose(x, (1, 0, 2))                       # (T, B, D) time-major
    x_tm = jnp.pad(x_tm, ((0, 0), (0, 0), (0, HP - D)))      # lane-pad once
    x_flat = x_tm.reshape(T * B, HP)

    out_flat, hc = pl.pallas_call(
        _tae_encoder_kernel,
        out_shape=(jax.ShapeDtypeStruct((T * B, HP), jnp.float32),
                   jax.ShapeDtypeStruct((2 * B, HP), jnp.float32)),
        in_specs=[_VMEM] * 10,
        out_specs=(_VMEM, _VMEM),
        scratch_shapes=[pltpu.VMEM((T * B, HP), jnp.float32),
                        pltpu.VMEM((T * B, HP), jnp.float32)],
    )(x_flat, *packed)

    out = out_flat.reshape(T, B, HP)[:, :, :h3].transpose(1, 0, 2)   # (B, T, H3)
    hn = hc[0:B, :h3][None, :, :]        # (1, B, H3) = PyTorch h_n
    cn = hc[B:2 * B, :h3][None, :, :]    # (1, B, H3) = PyTorch c_n
    return out, (hn, cn)


# ------------------------------ pure-JAX reference ---------------------------

def _ref_lstm_layer(x_btd, p):
    B = x_btd.shape[0]
    H = p["w_hh"].shape[1]
    w_ih_t = p["w_ih"].T
    w_hh_t = p["w_hh"].T
    b = p["b_ih"] + p["b_hh"]

    def step(carry, x_t):
        h, c = carry
        gates = x_t @ w_ih_t + h @ w_hh_t + b
        i = jax.nn.sigmoid(gates[:, 0 * H:1 * H])
        f = jax.nn.sigmoid(gates[:, 1 * H:2 * H])
        g = jnp.tanh(gates[:, 2 * H:3 * H])
        o = jax.nn.sigmoid(gates[:, 3 * H:4 * H])
        c = f * c + i * g
        h = o * jnp.tanh(c)
        return (h, c), h

    h0 = jnp.zeros((B, H), jnp.float32)
    (hn, cn), hs = lax.scan(step, (h0, h0), jnp.transpose(x_btd, (1, 0, 2)))
    return jnp.transpose(hs, (1, 0, 2)), hn, cn


def tae_encoder_ref(params, x_btd):
    x = x_btd.astype(jnp.float32)
    hn = cn = None
    for p in params:
        seq, hn, cn = _ref_lstm_layer(x, p)
        x = jnp.tanh(seq)
    return x, (hn[None], cn[None])


# ------------------------------------ main -----------------------------------

if __name__ == "__main__":
    B, T = 2, 8
    filter_1 = 32
    filter_lstm = [64, 32, 32]

    key = jax.random.PRNGKey(0)
    k_param, k_x = jax.random.split(key)
    params = init_tae_encoder_params(k_param, filter_1, filter_lstm)
    packed = pack_tae_encoder_params(params)          # packed once, outside jit
    x = jax.random.normal(k_x, (B, T, filter_1), jnp.float32)

    out, (h_n, c_n) = tae_encoder_forward(packed, x, h3=filter_lstm[2])
    jax.block_until_ready((out, h_n, c_n))

    out_ref, (h_ref, c_ref) = tae_encoder_ref(params, x)
    assert out.shape == (B, T, filter_lstm[2])
    assert h_n.shape == (1, B, filter_lstm[2]) and c_n.shape == (1, B, filter_lstm[2])

    np.testing.assert_allclose(np.asarray(out), np.asarray(out_ref), atol=1e-4, rtol=1e-4)
    np.testing.assert_allclose(np.asarray(h_n), np.asarray(h_ref), atol=1e-4, rtol=1e-4)
    np.testing.assert_allclose(np.asarray(c_n), np.asarray(c_ref), atol=1e-4, rtol=1e-4)

    print("KERNEL_OK")
</pallas_src>

<mosaic_0001>
module attributes {stable_mosaic.version = 11 : i64} {
  func.func @_tae_encoder_kernel(%arg0: memref<16x128xf32, #tpu.memory_space<vmem>>, %arg1: memref<128x512xf32, #tpu.memory_space<vmem>>, %arg2: memref<128x512xf32, #tpu.memory_space<vmem>>, %arg3: memref<1x512xf32, #tpu.memory_space<vmem>>, %arg4: memref<128x512xf32, #tpu.memory_space<vmem>>, %arg5: memref<128x512xf32, #tpu.memory_space<vmem>>, %arg6: memref<1x512xf32, #tpu.memory_space<vmem>>, %arg7: memref<128x512xf32, #tpu.memory_space<vmem>>, %arg8: memref<128x512xf32, #tpu.memory_space<vmem>>, %arg9: memref<1x512xf32, #tpu.memory_space<vmem>>, %arg10: memref<16x128xf32, #tpu.memory_space<vmem>>, %arg11: memref<4x128xf32, #tpu.memory_space<vmem>>, %arg12: memref<16x128xf32, #tpu.memory_space<vmem>>, %arg13: memref<16x128xf32, #tpu.memory_space<vmem>>) attributes {dimension_semantics = [], scalar_prefetch = 0 : i64, scratch_operands = 2 : i64, tpu.core_type = #tpu.core_type<tc>} {
    %c0 = arith.constant 0 : index
    %c0_0 = arith.constant 0 : index
    %0 = vector.load %arg0[%c0, %c0_0] : memref<16x128xf32, #tpu.memory_space<vmem>>, vector<16x128xf32>
    %c0_1 = arith.constant 0 : index
    %c0_2 = arith.constant 0 : index
    %1 = vector.load %arg1[%c0_1, %c0_2] : memref<128x512xf32, #tpu.memory_space<vmem>>, vector<128x512xf32>
    %cst = arith.constant dense<0.000000e+00> : vector<16x512xf32>
    %2 = tpu.matmul %0, %1, %cst {dimension_numbers = #tpu.dot_dimension_numbers<[1], [0], [0], [1], [0, 0, 1, 1], [], []>} : vector<16x128xf32>, vector<128x512xf32>, vector<16x512xf32> -> vector<16x512xf32>
    %c0_3 = arith.constant 0 : index
    %c0_4 = arith.constant 0 : index
    %3 = vector.load %arg3[%c0_3, %c0_4] : memref<1x512xf32, #tpu.memory_space<vmem>>, vector<1x512xf32>
    %4 = vector.broadcast %3 : vector<1x512xf32> to vector<16x512xf32>
    %5 = arith.addf %2, %4 : vector<16x512xf32>
    %cst_5 = arith.constant 0.000000e+00 : f32
    %6 = vector.broadcast %cst_5 : f32 to vector<2x128xf32>
    %cst_6 = arith.constant 0.000000e+00 : f32
    %7 = vector.broadcast %cst_6 : f32 to vector<2x128xf32>
    %8 = vector.extract_strided_slice %5 {offsets = [0, 0], sizes = [2, 512], strides = [1, 1]} : vector<16x512xf32> to vector<2x512xf32>
    %c0_7 = arith.constant 0 : index
    %c0_8 = arith.constant 0 : index
    %9 = vector.load %arg2[%c0_7, %c0_8] : memref<128x512xf32, #tpu.memory_space<vmem>>, vector<128x512xf32>
    %cst_9 = arith.constant dense<0.000000e+00> : vector<2x512xf32>
    %10 = tpu.matmul %6, %9, %cst_9 {dimension_numbers = #tpu.dot_dimension_numbers<[1], [0], [0], [1], [0, 0, 1, 1], [], []>} : vector<2x128xf32>, vector<128x512xf32>, vector<2x512xf32> -> vector<2x512xf32>
    %11 = arith.addf %8, %10 : vector<2x512xf32>
    %12 = vector.extract_strided_slice %11 {offsets = [0, 0], sizes = [2, 384], strides = [1, 1]} : vector<2x512xf32> to vector<2x384xf32>
    %13 = arith.negf %12 : vector<2x384xf32>
    %14 = math.exp %13 : vector<2x384xf32>
    %cst_10 = arith.constant 1.000000e+00 : f32
    %15 = vector.broadcast %cst_10 : f32 to vector<2x384xf32>
    %16 = arith.addf %15, %14 : vector<2x384xf32>
    %17 = arith.divf %15, %16 : vector<2x384xf32>
    %18 = vector.extract_strided_slice %17 {offsets = [0, 0], sizes = [2, 128], strides = [1, 1]} : vector<2x384xf32> to vector<2x128xf32>
    %19 = vector.extract_strided_slice %17 {offsets = [0, 128], sizes = [2, 128], strides = [1, 1]} : vector<2x384xf32> to vector<2x128xf32>
    %20 = vector.extract_strided_slice %17 {offsets = [0, 256], sizes = [2, 128], strides = [1, 1]} : vector<2x384xf32> to vector<2x128xf32>
    %21 = vector.extract_strided_slice %11 {offsets = [0, 384], sizes = [2, 128], strides = [1, 1]} : vector<2x512xf32> to vector<2x128xf32>
    %22 = math.tanh %21 : vector<2x128xf32>
    %23 = arith.mulf %19, %7 : vector<2x128xf32>
    %24 = arith.mulf %18, %22 : vector<2x128xf32>
    %25 = arith.addf %23, %24 : vector<2x128xf32>
    %26 = math.tanh %25 : vector<2x128xf32>
    %27 = arith.mulf %20, %26 : vector<2x128xf32>
    %28 = math.tanh %27 : vector<2x128xf32>
    %c0_11 = arith.constant 0 : index
    %c0_12 = arith.constant 0 : index
    %29 = vector.load %arg12[%c0_11, %c0_12] : memref<16x128xf32, #tpu.memory_space<vmem>>, vector<2x128xf32>
    tpu.vector_store %arg12[%c0_11, %c0_12], %28 {strides = array<i32>} : memref<16x128xf32, #tpu.memory_space<vmem>>, vector<2x128xf32>,
    %30 = vector.extract_strided_slice %5 {offsets = [2, 0], sizes = [2, 512], strides = [1, 1]} : vector<16x512xf32> to vector<2x512xf32>
    %c0_13 = arith.constant 0 : index
    %c0_14 = arith.constant 0 : index
    %31 = vector.load %arg2[%c0_13, %c0_14] : memref<128x512xf32, #tpu.memory_space<vmem>>, vector<128x512xf32>
    %cst_15 = arith.constant dense<0.000000e+00> : vector<2x512xf32>
    %32 = tpu.matmul %27, %31, %cst_15 {dimension_numbers = #tpu.dot_dimension_numbers<[1], [0], [0], [1], [0, 0, 1, 1], [], []>} : vector<2x128xf32>, vector<128x512xf32>, vector<2x512xf32> -> vector<2x512xf32>
    %33 = arith.addf %30, %32 : vector<2x512xf32>
    %34 = vector.extract_strided_slice %33 {offsets = [0, 0], sizes = [2, 384], strides = [1, 1]} : vector<2x512xf32> to vector<2x384xf32>
    %35 = arith.negf %34 : vector<2x384xf32>
    %36 = math.exp %35 : vector<2x384xf32>
    %cst_16 = arith.constant 1.000000e+00 : f32
    %37 = vector.broadcast %cst_16 : f32 to vector<2x384xf32>
    %38 = arith.addf %37, %36 : vector<2x384xf32>
    %39 = arith.divf %37, %38 : vector<2x384xf32>
    %40 = vector.extract_strided_slice %39 {offsets = [0, 0], sizes = [2, 128], strides = [1, 1]} : vector<2x384xf32> to vector<2x128xf32>
    %41 = vector.extract_strided_slice %39 {offsets = [0, 128], sizes = [2, 128], strides = [1, 1]} : vector<2x384xf32> to vector<2x128xf32>
    %42 = vector.extract_strided_slice %39 {offsets = [0, 256], sizes = [2, 128], strides = [1, 1]} : vector<2x384xf32> to vector<2x128xf32>
    %43 = vector.extract_strided_slice %33 {offsets = [0, 384], sizes = [2, 128], strides = [1, 1]} : vector<2x512xf32> to vector<2x128xf32>
    %44 = math.tanh %43 : vector<2x128xf32>
    %45 = arith.mulf %41, %25 : vector<2x128xf32>
    %46 = arith.mulf %40, %44 : vector<2x128xf32>
    %47 = arith.addf %45, %46 : vector<2x128xf32>
    %48 = math.tanh %47 : vector<2x128xf32>
    %49 = arith.mulf %42, %48 : vector<2x128xf32>
    %50 = math.tanh %49 : vector<2x128xf32>
    %c2 = arith.constant 2 : index
    %c0_17 = arith.constant 0 : index
    %51 = vector.load %arg12[%c2, %c0_17] : memref<16x128xf32, #tpu.memory_space<vmem>>, vector<2x128xf32>
    tpu.vector_store %arg12[%c2, %c0_17], %50 {strides = array<i32>} : memref<16x128xf32, #tpu.memory_space<vmem>>, vector<2x128xf32>,
    %52 = vector.extract_strided_slice %5 {offsets = [4, 0], sizes = [2, 512], strides = [1, 1]} : vector<16x512xf32> to vector<2x512xf32>
    %c0_18 = arith.constant 0 : index
    %c0_19 = arith.constant 0 : index
    %53 = vector.load %arg2[%c0_18, %c0_19] : memref<128x512xf32, #tpu.memory_space<vmem>>, vector<128x512xf32>
    %cst_20 = arith.constant dense<0.000000e+00> : vector<2x512xf32>
    %54 = tpu.matmul %49, %53, %cst_20 {dimension_numbers = #tpu.dot_dimension_numbers<[1], [0], [0], [1], [0, 0, 1, 1], [], []>} : vector<2x128xf32>, vector<128x512xf32>, vector<2x512xf32> -> vector<2x512xf32>
    %55 = arith.addf %52, %54 : vector<2x512xf32>
    %56 = vector.extract_strided_slice %55 {offsets = [0, 0], sizes = [2, 384], strides = [1, 1]} : vector<2x512xf32> to vector<2x384xf32>
    %57 = arith.negf %56 : vector<2x384xf32>
    %58 = math.exp %57 : vector<2x384xf32>
    %cst_21 = arith.constant 1.000000e+00 : f32
    %59 = vector.broadcast %cst_21 : f32 to vector<2x384xf32>
    %60 = arith.addf %59, %58 : vector<2x384xf32>
    %61 = arith.divf %59, %60 : vector<2x384xf32>
    %62 = vector.extract_strided_slice %61 {offsets = [0, 0], sizes = [2, 128], strides = [1, 1]} : vector<2x384xf32> to vector<2x128xf32>
    %63 = vector.extract_strided_slice %61 {offsets = [0, 128], sizes = [2, 128], strides = [1, 1]} : vector<2x384xf32> to vector<2x128xf32>
    %64 = vector.extract_strided_slice %61 {offsets = [0, 256], sizes = [2, 128], strides = [1, 1]} : vector<2x384xf32> to vector<2x128xf32>
    %65 = vector.extract_strided_slice %55 {offsets = [0, 384], sizes = [2, 128], strides = [1, 1]} : vector<2x512xf32> to vector<2x128xf32>
    %66 = math.tanh %65 : vector<2x128xf32>
    %67 = arith.mulf %63, %47 : vector<2x128xf32>
    %68 = arith.mulf %62, %66 : vector<2x128xf32>
    %69 = arith.addf %67, %68 : vector<2x128xf32>
    %70 = math.tanh %69 : vector<2x128xf32>
    %71 = arith.mulf %64, %70 : vector<2x128xf32>
    %72 = math.tanh %71 : vector<2x128xf32>
    %c4 = arith.constant 4 : index
    %c0_22 = arith.constant 0 : index
    %73 = vector.load %arg12[%c4, %c0_22] : memref<16x128xf32, #tpu.memory_space<vmem>>, vector<2x128xf32>
    tpu.vector_store %arg12[%c4, %c0_22], %72 {strides = array<i32>} : memref<16x128xf32, #tpu.memory_space<vmem>>, vector<2x128xf32>,
    %74 = vector.extract_strided_slice %5 {offsets = [6, 0], sizes = [2, 512], strides = [1, 1]} : vector<16x512xf32> to vector<2x512xf32>
    %c0_23 = arith.constant 0 : index
    %c0_24 = arith.constant 0 : index
    %75 = vector.load %arg2[%c0_23, %c0_24] : memref<128x512xf32, #tpu.memory_space<vmem>>, vector<128x512xf32>
    %cst_25 = arith.constant dense<0.000000e+00> : vector<2x512xf32>
    %76 = tpu.matmul %71, %75, %cst_25 {dimension_numbers = #tpu.dot_dimension_numbers<[1], [0], [0], [1], [0, 0, 1, 1], [], []>} : vector<2x128xf32>, vector<128x512xf32>, vector<2x512xf32> -> vector<2x512xf32>
    %77 = arith.addf %74, %76 : vector<2x512xf32>
    %78 = vector.extract_strided_slice %77 {offsets = [0, 0], sizes = [2, 384], strides = [1, 1]} : vector<2x512xf32> to vector<2x384xf32>
    %79 = arith.negf %78 : vector<2x384xf32>
    %80 = math.exp %79 : vector<2x384xf32>
    %cst_26 = arith.constant 1.000000e+00 : f32
    %81 = vector.broadcast %cst_26 : f32 to vector<2x384xf32>
    %82 = arith.addf %81, %80 : vector<2x384xf32>
    %83 = arith.divf %81, %82 : vector<2x384xf32>
    %84 = vector.extract_strided_slice %83 {offsets = [0, 0], sizes = [2, 128], strides = [1, 1]} : vector<2x384xf32> to vector<2x128xf32>
    %85 = vector.extract_strided_slice %83 {offsets = [0, 128], sizes = [2, 128], strides = [1, 1]} : vector<2x384xf32> to vector<2x128xf32>
    %86 = vector.extract_strided_slice %83 {offsets = [0, 256], sizes = [2, 128], strides = [1, 1]} : vector<2x384xf32> to vector<2x128xf32>
    %87 = vector.extract_strided_slice %77 {offsets = [0, 384], sizes = [2, 128], strides = [1, 1]} : vector<2x512xf32> to vector<2x128xf32>
    %88 = math.tanh %87 : vector<2x128xf32>
    %89 = arith.mulf %85, %69 : vector<2x128xf32>
    %90 = arith.mulf %84, %88 : vector<2x128xf32>
    %91 = arith.addf %89, %90 : vector<2x128xf32>
    %92 = math.tanh %91 : vector<2x128xf32>
    %93 = arith.mulf %86, %92 : vector<2x128xf32>
    %94 = math.tanh %93 : vector<2x128xf32>
    %c6 = arith.constant 6 : index
    %c0_27 = arith.constant 0 : index
    %95 = vector.load %arg12[%c6, %c0_27] : memref<16x128xf32, #tpu.memory_space<vmem>>, vector<2x128xf32>
    tpu.vector_store %arg12[%c6, %c0_27], %94 {strides = array<i32>} : memref<16x128xf32, #tpu.memory_space<vmem>>, vector<2x128xf32>,
    %96 = vector.extract_strided_slice %5 {offsets = [8, 0], sizes = [2, 512], strides = [1, 1]} : vector<16x512xf32> to vector<2x512xf32>
    %c0_28 = arith.constant 0 : index
    %c0_29 = arith.constant 0 : index
    %97 = vector.load %arg2[%c0_28, %c0_29] : memref<128x512xf32, #tpu.memory_space<vmem>>, vector<128x512xf32>
    %cst_30 = arith.constant dense<0.000000e+00> : vector<2x512xf32>
    %98 = tpu.matmul %93, %97, %cst_30 {dimension_numbers = #tpu.dot_dimension_numbers<[1], [0], [0], [1], [0, 0, 1, 1], [], []>} : vector<2x128xf32>, vector<128x512xf32>, vector<2x512xf32> -> vector<2x512xf32>
    %99 = arith.addf %96, %98 : vector<2x512xf32>
    %100 = vector.extract_strided_slice %99 {offsets = [0, 0], sizes = [2, 384], strides = [1, 1]} : vector<2x512xf32> to vector<2x384xf32>
    %101 = arith.negf %100 : vector<2x384xf32>
    %102 = math.exp %101 : vector<2x384xf32>
    %cst_31 = arith.constant 1.000000e+00 : f32
    %103 = vector.broadcast %cst_31 : f32 to vector<2x384xf32>
    %104 = arith.addf %103, %102 : vector<2x384xf32>
    %105 = arith.divf %103, %104 : vector<2x384xf32>
    %106 = vector.extract_strided_slice %105 {offsets = [0, 0], sizes = [2, 128], strides = [1, 1]} : vector<2x384xf32> to vector<2x128xf32>
    %107 = vector.extract_strided_slice %105 {offsets = [0, 128], sizes = [2, 128], strides = [1, 1]} : vector<2x384xf32> to vector<2x128xf32>
    %108 = vector.extract_strided_slice %105 {offsets = [0, 256], sizes = [2, 128], strides = [1, 1]} : vector<2x384xf32> to vector<2x128xf32>
    %109 = vector.extract_strided_slice %99 {offsets = [0, 384], sizes = [2, 128], strides = [1, 1]} : vector<2x512xf32> to vector<2x128xf32>
    %110 = math.tanh %109 : vector<2x128xf32>
    %111 = arith.mulf %107, %91 : vector<2x128xf32>
    %112 = arith.mulf %106, %110 : vector<2x128xf32>
    %113 = arith.addf %111, %112 : vector<2x128xf32>
    %114 = math.tanh %113 : vector<2x128xf32>
    %115 = arith.mulf %108, %114 : vector<2x128xf32>
    %116 = math.tanh %115 : vector<2x128xf32>
    %c8 = arith.constant 8 : index
    %c0_32 = arith.constant 0 : index
    %117 = vector.load %arg12[%c8, %c0_32] : memref<16x128xf32, #tpu.memory_space<vmem>>, vector<2x128xf32>
    tpu.vector_store %arg12[%c8, %c0_32], %116 {strides = array<i32>} : memref<16x128xf32, #tpu.memory_space<vmem>>, vector<2x128xf32>,
    %118 = vector.extract_strided_slice %5 {offsets = [10, 0], sizes = [2, 512], strides = [1, 1]} : vector<16x512xf32> to vector<2x512xf32>
    %c0_33 = arith.constant 0 : index
    %c0_34 = arith.constant 0 : index
    %119 = vector.load %arg2[%c0_33, %c0_34] : memref<128x512xf32, #tpu.memory_space<vmem>>, vector<128x512xf32>
    %cst_35 = arith.constant dense<0.000000e+00> : vector<2x512xf32>
    %120 = tpu.matmul %115, %119, %cst_35 {dimension_numbers = #tpu.dot_dimension_numbers<[1], [0], [0], [1], [0, 0, 1, 1], [], []>} : vector<2x128xf32>, vector<128x512xf32>, vector<2x512xf32> -> vector<2x512xf32>
    %121 = arith.addf %118, %120 : vector<2x512xf32>
    %122 = vector.extract_strided_slice %121 {offsets = [0, 0], sizes = [2, 384], strides = [1, 1]} : vector<2x512xf32> to vector<2x384xf32>
    %123 = arith.negf %122 : vector<2x384xf32>
    %124 = math.exp %123 : vector<2x384xf32>
    %cst_36 = arith.constant 1.000000e+00 : f32
    %125 = vector.broadcast %cst_36 : f32 to vector<2x384xf32>
    %126 = arith.addf %125, %124 : vector<2x384xf32>
    %127 = arith.divf %125, %126 : vector<2x384xf32>
    %128 = vector.extract_strided_slice %127 {offsets = [0, 0], sizes = [2, 128], strides = [1, 1]} : vector<2x384xf32> to vector<2x128xf32>
    %129 = vector.extract_strided_slice %127 {offsets = [0, 128], sizes = [2, 128], strides = [1, 1]} : vector<2x384xf32> to vector<2x128xf32>
    %130 = vector.extract_strided_slice %127 {offsets = [0, 256], sizes = [2, 128], strides = [1, 1]} : vector<2x384xf32> to vector<2x128xf32>
    %131 = vector.extract_strided_slice %121 {offsets = [0, 384], sizes = [2, 128], strides = [1, 1]} : vector<2x512xf32> to vector<2x128xf32>
    %132 = math.tanh %131 : vector<2x128xf32>
    %133 = arith.mulf %129, %113 : vector<2x128xf32>
    %134 = arith.mulf %128, %132 : vector<2x128xf32>
    %135 = arith.addf %133, %134 : vector<2x128xf32>
    %136 = math.tanh %135 : vector<2x128xf32>
    %137 = arith.mulf %130, %136 : vector<2x128xf32>
    %138 = math.tanh %137 : vector<2x128xf32>
    %c10 = arith.constant 10 : index
    %c0_37 = arith.constant 0 : index
    %139 = vector.load %arg12[%c10, %c0_37] : memref<16x128xf32, #tpu.memory_space<vmem>>, vector<2x128xf32>
    tpu.vector_store %arg12[%c10, %c0_37], %138 {strides = array<i32>} : memref<16x128xf32, #tpu.memory_space<vmem>>, vector<2x128xf32>,
    %140 = vector.extract_strided_slice %5 {offsets = [12, 0], sizes = [2, 512], strides = [1, 1]} : vector<16x512xf32> to vector<2x512xf32>
    %c0_38 = arith.constant 0 : index
    %c0_39 = arith.constant 0 : index
    %141 = vector.load %arg2[%c0_38, %c0_39] : memref<128x512xf32, #tpu.memory_space<vmem>>, vector<128x512xf32>
    %cst_40 = arith.constant dense<0.000000e+00> : vector<2x512xf32>
    %142 = tpu.matmul %137, %141, %cst_40 {dimension_numbers = #tpu.dot_dimension_numbers<[1], [0], [0], [1], [0, 0, 1, 1], [], []>} : vector<2x128xf32>, vector<128x512xf32>, vector<2x512xf32> -> vector<2x512xf32>
    %143 = arith.addf %140, %142 : vector<2x512xf32>
    %144 = vector.extract_strided_slice %143 {offsets = [0, 0], sizes = [2, 384], strides = [1, 1]} : vector<2x512xf32> to vector<2x384xf32>
    %145 = arith.negf %144 : vector<2x384xf32>
    %146 = math.exp %145 : vector<2x384xf32>
    %cst_41 = arith.constant 1.000000e+00 : f32
    %147 = vector.broadcast %cst_41 : f32 to vector<2x384xf32>
    %148 = arith.addf %147, %146 : vector<2x384xf32>
    %149 = arith.divf %147, %148 : vector<2x384xf32>
    %150 = vector.extract_strided_slice %149 {offsets = [0, 0], sizes = [2, 128], strides = [1, 1]} : vector<2x384xf32> to vector<2x128xf32>
    %151 = vector.extract_strided_slice %149 {offsets = [0, 128], sizes = [2, 128], strides = [1, 1]} : vector<2x384xf32> to vector<2x128xf32>
    %152 = vector.extract_strided_slice %149 {offsets = [0, 256], sizes = [2, 128], strides = [1, 1]} : vector<2x384xf32> to vector<2x128xf32>
    %153 = vector.extract_strided_slice %143 {offsets = [0, 384], sizes = [2, 128], strides = [1, 1]} : vector<2x512xf32> to vector<2x128xf32>
    %154 = math.tanh %153 : vector<2x128xf32>
    %155 = arith.mulf %151, %135 : vector<2x128xf32>
    %156 = arith.mulf %150, %154 : vector<2x128xf32>
    %157 = arith.addf %155, %156 : vector<2x128xf32>
    %158 = math.tanh %157 : vector<2x128xf32>
    %159 = arith.mulf %152, %158 : vector<2x128xf32>
    %160 = math.tanh %159 : vector<2x128xf32>
    %c12 = arith.constant 12 : index
    %c0_42 = arith.constant 0 : index
    %161 = vector.load %arg12[%c12, %c0_42] : memref<16x128xf32, #tpu.memory_space<vmem>>, vector<2x128xf32>
    tpu.vector_store %arg12[%c12, %c0_42], %160 {strides = array<i32>} : memref<16x128xf32, #tpu.memory_space<vmem>>, vector<2x128xf32>,
    %162 = vector.extract_strided_slice %5 {offsets = [14, 0], sizes = [2, 512], strides = [1, 1]} : vector<16x512xf32> to vector<2x512xf32>
    %c0_43 = arith.constant 0 : index
    %c0_44 = arith.constant 0 : index
    %163 = vector.load %arg2[%c0_43, %c0_44] : memref<128x512xf32, #tpu.memory_space<vmem>>, vector<128x512xf32>
    %cst_45 = arith.constant dense<0.000000e+00> : vector<2x512xf32>
    %164 = tpu.matmul %159, %163, %cst_45 {dimension_numbers = #tpu.dot_dimension_numbers<[1], [0], [0], [1], [0, 0, 1, 1], [], []>} : vector<2x128xf32>, vector<128x512xf32>, vector<2x512xf32> -> vector<2x512xf32>
    %165 = arith.addf %162, %164 : vector<2x512xf32>
    %166 = vector.extract_strided_slice %165 {offsets = [0, 0], sizes = [2, 384], strides = [1, 1]} : vector<2x512xf32> to vector<2x384xf32>
    %167 = arith.negf %166 : vector<2x384xf32>
    %168 = math.exp %167 : vector<2x384xf32>
    %cst_46 = arith.constant 1.000000e+00 : f32
    %169 = vector.broadcast %cst_46 : f32 to vector<2x384xf32>
    %170 = arith.addf %169, %168 : vector<2x384xf32>
    %171 = arith.divf %169, %170 : vector<2x384xf32>
    %172 = vector.extract_strided_slice %171 {offsets = [0, 0], sizes = [2, 128], strides = [1, 1]} : vector<2x384xf32> to vector<2x128xf32>
    %173 = vector.extract_strided_slice %171 {offsets = [0, 128], sizes = [2, 128], strides = [1, 1]} : vector<2x384xf32> to vector<2x128xf32>
    %174 = vector.extract_strided_slice %171 {offsets = [0, 256], sizes = [2, 128], strides = [1, 1]} : vector<2x384xf32> to vector<2x128xf32>
    %175 = vector.extract_strided_slice %165 {offsets = [0, 384], sizes = [2, 128], strides = [1, 1]} : vector<2x512xf32> to vector<2x128xf32>
    %176 = math.tanh %175 : vector<2x128xf32>
    %177 = arith.mulf %173, %157 : vector<2x128xf32>
    %178 = arith.mulf %172, %176 : vector<2x128xf32>
    %179 = arith.addf %177, %178 : vector<2x128xf32>
    %180 = math.tanh %179 : vector<2x128xf32>
    %181 = arith.mulf %174, %180 : vector<2x128xf32>
    %182 = math.tanh %181 : vector<2x128xf32>
    %c14 = arith.constant 14 : index
    %c0_47 = arith.constant 0 : index
    %183 = vector.load %arg12[%c14, %c0_47] : memref<16x128xf32, #tpu.memory_space<vmem>>, vector<2x128xf32>
    tpu.vector_store %arg12[%c14, %c0_47], %182 {strides = array<i32>} : memref<16x128xf32, #tpu.memory_space<vmem>>, vector<2x128xf32>,
    %c0_48 = arith.constant 0 : index
    %c0_49 = arith.constant 0 : index
    %184 = vector.load %arg12[%c0_48, %c0_49] : memref<16x128xf32, #tpu.memory_space<vmem>>, vector<16x128xf32>
    %c0_50 = arith.constant 0 : index
    %c0_51 = arith.constant 0 : index
    %185 = vector.load %arg4[%c0_50, %c0_51] : memref<128x512xf32, #tpu.memory_space<vmem>>, vector<128x512xf32>
    %cst_52 = arith.constant dense<0.000000e+00> : vector<16x512xf32>
    %186 = tpu.matmul %184, %185, %cst_52 {dimension_numbers = #tpu.dot_dimension_numbers<[1], [0], [0], [1], [0, 0, 1, 1], [], []>} : vector<16x128xf32>, vector<128x512xf32>, vector<16x512xf32> -> vector<16x512xf32>
    %c0_53 = arith.constant 0 : index
    %c0_54 = arith.constant 0 : index
    %187 = vector.load %arg6[%c0_53, %c0_54] : memref<1x512xf32, #tpu.memory_space<vmem>>, vector<1x512xf32>
    %188 = vector.broadcast %187 : vector<1x512xf32> to vector<16x512xf32>
    %189 = arith.addf %186, %188 : vector<16x512xf32>
    %cst_55 = arith.constant 0.000000e+00 : f32
    %190 = vector.broadcast %cst_55 : f32 to vector<2x128xf32>
    %cst_56 = arith.constant 0.000000e+00 : f32
    %191 = vector.broadcast %cst_56 : f32 to vector<2x128xf32>
    %192 = vector.extract_strided_slice %189 {offsets = [0, 0], sizes = [2, 512], strides = [1, 1]} : vector<16x512xf32> to vector<2x512xf32>
    %c0_57 = arith.constant 0 : index
    %c0_58 = arith.constant 0 : index
    %193 = vector.load %arg5[%c0_57, %c0_58] : memref<128x512xf32, #tpu.memory_space<vmem>>, vector<128x512xf32>
    %cst_59 = arith.constant dense<0.000000e+00> : vector<2x512xf32>
    %194 = tpu.matmul %190, %193, %cst_59 {dimension_numbers = #tpu.dot_dimension_numbers<[1], [0], [0], [1], [0, 0, 1, 1], [], []>} : vector<2x128xf32>, vector<128x512xf32>, vector<2x512xf32> -> vector<2x512xf32>
    %195 = arith.addf %192, %194 : vector<2x512xf32>
    %196 = vector.extract_strided_slice %195 {offsets = [0, 0], sizes = [2, 384], strides = [1, 1]} : vector<2x512xf32> to vector<2x384xf32>
    %197 = arith.negf %196 : vector<2x384xf32>
    %198 = math.exp %197 : vector<2x384xf32>
    %cst_60 = arith.constant 1.000000e+00 : f32
    %199 = vector.broadcast %cst_60 : f32 to vector<2x384xf32>
    %200 = arith.addf %199, %198 : vector<2x384xf32>
    %201 = arith.divf %199, %200 : vector<2x384xf32>
    %202 = vector.extract_strided_slice %201 {offsets = [0, 0], sizes = [2, 128], strides = [1, 1]} : vector<2x384xf32> to vector<2x128xf32>
    %203 = vector.extract_strided_slice %201 {offsets = [0, 128], sizes = [2, 128], strides = [1, 1]} : vector<2x384xf32> to vector<2x128xf32>
    %204 = vector.extract_strided_slice %201 {offsets = [0, 256], sizes = [2, 128], strides = [1, 1]} : vector<2x384xf32> to vector<2x128xf32>
    %205 = vector.extract_strided_slice %195 {offsets = [0, 384], sizes = [2, 128], strides = [1, 1]} : vector<2x512xf32> to vector<2x128xf32>
    %206 = math.tanh %205 : vector<2x128xf32>
    %207 = arith.mulf %203, %191 : vector<2x128xf32>
    %208 = arith.mulf %202, %206 : vector<2x128xf32>
    %209 = arith.addf %207, %208 : vector<2x128xf32>
    %210 = math.tanh %209 : vector<2x128xf32>
    %211 = arith.mulf %204, %210 : vector<2x128xf32>
    %212 = math.tanh %211 : vector<2x128xf32>
    %c0_61 = arith.constant 0 : index
    %c0_62 = arith.constant 0 : index
    %213 = vector.load %arg13[%c0_61, %c0_62] : memref<16x128xf32, #tpu.memory_space<vmem>>, vector<2x128xf32>
    tpu.vector_store %arg13[%c0_61, %c0_62], %212 {strides = array<i32>} : memref<16x128xf32, #tpu.memory_space<vmem>>, vector<2x128xf32>,
    %214 = vector.extract_strided_slice %189 {offsets = [2, 0], sizes = [2, 512], strides = [1, 1]} : vector<16x512xf32> to vector<2x512xf32>
    %c0_63 = arith.constant 0 : index
    %c0_64 = arith.constant 0 : index
    %215 = vector.load %arg5[%c0_63, %c0_64] : memref<128x512xf32, #tpu.memory_space<vmem>>, vector<128x512xf32>
    %cst_65 = arith.constant dense<0.000000e+00> : vector<2x512xf32>
    %216 = tpu.matmul %211, %215, %cst_65 {dimension_numbers = #tpu.dot_dimension_numbers<[1], [0], [0], [1], [0, 0, 1, 1], [], []>} : vector<2x128xf32>, vector<128x512xf32>, vector<2x512xf32> -> vector<2x512xf32>
    %217 = arith.addf %214, %216 : vector<2x512xf32>
    %218 = vector.extract_strided_slice %217 {offsets = [0, 0], sizes = [2, 384], strides = [1, 1]} : vector<2x512xf32> to vector<2x384xf32>
    %219 = arith.negf %218 : vector<2x384xf32>
    %220 = math.exp %219 : vector<2x384xf32>
    %cst_66 = arith.constant 1.000000e+00 : f32
    %221 = vector.broadcast %cst_66 : f32 to vector<2x384xf32>
    %222 = arith.addf %221, %220 : vector<2x384xf32>
    %223 = arith.divf %221, %222 : vector<2x384xf32>
    %224 = vector.extract_strided_slice %223 {offsets = [0, 0], sizes = [2, 128], strides = [1, 1]} : vector<2x384xf32> to vector<2x128xf32>
    %225 = vector.extract_strided_slice %223 {offsets = [0, 128], sizes = [2, 128], strides = [1, 1]} : vector<2x384xf32> to vector<2x128xf32>
    %226 = vector.extract_strided_slice %223 {offsets = [0, 256], sizes = [2, 128], strides = [1, 1]} : vector<2x384xf32> to vector<2x128xf32>
    %227 = vector.extract_strided_slice %217 {offsets = [0, 384], sizes = [2, 128], strides = [1, 1]} : vector<2x512xf32> to vector<2x128xf32>
    %228 = math.tanh %227 : vector<2x128xf32>
    %229 = arith.mulf %225, %209 : vector<2x128xf32>
    %230 = arith.mulf %224, %228 : vector<2x128xf32>
    %231 = arith.addf %229, %230 : vector<2x128xf32>
    %232 = math.tanh %231 : vector<2x128xf32>
    %233 = arith.mulf %226, %232 : vector<2x128xf32>
    %234 = math.tanh %233 : vector<2x128xf32>
    %c2_67 = arith.constant 2 : index
    %c0_68 = arith.constant 0 : index
    %235 = vector.load %arg13[%c2_67, %c0_68] : memref<16x128xf32, #tpu.memory_space<vmem>>, vector<2x128xf32>
    tpu.vector_store %arg13[%c2_67, %c0_68], %234 {strides = array<i32>} : memref<16x128xf32, #tpu.memory_space<vmem>>, vector<2x128xf32>,
    %236 = vector.extract_strided_slice %189 {offsets = [4, 0], sizes = [2, 512], strides = [1, 1]} : vector<16x512xf32> to vector<2x512xf32>
    %c0_69 = arith.constant 0 : index
    %c0_70 = arith.constant 0 : index
    %237 = vector.load %arg5[%c0_69, %c0_70] : memref<128x512xf32, #tpu.memory_space<vmem>>, vector<128x512xf32>
    %cst_71 = arith.constant dense<0.000000e+00> : vector<2x512xf32>
    %238 = tpu.matmul %233, %237, %cst_71 {dimension_numbers = #tpu.dot_dimension_numbers<[1], [0], [0], [1], [0, 0, 1, 1], [], []>} : vector<2x128xf32>, vector<128x512xf32>, vector<2x512xf32> -> vector<2x512xf32>
    %239 = arith.addf %236, %238 : vector<2x512xf32>
    %240 = vector.extract_strided_slice %239 {offsets = [0, 0], sizes = [2, 384], strides = [1, 1]} : vector<2x512xf32> to vector<2x384xf32>
    %241 = arith.negf %240 : vector<2x384xf32>
    %242 = math.exp %241 : vector<2x384xf32>
    %cst_72 = arith.constant 1.000000e+00 : f32
    %243 = vector.broadcast %cst_72 : f32 to vector<2x384xf32>
    %244 = arith.addf %243, %242 : vector<2x384xf32>
    %245 = arith.divf %243, %244 : vector<2x384xf32>
    %246 = vector.extract_strided_slice %245 {offsets = [0, 0], sizes = [2, 128], strides = [1, 1]} : vector<2x384xf32> to vector<2x128xf32>
    %247 = vector.extract_strided_slice %245 {offsets = [0, 128], sizes = [2, 128], strides = [1, 1]} : vector<2x384xf32> to vector<2x128xf32>
    %248 = vector.extract_strided_slice %245 {offsets = [0, 256], sizes = [2, 128], strides = [1, 1]} : vector<2x384xf32> to vector<2x128xf32>
    %249 = vector.extract_strided_slice %239 {offsets = [0, 384], sizes = [2, 128], strides = [1, 1]} : vector<2x512xf32> to vector<2x128xf32>
    %250 = math.tanh %249 : vector<2x128xf32>
    %251 = arith.mulf %247, %231 : vector<2x128xf32>
    %252 = arith.mulf %246, %250 : vector<2x128xf32>
    %253 = arith.addf %251, %252 : vector<2x128xf32>
    %254 = math.tanh %253 : vector<2x128xf32>
    %255 = arith.mulf %248, %254 : vector<2x128xf32>
    %256 = math.tanh %255 : vector<2x128xf32>
    %c4_73 = arith.constant 4 : index
    %c0_74 = arith.constant 0 : index
    %257 = vector.load %arg13[%c4_73, %c0_74] : memref<16x128xf32, #tpu.memory_space<vmem>>, vector<2x128xf32>
    tpu.vector_store %arg13[%c4_73, %c0_74], %256 {strides = array<i32>} : memref<16x128xf32, #tpu.memory_space<vmem>>, vector<2x128xf32>,
    %258 = vector.extract_strided_slice %189 {offsets = [6, 0], sizes = [2, 512], strides = [1, 1]} : vector<16x512xf32> to vector<2x512xf32>
    %c0_75 = arith.constant 0 : index
    %c0_76 = arith.constant 0 : index
    %259 = vector.load %arg5[%c0_75, %c0_76] : memref<128x512xf32, #tpu.memory_space<vmem>>, vector<128x512xf32>
    %cst_77 = arith.constant dense<0.000000e+00> : vector<2x512xf32>
    %260 = tpu.matmul %255, %259, %cst_77 {dimension_numbers = #tpu.dot_dimension_numbers<[1], [0], [0], [1], [0, 0, 1, 1], [], []>} : vector<2x128xf32>, vector<128x512xf32>, vector<2x512xf32> -> vector<2x512xf32>
    %261 = arith.addf %258, %260 : vector<2x512xf32>
    %262 = vector.extract_strided_slice %261 {offsets = [0, 0], sizes = [2, 384], strides = [1, 1]} : vector<2x512xf32> to vector<2x384xf32>
    %263 = arith.negf %262 : vector<2x384xf32>
    %264 = math.exp %263 : vector<2x384xf32>
    %cst_78 = arith.constant 1.000000e+00 : f32
    %265 = vector.broadcast %cst_78 : f32 to vector<2x384xf32>
    %266 = arith.addf %265, %264 : vector<2x384xf32>
    %267 = arith.divf %265, %266 : vector<2x384xf32>
    %268 = vector.extract_strided_slice %267 {offsets = [0, 0], sizes = [2, 128], strides = [1, 1]} : vector<2x384xf32> to vector<2x128xf32>
    %269 = vector.extract_strided_slice %267 {offsets = [0, 128], sizes = [2, 128], strides = [1, 1]} : vector<2x384xf32> to vector<2x128xf32>
    %270 = vector.extract_strided_slice %267 {offsets = [0, 256], sizes = [2, 128], strides = [1, 1]} : vector<2x384xf32> to vector<2x128xf32>
    %271 = vector.extract_strided_slice %261 {offsets = [0, 384], sizes = [2, 128], strides = [1, 1]} : vector<2x512xf32> to vector<2x128xf32>
    %272 = math.tanh %271 : vector<2x128xf32>
    %273 = arith.mulf %269, %253 : vector<2x128xf32>
    %274 = arith.mulf %268, %272 : vector<2x128xf32>
    %275 = arith.addf %273, %274 : vector<2x128xf32>
    %276 = math.tanh %275 : vector<2x128xf32>
    %277 = arith.mulf %270, %276 : vector<2x128xf32>
    %278 = math.tanh %277 : vector<2x128xf32>
    %c6_79 = arith.constant 6 : index
    %c0_80 = arith.constant 0 : index
    %279 = vector.load %arg13[%c6_79, %c0_80] : memref<16x128xf32, #tpu.memory_space<vmem>>, vector<2x128xf32>
    tpu.vector_store %arg13[%c6_79, %c0_80], %278 {strides = array<i32>} : memref<16x128xf32, #tpu.memory_space<vmem>>, vector<2x128xf32>,
    %280 = vector.extract_strided_slice %189 {offsets = [8, 0], sizes = [2, 512], strides = [1, 1]} : vector<16x512xf32> to vector<2x512xf32>
    %c0_81 = arith.constant 0 : index
    %c0_82 = arith.constant 0 : index
    %281 = vector.load %arg5[%c0_81, %c0_82] : memref<128x512xf32, #tpu.memory_space<vmem>>, vector<128x512xf32>
    %cst_83 = arith.constant dense<0.000000e+00> : vector<2x512xf32>
    %282 = tpu.matmul %277, %281, %cst_83 {dimension_numbers = #tpu.dot_dimension_numbers<[1], [0], [0], [1], [0, 0, 1, 1], [], []>} : vector<2x128xf32>, vector<128x512xf32>, vector<2x512xf32> -> vector<2x512xf32>
    %283 = arith.addf %280, %282 : vector<2x512xf32>
    %284 = vector.extract_strided_slice %283 {offsets = [0, 0], sizes = [2, 384], strides = [1, 1]} : vector<2x512xf32> to vector<2x384xf32>
    %285 = arith.negf %284 : vector<2x384xf32>
    %286 = math.exp %285 : vector<2x384xf32>
    %cst_84 = arith.constant 1.000000e+00 : f32
    %287 = vector.broadcast %cst_84 : f32 to vector<2x384xf32>
    %288 = arith.addf %287, %286 : vector<2x384xf32>
    %289 = arith.divf %287, %288 : vector<2x384xf32>
    %290 = vector.extract_strided_slice %289 {offsets = [0, 0], sizes = [2, 128], strides = [1, 1]} : vector<2x384xf32> to vector<2x128xf32>
    %291 = vector.extract_strided_slice %289 {offsets = [0, 128], sizes = [2, 128], strides = [1, 1]} : vector<2x384xf32> to vector<2x128xf32>
    %292 = vector.extract_strided_slice %289 {offsets = [0, 256], sizes = [2, 128], strides = [1, 1]} : vector<2x384xf32> to vector<2x128xf32>
    %293 = vector.extract_strided_slice %283 {offsets = [0, 384], sizes = [2, 128], strides = [1, 1]} : vector<2x512xf32> to vector<2x128xf32>
    %294 = math.tanh %293 : vector<2x128xf32>
    %295 = arith.mulf %291, %275 : vector<2x128xf32>
    %296 = arith.mulf %290, %294 : vector<2x128xf32>
    %297 = arith.addf %295, %296 : vector<2x128xf32>
    %298 = math.tanh %297 : vector<2x128xf32>
    %299 = arith.mulf %292, %298 : vector<2x128xf32>
    %300 = math.tanh %299 : vector<2x128xf32>
    %c8_85 = arith.constant 8 : index
    %c0_86 = arith.constant 0 : index
    %301 = vector.load %arg13[%c8_85, %c0_86] : memref<16x128xf32, #tpu.memory_space<vmem>>, vector<2x128xf32>
    tpu.vector_store %arg13[%c8_85, %c0_86], %300 {strides = array<i32>} : memref<16x128xf32, #tpu.memory_space<vmem>>, vector<2x128xf32>,
    %302 = vector.extract_strided_slice %189 {offsets = [10, 0], sizes = [2, 512], strides = [1, 1]} : vector<16x512xf32> to vector<2x512xf32>
    %c0_87 = arith.constant 0 : index
    %c0_88 = arith.constant 0 : index
    %303 = vector.load %arg5[%c0_87, %c0_88] : memref<128x512xf32, #tpu.memory_space<vmem>>, vector<128x512xf32>
    %cst_89 = arith.constant dense<0.000000e+00> : vector<2x512xf32>
    %304 = tpu.matmul %299, %303, %cst_89 {dimension_numbers = #tpu.dot_dimension_numbers<[1], [0], [0], [1], [0, 0, 1, 1], [], []>} : vector<2x128xf32>, vector<128x512xf32>, vector<2x512xf32> -> vector<2x512xf32>
    %305 = arith.addf %302, %304 : vector<2x512xf32>
    %306 = vector.extract_strided_slice %305 {offsets = [0, 0], sizes = [2, 384], strides = [1, 1]} : vector<2x512xf32> to vector<2x384xf32>
    %307 = arith.negf %306 : vector<2x384xf32>
    %308 = math.exp %307 : vector<2x384xf32>
    %cst_90 = arith.constant 1.000000e+00 : f32
    %309 = vector.broadcast %cst_90 : f32 to vector<2x384xf32>
    %310 = arith.addf %309, %308 : vector<2x384xf32>
    %311 = arith.divf %309, %310 : vector<2x384xf32>
    %312 = vector.extract_strided_slice %311 {offsets = [0, 0], sizes = [2, 128], strides = [1, 1]} : vector<2x384xf32> to vector<2x128xf32>
    %313 = vector.extract_strided_slice %311 {offsets = [0, 128], sizes = [2, 128], strides = [1, 1]} : vector<2x384xf32> to vector<2x128xf32>
    %314 = vector.extract_strided_slice %311 {offsets = [0, 256], sizes = [2, 128], strides = [1, 1]} : vector<2x384xf32> to vector<2x128xf32>
    %315 = vector.extract_strided_slice %305 {offsets = [0, 384], sizes = [2, 128], strides = [1, 1]} : vector<2x512xf32> to vector<2x128xf32>
    %316 = math.tanh %315 : vector<2x128xf32>
    %317 = arith.mulf %313, %297 : vector<2x128xf32>
    %318 = arith.mulf %312, %316 : vector<2x128xf32>
    %319 = arith.addf %317, %318 : vector<2x128xf32>
    %320 = math.tanh %319 : vector<2x128xf32>
    %321 = arith.mulf %314, %320 : vector<2x128xf32>
    %322 = math.tanh %321 : vector<2x128xf32>
    %c10_91 = arith.constant 10 : index
    %c0_92 = arith.constant 0 : index
    %323 = vector.load %arg13[%c10_91, %c0_92] : memref<16x128xf32, #tpu.memory_space<vmem>>, vector<2x128xf32>
    tpu.vector_store %arg13[%c10_91, %c0_92], %322 {strides = array<i32>} : memref<16x128xf32, #tpu.memory_space<vmem>>, vector<2x128xf32>,
    %324 = vector.extract_strided_slice %189 {offsets = [12, 0], sizes = [2, 512], strides = [1, 1]} : vector<16x512xf32> to vector<2x512xf32>
    %c0_93 = arith.constant 0 : index
    %c0_94 = arith.constant 0 : index
    %325 = vector.load %arg5[%c0_93, %c0_94] : memref<128x512xf32, #tpu.memory_space<vmem>>, vector<128x512xf32>
    %cst_95 = arith.constant dense<0.000000e+00> : vector<2x512xf32>
    %326 = tpu.matmul %321, %325, %cst_95 {dimension_numbers = #tpu.dot_dimension_numbers<[1], [0], [0], [1], [0, 0, 1, 1], [], []>} : vector<2x128xf32>, vector<128x512xf32>, vector<2x512xf32> -> vector<2x512xf32>
    %327 = arith.addf %324, %326 : vector<2x512xf32>
    %328 = vector.extract_strided_slice %327 {offsets = [0, 0], sizes = [2, 384], strides = [1, 1]} : vector<2x512xf32> to vector<2x384xf32>
    %329 = arith.negf %328 : vector<2x384xf32>
    %330 = math.exp %329 : vector<2x384xf32>
    %cst_96 = arith.constant 1.000000e+00 : f32
    %331 = vector.broadcast %cst_96 : f32 to vector<2x384xf32>
    %332 = arith.addf %331, %330 : vector<2x384xf32>
    %333 = arith.divf %331, %332 : vector<2x384xf32>
    %334 = vector.extract_strided_slice %333 {offsets = [0, 0], sizes = [2, 128], strides = [1, 1]} : vector<2x384xf32> to vector<2x128xf32>
    %335 = vector.extract_strided_slice %333 {offsets = [0, 128], sizes = [2, 128], strides = [1, 1]} : vector<2x384xf32> to vector<2x128xf32>
    %336 = vector.extract_strided_slice %333 {offsets = [0, 256], sizes = [2, 128], strides = [1, 1]} : vector<2x384xf32> to vector<2x128xf32>
    %337 = vector.extract_strided_slice %327 {offsets = [0, 384], sizes = [2, 128], strides = [1, 1]} : vector<2x512xf32> to vector<2x128xf32>
    %338 = math.tanh %337 : vector<2x128xf32>
    %339 = arith.mulf %335, %319 : vector<2x128xf32>
    %340 = arith.mulf %334, %338 : vector<2x128xf32>
    %341 = arith.addf %339, %340 : vector<2x128xf32>
    %342 = math.tanh %341 : vector<2x128xf32>
    %343 = arith.mulf %336, %342 : vector<2x128xf32>
    %344 = math.tanh %343 : vector<2x128xf32>
    %c12_97 = arith.constant 12 : index
    %c0_98 = arith.constant 0 : index
    %345 = vector.load %arg13[%c12_97, %c0_98] : memref<16x128xf32, #tpu.memory_space<vmem>>, vector<2x128xf32>
    tpu.vector_store %arg13[%c12_97, %c0_98], %344 {strides = array<i32>} : memref<16x128xf32, #tpu.memory_space<vmem>>, vector<2x128xf32>,
    %346 = vector.extract_strided_slice %189 {offsets = [14, 0], sizes = [2, 512], strides = [1, 1]} : vector<16x512xf32> to vector<2x512xf32>
    %c0_99 = arith.constant 0 : index
    %c0_100 = arith.constant 0 : index
    %347 = vector.load %arg5[%c0_99, %c0_100] : memref<128x512xf32, #tpu.memory_space<vmem>>, vector<128x512xf32>
    %cst_101 = arith.constant dense<0.000000e+00> : vector<2x512xf32>
    %348 = tpu.matmul %343, %347, %cst_101 {dimension_numbers = #tpu.dot_dimension_numbers<[1], [0], [0], [1], [0, 0, 1, 1], [], []>} : vector<2x128xf32>, vector<128x512xf32>, vector<2x512xf32> -> vector<2x512xf32>
    %349 = arith.addf %346, %348 : vector<2x512xf32>
    %350 = vector.extract_strided_slice %349 {offsets = [0, 0], sizes = [2, 384], strides = [1, 1]} : vector<2x512xf32> to vector<2x384xf32>
    %351 = arith.negf %350 : vector<2x384xf32>
    %352 = math.exp %351 : vector<2x384xf32>
    %cst_102 = arith.constant 1.000000e+00 : f32
    %353 = vector.broadcast %cst_102 : f32 to vector<2x384xf32>
    %354 = arith.addf %353, %352 : vector<2x384xf32>
    %355 = arith.divf %353, %354 : vector<2x384xf32>
    %356 = vector.extract_strided_slice %355 {offsets = [0, 0], sizes = [2, 128], strides = [1, 1]} : vector<2x384xf32> to vector<2x128xf32>
    %357 = vector.extract_strided_slice %355 {offsets = [0, 128], sizes = [2, 128], strides = [1, 1]} : vector<2x384xf32> to vector<2x128xf32>
    %358 = vector.extract_strided_slice %355 {offsets = [0, 256], sizes = [2, 128], strides = [1, 1]} : vector<2x384xf32> to vector<2x128xf32>
    %359 = vector.extract_strided_slice %349 {offsets = [0, 384], sizes = [2, 128], strides = [1, 1]} : vector<2x512xf32> to vector<2x128xf32>
    %360 = math.tanh %359 : vector<2x128xf32>
    %361 = arith.mulf %357, %341 : vector<2x128xf32>
    %362 = arith.mulf %356, %360 : vector<2x128xf32>
    %363 = arith.addf %361, %362 : vector<2x128xf32>
    %364 = math.tanh %363 : vector<2x128xf32>
    %365 = arith.mulf %358, %364 : vector<2x128xf32>
    %366 = math.tanh %365 : vector<2x128xf32>
    %c14_103 = arith.constant 14 : index
    %c0_104 = arith.constant 0 : index
    %367 = vector.load %arg13[%c14_103, %c0_104] : memref<16x128xf32, #tpu.memory_space<vmem>>, vector<2x128xf32>
    tpu.vector_store %arg13[%c14_103, %c0_104], %366 {strides = array<i32>} : memref<16x128xf32, #tpu.memory_space<vmem>>, vector<2x128xf32>,
    %c0_105 = arith.constant 0 : index
    %c0_106 = arith.constant 0 : index
    %368 = vector.load %arg13[%c0_105, %c0_106] : memref<16x128xf32, #tpu.memory_space<vmem>>, vector<16x128xf32>
    %c0_107 = arith.constant 0 : index
    %c0_108 = arith.constant 0 : index
    %369 = vector.load %arg7[%c0_107, %c0_108] : memref<128x512xf32, #tpu.memory_space<vmem>>, vector<128x512xf32>
    %cst_109 = arith.constant dense<0.000000e+00> : vector<16x512xf32>
    %370 = tpu.matmul %368, %369, %cst_109 {dimension_numbers = #tpu.dot_dimension_numbers<[1], [0], [0], [1], [0, 0, 1, 1], [], []>} : vector<16x128xf32>, vector<128x512xf32>, vector<16x512xf32> -> vector<16x512xf32>
    %c0_110 = arith.constant 0 : index
    %c0_111 = arith.constant 0 : index
    %371 = vector.load %arg9[%c0_110, %c0_111] : memref<1x512xf32, #tpu.memory_space<vmem>>, vector<1x512xf32>
    %372 = vector.broadcast %371 : vector<1x512xf32> to vector<16x512xf32>
    %373 = arith.addf %370, %372 : vector<16x512xf32>
    %cst_112 = arith.constant 0.000000e+00 : f32
    %374 = vector.broadcast %cst_112 : f32 to vector<2x128xf32>
    %cst_113 = arith.constant 0.000000e+00 : f32
    %375 = vector.broadcast %cst_113 : f32 to vector<2x128xf32>
    %376 = vector.extract_strided_slice %373 {offsets = [0, 0], sizes = [2, 512], strides = [1, 1]} : vector<16x512xf32> to vector<2x512xf32>
    %c0_114 = arith.constant 0 : index
    %c0_115 = arith.constant 0 : index
    %377 = vector.load %arg8[%c0_114, %c0_115] : memref<128x512xf32, #tpu.memory_space<vmem>>, vector<128x512xf32>
    %cst_116 = arith.constant dense<0.000000e+00> : vector<2x512xf32>
    %378 = tpu.matmul %374, %377, %cst_116 {dimension_numbers = #tpu.dot_dimension_numbers<[1], [0], [0], [1], [0, 0, 1, 1], [], []>} : vector<2x128xf32>, vector<128x512xf32>, vector<2x512xf32> -> vector<2x512xf32>
    %379 = arith.addf %376, %378 : vector<2x512xf32>
    %380 = vector.extract_strided_slice %379 {offsets = [0, 0], sizes = [2, 384], strides = [1, 1]} : vector<2x512xf32> to vector<2x384xf32>
    %381 = arith.negf %380 : vector<2x384xf32>
    %382 = math.exp %381 : vector<2x384xf32>
    %cst_117 = arith.constant 1.000000e+00 : f32
    %383 = vector.broadcast %cst_117 : f32 to vector<2x384xf32>
    %384 = arith.addf %383, %382 : vector<2x384xf32>
    %385 = arith.divf %383, %384 : vector<2x384xf32>
    %386 = vector.extract_strided_slice %385 {offsets = [0, 0], sizes = [2, 128], strides = [1, 1]} : vector<2x384xf32> to vector<2x128xf32>
    %387 = vector.extract_strided_slice %385 {offsets = [0, 128], sizes = [2, 128], strides = [1, 1]} : vector<2x384xf32> to vector<2x128xf32>
    %388 = vector.extract_strided_slice %385 {offsets = [0, 256], sizes = [2, 128], strides = [1, 1]} : vector<2x384xf32> to vector<2x128xf32>
    %389 = vector.extract_strided_slice %379 {offsets = [0, 384], sizes = [2, 128], strides = [1, 1]} : vector<2x512xf32> to vector<2x128xf32>
    %390 = math.tanh %389 : vector<2x128xf32>
    %391 = arith.mulf %387, %375 : vector<2x128xf32>
    %392 = arith.mulf %386, %390 : vector<2x128xf32>
    %393 = arith.addf %391, %392 : vector<2x128xf32>
    %394 = math.tanh %393 : vector<2x128xf32>
    %395 = arith.mulf %388, %394 : vector<2x128xf32>
    %396 = math.tanh %395 : vector<2x128xf32>
    %c0_118 = arith.constant 0 : index
    %c0_119 = arith.constant 0 : index
    %397 = vector.load %arg10[%c0_118, %c0_119] : memref<16x128xf32, #tpu.memory_space<vmem>>, vector<2x128xf32>
    tpu.vector_store %arg10[%c0_118, %c0_119], %396 {strides = array<i32>} : memref<16x128xf32, #tpu.memory_space<vmem>>, vector<2x128xf32>,
    %398 = vector.extract_strided_slice %373 {offsets = [2, 0], sizes = [2, 512], strides = [1, 1]} : vector<16x512xf32> to vector<2x512xf32>
    %c0_120 = arith.constant 0 : index
    %c0_121 = arith.constant 0 : index
    %399 = vector.load %arg8[%c0_120, %c0_121] : memref<128x512xf32, #tpu.memory_space<vmem>>, vector<128x512xf32>
    %cst_122 = arith.constant dense<0.000000e+00> : vector<2x512xf32>
    %400 = tpu.matmul %395, %399, %cst_122 {dimension_numbers = #tpu.dot_dimension_numbers<[1], [0], [0], [1], [0, 0, 1, 1], [], []>} : vector<2x128xf32>, vector<128x512xf32>, vector<2x512xf32> -> vector<2x512xf32>
    %401 = arith.addf %398, %400 : vector<2x512xf32>
    %402 = vector.extract_strided_slice %401 {offsets = [0, 0], sizes = [2, 384], strides = [1, 1]} : vector<2x512xf32> to vector<2x384xf32>
    %403 = arith.negf %402 : vector<2x384xf32>
    %404 = math.exp %403 : vector<2x384xf32>
    %cst_123 = arith.constant 1.000000e+00 : f32
    %405 = vector.broadcast %cst_123 : f32 to vector<2x384xf32>
    %406 = arith.addf %405, %404 : vector<2x384xf32>
    %407 = arith.divf %405, %406 : vector<2x384xf32>
    %408 = vector.extract_strided_slice %407 {offsets = [0, 0], sizes = [2, 128], strides = [1, 1]} : vector<2x384xf32> to vector<2x128xf32>
    %409 = vector.extract_strided_slice %407 {offsets = [0, 128], sizes = [2, 128], strides = [1, 1]} : vector<2x384xf32> to vector<2x128xf32>
    %410 = vector.extract_strided_slice %407 {offsets = [0, 256], sizes = [2, 128], strides = [1, 1]} : vector<2x384xf32> to vector<2x128xf32>
    %411 = vector.extract_strided_slice %401 {offsets = [0, 384], sizes = [2, 128], strides = [1, 1]} : vector<2x512xf32> to vector<2x128xf32>
    %412 = math.tanh %411 : vector<2x128xf32>
    %413 = arith.mulf %409, %393 : vector<2x128xf32>
    %414 = arith.mulf %408, %412 : vector<2x128xf32>
    %415 = arith.addf %413, %414 : vector<2x128xf32>
    %416 = math.tanh %415 : vector<2x128xf32>
    %417 = arith.mulf %410, %416 : vector<2x128xf32>
    %418 = math.tanh %417 : vector<2x128xf32>
    %c2_124 = arith.constant 2 : index
    %c0_125 = arith.constant 0 : index
    %419 = vector.load %arg10[%c2_124, %c0_125] : memref<16x128xf32, #tpu.memory_space<vmem>>, vector<2x128xf32>
    tpu.vector_store %arg10[%c2_124, %c0_125], %418 {strides = array<i32>} : memref<16x128xf32, #tpu.memory_space<vmem>>, vector<2x128xf32>,
    %420 = vector.extract_strided_slice %373 {offsets = [4, 0], sizes = [2, 512], strides = [1, 1]} : vector<16x512xf32> to vector<2x512xf32>
    %c0_126 = arith.constant 0 : index
    %c0_127 = arith.constant 0 : index
    %421 = vector.load %arg8[%c0_126, %c0_127] : memref<128x512xf32, #tpu.memory_space<vmem>>, vector<128x512xf32>
    %cst_128 = arith.constant dense<0.000000e+00> : vector<2x512xf32>
    %422 = tpu.matmul %417, %421, %cst_128 {dimension_numbers = #tpu.dot_dimension_numbers<[1], [0], [0], [1], [0, 0, 1, 1], [], []>} : vector<2x128xf32>, vector<128x512xf32>, vector<2x512xf32> -> vector<2x512xf32>
    %423 = arith.addf %420, %422 : vector<2x512xf32>
    %424 = vector.extract_strided_slice %423 {offsets = [0, 0], sizes = [2, 384], strides = [1, 1]} : vector<2x512xf32> to vector<2x384xf32>
    %425 = arith.negf %424 : vector<2x384xf32>
    %426 = math.exp %425 : vector<2x384xf32>
    %cst_129 = arith.constant 1.000000e+00 : f32
    %427 = vector.broadcast %cst_129 : f32 to vector<2x384xf32>
    %428 = arith.addf %427, %426 : vector<2x384xf32>
    %429 = arith.divf %427, %428 : vector<2x384xf32>
    %430 = vector.extract_strided_slice %429 {offsets = [0, 0], sizes = [2, 128], strides = [1, 1]} : vector<2x384xf32> to vector<2x128xf32>
    %431 = vector.extract_strided_slice %429 {offsets = [0, 128], sizes = [2, 128], strides = [1, 1]} : vector<2x384xf32> to vector<2x128xf32>
    %432 = vector.extract_strided_slice %429 {offsets = [0, 256], sizes = [2, 128], strides = [1, 1]} : vector<2x384xf32> to vector<2x128xf32>
    %433 = vector.extract_strided_slice %423 {offsets = [0, 384], sizes = [2, 128], strides = [1, 1]} : vector<2x512xf32> to vector<2x128xf32>
    %434 = math.tanh %433 : vector<2x128xf32>
    %435 = arith.mulf %431, %415 : vector<2x128xf32>
    %436 = arith.mulf %430, %434 : vector<2x128xf32>
    %437 = arith.addf %435, %436 : vector<2x128xf32>
    %438 = math.tanh %437 : vector<2x128xf32>
    %439 = arith.mulf %432, %438 : vector<2x128xf32>
    %440 = math.tanh %439 : vector<2x128xf32>
    %c4_130 = arith.constant 4 : index
    %c0_131 = arith.constant 0 : index
    %441 = vector.load %arg10[%c4_130, %c0_131] : memref<16x128xf32, #tpu.memory_space<vmem>>, vector<2x128xf32>
    tpu.vector_store %arg10[%c4_130, %c0_131], %440 {strides = array<i32>} : memref<16x128xf32, #tpu.memory_space<vmem>>, vector<2x128xf32>,
    %442 = vector.extract_strided_slice %373 {offsets = [6, 0], sizes = [2, 512], strides = [1, 1]} : vector<16x512xf32> to vector<2x512xf32>
    %c0_132 = arith.constant 0 : index
    %c0_133 = arith.constant 0 : index
    %443 = vector.load %arg8[%c0_132, %c0_133] : memref<128x512xf32, #tpu.memory_space<vmem>>, vector<128x512xf32>
    %cst_134 = arith.constant dense<0.000000e+00> : vector<2x512xf32>
    %444 = tpu.matmul %439, %443, %cst_134 {dimension_numbers = #tpu.dot_dimension_numbers<[1], [0], [0], [1], [0, 0, 1, 1], [], []>} : vector<2x128xf32>, vector<128x512xf32>, vector<2x512xf32> -> vector<2x512xf32>
    %445 = arith.addf %442, %444 : vector<2x512xf32>
    %446 = vector.extract_strided_slice %445 {offsets = [0, 0], sizes = [2, 384], strides = [1, 1]} : vector<2x512xf32> to vector<2x384xf32>
    %447 = arith.negf %446 : vector<2x384xf32>
    %448 = math.exp %447 : vector<2x384xf32>
    %cst_135 = arith.constant 1.000000e+00 : f32
    %449 = vector.broadcast %cst_135 : f32 to vector<2x384xf32>
    %450 = arith.addf %449, %448 : vector<2x384xf32>
    %451 = arith.divf %449, %450 : vector<2x384xf32>
    %452 = vector.extract_strided_slice %451 {offsets = [0, 0], sizes = [2, 128], strides = [1, 1]} : vector<2x384xf32> to vector<2x128xf32>
    %453 = vector.extract_strided_slice %451 {offsets = [0, 128], sizes = [2, 128], strides = [1, 1]} : vector<2x384xf32> to vector<2x128xf32>
    %454 = vector.extract_strided_slice %451 {offsets = [0, 256], sizes = [2, 128], strides = [1, 1]} : vector<2x384xf32> to vector<2x128xf32>
    %455 = vector.extract_strided_slice %445 {offsets = [0, 384], sizes = [2, 128], strides = [1, 1]} : vector<2x512xf32> to vector<2x128xf32>
    %456 = math.tanh %455 : vector<2x128xf32>
    %457 = arith.mulf %453, %437 : vector<2x128xf32>
    %458 = arith.mulf %452, %456 : vector<2x128xf32>
    %459 = arith.addf %457, %458 : vector<2x128xf32>
    %460 = math.tanh %459 : vector<2x128xf32>
    %461 = arith.mulf %454, %460 : vector<2x128xf32>
    %462 = math.tanh %461 : vector<2x128xf32>
    %c6_136 = arith.constant 6 : index
    %c0_137 = arith.constant 0 : index
    %463 = vector.load %arg10[%c6_136, %c0_137] : memref<16x128xf32, #tpu.memory_space<vmem>>, vector<2x128xf32>
    tpu.vector_store %arg10[%c6_136, %c0_137], %462 {strides = array<i32>} : memref<16x128xf32, #tpu.memory_space<vmem>>, vector<2x128xf32>,
    %464 = vector.extract_strided_slice %373 {offsets = [8, 0], sizes = [2, 512], strides = [1, 1]} : vector<16x512xf32> to vector<2x512xf32>
    %c0_138 = arith.constant 0 : index
    %c0_139 = arith.constant 0 : index
    %465 = vector.load %arg8[%c0_138, %c0_139] : memref<128x512xf32, #tpu.memory_space<vmem>>, vector<128x512xf32>
    %cst_140 = arith.constant dense<0.000000e+00> : vector<2x512xf32>
    %466 = tpu.matmul %461, %465, %cst_140 {dimension_numbers = #tpu.dot_dimension_numbers<[1], [0], [0], [1], [0, 0, 1, 1], [], []>} : vector<2x128xf32>, vector<128x512xf32>, vector<2x512xf32> -> vector<2x512xf32>
    %467 = arith.addf %464, %466 : vector<2x512xf32>
    %468 = vector.extract_strided_slice %467 {offsets = [0, 0], sizes = [2, 384], strides = [1, 1]} : vector<2x512xf32> to vector<2x384xf32>
    %469 = arith.negf %468 : vector<2x384xf32>
    %470 = math.exp %469 : vector<2x384xf32>
    %cst_141 = arith.constant 1.000000e+00 : f32
    %471 = vector.broadcast %cst_141 : f32 to vector<2x384xf32>
    %472 = arith.addf %471, %470 : vector<2x384xf32>
    %473 = arith.divf %471, %472 : vector<2x384xf32>
    %474 = vector.extract_strided_slice %473 {offsets = [0, 0], sizes = [2, 128], strides = [1, 1]} : vector<2x384xf32> to vector<2x128xf32>
    %475 = vector.extract_strided_slice %473 {offsets = [0, 128], sizes = [2, 128], strides = [1, 1]} : vector<2x384xf32> to vector<2x128xf32>
    %476 = vector.extract_strided_slice %473 {offsets = [0, 256], sizes = [2, 128], strides = [1, 1]} : vector<2x384xf32> to vector<2x128xf32>
    %477 = vector.extract_strided_slice %467 {offsets = [0, 384], sizes = [2, 128], strides = [1, 1]} : vector<2x512xf32> to vector<2x128xf32>
    %478 = math.tanh %477 : vector<2x128xf32>
    %479 = arith.mulf %475, %459 : vector<2x128xf32>
    %480 = arith.mulf %474, %478 : vector<2x128xf32>
    %481 = arith.addf %479, %480 : vector<2x128xf32>
    %482 = math.tanh %481 : vector<2x128xf32>
    %483 = arith.mulf %476, %482 : vector<2x128xf32>
    %484 = math.tanh %483 : vector<2x128xf32>
    %c8_142 = arith.constant 8 : index
    %c0_143 = arith.constant 0 : index
    %485 = vector.load %arg10[%c8_142, %c0_143] : memref<16x128xf32, #tpu.memory_space<vmem>>, vector<2x128xf32>
    tpu.vector_store %arg10[%c8_142, %c0_143], %484 {strides = array<i32>} : memref<16x128xf32, #tpu.memory_space<vmem>>, vector<2x128xf32>,
    %486 = vector.extract_strided_slice %373 {offsets = [10, 0], sizes = [2, 512], strides = [1, 1]} : vector<16x512xf32> to vector<2x512xf32>
    %c0_144 = arith.constant 0 : index
    %c0_145 = arith.constant 0 : index
    %487 = vector.load %arg8[%c0_144, %c0_145] : memref<128x512xf32, #tpu.memory_space<vmem>>, vector<128x512xf32>
    %cst_146 = arith.constant dense<0.000000e+00> : vector<2x512xf32>
    %488 = tpu.matmul %483, %487, %cst_146 {dimension_numbers = #tpu.dot_dimension_numbers<[1], [0], [0], [1], [0, 0, 1, 1], [], []>} : vector<2x128xf32>, vector<128x512xf32>, vector<2x512xf32> -> vector<2x512xf32>
    %489 = arith.addf %486, %488 : vector<2x512xf32>
    %490 = vector.extract_strided_slice %489 {offsets = [0, 0], sizes = [2, 384], strides = [1, 1]} : vector<2x512xf32> to vector<2x384xf32>
    %491 = arith.negf %490 : vector<2x384xf32>
    %492 = math.exp %491 : vector<2x384xf32>
    %cst_147 = arith.constant 1.000000e+00 : f32
    %493 = vector.broadcast %cst_147 : f32 to vector<2x384xf32>
    %494 = arith.addf %493, %492 : vector<2x384xf32>
    %495 = arith.divf %493, %494 : vector<2x384xf32>
    %496 = vector.extract_strided_slice %495 {offsets = [0, 0], sizes = [2, 128], strides = [1, 1]} : vector<2x384xf32> to vector<2x128xf32>
    %497 = vector.extract_strided_slice %495 {offsets = [0, 128], sizes = [2, 128], strides = [1, 1]} : vector<2x384xf32> to vector<2x128xf32>
    %498 = vector.extract_strided_slice %495 {offsets = [0, 256], sizes = [2, 128], strides = [1, 1]} : vector<2x384xf32> to vector<2x128xf32>
    %499 = vector.extract_strided_slice %489 {offsets = [0, 384], sizes = [2, 128], strides = [1, 1]} : vector<2x512xf32> to vector<2x128xf32>
    %500 = math.tanh %499 : vector<2x128xf32>
    %501 = arith.mulf %497, %481 : vector<2x128xf32>
    %502 = arith.mulf %496, %500 : vector<2x128xf32>
    %503 = arith.addf %501, %502 : vector<2x128xf32>
    %504 = math.tanh %503 : vector<2x128xf32>
    %505 = arith.mulf %498, %504 : vector<2x128xf32>
    %506 = math.tanh %505 : vector<2x128xf32>
    %c10_148 = arith.constant 10 : index
    %c0_149 = arith.constant 0 : index
    %507 = vector.load %arg10[%c10_148, %c0_149] : memref<16x128xf32, #tpu.memory_space<vmem>>, vector<2x128xf32>
    tpu.vector_store %arg10[%c10_148, %c0_149], %506 {strides = array<i32>} : memref<16x128xf32, #tpu.memory_space<vmem>>, vector<2x128xf32>,
    %508 = vector.extract_strided_slice %373 {offsets = [12, 0], sizes = [2, 512], strides = [1, 1]} : vector<16x512xf32> to vector<2x512xf32>
    %c0_150 = arith.constant 0 : index
    %c0_151 = arith.constant 0 : index
    %509 = vector.load %arg8[%c0_150, %c0_151] : memref<128x512xf32, #tpu.memory_space<vmem>>, vector<128x512xf32>
    %cst_152 = arith.constant dense<0.000000e+00> : vector<2x512xf32>
    %510 = tpu.matmul %505, %509, %cst_152 {dimension_numbers = #tpu.dot_dimension_numbers<[1], [0], [0], [1], [0, 0, 1, 1], [], []>} : vector<2x128xf32>, vector<128x512xf32>, vector<2x512xf32> -> vector<2x512xf32>
    %511 = arith.addf %508, %510 : vector<2x512xf32>
    %512 = vector.extract_strided_slice %511 {offsets = [0, 0], sizes = [2, 384], strides = [1, 1]} : vector<2x512xf32> to vector<2x384xf32>
    %513 = arith.negf %512 : vector<2x384xf32>
    %514 = math.exp %513 : vector<2x384xf32>
    %cst_153 = arith.constant 1.000000e+00 : f32
    %515 = vector.broadcast %cst_153 : f32 to vector<2x384xf32>
    %516 = arith.addf %515, %514 : vector<2x384xf32>
    %517 = arith.divf %515, %516 : vector<2x384xf32>
    %518 = vector.extract_strided_slice %517 {offsets = [0, 0], sizes = [2, 128], strides = [1, 1]} : vector<2x384xf32> to vector<2x128xf32>
    %519 = vector.extract_strided_slice %517 {offsets = [0, 128], sizes = [2, 128], strides = [1, 1]} : vector<2x384xf32> to vector<2x128xf32>
    %520 = vector.extract_strided_slice %517 {offsets = [0, 256], sizes = [2, 128], strides = [1, 1]} : vector<2x384xf32> to vector<2x128xf32>
    %521 = vector.extract_strided_slice %511 {offsets = [0, 384], sizes = [2, 128], strides = [1, 1]} : vector<2x512xf32> to vector<2x128xf32>
    %522 = math.tanh %521 : vector<2x128xf32>
    %523 = arith.mulf %519, %503 : vector<2x128xf32>
    %524 = arith.mulf %518, %522 : vector<2x128xf32>
    %525 = arith.addf %523, %524 : vector<2x128xf32>
    %526 = math.tanh %525 : vector<2x128xf32>
    %527 = arith.mulf %520, %526 : vector<2x128xf32>
    %528 = math.tanh %527 : vector<2x128xf32>
    %c12_154 = arith.constant 12 : index
    %c0_155 = arith.constant 0 : index
    %529 = vector.load %arg10[%c12_154, %c0_155] : memref<16x128xf32, #tpu.memory_space<vmem>>, vector<2x128xf32>
    tpu.vector_store %arg10[%c12_154, %c0_155], %528 {strides = array<i32>} : memref<16x128xf32, #tpu.memory_space<vmem>>, vector<2x128xf32>,
    %530 = vector.extract_strided_slice %373 {offsets = [14, 0], sizes = [2, 512], strides = [1, 1]} : vector<16x512xf32> to vector<2x512xf32>
    %c0_156 = arith.constant 0 : index
    %c0_157 = arith.constant 0 : index
    %531 = vector.load %arg8[%c0_156, %c0_157] : memref<128x512xf32, #tpu.memory_space<vmem>>, vector<128x512xf32>
    %cst_158 = arith.constant dense<0.000000e+00> : vector<2x512xf32>
    %532 = tpu.matmul %527, %531, %cst_158 {dimension_numbers = #tpu.dot_dimension_numbers<[1], [0], [0], [1], [0, 0, 1, 1], [], []>} : vector<2x128xf32>, vector<128x512xf32>, vector<2x512xf32> -> vector<2x512xf32>
    %533 = arith.addf %530, %532 : vector<2x512xf32>
    %534 = vector.extract_strided_slice %533 {offsets = [0, 0], sizes = [2, 384], strides = [1, 1]} : vector<2x512xf32> to vector<2x384xf32>
    %535 = arith.negf %534 : vector<2x384xf32>
    %536 = math.exp %535 : vector<2x384xf32>
    %cst_159 = arith.constant 1.000000e+00 : f32
    %537 = vector.broadcast %cst_159 : f32 to vector<2x384xf32>
    %538 = arith.addf %537, %536 : vector<2x384xf32>
    %539 = arith.divf %537, %538 : vector<2x384xf32>
    %540 = vector.extract_strided_slice %539 {offsets = [0, 0], sizes = [2, 128], strides = [1, 1]} : vector<2x384xf32> to vector<2x128xf32>
    %541 = vector.extract_strided_slice %539 {offsets = [0, 128], sizes = [2, 128], strides = [1, 1]} : vector<2x384xf32> to vector<2x128xf32>
    %542 = vector.extract_strided_slice %539 {offsets = [0, 256], sizes = [2, 128], strides = [1, 1]} : vector<2x384xf32> to vector<2x128xf32>
    %543 = vector.extract_strided_slice %533 {offsets = [0, 384], sizes = [2, 128], strides = [1, 1]} : vector<2x512xf32> to vector<2x128xf32>
    %544 = math.tanh %543 : vector<2x128xf32>
    %545 = arith.mulf %541, %525 : vector<2x128xf32>
    %546 = arith.mulf %540, %544 : vector<2x128xf32>
    %547 = arith.addf %545, %546 : vector<2x128xf32>
    %548 = math.tanh %547 : vector<2x128xf32>
    %549 = arith.mulf %542, %548 : vector<2x128xf32>
    %550 = math.tanh %549 : vector<2x128xf32>
    %c14_160 = arith.constant 14 : index
    %c0_161 = arith.constant 0 : index
    %551 = vector.load %arg10[%c14_160, %c0_161] : memref<16x128xf32, #tpu.memory_space<vmem>>, vector<2x128xf32>
    tpu.vector_store %arg10[%c14_160, %c0_161], %550 {strides = array<i32>} : memref<16x128xf32, #tpu.memory_space<vmem>>, vector<2x128xf32>,
    %c0_162 = arith.constant 0 : index
    %c0_163 = arith.constant 0 : index
    %552 = vector.load %arg11[%c0_162, %c0_163] : memref<4x128xf32, #tpu.memory_space<vmem>>, vector<2x128xf32>
    tpu.vector_store %arg11[%c0_162, %c0_163], %549 {strides = array<i32>} : memref<4x128xf32, #tpu.memory_space<vmem>>, vector<2x128xf32>,
    %c2_164 = arith.constant 2 : index
    %c0_165 = arith.constant 0 : index
    %553 = vector.load %arg11[%c2_164, %c0_165] : memref<4x128xf32, #tpu.memory_space<vmem>>, vector<2x128xf32>
    tpu.vector_store %arg11[%c2_164, %c0_165], %547 {strides = array<i32>} : memref<4x128xf32, #tpu.memory_space<vmem>>, vector<2x128xf32>,
    return
  }
}

</mosaic_0001>

<llo_original>
// kernel: tae_encoder_forward.1
$region0: #{tae_encoder_forward.1}
  #allocation0 [shape = 'u32[]', space=smem, size = 0x4, offset = 0x4, fixed_abs, tag = 'smem constant byte address 0x4 - core index']
  #allocation1 [shape = 'u32[144,128]{1,0:T(1,128)}', space=vmem, size = 0x12000, scoped, tag = 'internal scratch']
  #allocation2 [shape = 'f32[16,128]{1,0:T(8,128)}', space=vmem, size = 0x2000, scoped, tag = 'scratch operand']
  #allocation3 [shape = 'f32[16,128]{1,0:T(8,128)}', space=vmem, size = 0x2000, scoped, tag = 'scratch operand']
  %s0 = inlined_call_operand.vmem [shape: f32[16,128], index: 0, kind: input, shape index: {}]
  %s1 = inlined_call_operand.hbm [shape: f32[128,512], index: 1, kind: input, shape index: {}]
  %s2 = inlined_call_operand.hbm [shape: f32[128,512], index: 2, kind: input, shape index: {}]
  %s3 = inlined_call_operand.vmem [shape: f32[1,512], index: 3, kind: input, shape index: {}]
  %s4 = inlined_call_operand.hbm [shape: f32[128,512], index: 4, kind: input, shape index: {}]
  %s5 = inlined_call_operand.hbm [shape: f32[128,512], index: 5, kind: input, shape index: {}]
  %s6 = inlined_call_operand.vmem [shape: f32[1,512], index: 6, kind: input, shape index: {}]
  %s7 = inlined_call_operand.hbm [shape: f32[128,512], index: 7, kind: input, shape index: {}]
  %s8 = inlined_call_operand.hbm [shape: f32[128,512], index: 8, kind: input, shape index: {}]
  %s9 = inlined_call_operand.vmem [shape: f32[1,512], index: 9, kind: input, shape index: {}]
  %s10 = inlined_call_operand.vmem [shape: f32[16,128], index: 10, kind: output, shape index: {0}]
  %s11 = inlined_call_operand.vmem [shape: f32[4,128], index: 11, kind: output, shape index: {1}]
  %12 = xla_tuple %s10, %s11
  %s13 = sld [smem:[#allocation0]]
  $region82: #{tae_encoder_forward.1} parent=0
    _
  %s15 = ssub.s32 1, %s13
  %s16 = scalar_select 0, %s15, %s13
  $region1: #{tae_encoder_forward.1} parent=0
    #allocation4 [shape = 'u8[262144]{0}', space=vmem, size = 0x40000, scoped, tag = 'input window, operand 1, single buffered']
    #allocation5 [shape = 's32[1]{0}', space=sflag, size = 0x4, scoped, tag = 'scoped memory for tae_encoder_forward.1']
    #allocation6 [shape = 'u8[262144]{0}', space=vmem, size = 0x40000, scoped, tag = 'input window, operand 2, single buffered']
    #allocation7 [shape = 's32[1]{0}', space=sflag, size = 0x4, scoped, tag = 'scoped memory for tae_encoder_forward.1']
    #allocation8 [shape = 'u8[262144]{0}', space=vmem, size = 0x40000, scoped, tag = 'input window, operand 4, single buffered']
    #allocation9 [shape = 'u8[262144]{0}', space=vmem, size = 0x40000, scoped, tag = 'input window, operand 5, single buffered']
    #allocation10 [shape = 's32[1]{0}', space=sflag, size = 0x4, scoped, tag = 'scoped memory for tae_encoder_forward.1']
    #allocation11 [shape = 'u8[262144]{0}', space=vmem, size = 0x40000, scoped, tag = 'input window, operand 7, single buffered']
    #allocation12 [shape = 'u8[262144]{0}', space=vmem, size = 0x40000, scoped, tag = 'input window, operand 8, single buffered']
    #allocation13 [shape = 's32[1]{0}', space=sflag, size = 0x4, scoped, tag = 'scoped memory for tae_encoder_forward.1']
    %17 = vsyncpa [#allocation5], 0
    %18 = vsyncpa [#allocation7], 0
    %19 = vsyncpa [#allocation10], 0
    %20 = vsyncpa [#allocation13], 0
    // Predicated region
    $region2: #{tae_encoder_forward.1} parent=1 // pred_check
      _
    $region3: #{tae_encoder_forward.1} parent=1 // pred_check_branch
      %22 = sbr.rel (0) target = $region5
    $region4: #{tae_encoder_forward.1} parent=1 // pred_region
      _
    $region5: #{tae_encoder_forward.1} parent=1 // pred_fallthru
      _
    // Predicated region
    $region6: #{tae_encoder_forward.1} parent=1 // pred_check
      _
    $region7: #{tae_encoder_forward.1} parent=1 // pred_check_branch
      %24 = sbr.rel (0) target = $region9
    $region8: #{tae_encoder_forward.1} parent=1 // pred_region
      %s26 = ssub.s32 8192, 8192
      %27 = vsyncadd [#allocation5], %s26
      %s28 = sshll.u32 [#allocation4], 4
      %s29 = int_to_ptr.vmem [resolvable:$true] %s28
      %34 = dma.hbm_to_vmem [thread:$0]  %s1, 8192, %s29, [#allocation5], 512, 512, 32
    $region9: #{tae_encoder_forward.1} parent=1 // pred_fallthru
      _
    // Predicated region
    $region10: #{tae_encoder_forward.1} parent=1 // pred_check
      _
    $region11: #{tae_encoder_forward.1} parent=1 // pred_check_branch
      %36 = sbr.rel (0) target = $region13
    $region12: #{tae_encoder_forward.1} parent=1 // pred_region
      %s38 = ssub.s32 8192, 8192
      %39 = vsyncadd [#allocation7], %s38
      %s40 = sshll.u32 [#allocation6], 4
      %s41 = int_to_ptr.vmem [resolvable:$true] %s40
      %46 = dma.hbm_to_vmem [thread:$0]  %s2, 8192, %s41, [#allocation7], 512, 512, 32
    $region13: #{tae_encoder_forward.1} parent=1 // pred_fallthru
      _
    // Predicated region
    $region14: #{tae_encoder_forward.1} parent=1 // pred_check
      _
    $region15: #{tae_encoder_forward.1} parent=1 // pred_check_branch
      %48 = sbr.rel (0) target = $region17
    $region16: #{tae_encoder_forward.1} parent=1 // pred_region
      _
    $region17: #{tae_encoder_forward.1} parent=1 // pred_fallthru
      _
    // Predicated region
    $region18: #{tae_encoder_forward.1} parent=1 // pred_check
      _
    $region19: #{tae_encoder_forward.1} parent=1 // pred_check_branch
      %50 = sbr.rel (0) target = $region21
    $region20: #{tae_encoder_forward.1} parent=1 // pred_region
      %s52 = ssub.s32 8192, 8192
      %53 = vsyncadd [#allocation7], %s52
      %s54 = sshll.u32 [#allocation8], 4
      %s55 = int_to_ptr.vmem [resolvable:$true] %s54
      %60 = dma.hbm_to_vmem [thread:$0]  %s4, 8192, %s55, [#allocation7], 512, 512, 32
    $region21: #{tae_encoder_forward.1} parent=1 // pred_fallthru
      _
    // Predicated region
    $region22: #{tae_encoder_forward.1} parent=1 // pred_check
      _
    $region23: #{tae_encoder_forward.1} parent=1 // pred_check_branch
      %62 = sbr.rel (0) target = $region25
    $region24: #{tae_encoder_forward.1} parent=1 // pred_region
      %s64 = ssub.s32 8192, 8192
      %65 = vsyncadd [#allocation10], %s64
      %s66 = sshll.u32 [#allocation9], 4
      %s67 = int_to_ptr.vmem [resolvable:$true] %s66
      %72 = dma.hbm_to_vmem [thread:$0]  %s5, 8192, %s67, [#allocation10], 512, 512, 32
    $region25: #{tae_encoder_forward.1} parent=1 // pred_fallthru
      _
    // Predicated region
    $region26: #{tae_encoder_forward.1} parent=1 // pred_check
      _
    $region27: #{tae_encoder_forward.1} parent=1 // pred_check_branch
      %74 = sbr.rel (0) target = $region29
    $region28: #{tae_encoder_forward.1} parent=1 // pred_region
      _
    $region29: #{tae_encoder_forward.1} parent=1 // pred_fallthru
      _
    // Predicated region
    $region30: #{tae_encoder_forward.1} parent=1 // pred_check
      _
    $region31: #{tae_encoder_forward.1} parent=1 // pred_check_branch
      %76 = sbr.rel (0) target = $region33
    $region32: #{tae_encoder_forward.1} parent=1 // pred_region
      %s78 = ssub.s32 8192, 8192
      %79 = vsyncadd [#allocation10], %s78
      %s80 = sshll.u32 [#allocation11], 4
      %s81 = int_to_ptr.vmem [resolvable:$true] %s80
      %86 = dma.hbm_to_vmem [thread:$0]  %s7, 8192, %s81, [#allocation10], 512, 512, 32
    $region33: #{tae_encoder_forward.1} parent=1 // pred_fallthru
      _
    // Predicated region
    $region34: #{tae_encoder_forward.1} parent=1 // pred_check
      _
    $region35: #{tae_encoder_forward.1} parent=1 // pred_check_branch
      %88 = sbr.rel (0) target = $region37
    $region36: #{tae_encoder_forward.1} parent=1 // pred_region
      %s90 = ssub.s32 8192, 8192
      %91 = vsyncadd [#allocation13], %s90
      %s92 = sshll.u32 [#allocation12], 4
      %s93 = int_to_ptr.vmem [resolvable:$true] %s92
      %98 = dma.hbm_to_vmem [thread:$0]  %s8, 8192, %s93, [#allocation13], 512, 512, 32
    $region37: #{tae_encoder_forward.1} parent=1 // pred_fallthru
      _
    // Predicated region
    $region38: #{tae_encoder_forward.1} parent=1 // pred_check
      _
    $region39: #{tae_encoder_forward.1} parent=1 // pred_check_branch
      %100 = sbr.rel (0) target = $region41
    $region40: #{tae_encoder_forward.1} parent=1 // pred_region
      _
    $region41: #{tae_encoder_forward.1} parent=1 // pred_fallthru
      _
    // Predicated region
    $region42: #{tae_encoder_forward.1} parent=1 // pred_check
      _
    $region43: #{tae_encoder_forward.1} parent=1 // pred_check_branch
      %102 = sbr.rel (0) target = $region45
    $region44: #{tae_encoder_forward.1} parent=1 // pred_region
      %103 = dma.done [#allocation5], 8192
    $region45: #{tae_encoder_forward.1} parent=1 // pred_fallthru
      _
    // Predicated region
    $region46: #{tae_encoder_forward.1} parent=1 // pred_check
      _
    $region47: #{tae_encoder_forward.1} parent=1 // pred_check_branch
      %105 = sbr.rel (0) target = $region49
    $region48: #{tae_encoder_forward.1} parent=1 // pred_region
      %106 = dma.done [#allocation7], 8192
    $region49: #{tae_encoder_forward.1} parent=1 // pred_fallthru
      _
    // Predicated region
    $region50: #{tae_encoder_forward.1} parent=1 // pred_check
      _
    $region51: #{tae_encoder_forward.1} parent=1 // pred_check_branch
      %108 = sbr.rel (0) target = $region53
    $region52: #{tae_encoder_forward.1} parent=1 // pred_region
      %109 = dma.done [#allocation7], 8192
    $region53: #{tae_encoder_forward.1} parent=1 // pred_fallthru
      _
    // Predicated region
    $region54: #{tae_encoder_forward.1} parent=1 // pred_check
      _
    $region55: #{tae_encoder_forward.1} parent=1 // pred_check_branch
      %111 = sbr.rel (0) target = $region57
    $region56: #{tae_encoder_forward.1} parent=1 // pred_region
      %112 = dma.done [#allocation10], 8192
    $region57: #{tae_encoder_forward.1} parent=1 // pred_fallthru
      _
    // Predicated region
    $region58: #{tae_encoder_forward.1} parent=1 // pred_check
      _
    $region59: #{tae_encoder_forward.1} parent=1 // pred_check_branch
      %114 = sbr.rel (0) target = $region61
    $region60: #{tae_encoder_forward.1} parent=1 // pred_region
      %115 = dma.done [#allocation10], 8192
    $region61: #{tae_encoder_forward.1} parent=1 // pred_fallthru
      _
    // Predicated region
    $region62: #{tae_encoder_forward.1} parent=1 // pred_check
      _
    $region63: #{tae_encoder_forward.1} parent=1 // pred_check_branch
      %117 = sbr.rel (0) target = $region65
    $region64: #{tae_encoder_forward.1} parent=1 // pred_region
      %118 = dma.done [#allocation13], 8192
    $region65: #{tae_encoder_forward.1} parent=1 // pred_fallthru
      _
    %v119 = vld [vmem:[%s0] sm:$0xff]
    %v120 = vld [vmem:[%s0 + $0x8] sm:$0xff]
    %v121 = vld [vmem:[#allocation4] sm:$0xff]
    %v122 = vld [vmem:[#allocation4 + $0x8] sm:$0xff]
    %v123 = vld [vmem:[#allocation4 + $0x10] sm:$0xff]
    %v124 = vld [vmem:[#allocation4 + $0x18] sm:$0xff]
    %v125 = vld [vmem:[#allocation4 + $0x20] sm:$0xff]
    %v126 = vld [vmem:[#allocation4 + $0x28] sm:$0xff]
    %v127 = vld [vmem:[#allocation4 + $0x30] sm:$0xff]
    %v128 = vld [vmem:[#allocation4 + $0x38] sm:$0xff]
    %v129 = vld [vmem:[#allocation4 + $0x40] sm:$0xff]
    %v130 = vld [vmem:[#allocation4 + $0x48] sm:$0xff]
    %v131 = vld [vmem:[#allocation4 + $0x50] sm:$0xff]
    %v132 = vld [vmem:[#allocation4 + $0x58] sm:$0xff]
    %v133 = vld [vmem:[#allocation4 + $0x60] sm:$0xff]
    %v134 = vld [vmem:[#allocation4 + $0x68] sm:$0xff]
    %v135 = vld [vmem:[#allocation4 + $0x70] sm:$0xff]
    %v136 = vld [vmem:[#allocation4 + $0x78] sm:$0xff]
    %v137 = vld [vmem:[#allocation4 + $0x80] sm:$0xff]
    %v138 = vld [vmem:[#allocation4 + $0x88] sm:$0xff]
    %v139 = vld [vmem:[#allocation4 + $0x90] sm:$0xff]
    %v140 = vld [vmem:[#allocation4 + $0x98] sm:$0xff]
    %v141 = vld [vmem:[#allocation4 + $0xa0] sm:$0xff]
    %v142 = vld [vmem:[#allocation4 + $0xa8] sm:$0xff]
    %v143 = vld [vmem:[#allocation4 + $0xb0] sm:$0xff]
    %v144 = vld [vmem:[#allocation4 + $0xb8] sm:$0xff]
    %v145 = vld [vmem:[#allocation4 + $0xc0] sm:$0xff]
    %v146 = vld [vmem:[#allocation4 + $0xc8] sm:$0xff]
    %v147 = vld [vmem:[#allocation4 + $0xd0] sm:$0xff]
    %v148 = vld [vmem:[#allocation4 + $0xd8] sm:$0xff]
    %v149 = vld [vmem:[#allocation4 + $0xe0] sm:$0xff]
    %v150 = vld [vmem:[#allocation4 + $0xe8] sm:$0xff]
    %v151 = vld [vmem:[#allocation4 + $0xf0] sm:$0xff]
    %v152 = vld [vmem:[#allocation4 + $0xf8] sm:$0xff]
    %v153 = vld [vmem:[#allocation4 + $0x100] sm:$0xff]
    %v154 = vld [vmem:[#allocation4 + $0x108] sm:$0xff]
    %v155 = vld [vmem:[#allocation4 + $0x110] sm:$0xff]
    %v156 = vld [vmem:[#allocation4 + $0x118] sm:$0xff]
    %v157 = vld [vmem:[#allocation4 + $0x120] sm:$0xff]
    %v158 = vld [vmem:[#allocation4 + $0x128] sm:$0xff]
    %v159 = vld [vmem:[#allocation4 + $0x130] sm:$0xff]
    %v160 = vld [vmem:[#allocation4 + $0x138] sm:$0xff]
    %v161 = vld [vmem:[#allocation4 + $0x140] sm:$0xff]
    %v162 = vld [vmem:[#allocation4 + $0x148] sm:$0xff]
    %v163 = vld [vmem:[#allocation4 + $0x150] sm:$0xff]
    %v164 = vld [vmem:[#allocation4 + $0x158] sm:$0xff]
    %v165 = vld [vmem:[#allocation4 + $0x160] sm:$0xff]
    %v166 = vld [vmem:[#allocation4 + $0x168] sm:$0xff]
    %v167 = vld [vmem:[#allocation4 + $0x170] sm:$0xff]
    %v168 = vld [vmem:[#allocation4 + $0x178] sm:$0xff]
    %v169 = vld [vmem:[#allocation4 + $0x180] sm:$0xff]
    %v170 = vld [vmem:[#allocation4 + $0x188] sm:$0xff]
    %v171 = vld [vmem:[#allocation4 + $0x190] sm:$0xff]
    %v172 = vld [vmem:[#allocation4 + $0x198] sm:$0xff]
    %v173 = vld [vmem:[#allocation4 + $0x1a0] sm:$0xff]
    %v174 = vld [vmem:[#allocation4 + $0x1a8] sm:$0xff]
    %v175 = vld [vmem:[#allocation4 + $0x1b0] sm:$0xff]
    %v176 = vld [vmem:[#allocation4 + $0x1b8] sm:$0xff]
    %v177 = vld [vmem:[#allocation4 + $0x1c0] sm:$0xff]
    %v178 = vld [vmem:[#allocation4 + $0x1c8] sm:$0xff]
    %v179 = vld [vmem:[#allocation4 + $0x1d0] sm:$0xff]
    %v180 = vld [vmem:[#allocation4 + $0x1d8] sm:$0xff]
    %v181 = vld [vmem:[#allocation4 + $0x1e0] sm:$0xff]
    %v182 = vld [vmem:[#allocation4 + $0x1e8] sm:$0xff]
    %v183 = vld [vmem:[#allocation4 + $0x1f0] sm:$0xff]
    %v184 = vld [vmem:[#allocation4 + $0x1f8] sm:$0xff]
    %v185 = vld [vmem:[%s3] sm:$0xf]
    %v187 = vlaneseq
    %v188 = vshrl.u32 %v187, 7
    %v189 = vsub.s32 0, %v188
    %v190 = vrot.slane %v185, %v189
    %v191 = vlaneseq
    %v192 = vshrl.u32 %v191, 7
    %v193 = vsub.s32 1, %v192
    %v194 = vrot.slane %v185, %v193
    %v195 = vlaneseq
    %v196 = vshrl.u32 %v195, 7
    %v197 = vsub.s32 2, %v196
    %v198 = vrot.slane %v185, %v197
    %v199 = vlaneseq
    %v200 = vshrl.u32 %v199, 7
    %v201 = vsub.s32 3, %v200
    %v202 = vrot.slane %v185, %v201
    %207 = vmatprep.subr.mxu0 %v122
    %208 = vmatpush1.msra.mxu0 %v121
    %209 = vmatprep.subr.mxu0 %v126
    %210 = vmatpush1.msra.mxu0 %v125
    %211 = vmatprep.subr.mxu0 %v130
    %212 = vmatpush1.msra.mxu0 %v129
    %213 = vmatprep.subr.mxu0 %v134
    %214 = vmatpush1.msra.mxu0 %v133
    %215 = vmatprep.subr.mxu0 %v138
    %216 = vmatpush1.msra.mxu0 %v137
    %217 = vmatprep.subr.mxu0 %v142
    %218 = vmatpush1.msra.mxu0 %v141
    %219 = vmatprep.subr.mxu0 %v146
    %220 = vmatpush1.msra.mxu0 %v145
    %221 = vmatprep.subr.mxu0 %v150
    %222 = vmatpush1.msra.mxu0 %v149
    %223 = vmatprep.subr.mxu0 %v154
    %224 = vmatpush1.msra.mxu0 %v153
    %225 = vmatprep.subr.mxu0 %v158
    %226 = vmatpush1.msra.mxu0 %v157
    %227 = vmatprep.subr.mxu0 %v162
    %228 = vmatpush1.msra.mxu0 %v161
    %229 = vmatprep.subr.mxu0 %v166
    %230 = vmatpush1.msra.mxu0 %v165
    %231 = vmatprep.subr.mxu0 %v170
    %232 = vmatpush1.msra.mxu0 %v169
    %233 = vmatprep.subr.mxu0 %v174
    %234 = vmatpush1.msra.mxu0 %v173
    %235 = vmatprep.subr.mxu0 %v178
    %236 = vmatpush1.msra.mxu0 %v177
    %237 = vmatprep.subr.mxu0 %v182
    %238 = vmatpush1.msra.mxu0 %v181
    %239 = vmatprep.subr.mxu0 0.0
    %240 = vmatpush1.msra.mxu0 0.0
    %241 = vmatprep.subr.mxu0 0.0
    %242 = vmatpush1.msra.mxu0 0.0
    %243 = vmatprep.subr.mxu0 0.0
    %244 = vmatpush1.msra.mxu0 0.0
    %245 = vmatprep.subr.mxu0 0.0
    %246 = vmatpush1.msra.mxu0 0.0
    %247 = vmatprep.subr.mxu0 0.0
    %248 = vmatpush1.msra.mxu0 0.0
    %249 = vmatprep.subr.mxu0 0.0
    %250 = vmatpush1.msra.mxu0 0.0
    %251 = vmatprep.subr.mxu0 0.0
    %252 = vmatpush1.msra.mxu0 0.0
    %253 = vmatprep.subr.mxu0 0.0
    %254 = vmatpush1.msra.mxu0 0.0
    %255 = vmatprep.subr.mxu0 0.0
    %256 = vmatpush1.msra.mxu0 0.0
    %257 = vmatprep.subr.mxu0 0.0
    %258 = vmatpush1.msra.mxu0 0.0
    %259 = vmatprep.subr.mxu0 0.0
    %260 = vmatpush1.msra.mxu0 0.0
    %261 = vmatprep.subr.mxu0 0.0
    %262 = vmatpush1.msra.mxu0 0.0
    %263 = vmatprep.subr.mxu0 0.0
    %264 = vmatpush1.msra.mxu0 0.0
    %265 = vmatprep.subr.mxu0 0.0
    %266 = vmatpush1.msra.mxu0 0.0
    %267 = vmatprep.subr.mxu0 0.0
    %268 = vmatpush1.msra.mxu0 0.0
    %269 = vmatprep.subr.mxu0 0.0
    %270 = vmatpush1.msra.mxu0 0.0
    %271 = vmatprep.mubr.f32.mxu0 0.0
    %272 = vmatmul.mubr.f32.gmra.mrb[0].mxu0 %v119
    %v273 = vpop.f32.mrb[0].mxu0
    %v274 = vadd.f32 %v190, %v273
    %v275 = vpop.f32.mrb[0].mxu0
    %v276 = vadd.f32 %v194, %v275
    %277 = vmatprep.mubr.f32.mxu0 0.0
    %278 = vmatmul.mubr.f32.gmra.mrb[0].mxu0 %v120
    %v279 = vpop.f32.mrb[0].mxu0
    %v280 = vadd.f32 %v190, %v279
    %v281 = vpop.f32.mrb[0].mxu0
    %v282 = vadd.f32 %v194, %v281
    %283 = vdwg.mxu0
    %284 = vmatprep.subr.mxu0 %v124
    %285 = vmatpush1.msra.mxu0 %v123
    %286 = vmatprep.subr.mxu0 %v128
    %287 = vmatpush1.msra.mxu0 %v127
    %288 = vmatprep.subr.mxu0 %v132
    %289 = vmatpush1.msra.mxu0 %v131
    %290 = vmatprep.subr.mxu0 %v136
    %291 = vmatpush1.msra.mxu0 %v135
    %292 = vmatprep.subr.mxu0 %v140
    %293 = vmatpush1.msra.mxu0 %v139
    %294 = vmatprep.subr.mxu0 %v144
    %295 = vmatpush1.msra.mxu0 %v143
    %296 = vmatprep.subr.mxu0 %v148
    %297 = vmatpush1.msra.mxu0 %v147
    %298 = vmatprep.subr.mxu0 %v152
    %299 = vmatpush1.msra.mxu0 %v151
    %300 = vmatprep.subr.mxu0 %v156
    %301 = vmatpush1.msra.mxu0 %v155
    %302 = vmatprep.subr.mxu0 %v160
    %303 = vmatpush1.msra.mxu0 %v159
    %304 = vmatprep.subr.mxu0 %v164
    %305 = vmatpush1.msra.mxu0 %v163
    %306 = vmatprep.subr.mxu0 %v168
    %307 = vmatpush1.msra.mxu0 %v167
    %308 = vmatprep.subr.mxu0 %v172
    %309 = vmatpush1.msra.mxu0 %v171
    %310 = vmatprep.subr.mxu0 %v176
    %311 = vmatpush1.msra.mxu0 %v175
    %312 = vmatprep.subr.mxu0 %v180
    %313 = vmatpush1.msra.mxu0 %v179
    %314 = vmatprep.subr.mxu0 %v184
    %315 = vmatpush1.msra.mxu0 %v183
    %316 = vmatprep.subr.mxu0 0.0
    %317 = vmatpush1.msra.mxu0 0.0
    %318 = vmatprep.subr.mxu0 0.0
    %319 = vmatpush1.msra.mxu0 0.0
    %320 = vmatprep.subr.mxu0 0.0
    %321 = vmatpush1.msra.mxu0 0.0
    %322 = vmatprep.subr.mxu0 0.0
    %323 = vmatpush1.msra.mxu0 0.0
    %324 = vmatprep.subr.mxu0 0.0
    %325 = vmatpush1.msra.mxu0 0.0
    %326 = vmatprep.subr.mxu0 0.0
    %327 = vmatpush1.msra.mxu0 0.0
    %328 = vmatprep.subr.mxu0 0.0
    %329 = vmatpush1.msra.mxu0 0.0
    %330 = vmatprep.subr.mxu0 0.0
    %331 = vmatpush1.msra.mxu0 0.0
    %332 = vmatprep.subr.mxu0 0.0
    %333 = vmatpush1.msra.mxu0 0.0
    %334 = vmatprep.subr.mxu0 0.0
    %335 = vmatpush1.msra.mxu0 0.0
    %336 = vmatprep.subr.mxu0 0.0
    %337 = vmatpush1.msra.mxu0 0.0
    %338 = vmatprep.subr.mxu0 0.0
    %339 = vmatpush1.msra.mxu0 0.0
    %340 = vmatprep.subr.mxu0 0.0
    %341 = vmatpush1.msra.mxu0 0.0
    %342 = vmatprep.subr.mxu0 0.0
    %343 = vmatpush1.msra.mxu0 0.0
    %344 = vmatprep.subr.mxu0 0.0
    %345 = vmatpush1.msra.mxu0 0.0
    %346 = vmatprep.subr.mxu0 0.0
    %347 = vmatpush1.msra.mxu0 0.0
    %348 = vmatprep.mubr.f32.mxu0 0.0
    %349 = vmatmul.mubr.f32.gmra.mrb[0].mxu0 %v119
    %v350 = vpop.f32.mrb[0].mxu0
    %v351 = vadd.f32 %v198, %v350
    %v352 = vpop.f32.mrb[0].mxu0
    %v353 = vadd.f32 %v202, %v352
    %354 = vmatprep.mubr.f32.mxu0 0.0
    %355 = vmatmul.mubr.f32.gmra.mrb[0].mxu0 %v120
    %v356 = vpop.f32.mrb[0].mxu0
    %v357 = vadd.f32 %v198, %v356
    %v358 = vpop.f32.mrb[0].mxu0
    %v359 = vadd.f32 %v202, %v358
    %360 = vdwg.mxu0
    %v361 = vld [vmem:[#allocation6] sm:$0xff]
    %v362 = vld [vmem:[#allocation6 + $0x8] sm:$0xff]
    %v363 = vld [vmem:[#allocation6 + $0x10] sm:$0xff]
    %v364 = vld [vmem:[#allocation6 + $0x18] sm:$0xff]
    %v365 = vld [vmem:[#allocation6 + $0x20] sm:$0xff]
    %v366 = vld [vmem:[#allocation6 + $0x28] sm:$0xff]
    %v367 = vld [vmem:[#allocation6 + $0x30] sm:$0xff]
    %v368 = vld [vmem:[#allocation6 + $0x38] sm:$0xff]
    %v369 = vld [vmem:[#allocation6 + $0x40] sm:$0xff]
    %v370 = vld [vmem:[#allocation6 + $0x48] sm:$0xff]
    %v371 = vld [vmem:[#allocation6 + $0x50] sm:$0xff]
    %v372 = vld [vmem:[#allocation6 + $0x58] sm:$0xff]
    %v373 = vld [vmem:[#allocation6 + $0x60] sm:$0xff]
    %v374 = vld [vmem:[#allocation6 + $0x68] sm:$0xff]
    %v375 = vld [vmem:[#allocation6 + $0x70] sm:$0xff]
    %v376 = vld [vmem:[#allocation6 + $0x78] sm:$0xff]
    %v377 = vld [vmem:[#allocation6 + $0x80] sm:$0xff]
    %v378 = vld [vmem:[#allocation6 + $0x88] sm:$0xff]
    %v379 = vld [vmem:[#allocation6 + $0x90] sm:$0xff]
    %v380 = vld [vmem:[#allocation6 + $0x98] sm:$0xff]
    %v381 = vld [vmem:[#allocation6 + $0xa0] sm:$0xff]
    %v382 = vld [vmem:[#allocation6 + $0xa8] sm:$0xff]
    %v383 = vld [vmem:[#allocation6 + $0xb0] sm:$0xff]
    %v384 = vld [vmem:[#allocation6 + $0xb8] sm:$0xff]
    %v385 = vld [vmem:[#allocation6 + $0xc0] sm:$0xff]
    %v386 = vld [vmem:[#allocation6 + $0xc8] sm:$0xff]
    %v387 = vld [vmem:[#allocation6 + $0xd0] sm:$0xff]
    %v388 = vld [vmem:[#allocation6 + $0xd8] sm:$0xff]
    %v389 = vld [vmem:[#allocation6 + $0xe0] sm:$0xff]
    %v390 = vld [vmem:[#allocation6 + $0xe8] sm:$0xff]
    %v391 = vld [vmem:[#allocation6 + $0xf0] sm:$0xff]
    %v392 = vld [vmem:[#allocation6 + $0xf8] sm:$0xff]
    %v393 = vld [vmem:[#allocation6 + $0x100] sm:$0xff]
    %v394 = vld [vmem:[#allocation6 + $0x108] sm:$0xff]
    %v395 = vld [vmem:[#allocation6 + $0x110] sm:$0xff]
    %v396 = vld [vmem:[#allocation6 + $0x118] sm:$0xff]
    %v397 = vld [vmem:[#allocation6 + $0x120] sm:$0xff]
    %v398 = vld [vmem:[#allocation6 + $0x128] sm:$0xff]
    %v399 = vld [vmem:[#allocation6 + $0x130] sm:$0xff]
    %v400 = vld [vmem:[#allocation6 + $0x138] sm:$0xff]
    %v401 = vld [vmem:[#allocation6 + $0x140] sm:$0xff]
    %v402 = vld [vmem:[#allocation6 + $0x148] sm:$0xff]
    %v403 = vld [vmem:[#allocation6 + $0x150] sm:$0xff]
    %v404 = vld [vmem:[#allocation6 + $0x158] sm:$0xff]
    %v405 = vld [vmem:[#allocation6 + $0x160] sm:$0xff]
    %v406 = vld [vmem:[#allocation6 + $0x168] sm:$0xff]
    %v407 = vld [vmem:[#allocation6 + $0x170] sm:$0xff]
    %v408 = vld [vmem:[#allocation6 + $0x178] sm:$0xff]
    %v409 = vld [vmem:[#allocation6 + $0x180] sm:$0xff]
    %v410 = vld [vmem:[#allocation6 + $0x188] sm:$0xff]
    %v411 = vld [vmem:[#allocation6 + $0x190] sm:$0xff]
    %v412 = vld [vmem:[#allocation6 + $0x198] sm:$0xff]
    %v413 = vld [vmem:[#allocation6 + $0x1a0] sm:$0xff]
    %v414 = vld [vmem:[#allocation6 + $0x1a8] sm:$0xff]
    %v415 = vld [vmem:[#allocation6 + $0x1b0] sm:$0xff]
    %v416 = vld [vmem:[#allocation6 + $0x1b8] sm:$0xff]
    %v417 = vld [vmem:[#allocation6 + $0x1c0] sm:$0xff]
    %v418 = vld [vmem:[#allocation6 + $0x1c8] sm:$0xff]
    %v419 = vld [vmem:[#allocation6 + $0x1d0] sm:$0xff]
    %v420 = vld [vmem:[#allocation6 + $0x1d8] sm:$0xff]
    %v421 = vld [vmem:[#allocation6 + $0x1e0] sm:$0xff]
    %v422 = vld [vmem:[#allocation6 + $0x1e8] sm:$0xff]
    %v423 = vld [vmem:[#allocation6 + $0x1f0] sm:$0xff]
    %v424 = vld [vmem:[#allocation6 + $0x1f8] sm:$0xff]
    %425 = vmatprep.subr.mxu0 %v362
    %426 = vmatpush1.msra.mxu0 %v361
    %427 = vmatprep.subr.mxu0 %v366
    %428 = vmatpush1.msra.mxu0 %v365
    %429 = vmatprep.subr.mxu0 %v370
    %430 = vmatpush1.msra.mxu0 %v369
    %431 = vmatprep.subr.mxu0 %v374
    %432 = vmatpush1.msra.mxu0 %v373
    %433 = vmatprep.subr.mxu0 %v378
    %434 = vmatpush1.msra.mxu0 %v377
    %435 = vmatprep.subr.mxu0 %v382
    %436 = vmatpush1.msra.mxu0 %v381
    %437 = vmatprep.subr.mxu0 %v386
    %438 = vmatpush1.msra.mxu0 %v385
    %439 = vmatprep.subr.mxu0 %v390
    %440 = vmatpush1.msra.mxu0 %v389
    %441 = vmatprep.subr.mxu0 %v394
    %442 = vmatpush1.msra.mxu0 %v393
    %443 = vmatprep.subr.mxu0 %v398
    %444 = vmatpush1.msra.mxu0 %v397
    %445 = vmatprep.subr.mxu0 %v402
    %446 = vmatpush1.msra.mxu0 %v401
    %447 = vmatprep.subr.mxu0 %v406
    %448 = vmatpush1.msra.mxu0 %v405
    %449 = vmatprep.subr.mxu0 %v410
    %450 = vmatpush1.msra.mxu0 %v409
    %451 = vmatprep.subr.mxu0 %v414
    %452 = vmatpush1.msra.mxu0 %v413
    %453 = vmatprep.subr.mxu0 %v418
    %454 = vmatpush1.msra.mxu0 %v417
    %455 = vmatprep.subr.mxu0 %v422
    %456 = vmatpush1.msra.mxu0 %v421
    %457 = vmatprep.subr.mxu0 0.0
    %458 = vmatpush1.msra.mxu0 0.0
    %459 = vmatprep.subr.mxu0 0.0
    %460 = vmatpush1.msra.mxu0 0.0
    %461 = vmatprep.subr.mxu0 0.0
    %462 = vmatpush1.msra.mxu0 0.0
    %463 = vmatprep.subr.mxu0 0.0
    %464 = vmatpush1.msra.mxu0 0.0
    %465 = vmatprep.subr.mxu0 0.0
    %466 = vmatpush1.msra.mxu0 0.0
    %467 = vmatprep.subr.mxu0 0.0
    %468 = vmatpush1.msra.mxu0 0.0
    %469 = vmatprep.subr.mxu0 0.0
    %470 = vmatpush1.msra.mxu0 0.0
    %471 = vmatprep.subr.mxu0 0.0
    %472 = vmatpush1.msra.mxu0 0.0
    %473 = vmatprep.subr.mxu0 0.0
    %474 = vmatpush1.msra.mxu0 0.0
    %475 = vmatprep.subr.mxu0 0.0
    %476 = vmatpush1.msra.mxu0 0.0
    %477 = vmatprep.subr.mxu0 0.0
    %478 = vmatpush1.msra.mxu0 0.0
    %479 = vmatprep.subr.mxu0 0.0
    %480 = vmatpush1.msra.mxu0 0.0
    %481 = vmatprep.subr.mxu0 0.0
    %482 = vmatpush1.msra.mxu0 0.0
    %483 = vmatprep.subr.mxu0 0.0
    %484 = vmatpush1.msra.mxu0 0.0
    %485 = vmatprep.subr.mxu0 0.0
    %486 = vmatpush1.msra.mxu0 0.0
    %487 = vmatprep.subr.mxu0 0.0
    %488 = vmatpush1.msra.mxu0 0.0
    %489 = vmatprep.mubr.f32.mxu0 0.0
    %490 = vmatmul.mubr.f32.gmra.mrb[0].mxu0 0.0
    %v491 = vpop.f32.mrb[0].mxu0
    %v492 = vadd.f32 0.0, %v491
    %v493 = vpop.f32.mrb[0].mxu0
    %v494 = vadd.f32 0.0, %v493
    %495 = vdwg.mxu0
    %496 = vmatprep.subr.mxu0 %v364
    %497 = vmatpush1.msra.mxu0 %v363
    %498 = vmatprep.subr.mxu0 %v368
    %499 = vmatpush1.msra.mxu0 %v367
    %500 = vmatprep.subr.mxu0 %v372
    %501 = vmatpush1.msra.mxu0 %v371
    %502 = vmatprep.subr.mxu0 %v376
    %503 = vmatpush1.msra.mxu0 %v375
    %504 = vmatprep.subr.mxu0 %v380
    %505 = vmatpush1.msra.mxu0 %v379
    %506 = vmatprep.subr.mxu0 %v384
    %507 = vmatpush1.msra.mxu0 %v383
    %508 = vmatprep.subr.mxu0 %v388
    %509 = vmatpush1.msra.mxu0 %v387
    %510 = vmatprep.subr.mxu0 %v392
    %511 = vmatpush1.msra.mxu0 %v391
    %512 = vmatprep.subr.mxu0 %v396
    %513 = vmatpush1.msra.mxu0 %v395
    %514 = vmatprep.subr.mxu0 %v400
    %515 = vmatpush1.msra.mxu0 %v399
    %516 = vmatprep.subr.mxu0 %v404
    %517 = vmatpush1.msra.mxu0 %v403
    %518 = vmatprep.subr.mxu0 %v408
    %519 = vmatpush1.msra.mxu0 %v407
    %520 = vmatprep.subr.mxu0 %v412
    %521 = vmatpush1.msra.mxu0 %v411
    %522 = vmatprep.subr.mxu0 %v416
    %523 = vmatpush1.msra.mxu0 %v415
    %524 = vmatprep.subr.mxu0 %v420
    %525 = vmatpush1.msra.mxu0 %v419
    %526 = vmatprep.subr.mxu0 %v424
    %527 = vmatpush1.msra.mxu0 %v423
    %528 = vmatprep.subr.mxu0 0.0
    %529 = vmatpush1.msra.mxu0 0.0
    %530 = vmatprep.subr.mxu0 0.0
    %531 = vmatpush1.msra.mxu0 0.0
    %532 = vmatprep.subr.mxu0 0.0
    %533 = vmatpush1.msra.mxu0 0.0
    %534 = vmatprep.subr.mxu0 0.0
    %535 = vmatpush1.msra.mxu0 0.0
    %536 = vmatprep.subr.mxu0 0.0
    %537 = vmatpush1.msra.mxu0 0.0
    %538 = vmatprep.subr.mxu0 0.0
    %539 = vmatpush1.msra.mxu0 0.0
    %540 = vmatprep.subr.mxu0 0.0
    %541 = vmatpush1.msra.mxu0 0.0
    %542 = vmatprep.subr.mxu0 0.0
    %543 = vmatpush1.msra.mxu0 0.0
    %544 = vmatprep.subr.mxu0 0.0
    %545 = vmatpush1.msra.mxu0 0.0
    %546 = vmatprep.subr.mxu0 0.0
    %547 = vmatpush1.msra.mxu0 0.0
    %548 = vmatprep.subr.mxu0 0.0
    %549 = vmatpush1.msra.mxu0 0.0
    %550 = vmatprep.subr.mxu0 0.0
    %551 = vmatpush1.msra.mxu0 0.0
    %552 = vmatprep.subr.mxu0 0.0
    %553 = vmatpush1.msra.mxu0 0.0
    %554 = vmatprep.subr.mxu0 0.0
    %555 = vmatpush1.msra.mxu0 0.0
    %556 = vmatprep.subr.mxu0 0.0
    %557 = vmatpush1.msra.mxu0 0.0
    %558 = vmatprep.subr.mxu0 0.0
    %559 = vmatpush1.msra.mxu0 0.0
    %560 = vmatprep.mubr.f32.mxu0 0.0
    %561 = vmatmul.mubr.f32.gmra.mrb[0].mxu0 0.0
    %v562 = vpop.f32.mrb[0].mxu0
    %v563 = vadd.f32 0.0, %v562
    %v564 = vpop.f32.mrb[0].mxu0
    %v565 = vadd.f32 0.0, %v564
    %566 = vdwg.mxu0
    %v567 = vadd.f32 %v274, %v492
    %v568 = vadd.f32 %v276, %v494
    %v569 = vadd.f32 %v351, %v563
    %v570 = vadd.f32 %v353, %v565
    %v571 = vxor.u32 %v567, 2147483648
    %v572 = vxor.u32 %v568, 2147483648
    %v573 = vxor.u32 %v569, 2147483648
    %v574 = vmul.f32 %v571, 1.442695
    %v575 = vpow.pop %v574
    %v576 = vmul.f32 %v572, 1.442695
    %v577 = vpow.pop %v576
    %v578 = vmul.f32 %v573, 1.442695
    %v579 = vpow.pop %v578
    %v580 = vadd.f32 %v575, 1.0
    %v581 = vadd.f32 %v577, 1.0
    %v582 = vadd.f32 %v579, 1.0
    %v583 = vrcp.pop %v580
    %v584 = vmul.f32 1.0, %v583
    %v585 = vrcp.pop %v581
    %v586 = vmul.f32 1.0, %v585
    %v587 = vrcp.pop %v582
    %v588 = vmul.f32 1.0, %v587
    %v589 = vtanh.pop %v570
    %v590 = vmul.f32 %v586, 0.0
    %v591 = vmul.f32 %v584, %v589
    %v592 = vadd.f32 %v590, %v591
    %v593 = vtanh.pop %v592
    %v594 = vmul.f32 %v588, %v593
    %v595 = vtanh.pop %v594
    %596 = vst [vmem:[#allocation2] sm:$0x3] %v595
    %v597 = vld [vmem:[#allocation6] sm:$0xff]
    %v598 = vld [vmem:[#allocation6 + $0x8] sm:$0xff]
    %v599 = vld [vmem:[#allocation6 + $0x10] sm:$0xff]
    %v600 = vld [vmem:[#allocation6 + $0x18] sm:$0xff]
    %v601 = vld [vmem:[#allocation6 + $0x20] sm:$0xff]
    %v602 = vld [vmem:[#allocation6 + $0x28] sm:$0xff]
    %v603 = vld [vmem:[#allocation6 + $0x30] sm:$0xff]
    %v604 = vld [vmem:[#allocation6 + $0x38] sm:$0xff]
    %v605 = vld [vmem:[#allocation6 + $0x40] sm:$0xff]
    %v606 = vld [vmem:[#allocation6 + $0x48] sm:$0xff]
    %v607 = vld [vmem:[#allocation6 + $0x50] sm:$0xff]
    %v608 = vld [vmem:[#allocation6 + $0x58] sm:$0xff]
    %v609 = vld [vmem:[#allocation6 + $0x60] sm:$0xff]
    %v610 = vld [vmem:[#allocation6 + $0x68] sm:$0xff]
    %v611 = vld [vmem:[#allocation6 + $0x70] sm:$0xff]
    %v612 = vld [vmem:[#allocation6 + $0x78] sm:$0xff]
    %v613 = vld [vmem:[#allocation6 + $0x80] sm:$0xff]
    %v614 = vld [vmem:[#allocation6 + $0x88] sm:$0xff]
    %v615 = vld [vmem:[#allocation6 + $0x90] sm:$0xff]
    %v616 = vld [vmem:[#allocation6 + $0x98] sm:$0xff]
    %v617 = vld [vmem:[#allocation6 + $0xa0] sm:$0xff]
    %v618 = vld [vmem:[#allocation6 + $0xa8] sm:$0xff]
    %v619 = vld [vmem:[#allocation6 + $0xb0] sm:$0xff]
    %v620 = vld [vmem:[#allocation6 + $0xb8] sm:$0xff]
    %v621 = vld [vmem:[#allocation6 + $0xc0] sm:$0xff]
    %v622 = vld [vmem:[#allocation6 + $0xc8] sm:$0xff]
    %v623 = vld [vmem:[#allocation6 + $0xd0] sm:$0xff]
    %v624 = vld [vmem:[#allocation6 + $0xd8] sm:$0xff]
    %v625 = vld [vmem:[#allocation6 + $0xe0] sm:$0xff]
    %v626 = vld [vmem:[#allocation6 + $0xe8] sm:$0xff]
    %v627 = vld [vmem:[#allocation6 + $0xf0] sm:$0xff]
    %v628 = vld [vmem:[#allocation6 + $0xf8] sm:$0xff]
    %v629 = vld [vmem:[#allocation6 + $0x100] sm:$0xff]
    %v630 = vld [vmem:[#allocation6 + $0x108] sm:$0xff]
    %v631 = vld [vmem:[#allocation6 + $0x110] sm:$0xff]
    %v632 = vld [vmem:[#allocation6 + $0x118] sm:$0xff]
    %v633 = vld [vmem:[#allocation6 + $0x120] sm:$0xff]
    %v634 = vld [vmem:[#allocation6 + $0x128] sm:$0xff]
    %v635 = vld [vmem:[#allocation6 + $0x130] sm:$0xff]
    %v636 = vld [vmem:[#allocation6 + $0x138] sm:$0xff]
    %v637 = vld [vmem:[#allocation6 + $0x140] sm:$0xff]
    %v638 = vld [vmem:[#allocation6 + $0x148] sm:$0xff]
    %v639 = vld [vmem:[#allocation6 + $0x150] sm:$0xff]
    %v640 = vld [vmem:[#allocation6 + $0x158] sm:$0xff]
    %v641 = vld [vmem:[#allocation6 + $0x160] sm:$0xff]
    %v642 = vld [vmem:[#allocation6 + $0x168] sm:$0xff]
    %v643 = vld [vmem:[#allocation6 + $0x170] sm:$0xff]
    %v644 = vld [vmem:[#allocation6 + $0x178] sm:$0xff]
    %v645 = vld [vmem:[#allocation6 + $0x180] sm:$0xff]
    %v646 = vld [vmem:[#allocation6 + $0x188] sm:$0xff]
    %v647 = vld [vmem:[#allocation6 + $0x190] sm:$0xff]
    %v648 = vld [vmem:[#allocation6 + $0x198] sm:$0xff]
    %v649 = vld [vmem:[#allocation6 + $0x1a0] sm:$0xff]
    %v650 = vld [vmem:[#allocation6 + $0x1a8] sm:$0xff]
    %v651 = vld [vmem:[#allocation6 + $0x1b0] sm:$0xff]
    %v652 = vld [vmem:[#allocation6 + $0x1b8] sm:$0xff]
    %v653 = vld [vmem:[#allocation6 + $0x1c0] sm:$0xff]
    %v654 = vld [vmem:[#allocation6 + $0x1c8] sm:$0xff]
    %v655 = vld [vmem:[#allocation6 + $0x1d0] sm:$0xff]
    %v656 = vld [vmem:[#allocation6 + $0x1d8] sm:$0xff]
    %v657 = vld [vmem:[#allocation6 + $0x1e0] sm:$0xff]
    %v658 = vld [vmem:[#allocation6 + $0x1e8] sm:$0xff]
    %v659 = vld [vmem:[#allocation6 + $0x1f0] sm:$0xff]
    %v660 = vld [vmem:[#allocation6 + $0x1f8] sm:$0xff]
    %661 = vmatprep.subr.mxu0 %v598
    %662 = vmatpush1.msra.mxu0 %v597
    %663 = vmatprep.subr.mxu0 %v602
    %664 = vmatpush1.msra.mxu0 %v601
    %665 = vmatprep.subr.mxu0 %v606
    %666 = vmatpush1.msra.mxu0 %v605
    %667 = vmatprep.subr.mxu0 %v610
    %668 = vmatpush1.msra.mxu0 %v609
    %669 = vmatprep.subr.mxu0 %v614
    %670 = vmatpush1.msra.mxu0 %v613
    %671 = vmatprep.subr.mxu0 %v618
    %672 = vmatpush1.msra.mxu0 %v617
    %673 = vmatprep.subr.mxu0 %v622
    %674 = vmatpush1.msra.mxu0 %v621
    %675 = vmatprep.subr.mxu0 %v626
    %676 = vmatpush1.msra.mxu0 %v625
    %677 = vmatprep.subr.mxu0 %v630
    %678 = vmatpush1.msra.mxu0 %v629
    %679 = vmatprep.subr.mxu0 %v634
    %680 = vmatpush1.msra.mxu0 %v633
    %681 = vmatprep.subr.mxu0 %v638
    %682 = vmatpush1.msra.mxu0 %v637
    %683 = vmatprep.subr.mxu0 %v642
    %684 = vmatpush1.msra.mxu0 %v641
    %685 = vmatprep.subr.mxu0 %v646
    %686 = vmatpush1.msra.mxu0 %v645
    %687 = vmatprep.subr.mxu0 %v650
    %688 = vmatpush1.msra.mxu0 %v649
    %689 = vmatprep.subr.mxu0 %v654
    %690 = vmatpush1.msra.mxu0 %v653
    %691 = vmatprep.subr.mxu0 %v658
    %692 = vmatpush1.msra.mxu0 %v657
    %693 = vmatprep.subr.mxu0 0.0
    %694 = vmatpush1.msra.mxu0 0.0
    %695 = vmatprep.subr.mxu0 0.0
    %696 = vmatpush1.msra.mxu0 0.0
    %697 = vmatprep.subr.mxu0 0.0
    %698 = vmatpush1.msra.mxu0 0.0
    %699 = vmatprep.subr.mxu0 0.0
    %700 = vmatpush1.msra.mxu0 0.0
    %701 = vmatprep.subr.mxu0 0.0
    %702 = vmatpush1.msra.mxu0 0.0
    %703 = vmatprep.subr.mxu0 0.0
    %704 = vmatpush1.msra.mxu0 0.0
    %705 = vmatprep.subr.mxu0 0.0
    %706 = vmatpush1.msra.mxu0 0.0
    %707 = vmatprep.subr.mxu0 0.0
    %708 = vmatpush1.msra.mxu0 0.0
    %709 = vmatprep.subr.mxu0 0.0
    %710 = vmatpush1.msra.mxu0 0.0
    %711 = vmatprep.subr.mxu0 0.0
    %712 = vmatpush1.msra.mxu0 0.0
    %713 = vmatprep.subr.mxu0 0.0
    %714 = vmatpush1.msra.mxu0 0.0
    %715 = vmatprep.subr.mxu0 0.0
    %716 = vmatpush1.msra.mxu0 0.0
    %717 = vmatprep.subr.mxu0 0.0
    %718 = vmatpush1.msra.mxu0 0.0
    %719 = vmatprep.subr.mxu0 0.0
    %720 = vmatpush1.msra.mxu0 0.0
    %721 = vmatprep.subr.mxu0 0.0
    %722 = vmatpush1.msra.mxu0 0.0
    %723 = vmatprep.subr.mxu0 0.0
    %724 = vmatpush1.msra.mxu0 0.0
    %725 = vmatprep.mubr.f32.mxu0 0.0
    %726 = vmatmul.mubr.f32.gmra.mrb[0].mxu0 %v594
    %v727 = vpop.f32.mrb[0].mxu0
    %v728 = vadd.f32 0.0, %v727
    %v729 = vpop.f32.mrb[0].mxu0
    %v730 = vadd.f32 0.0, %v729
    %731 = vdwg.mxu0
    %732 = vmatprep.subr.mxu0 %v600
    %733 = vmatpush1.msra.mxu0 %v599
    %734 = vmatprep.subr.mxu0 %v604
    %735 = vmatpush1.msra.mxu0 %v603
    %736 = vmatprep.subr.mxu0 %v608
    %737 = vmatpush1.msra.mxu0 %v607
    %738 = vmatprep.subr.mxu0 %v612
    %739 = vmatpush1.msra.mxu0 %v611
    %740 = vmatprep.subr.mxu0 %v616
    %741 = vmatpush1.msra.mxu0 %v615
    %742 = vmatprep.subr.mxu0 %v620
    %743 = vmatpush1.msra.mxu0 %v619
    %744 = vmatprep.subr.mxu0 %v624
    %745 = vmatpush1.msra.mxu0 %v623
    %746 = vmatprep.subr.mxu0 %v628
    %747 = vmatpush1.msra.mxu0 %v627
    %748 = vmatprep.subr.mxu0 %v632
    %749 = vmatpush1.msra.mxu0 %v631
    %750 = vmatprep.subr.mxu0 %v636
    %751 = vmatpush1.msra.mxu0 %v635
    %752 = vmatprep.subr.mxu0 %v640
    %753 = vmatpush1.msra.mxu0 %v639
    %754 = vmatprep.subr.mxu0 %v644
    %755 = vmatpush1.msra.mxu0 %v643
    %756 = vmatprep.subr.mxu0 %v648
    %757 = vmatpush1.msra.mxu0 %v647
    %758 = vmatprep.subr.mxu0 %v652
    %759 = vmatpush1.msra.mxu0 %v651
    %760 = vmatprep.subr.mxu0 %v656
    %761 = vmatpush1.msra.mxu0 %v655
    %762 = vmatprep.subr.mxu0 %v660
    %763 = vmatpush1.msra.mxu0 %v659
    %764 = vmatprep.subr.mxu0 0.0
    %765 = vmatpush1.msra.mxu0 0.0
    %766 = vmatprep.subr.mxu0 0.0
    %767 = vmatpush1.msra.mxu0 0.0
    %768 = vmatprep.subr.mxu0 0.0
    %769 = vmatpush1.msra.mxu0 0.0
    %770 = vmatprep.subr.mxu0 0.0
    %771 = vmatpush1.msra.mxu0 0.0
    %772 = vmatprep.subr.mxu0 0.0
    %773 = vmatpush1.msra.mxu0 0.0
    %774 = vmatprep.subr.mxu0 0.0
    %775 = vmatpush1.msra.mxu0 0.0
    %776 = vmatprep.subr.mxu0 0.0
    %777 = vmatpush1.msra.mxu0 0.0
    %778 = vmatprep.subr.mxu0 0.0
    %779 = vmatpush1.msra.mxu0 0.0
    %780 = vmatprep.subr.mxu0 0.0
    %781 = vmatpush1.msra.mxu0 0.0
    %782 = vmatprep.subr.mxu0 0.0
    %783 = vmatpush1.msra.mxu0 0.0
    %784 = vmatprep.subr.mxu0 0.0
    %785 = vmatpush1.msra.mxu0 0.0
    %786 = vmatprep.subr.mxu0 0.0
    %787 = vmatpush1.msra.mxu0 0.0
    %788 = vmatprep.subr.mxu0 0.0
    %789 = vmatpush1.msra.mxu0 0.0
    %790 = vmatprep.subr.mxu0 0.0
    %791 = vmatpush1.msra.mxu0 0.0
    %792 = vmatprep.subr.mxu0 0.0
    %793 = vmatpush1.msra.mxu0 0.0
    %794 = vmatprep.subr.mxu0 0.0
    %795 = vmatpush1.msra.mxu0 0.0
    %796 = vmatprep.mubr.f32.mxu0 0.0
    %797 = vmatmul.mubr.f32.gmra.mrb[0].mxu0 %v594
    %v798 = vpop.f32.mrb[0].mxu0
    %v799 = vadd.f32 0.0, %v798
    %v800 = vpop.f32.mrb[0].mxu0
    %v801 = vadd.f32 0.0, %v800
    %802 = vdwg.mxu0
    %v807 = vrot.slane %v728, 6
    %v808 = vrot.slane %v730, 6
    %v809 = vrot.slane %v799, 6
    %v810 = vrot.slane %v801, 6
    %v815 = vadd.f32 %v274, %v807
    %v816 = vadd.f32 %v276, %v808
    %v817 = vadd.f32 %v351, %v809
    %v818 = vadd.f32 %v353, %v810
    %v819 = vxor.u32 %v815, 2147483648
    %v820 = vxor.u32 %v816, 2147483648
    %v821 = vxor.u32 %v817, 2147483648
    %v822 = vmul.f32 %v819, 1.442695
    %v823 = vpow.pop %v822
    %v824 = vmul.f32 %v820, 1.442695
    %v825 = vpow.pop %v824
    %v826 = vmul.f32 %v821, 1.442695
    %v827 = vpow.pop %v826
    %v828 = vadd.f32 %v823, 1.0
    %v829 = vadd.f32 %v825, 1.0
    %v830 = vadd.f32 %v827, 1.0
    %v831 = vrcp.pop %v828
    %v832 = vmul.f32 1.0, %v831
    %v833 = vrcp.pop %v829
    %v834 = vmul.f32 1.0, %v833
    %v835 = vrcp.pop %v830
    %v836 = vmul.f32 1.0, %v835
    %v837 = vtanh.pop %v818
    %v839 = vrot.slane %v592, 6
    %v841 = vmul.f32 %v834, %v839
    %v842 = vmul.f32 %v832, %v837
    %v843 = vadd.f32 %v841, %v842
    %v844 = vtanh.pop %v843
    %v845 = vmul.f32 %v836, %v844
    %v846 = vtanh.pop %v845
    %847 = vst [vmem:[#allocation2] sm:$0xc] %v846
    %v848 = vld [vmem:[#allocation6] sm:$0xff]
    %v849 = vld [vmem:[#allocation6 + $0x8] sm:$0xff]
    %v850 = vld [vmem:[#allocation6 + $0x10] sm:$0xff]
    %v851 = vld [vmem:[#allocation6 + $0x18] sm:$0xff]
    %v852 = vld [vmem:[#allocation6 + $0x20] sm:$0xff]
    %v853 = vld [vmem:[#allocation6 + $0x28] sm:$0xff]
    %v854 = vld [vmem:[#allocation6 + $0x30] sm:$0xff]
    %v855 = vld [vmem:[#allocation6 + $0x38] sm:$0xff]
    %v856 = vld [vmem:[#allocation6 + $0x40] sm:$0xff]
    %v857 = vld [vmem:[#allocation6 + $0x48] sm:$0xff]
    %v858 = vld [vmem:[#allocation6 + $0x50] sm:$0xff]
    %v859 = vld [vmem:[#allocation6 + $0x58] sm:$0xff]
    %v860 = vld [vmem:[#allocation6 + $0x60] sm:$0xff]
    %v861 = vld [vmem:[#allocation6 + $0x68] sm:$0xff]
    %v862 = vld [vmem:[#allocation6 + $0x70] sm:$0xff]
    %v863 = vld [vmem:[#allocation6 + $0x78] sm:$0xff]
    %v864 = vld [vmem:[#allocation6 + $0x80] sm:$0xff]
    %v865 = vld [vmem:[#allocation6 + $0x88] sm:$0xff]
    %v866 = vld [vmem:[#allocation6 + $0x90] sm:$0xff]
    %v867 = vld [vmem:[#allocation6 + $0x98] sm:$0xff]
    %v868 = vld [vmem:[#allocation6 + $0xa0] sm:$0xff]
    %v869 = vld [vmem:[#allocation6 + $0xa8] sm:$0xff]
    %v870 = vld [vmem:[#allocation6 + $0xb0] sm:$0xff]
    %v871 = vld [vmem:[#allocation6 + $0xb8] sm:$0xff]
    %v872 = vld [vmem:[#allocation6 + $0xc0] sm:$0xff]
    %v873 = vld [vmem:[#allocation6 + $0xc8] sm:$0xff]
    %v874 = vld [vmem:[#allocation6 + $0xd0] sm:$0xff]
    %v875 = vld [vmem:[#allocation6 + $0xd8] sm:$0xff]
    %v876 = vld [vmem:[#allocation6 + $0xe0] sm:$0xff]
    %v877 = vld [vmem:[#allocation6 + $0xe8] sm:$0xff]
    %v878 = vld [vmem:[#allocation6 + $0xf0] sm:$0xff]
    %v879 = vld [vmem:[#allocation6 + $0xf8] sm:$0xff]
    %v880 = vld [vmem:[#allocation6 + $0x100] sm:$0xff]
    %v881 = vld [vmem:[#allocation6 + $0x108] sm:$0xff]
    %v882 = vld [vmem:[#allocation6 + $0x110] sm:$0xff]
    %v883 = vld [vmem:[#allocation6 + $0x118] sm:$0xff]
    %v884 = vld [vmem:[#allocation6 + $0x120] sm:$0xff]
    %v885 = vld [vmem:[#allocation6 + $0x128] sm:$0xff]
    %v886 = vld [vmem:[#allocation6 + $0x130] sm:$0xff]
    %v887 = vld [vmem:[#allocation6 + $0x138] sm:$0xff]
    %v888 = vld [vmem:[#allocation6 + $0x140] sm:$0xff]
    %v889 = vld [vmem:[#allocation6 + $0x148] sm:$0xff]
    %v890 = vld [vmem:[#allocation6 + $0x150] sm:$0xff]
    %v891 = vld [vmem:[#allocation6 + $0x158] sm:$0xff]
    %v892 = vld [vmem:[#allocation6 + $0x160] sm:$0xff]
    %v893 = vld [vmem:[#allocation6 + $0x168] sm:$0xff]
    %v894 = vld [vmem:[#allocation6 + $0x170] sm:$0xff]
    %v895 = vld [vmem:[#allocation6 + $0x178] sm:$0xff]
    %v896 = vld [vmem:[#allocation6 + $0x180] sm:$0xff]
    %v897 = vld [vmem:[#allocation6 + $0x188] sm:$0xff]
    %v898 = vld [vmem:[#allocation6 + $0x190] sm:$0xff]
    %v899 = vld [vmem:[#allocation6 + $0x198] sm:$0xff]
    %v900 = vld [vmem:[#allocation6 + $0x1a0] sm:$0xff]
    %v901 = vld [vmem:[#allocation6 + $0x1a8] sm:$0xff]
    %v902 = vld [vmem:[#allocation6 + $0x1b0] sm:$0xff]
    %v903 = vld [vmem:[#allocation6 + $0x1b8] sm:$0xff]
    %v904 = vld [vmem:[#allocation6 + $0x1c0] sm:$0xff]
    %v905 = vld [vmem:[#allocation6 + $0x1c8] sm:$0xff]
    %v906 = vld [vmem:[#allocation6 + $0x1d0] sm:$0xff]
    %v907 = vld [vmem:[#allocation6 + $0x1d8] sm:$0xff]
    %v908 = vld [vmem:[#allocation6 + $0x1e0] sm:$0xff]
    %v909 = vld [vmem:[#allocation6 + $0x1e8] sm:$0xff]
    %v910 = vld [vmem:[#allocation6 + $0x1f0] sm:$0xff]
    %v911 = vld [vmem:[#allocation6 + $0x1f8] sm:$0xff]
    %v913 = vrot.slane %v845, 2
    %915 = vmatprep.subr.mxu0 %v849
    %916 = vmatpush1.msra.mxu0 %v848
    %917 = vmatprep.subr.mxu0 %v853
    %918 = vmatpush1.msra.mxu0 %v852
    %919 = vmatprep.subr.mxu0 %v857
    %920 = vmatpush1.msra.mxu0 %v856
    %921 = vmatprep.subr.mxu0 %v861
    %922 = vmatpush1.msra.mxu0 %v860
    %923 = vmatprep.subr.mxu0 %v865
    %924 = vmatpush1.msra.mxu0 %v864
    %925 = vmatprep.subr.mxu0 %v869
    %926 = vmatpush1.msra.mxu0 %v868
    %927 = vmatprep.subr.mxu0 %v873
    %928 = vmatpush1.msra.mxu0 %v872
    %929 = vmatprep.subr.mxu0 %v877
    %930 = vmatpush1.msra.mxu0 %v876
    %931 = vmatprep.subr.mxu0 %v881
    %932 = vmatpush1.msra.mxu0 %v880
    %933 = vmatprep.subr.mxu0 %v885
    %934 = vmatpush1.msra.mxu0 %v884
    %935 = vmatprep.subr.mxu0 %v889
    %936 = vmatpush1.msra.mxu0 %v888
    %937 = vmatprep.subr.mxu0 %v893
    %938 = vmatpush1.msra.mxu0 %v892
    %939 = vmatprep.subr.mxu0 %v897
    %940 = vmatpush1.msra.mxu0 %v896
    %941 = vmatprep.subr.mxu0 %v901
    %942 = vmatpush1.msra.mxu0 %v900
    %943 = vmatprep.subr.mxu0 %v905
    %944 = vmatpush1.msra.mxu0 %v904
    %945 = vmatprep.subr.mxu0 %v909
    %946 = vmatpush1.msra.mxu0 %v908
    %947 = vmatprep.subr.mxu0 0.0
    %948 = vmatpush1.msra.mxu0 0.0
    %949 = vmatprep.subr.mxu0 0.0
    %950 = vmatpush1.msra.mxu0 0.0
    %951 = vmatprep.subr.mxu0 0.0
    %952 = vmatpush1.msra.mxu0 0.0
    %953 = vmatprep.subr.mxu0 0.0
    %954 = vmatpush1.msra.mxu0 0.0
    %955 = vmatprep.subr.mxu0 0.0
    %956 = vmatpush1.msra.mxu0 0.0
    %957 = vmatprep.subr.mxu0 0.0
    %958 = vmatpush1.msra.mxu0 0.0
    %959 = vmatprep.subr.mxu0 0.0
    %960 = vmatpush1.msra.mxu0 0.0
    %961 = vmatprep.subr.mxu0 0.0
    %962 = vmatpush1.msra.mxu0 0.0
    %963 = vmatprep.subr.mxu0 0.0
    %964 = vmatpush1.msra.mxu0 0.0
    %965 = vmatprep.subr.mxu0 0.0
    %966 = vmatpush1.msra.mxu0 0.0
    %967 = vmatprep.subr.mxu0 0.0
    %968 = vmatpush1.msra.mxu0 0.0
    %969 = vmatprep.subr.mxu0 0.0
    %970 = vmatpush1.msra.mxu0 0.0
    %971 = vmatprep.subr.mxu0 0.0
    %972 = vmatpush1.msra.mxu0 0.0
    %973 = vmatprep.subr.mxu0 0.0
    %974 = vmatpush1.msra.mxu0 0.0
    %975 = vmatprep.subr.mxu0 0.0
    %976 = vmatpush1.msra.mxu0 0.0
    %977 = vmatprep.subr.mxu0 0.0
    %978 = vmatpush1.msra.mxu0 0.0
    %979 = vmatprep.mubr.f32.mxu0 0.0
    %980 = vmatmul.mubr.f32.gmra.mrb[0].mxu0 %v913
    %v981 = vpop.f32.mrb[0].mxu0
    %v982 = vadd.f32 0.0, %v981
    %v983 = vpop.f32.mrb[0].mxu0
    %v984 = vadd.f32 0.0, %v983
    %985 = vdwg.mxu0
    %986 = vmatprep.subr.mxu0 %v851
    %987 = vmatpush1.msra.mxu0 %v850
    %988 = vmatprep.subr.mxu0 %v855
    %989 = vmatpush1.msra.mxu0 %v854
    %990 = vmatprep.subr.mxu0 %v859
    %991 = vmatpush1.msra.mxu0 %v858
    %992 = vmatprep.subr.mxu0 %v863
    %993 = vmatpush1.msra.mxu0 %v862
    %994 = vmatprep.subr.mxu0 %v867
    %995 = vmatpush1.msra.mxu0 %v866
    %996 = vmatprep.subr.mxu0 %v871
    %997 = vmatpush1.msra.mxu0 %v870
    %998 = vmatprep.subr.mxu0 %v875
    %999 = vmatpush1.msra.mxu0 %v874
    %1000 = vmatprep.subr.mxu0 %v879
    %1001 = vmatpush1.msra.mxu0 %v878
    %1002 = vmatprep.subr.mxu0 %v883
    %1003 = vmatpush1.msra.mxu0 %v882
    %1004 = vmatprep.subr.mxu0 %v887
    %1005 = vmatpush1.msra.mxu0 %v886
    %1006 = vmatprep.subr.mxu0 %v891
    %1007 = vmatpush1.msra.mxu0 %v890
    %1008 = vmatprep.subr.mxu0 %v895
    %1009 = vmatpush1.msra.mxu0 %v894
    %1010 = vmatprep.subr.mxu0 %v899
    %1011 = vmatpush1.msra.mxu0 %v898
    %1012 = vmatprep.subr.mxu0 %v903
    %1013 = vmatpush1.msra.mxu0 %v902
    %1014 = vmatprep.subr.mxu0 %v907
    %1015 = vmatpush1.msra.mxu0 %v906
    %1016 = vmatprep.subr.mxu0 %v911
    %1017 = vmatpush1.msra.mxu0 %v910
    %1018 = vmatprep.subr.mxu0 0.0
    %1019 = vmatpush1.msra.mxu0 0.0
    %1020 = vmatprep.subr.mxu0 0.0
    %1021 = vmatpush1.msra.mxu0 0.0
    %1022 = vmatprep.subr.mxu0 0.0
    %1023 = vmatpush1.msra.mxu0 0.0
    %1024 = vmatprep.subr.mxu0 0.0
    %1025 = vmatpush1.msra.mxu0 0.0
    %1026 = vmatprep.subr.mxu0 0.0
    %1027 = vmatpush1.msra.mxu0 0.0
    %1028 = vmatprep.subr.mxu0 0.0
    %1029 = vmatpush1.msra.mxu0 0.0
    %1030 = vmatprep.subr.mxu0 0.0
    %1031 = vmatpush1.msra.mxu0 0.0
    %1032 = vmatprep.subr.mxu0 0.0
    %1033 = vmatpush1.msra.mxu0 0.0
    %1034 = vmatprep.subr.mxu0 0.0
    %1035 = vmatpush1.msra.mxu0 0.0
    %1036 = vmatprep.subr.mxu0 0.0
    %1037 = vmatpush1.msra.mxu0 0.0
    %1038 = vmatprep.subr.mxu0 0.0
    %1039 = vmatpush1.msra.mxu0 0.0
    %1040 = vmatprep.subr.mxu0 0.0
    %1041 = vmatpush1.msra.mxu0 0.0
    %1042 = vmatprep.subr.mxu0 0.0
    %1043 = vmatpush1.msra.mxu0 0.0
    %1044 = vmatprep.subr.mxu0 0.0
    %1045 = vmatpush1.msra.mxu0 0.0
    %1046 = vmatprep.subr.mxu0 0.0
    %1047 = vmatpush1.msra.mxu0 0.0
    %1048 = vmatprep.subr.mxu0 0.0
    %1049 = vmatpush1.msra.mxu0 0.0
    %1050 = vmatprep.mubr.f32.mxu0 0.0
    %1051 = vmatmul.mubr.f32.gmra.mrb[0].mxu0 %v913
    %v1052 = vpop.f32.mrb[0].mxu0
    %v1053 = vadd.f32 0.0, %v1052
    %v1054 = vpop.f32.mrb[0].mxu0
    %v1055 = vadd.f32 0.0, %v1054
    %1056 = vdwg.mxu0
    %v1061 = vrot.slane %v982, 4
    %v1062 = vrot.slane %v984, 4
    %v1063 = vrot.slane %v1053, 4
    %v1064 = vrot.slane %v1055, 4
    %v1069 = vadd.f32 %v274, %v1061
    %v1070 = vadd.f32 %v276, %v1062
    %v1071 = vadd.f32 %v351, %v1063
    %v1072 = vadd.f32 %v353, %v1064
    %v1073 = vxor.u32 %v1069, 2147483648
    %v1074 = vxor.u32 %v1070, 2147483648
    %v1075 = vxor.u32 %v1071, 2147483648
    %v1076 = vmul.f32 %v1073, 1.442695
    %v1077 = vpow.pop %v1076
    %v1078 = vmul.f32 %v1074, 1.442695
    %v1079 = vpow.pop %v1078
    %v1080 = vmul.f32 %v1075, 1.442695
    %v1081 = vpow.pop %v1080
    %v1082 = vadd.f32 %v1077, 1.0
    %v1083 = vadd.f32 %v1079, 1.0
    %v1084 = vadd.f32 %v1081, 1.0
    %v1085 = vrcp.pop %v1082
    %v1086 = vmul.f32 1.0, %v1085
    %v1087 = vrcp.pop %v1083
    %v1088 = vmul.f32 1.0, %v1087
    %v1089 = vrcp.pop %v1084
    %v1090 = vmul.f32 1.0, %v1089
    %v1091 = vtanh.pop %v1072
    %v1093 = vrot.slane %v843, 6
    %v1095 = vmul.f32 %v1088, %v1093
    %v1096 = vmul.f32 %v1086, %v1091
    %v1097 = vadd.f32 %v1095, %v1096
    %v1098 = vtanh.pop %v1097
    %v1099 = vmul.f32 %v1090, %v1098
    %v1100 = vtanh.pop %v1099
    %1101 = vst [vmem:[#allocation2] sm:$0x30] %v1100
    %v1102 = vld [vmem:[#allocation6] sm:$0xff]
    %v1103 = vld [vmem:[#allocation6 + $0x8] sm:$0xff]
    %v1104 = vld [vmem:[#allocation6 + $0x10] sm:$0xff]
    %v1105 = vld [vmem:[#allocation6 + $0x18] sm:$0xff]
    %v1106 = vld [vmem:[#allocation6 + $0x20] sm:$0xff]
    %v1107 = vld [vmem:[#allocation6 + $0x28] sm:$0xff]
    %v1108 = vld [vmem:[#allocation6 + $0x30] sm:$0xff]
    %v1109 = vld [vmem:[#allocation6 + $0x38] sm:$0xff]
    %v1110 = vld [vmem:[#allocation6 + $0x40] sm:$0xff]
    %v1111 = vld [vmem:[#allocation6 + $0x48] sm:$0xff]
    %v1112 = vld [vmem:[#allocation6 + $0x50] sm:$0xff]
    %v1113 = vld [vmem:[#allocation6 + $0x58] sm:$0xff]
    %v1114 = vld [vmem:[#allocation6 + $0x60] sm:$0xff]
    %v1115 = vld [vmem:[#allocation6 + $0x68] sm:$0xff]
    %v1116 = vld [vmem:[#allocation6 + $0x70] sm:$0xff]
    %v1117 = vld [vmem:[#allocation6 + $0x78] sm:$0xff]
    %v1118 = vld [vmem:[#allocation6 + $0x80] sm:$0xff]
    %v1119 = vld [vmem:[#allocation6 + $0x88] sm:$0xff]
    %v1120 = vld [vmem:[#allocation6 + $0x90] sm:$0xff]
    %v1121 = vld [vmem:[#allocation6 + $0x98] sm:$0xff]
    %v1122 = vld [vmem:[#allocation6 + $0xa0] sm:$0xff]
    %v1123 = vld [vmem:[#allocation6 + $0xa8] sm:$0xff]
    %v1124 = vld [vmem:[#allocation6 + $0xb0] sm:$0xff]
    %v1125 = vld [vmem:[#allocation6 + $0xb8] sm:$0xff]
    %v1126 = vld [vmem:[#allocation6 + $0xc0] sm:$0xff]
    %v1127 = vld [vmem:[#allocation6 + $0xc8] sm:$0xff]
    %v1128 = vld [vmem:[#allocation6 + $0xd0] sm:$0xff]
    %v1129 = vld [vmem:[#allocation6 + $0xd8] sm:$0xff]
    %v1130 = vld [vmem:[#allocation6 + $0xe0] sm:$0xff]
    %v1131 = vld [vmem:[#allocation6 + $0xe8] sm:$0xff]
    %v1132 = vld [vmem:[#allocation6 + $0xf0] sm:$0xff]
    %v1133 = vld [vmem:[#allocation6 + $0xf8] sm:$0xff]
    %v1134 = vld [vmem:[#allocation6 + $0x100] sm:$0xff]
    %v1135 = vld [vmem:[#allocation6 + $0x108] sm:$0xff]
    %v1136 = vld [vmem:[#allocation6 + $0x110] sm:$0xff]
    %v1137 = vld [vmem:[#allocation6 + $0x118] sm:$0xff]
    %v1138 = vld [vmem:[#allocation6 + $0x120] sm:$0xff]
    %v1139 = vld [vmem:[#allocation6 + $0x128] sm:$0xff]
    %v1140 = vld [vmem:[#allocation6 + $0x130] sm:$0xff]
    %v1141 = vld [vmem:[#allocation6 + $0x138] sm:$0xff]
    %v1142 = vld [vmem:[#allocation6 + $0x140] sm:$0xff]
    %v1143 = vld [vmem:[#allocation6 + $0x148] sm:$0xff]
    %v1144 = vld [vmem:[#allocation6 + $0x150] sm:$0xff]
    %v1145 = vld [vmem:[#allocation6 + $0x158] sm:$0xff]
    %v1146 = vld [vmem:[#allocation6 + $0x160] sm:$0xff]
    %v1147 = vld [vmem:[#allocation6 + $0x168] sm:$0xff]
    %v1148 = vld [vmem:[#allocation6 + $0x170] sm:$0xff]
    %v1149 = vld [vmem:[#allocation6 + $0x178] sm:$0xff]
    %v1150 = vld [vmem:[#allocation6 + $0x180] sm:$0xff]
    %v1151 = vld [vmem:[#allocation6 + $0x188] sm:$0xff]
    %v1152 = vld [vmem:[#allocation6 + $0x190] sm:$0xff]
    %v1153 = vld [vmem:[#allocation6 + $0x198] sm:$0xff]
    %v1154 = vld [vmem:[#allocation6 + $0x1a0] sm:$0xff]
    %v1155 = vld [vmem:[#allocation6 + $0x1a8] sm:$0xff]
    %v1156 = vld [vmem:[#allocation6 + $0x1b0] sm:$0xff]
    %v1157 = vld [vmem:[#allocation6 + $0x1b8] sm:$0xff]
    %v1158 = vld [vmem:[#allocation6 + $0x1c0] sm:$0xff]
    %v1159 = vld [vmem:[#allocation6 + $0x1c8] sm:$0xff]
    %v1160 = vld [vmem:[#allocation6 + $0x1d0] sm:$0xff]
    %v1161 = vld [vmem:[#allocation6 + $0x1d8] sm:$0xff]
    %v1162 = vld [vmem:[#allocation6 + $0x1e0] sm:$0xff]
    %v1163 = vld [vmem:[#allocation6 + $0x1e8] sm:$0xff]
    %v1164 = vld [vmem:[#allocation6 + $0x1f0] sm:$0xff]
    %v1165 = vld [vmem:[#allocation6 + $0x1f8] sm:$0xff]
    %v1167 = vrot.slane %v1099, 4
    %1169 = vmatprep.subr.mxu0 %v1103
    %1170 = vmatpush1.msra.mxu0 %v1102
    %1171 = vmatprep.subr.mxu0 %v1107
    %1172 = vmatpush1.msra.mxu0 %v1106
    %1173 = vmatprep.subr.mxu0 %v1111
    %1174 = vmatpush1.msra.mxu0 %v1110
    %1175 = vmatprep.subr.mxu0 %v1115
    %1176 = vmatpush1.msra.mxu0 %v1114
    %1177 = vmatprep.subr.mxu0 %v1119
    %1178 = vmatpush1.msra.mxu0 %v1118
    %1179 = vmatprep.subr.mxu0 %v1123
    %1180 = vmatpush1.msra.mxu0 %v1122
    %1181 = vmatprep.subr.mxu0 %v1127
    %1182 = vmatpush1.msra.mxu0 %v1126
    %1183 = vmatprep.subr.mxu0 %v1131
    %1184 = vmatpush1.msra.mxu0 %v1130
    %1185 = vmatprep.subr.mxu0 %v1135
    %1186 = vmatpush1.msra.mxu0 %v1134
    %1187 = vmatprep.subr.mxu0 %v1139
    %1188 = vmatpush1.msra.mxu0 %v1138
    %1189 = vmatprep.subr.mxu0 %v1143
    %1190 = vmatpush1.msra.mxu0 %v1142
    %1191 = vmatprep.subr.mxu0 %v1147
    %1192 = vmatpush1.msra.mxu0 %v1146
    %1193 = vmatprep.subr.mxu0 %v1151
    %1194 = vmatpush1.msra.mxu0 %v1150
    %1195 = vmatprep.subr.mxu0 %v1155
    %1196 = vmatpush1.msra.mxu0 %v1154
    %1197 = vmatprep.subr.mxu0 %v1159
    %1198 = vmatpush1.msra.mxu0 %v1158
    %1199 = vmatprep.subr.mxu0 %v1163
    %1200 = vmatpush1.msra.mxu0 %v1162
    %1201 = vmatprep.subr.mxu0 0.0
    %1202 = vmatpush1.msra.mxu0 0.0
    %1203 = vmatprep.subr.mxu0 0.0
    %1204 = vmatpush1.msra.mxu0 0.0
    %1205 = vmatprep.subr.mxu0 0.0
    %1206 = vmatpush1.msra.mxu0 0.0
    %1207 = vmatprep.subr.mxu0 0.0
    %1208 = vmatpush1.msra.mxu0 0.0
    %1209 = vmatprep.subr.mxu0 0.0
    %1210 = vmatpush1.msra.mxu0 0.0
    %1211 = vmatprep.subr.mxu0 0.0
    %1212 = vmatpush1.msra.mxu0 0.0
    %1213 = vmatprep.subr.mxu0 0.0
    %1214 = vmatpush1.msra.mxu0 0.0
    %1215 = vmatprep.subr.mxu0 0.0
    %1216 = vmatpush1.msra.mxu0 0.0
    %1217 = vmatprep.subr.mxu0 0.0
    %1218 = vmatpush1.msra.mxu0 0.0
    %1219 = vmatprep.subr.mxu0 0.0
    %1220 = vmatpush1.msra.mxu0 0.0
    %1221 = vmatprep.subr.mxu0 0.0
    %1222 = vmatpush1.msra.mxu0 0.0
    %1223 = vmatprep.subr.mxu0 0.0
    %1224 = vmatpush1.msra.mxu0 0.0
    %1225 = vmatprep.subr.mxu0 0.0
    %1226 = vmatpush1.msra.mxu0 0.0
    %1227 = vmatprep.subr.mxu0 0.0
    %1228 = vmatpush1.msra.mxu0 0.0
    %1229 = vmatprep.subr.mxu0 0.0
    %1230 = vmatpush1.msra.mxu0 0.0
    %1231 = vmatprep.subr.mxu0 0.0
    %1232 = vmatpush1.msra.mxu0 0.0
    %1233 = vmatprep.mubr.f32.mxu0 0.0
    %1234 = vmatmul.mubr.f32.gmra.mrb[0].mxu0 %v1167
    %v1235 = vpop.f32.mrb[0].mxu0
    %v1236 = vadd.f32 0.0, %v1235
    %v1237 = vpop.f32.mrb[0].mxu0
    %v1238 = vadd.f32 0.0, %v1237
    %1239 = vdwg.mxu0
    %1240 = vmatprep.subr.mxu0 %v1105
    %1241 = vmatpush1.msra.mxu0 %v1104
    %1242 = vmatprep.subr.mxu0 %v1109
    %1243 = vmatpush1.msra.mxu0 %v1108
    %1244 = vmatprep.subr.mxu0 %v1113
    %1245 = vmatpush1.msra.mxu0 %v1112
    %1246 = vmatprep.subr.mxu0 %v1117
    %1247 = vmatpush1.msra.mxu0 %v1116
    %1248 = vmatprep.subr.mxu0 %v1121
    %1249 = vmatpush1.msra.mxu0 %v1120
    %1250 = vmatprep.subr.mxu0 %v1125
    %1251 = vmatpush1.msra.mxu0 %v1124
    %1252 = vmatprep.subr.mxu0 %v1129
    %1253 = vmatpush1.msra.mxu0 %v1128
    %1254 = vmatprep.subr.mxu0 %v1133
    %1255 = vmatpush1.msra.mxu0 %v1132
    %1256 = vmatprep.subr.mxu0 %v1137
    %1257 = vmatpush1.msra.mxu0 %v1136
    %1258 = vmatprep.subr.mxu0 %v1141
    %1259 = vmatpush1.msra.mxu0 %v1140
    %1260 = vmatprep.subr.mxu0 %v1145
    %1261 = vmatpush1.msra.mxu0 %v1144
    %1262 = vmatprep.subr.mxu0 %v1149
    %1263 = vmatpush1.msra.mxu0 %v1148
    %1264 = vmatprep.subr.mxu0 %v1153
    %1265 = vmatpush1.msra.mxu0 %v1152
    %1266 = vmatprep.subr.mxu0 %v1157
    %1267 = vmatpush1.msra.mxu0 %v1156
    %1268 = vmatprep.subr.mxu0 %v1161
    %1269 = vmatpush1.msra.mxu0 %v1160
    %1270 = vmatprep.subr.mxu0 %v1165
    %1271 = vmatpush1.msra.mxu0 %v1164
    %1272 = vmatprep.subr.mxu0 0.0
    %1273 = vmatpush1.msra.mxu0 0.0
    %1274 = vmatprep.subr.mxu0 0.0
    %1275 = vmatpush1.msra.mxu0 0.0
    %1276 = vmatprep.subr.mxu0 0.0
    %1277 = vmatpush1.msra.mxu0 0.0
    %1278 = vmatprep.subr.mxu0 0.0
    %1279 = vmatpush1.msra.mxu0 0.0
    %1280 = vmatprep.subr.mxu0 0.0
    %1281 = vmatpush1.msra.mxu0 0.0
    %1282 = vmatprep.subr.mxu0 0.0
    %1283 = vmatpush1.msra.mxu0 0.0
    %1284 = vmatprep.subr.mxu0 0.0
    %1285 = vmatpush1.msra.mxu0 0.0
    %1286 = vmatprep.subr.mxu0 0.0
    %1287 = vmatpush1.msra.mxu0 0.0
    %1288 = vmatprep.subr.mxu0 0.0
    %1289 = vmatpush1.msra.mxu0 0.0
    %1290 = vmatprep.subr.mxu0 0.0
    %1291 = vmatpush1.msra.mxu0 0.0
    %1292 = vmatprep.subr.mxu0 0.0
    %1293 = vmatpush1.msra.mxu0 0.0
    %1294 = vmatprep.subr.mxu0 0.0
    %1295 = vmatpush1.msra.mxu0 0.0
    %1296 = vmatprep.subr.mxu0 0.0
    %1297 = vmatpush1.msra.mxu0 0.0
    %1298 = vmatprep.subr.mxu0 0.0
    %1299 = vmatpush1.msra.mxu0 0.0
    %1300 = vmatprep.subr.mxu0 0.0
    %1301 = vmatpush1.msra.mxu0 0.0
    %1302 = vmatprep.subr.mxu0 0.0
    %1303 = vmatpush1.msra.mxu0 0.0
    %1304 = vmatprep.mubr.f32.mxu0 0.0
    %1305 = vmatmul.mubr.f32.gmra.mrb[0].mxu0 %v1167
    %v1306 = vpop.f32.mrb[0].mxu0
    %v1307 = vadd.f32 0.0, %v1306
    %v1308 = vpop.f32.mrb[0].mxu0
    %v1309 = vadd.f32 0.0, %v1308
    %1310 = vdwg.mxu0
    %v1315 = vrot.slane %v1236, 2
    %v1316 = vrot.slane %v1238, 2
    %v1317 = vrot.slane %v1307, 2
    %v1318 = vrot.slane %v1309, 2
    %v1323 = vadd.f32 %v274, %v1315
    %v1324 = vadd.f32 %v276, %v1316
    %v1325 = vadd.f32 %v351, %v1317
    %v1326 = vadd.f32 %v353, %v1318
    %v1327 = vxor.u32 %v1323, 2147483648
    %v1328 = vxor.u32 %v1324, 2147483648
    %v1329 = vxor.u32 %v1325, 2147483648
    %v1330 = vmul.f32 %v1327, 1.442695
    %v1331 = vpow.pop %v1330
    %v1332 = vmul.f32 %v1328, 1.442695
    %v1333 = vpow.pop %v1332
    %v1334 = vmul.f32 %v1329, 1.442695
    %v1335 = vpow.pop %v1334
    %v1336 = vadd.f32 %v1331, 1.0
    %v1337 = vadd.f32 %v1333, 1.0
    %v1338 = vadd.f32 %v1335, 1.0
    %v1339 = vrcp.pop %v1336
    %v1340 = vmul.f32 1.0, %v1339
    %v1341 = vrcp.pop %v1337
    %v1342 = vmul.f32 1.0, %v1341
    %v1343 = vrcp.pop %v1338
    %v1344 = vmul.f32 1.0, %v1343
    %v1345 = vtanh.pop %v1326
    %v1347 = vrot.slane %v1097, 6
    %v1349 = vmul.f32 %v1342, %v1347
    %v1350 = vmul.f32 %v1340, %v1345
    %v1351 = vadd.f32 %v1349, %v1350
    %v1352 = vtanh.pop %v1351
    %v1353 = vmul.f32 %v1344, %v1352
    %v1354 = vtanh.pop %v1353
    %1355 = vst [vmem:[#allocation2] sm:$0xc0] %v1354
    %v1356 = vld [vmem:[#allocation6] sm:$0xff]
    %v1357 = vld [vmem:[#allocation6 + $0x8] sm:$0xff]
    %v1358 = vld [vmem:[#allocation6 + $0x10] sm:$0xff]
    %v1359 = vld [vmem:[#allocation6 + $0x18] sm:$0xff]
    %v1360 = vld [vmem:[#allocation6 + $0x20] sm:$0xff]
    %v1361 = vld [vmem:[#allocation6 + $0x28] sm:$0xff]
    %v1362 = vld [vmem:[#allocation6 + $0x30] sm:$0xff]
    %v1363 = vld [vmem:[#allocation6 + $0x38] sm:$0xff]
    %v1364 = vld [vmem:[#allocation6 + $0x40] sm:$0xff]
    %v1365 = vld [vmem:[#allocation6 + $0x48] sm:$0xff]
    %v1366 = vld [vmem:[#allocation6 + $0x50] sm:$0xff]
    %v1367 = vld [vmem:[#allocation6 + $0x58] sm:$0xff]
    %v1368 = vld [vmem:[#allocation6 + $0x60] sm:$0xff]
    %v1369 = vld [vmem:[#allocation6 + $0x68] sm:$0xff]
    %v1370 = vld [vmem:[#allocation6 + $0x70] sm:$0xff]
    %v1371 = vld [vmem:[#allocation6 + $0x78] sm:$0xff]
    %v1372 = vld [vmem:[#allocation6 + $0x80] sm:$0xff]
    %v1373 = vld [vmem:[#allocation6 + $0x88] sm:$0xff]
    %v1374 = vld [vmem:[#allocation6 + $0x90] sm:$0xff]
    %v1375 = vld [vmem:[#allocation6 + $0x98] sm:$0xff]
    %v1376 = vld [vmem:[#allocation6 + $0xa0] sm:$0xff]
    %v1377 = vld [vmem:[#allocation6 + $0xa8] sm:$0xff]
    %v1378 = vld [vmem:[#allocation6 + $0xb0] sm:$0xff]
    %v1379 = vld [vmem:[#allocation6 + $0xb8] sm:$0xff]
    %v1380 = vld [vmem:[#allocation6 + $0xc0] sm:$0xff]
    %v1381 = vld [vmem:[#allocation6 + $0xc8] sm:$0xff]
    %v1382 = vld [vmem:[#allocation6 + $0xd0] sm:$0xff]
    %v1383 = vld [vmem:[#allocation6 + $0xd8] sm:$0xff]
    %v1384 = vld [vmem:[#allocation6 + $0xe0] sm:$0xff]
    %v1385 = vld [vmem:[#allocation6 + $0xe8] sm:$0xff]
    %v1386 = vld [vmem:[#allocation6 + $0xf0] sm:$0xff]
    %v1387 = vld [vmem:[#allocation6 + $0xf8] sm:$0xff]
    %v1388 = vld [vmem:[#allocation6 + $0x100] sm:$0xff]
    %v1389 = vld [vmem:[#allocation6 + $0x108] sm:$0xff]
    %v1390 = vld [vmem:[#allocation6 + $0x110] sm:$0xff]
    %v1391 = vld [vmem:[#allocation6 + $0x118] sm:$0xff]
    %v1392 = vld [vmem:[#allocation6 + $0x120] sm:$0xff]
    %v1393 = vld [vmem:[#allocation6 + $0x128] sm:$0xff]
    %v1394 = vld [vmem:[#allocation6 + $0x130] sm:$0xff]
    %v1395 = vld [vmem:[#allocation6 + $0x138] sm:$0xff]
    %v1396 = vld [vmem:[#allocation6 + $0x140] sm:$0xff]
    %v1397 = vld [vmem:[#allocation6 + $0x148] sm:$0xff]
    %v1398 = vld [vmem:[#allocation6 + $0x150] sm:$0xff]
    %v1399 = vld [vmem:[#allocation6 + $0x158] sm:$0xff]
    %v1400 = vld [vmem:[#allocation6 + $0x160] sm:$0xff]
    %v1401 = vld [vmem:[#allocation6 + $0x168] sm:$0xff]
    %v1402 = vld [vmem:[#allocation6 + $0x170] sm:$0xff]
    %v1403 = vld [vmem:[#allocation6 + $0x178] sm:$0xff]
    %v1404 = vld [vmem:[#allocation6 + $0x180] sm:$0xff]
    %v1405 = vld [vmem:[#allocation6 + $0x188] sm:$0xff]
    %v1406 = vld [vmem:[#allocation6 + $0x190] sm:$0xff]
    %v1407 = vld [vmem:[#allocation6 + $0x198] sm:$0xff]
    %v1408 = vld [vmem:[#allocation6 + $0x1a0] sm:$0xff]
    %v1409 = vld [vmem:[#allocation6 + $0x1a8] sm:$0xff]
    %v1410 = vld [vmem:[#allocation6 + $0x1b0] sm:$0xff]
    %v1411 = vld [vmem:[#allocation6 + $0x1b8] sm:$0xff]
    %v1412 = vld [vmem:[#allocation6 + $0x1c0] sm:$0xff]
    %v1413 = vld [vmem:[#allocation6 + $0x1c8] sm:$0xff]
    %v1414 = vld [vmem:[#allocation6 + $0x1d0] sm:$0xff]
    %v1415 = vld [vmem:[#allocation6 + $0x1d8] sm:$0xff]
    %v1416 = vld [vmem:[#allocation6 + $0x1e0] sm:$0xff]
    %v1417 = vld [vmem:[#allocation6 + $0x1e8] sm:$0xff]
    %v1418 = vld [vmem:[#allocation6 + $0x1f0] sm:$0xff]
    %v1419 = vld [vmem:[#allocation6 + $0x1f8] sm:$0xff]
    %v1421 = vrot.slane %v1353, 6
    %1423 = vmatprep.subr.mxu0 %v1357
    %1424 = vmatpush1.msra.mxu0 %v1356
    %1425 = vmatprep.subr.mxu0 %v1361
    %1426 = vmatpush1.msra.mxu0 %v1360
    %1427 = vmatprep.subr.mxu0 %v1365
    %1428 = vmatpush1.msra.mxu0 %v1364
    %1429 = vmatprep.subr.mxu0 %v1369
    %1430 = vmatpush1.msra.mxu0 %v1368
    %1431 = vmatprep.subr.mxu0 %v1373
    %1432 = vmatpush1.msra.mxu0 %v1372
    %1433 = vmatprep.subr.mxu0 %v1377
    %1434 = vmatpush1.msra.mxu0 %v1376
    %1435 = vmatprep.subr.mxu0 %v1381
    %1436 = vmatpush1.msra.mxu0 %v1380
    %1437 = vmatprep.subr.mxu0 %v1385
    %1438 = vmatpush1.msra.mxu0 %v1384
    %1439 = vmatprep.subr.mxu0 %v1389
    %1440 = vmatpush1.msra.mxu0 %v1388
    %1441 = vmatprep.subr.mxu0 %v1393
    %1442 = vmatpush1.msra.mxu0 %v1392
    %1443 = vmatprep.subr.mxu0 %v1397
    %1444 = vmatpush1.msra.mxu0 %v1396
    %1445 = vmatprep.subr.mxu0 %v1401
    %1446 = vmatpush1.msra.mxu0 %v1400
    %1447 = vmatprep.subr.mxu0 %v1405
    %1448 = vmatpush1.msra.mxu0 %v1404
    %1449 = vmatprep.subr.mxu0 %v1409
    %1450 = vmatpush1.msra.mxu0 %v1408
    %1451 = vmatprep.subr.mxu0 %v1413
    %1452 = vmatpush1.msra.mxu0 %v1412
    %1453 = vmatprep.subr.mxu0 %v1417
    %1454 = vmatpush1.msra.mxu0 %v1416
    %1455 = vmatprep.subr.mxu0 0.0
    %1456 = vmatpush1.msra.mxu0 0.0
    %1457 = vmatprep.subr.mxu0 0.0
    %1458 = vmatpush1.msra.mxu0 0.0
    %1459 = vmatprep.subr.mxu0 0.0
    %1460 = vmatpush1.msra.mxu0 0.0
    %1461 = vmatprep.subr.mxu0 0.0
    %1462 = vmatpush1.msra.mxu0 0.0
    %1463 = vmatprep.subr.mxu0 0.0
    %1464 = vmatpush1.msra.mxu0 0.0
    %1465 = vmatprep.subr.mxu0 0.0
    %1466 = vmatpush1.msra.mxu0 0.0
    %1467 = vmatprep.subr.mxu0 0.0
    %1468 = vmatpush1.msra.mxu0 0.0
    %1469 = vmatprep.subr.mxu0 0.0
    %1470 = vmatpush1.msra.mxu0 0.0
    %1471 = vmatprep.subr.mxu0 0.0
    %1472 = vmatpush1.msra.mxu0 0.0
    %1473 = vmatprep.subr.mxu0 0.0
    %1474 = vmatpush1.msra.mxu0 0.0
    %1475 = vmatprep.subr.mxu0 0.0
    %1476 = vmatpush1.msra.mxu0 0.0
    %1477 = vmatprep.subr.mxu0 0.0
    %1478 = vmatpush1.msra.mxu0 0.0
    %1479 = vmatprep.subr.mxu0 0.0
    %1480 = vmatpush1.msra.mxu0 0.0
    %1481 = vmatprep.subr.mxu0 0.0
    %1482 = vmatpush1.msra.mxu0 0.0
    %1483 = vmatprep.subr.mxu0 0.0
    %1484 = vmatpush1.msra.mxu0 0.0
    %1485 = vmatprep.subr.mxu0 0.0
    %1486 = vmatpush1.msra.mxu0 0.0
    %1487 = vmatprep.mubr.f32.mxu0 0.0
    %1488 = vmatmul.mubr.f32.gmra.mrb[0].mxu0 %v1421
    %v1489 = vpop.f32.mrb[0].mxu0
    %v1490 = vadd.f32 0.0, %v1489
    %v1491 = vpop.f32.mrb[0].mxu0
    %v1492 = vadd.f32 0.0, %v1491
    %1493 = vdwg.mxu0
    %1494 = vmatprep.subr.mxu0 %v1359
    %1495 = vmatpush1.msra.mxu0 %v1358
    %1496 = vmatprep.subr.mxu0 %v1363
    %1497 = vmatpush1.msra.mxu0 %v1362
    %1498 = vmatprep.subr.mxu0 %v1367
    %1499 = vmatpush1.msra.mxu0 %v1366
    %1500 = vmatprep.subr.mxu0 %v1371
    %1501 = vmatpush1.msra.mxu0 %v1370
    %1502 = vmatprep.subr.mxu0 %v1375
    %1503 = vmatpush1.msra.mxu0 %v1374
    %1504 = vmatprep.subr.mxu0 %v1379
    %1505 = vmatpush1.msra.mxu0 %v1378
    %1506 = vmatprep.subr.mxu0 %v1383
    %1507 = vmatpush1.msra.mxu0 %v1382
    %1508 = vmatprep.subr.mxu0 %v1387
    %1509 = vmatpush1.msra.mxu0 %v1386
    %1510 = vmatprep.subr.mxu0 %v1391
    %1511 = vmatpush1.msra.mxu0 %v1390
    %1512 = vmatprep.subr.mxu0 %v1395
    %1513 = vmatpush1.msra.mxu0 %v1394
    %1514 = vmatprep.subr.mxu0 %v1399
    %1515 = vmatpush1.msra.mxu0 %v1398
    %1516 = vmatprep.subr.mxu0 %v1403
    %1517 = vmatpush1.msra.mxu0 %v1402
    %1518 = vmatprep.subr.mxu0 %v1407
    %1519 = vmatpush1.msra.mxu0 %v1406
    %1520 = vmatprep.subr.mxu0 %v1411
    %1521 = vmatpush1.msra.mxu0 %v1410
    %1522 = vmatprep.subr.mxu0 %v1415
    %1523 = vmatpush1.msra.mxu0 %v1414
    %1524 = vmatprep.subr.mxu0 %v1419
    %1525 = vmatpush1.msra.mxu0 %v1418
    %1526 = vmatprep.subr.mxu0 0.0
    %1527 = vmatpush1.msra.mxu0 0.0
    %1528 = vmatprep.subr.mxu0 0.0
    %1529 = vmatpush1.msra.mxu0 0.0
    %1530 = vmatprep.subr.mxu0 0.0
    %1531 = vmatpush1.msra.mxu0 0.0
    %1532 = vmatprep.subr.mxu0 0.0
    %1533 = vmatpush1.msra.mxu0 0.0
    %1534 = vmatprep.subr.mxu0 0.0
    %1535 = vmatpush1.msra.mxu0 0.0
    %1536 = vmatprep.subr.mxu0 0.0
    %1537 = vmatpush1.msra.mxu0 0.0
    %1538 = vmatprep.subr.mxu0 0.0
    %1539 = vmatpush1.msra.mxu0 0.0
    %1540 = vmatprep.subr.mxu0 0.0
    %1541 = vmatpush1.msra.mxu0 0.0
    %1542 = vmatprep.subr.mxu0 0.0
    %1543 = vmatpush1.msra.mxu0 0.0
    %1544 = vmatprep.subr.mxu0 0.0
    %1545 = vmatpush1.msra.mxu0 0.0
    %1546 = vmatprep.subr.mxu0 0.0
    %1547 = vmatpush1.msra.mxu0 0.0
    %1548 = vmatprep.subr.mxu0 0.0
    %1549 = vmatpush1.msra.mxu0 0.0
    %1550 = vmatprep.subr.mxu0 0.0
    %1551 = vmatpush1.msra.mxu0 0.0
    %1552 = vmatprep.subr.mxu0 0.0
    %1553 = vmatpush1.msra.mxu0 0.0
    %1554 = vmatprep.subr.mxu0 0.0
    %1555 = vmatpush1.msra.mxu0 0.0
    %1556 = vmatprep.subr.mxu0 0.0
    %1557 = vmatpush1.msra.mxu0 0.0
    %1558 = vmatprep.mubr.f32.mxu0 0.0
    %1559 = vmatmul.mubr.f32.gmra.mrb[0].mxu0 %v1421
    %v1560 = vpop.f32.mrb[0].mxu0
    %v1561 = vadd.f32 0.0, %v1560
    %v1562 = vpop.f32.mrb[0].mxu0
    %v1563 = vadd.f32 0.0, %v1562
    %1564 = vdwg.mxu0
    %v1565 = vadd.f32 %v280, %v1490
    %v1566 = vadd.f32 %v282, %v1492
    %v1567 = vadd.f32 %v357, %v1561
    %v1568 = vadd.f32 %v359, %v1563
    %v1569 = vxor.u32 %v1565, 2147483648
    %v1570 = vxor.u32 %v1566, 2147483648
    %v1571 = vxor.u32 %v1567, 2147483648
    %v1572 = vmul.f32 %v1569, 1.442695
    %v1573 = vpow.pop %v1572
    %v1574 = vmul.f32 %v1570, 1.442695
    %v1575 = vpow.pop %v1574
    %v1576 = vmul.f32 %v1571, 1.442695
    %v1577 = vpow.pop %v1576
    %v1578 = vadd.f32 %v1573, 1.0
    %v1579 = vadd.f32 %v1575, 1.0
    %v1580 = vadd.f32 %v1577, 1.0
    %v1581 = vrcp.pop %v1578
    %v1582 = vmul.f32 1.0, %v1581
    %v1583 = vrcp.pop %v1579
    %v1584 = vmul.f32 1.0, %v1583
    %v1585 = vrcp.pop %v1580
    %v1586 = vmul.f32 1.0, %v1585
    %v1587 = vtanh.pop %v1568
    %v1589 = vrot.slane %v1351, 6
    %v1591 = vmul.f32 %v1584, %v1589
    %v1592 = vmul.f32 %v1582, %v1587
    %v1593 = vadd.f32 %v1591, %v1592
    %v1594 = vtanh.pop %v1593
    %v1595 = vmul.f32 %v1586, %v1594
    %v1596 = vtanh.pop %v1595
    %1597 = vst [vmem:[#allocation2 + $0x8] sm:$0x3] %v1596
    %v1598 = vld [vmem:[#allocation6] sm:$0xff]
    %v1599 = vld [vmem:[#allocation6 + $0x8] sm:$0xff]
    %v1600 = vld [vmem:[#allocation6 + $0x10] sm:$0xff]
    %v1601 = vld [vmem:[#allocation6 + $0x18] sm:$0xff]
    %v1602 = vld [vmem:[#allocation6 + $0x20] sm:$0xff]
    %v1603 = vld [vmem:[#allocation6 + $0x28] sm:$0xff]
    %v1604 = vld [vmem:[#allocation6 + $0x30] sm:$0xff]
    %v1605 = vld [vmem:[#allocation6 + $0x38] sm:$0xff]
    %v1606 = vld [vmem:[#allocation6 + $0x40] sm:$0xff]
    %v1607 = vld [vmem:[#allocation6 + $0x48] sm:$0xff]
    %v1608 = vld [vmem:[#allocation6 + $0x50] sm:$0xff]
    %v1609 = vld [vmem:[#allocation6 + $0x58] sm:$0xff]
    %v1610 = vld [vmem:[#allocation6 + $0x60] sm:$0xff]
    %v1611 = vld [vmem:[#allocation6 + $0x68] sm:$0xff]
    %v1612 = vld [vmem:[#allocation6 + $0x70] sm:$0xff]
    %v1613 = vld [vmem:[#allocation6 + $0x78] sm:$0xff]
    %v1614 = vld [vmem:[#allocation6 + $0x80] sm:$0xff]
    %v1615 = vld [vmem:[#allocation6 + $0x88] sm:$0xff]
    %v1616 = vld [vmem:[#allocation6 + $0x90] sm:$0xff]
    %v1617 = vld [vmem:[#allocation6 + $0x98] sm:$0xff]
    %v1618 = vld [vmem:[#allocation6 + $0xa0] sm:$0xff]
    %v1619 = vld [vmem:[#allocation6 + $0xa8] sm:$0xff]
    %v1620 = vld [vmem:[#allocation6 + $0xb0] sm:$0xff]
    %v1621 = vld [vmem:[#allocation6 + $0xb8] sm:$0xff]
    %v1622 = vld [vmem:[#allocation6 + $0xc0] sm:$0xff]
    %v1623 = vld [vmem:[#allocation6 + $0xc8] sm:$0xff]
    %v1624 = vld [vmem:[#allocation6 + $0xd0] sm:$0xff]
    %v1625 = vld [vmem:[#allocation6 + $0xd8] sm:$0xff]
    %v1626 = vld [vmem:[#allocation6 + $0xe0] sm:$0xff]
    %v1627 = vld [vmem:[#allocation6 + $0xe8] sm:$0xff]
    %v1628 = vld [vmem:[#allocation6 + $0xf0] sm:$0xff]
    %v1629 = vld [vmem:[#allocation6 + $0xf8] sm:$0xff]
    %v1630 = vld [vmem:[#allocation6 + $0x100] sm:$0xff]
    %v1631 = vld [vmem:[#allocation6 + $0x108] sm:$0xff]
    %v1632 = vld [vmem:[#allocation6 + $0x110] sm:$0xff]
    %v1633 = vld [vmem:[#allocation6 + $0x118] sm:$0xff]
    %v1634 = vld [vmem:[#allocation6 + $0x120] sm:$0xff]
    %v1635 = vld [vmem:[#allocation6 + $0x128] sm:$0xff]
    %v1636 = vld [vmem:[#allocation6 + $0x130] sm:$0xff]
    %v1637 = vld [vmem:[#allocation6 + $0x138] sm:$0xff]
    %v1638 = vld [vmem:[#allocation6 + $0x140] sm:$0xff]
    %v1639 = vld [vmem:[#allocation6 + $0x148] sm:$0xff]
    %v1640 = vld [vmem:[#allocation6 + $0x150] sm:$0xff]
    %v1641 = vld [vmem:[#allocation6 + $0x158] sm:$0xff]
    %v1642 = vld [vmem:[#allocation6 + $0x160] sm:$0xff]
    %v1643 = vld [vmem:[#allocation6 + $0x168] sm:$0xff]
    %v1644 = vld [vmem:[#allocation6 + $0x170] sm:$0xff]
    %v1645 = vld [vmem:[#allocation6 + $0x178] sm:$0xff]
    %v1646 = vld [vmem:[#allocation6 + $0x180] sm:$0xff]
    %v1647 = vld [vmem:[#allocation6 + $0x188] sm:$0xff]
    %v1648 = vld [vmem:[#allocation6 + $0x190] sm:$0xff]
    %v1649 = vld [vmem:[#allocation6 + $0x198] sm:$0xff]
    %v1650 = vld [vmem:[#allocation6 + $0x1a0] sm:$0xff]
    %v1651 = vld [vmem:[#allocation6 + $0x1a8] sm:$0xff]
    %v1652 = vld [vmem:[#allocation6 + $0x1b0] sm:$0xff]
    %v1653 = vld [vmem:[#allocation6 + $0x1b8] sm:$0xff]
    %v1654 = vld [vmem:[#allocation6 + $0x1c0] sm:$0xff]
    %v1655 = vld [vmem:[#allocation6 + $0x1c8] sm:$0xff]
    %v1656 = vld [vmem:[#allocation6 + $0x1d0] sm:$0xff]
    %v1657 = vld [vmem:[#allocation6 + $0x1d8] sm:$0xff]
    %v1658 = vld [vmem:[#allocation6 + $0x1e0] sm:$0xff]
    %v1659 = vld [vmem:[#allocation6 + $0x1e8] sm:$0xff]
    %v1660 = vld [vmem:[#allocation6 + $0x1f0] sm:$0xff]
    %v1661 = vld [vmem:[#allocation6 + $0x1f8] sm:$0xff]
    %1662 = vmatprep.subr.mxu0 %v1599
    %1663 = vmatpush1.msra.mxu0 %v1598
    %1664 = vmatprep.subr.mxu0 %v1603
    %1665 = vmatpush1.msra.mxu0 %v1602
    %1666 = vmatprep.subr.mxu0 %v1607
    %1667 = vmatpush1.msra.mxu0 %v1606
    %1668 = vmatprep.subr.mxu0 %v1611
    %1669 = vmatpush1.msra.mxu0 %v1610
    %1670 = vmatprep.subr.mxu0 %v1615
    %1671 = vmatpush1.msra.mxu0 %v1614
    %1672 = vmatprep.subr.mxu0 %v1619
    %1673 = vmatpush1.msra.mxu0 %v1618
    %1674 = vmatprep.subr.mxu0 %v1623
    %1675 = vmatpush1.msra.mxu0 %v1622
    %1676 = vmatprep.subr.mxu0 %v1627
    %1677 = vmatpush1.msra.mxu0 %v1626
    %1678 = vmatprep.subr.mxu0 %v1631
    %1679 = vmatpush1.msra.mxu0 %v1630
    %1680 = vmatprep.subr.mxu0 %v1635
    %1681 = vmatpush1.msra.mxu0 %v1634
    %1682 = vmatprep.subr.mxu0 %v1639
    %1683 = vmatpush1.msra.mxu0 %v1638
    %1684 = vmatprep.subr.mxu0 %v1643
    %1685 = vmatpush1.msra.mxu0 %v1642
    %1686 = vmatprep.subr.mxu0 %v1647
    %1687 = vmatpush1.msra.mxu0 %v1646
    %1688 = vmatprep.subr.mxu0 %v1651
    %1689 = vmatpush1.msra.mxu0 %v1650
    %1690 = vmatprep.subr.mxu0 %v1655
    %1691 = vmatpush1.msra.mxu0 %v1654
    %1692 = vmatprep.subr.mxu0 %v1659
    %1693 = vmatpush1.msra.mxu0 %v1658
    %1694 = vmatprep.subr.mxu0 0.0
    %1695 = vmatpush1.msra.mxu0 0.0
    %1696 = vmatprep.subr.mxu0 0.0
    %1697 = vmatpush1.msra.mxu0 0.0
    %1698 = vmatprep.subr.mxu0 0.0
    %1699 = vmatpush1.msra.mxu0 0.0
    %1700 = vmatprep.subr.mxu0 0.0
    %1701 = vmatpush1.msra.mxu0 0.0
    %1702 = vmatprep.subr.mxu0 0.0
    %1703 = vmatpush1.msra.mxu0 0.0
    %1704 = vmatprep.subr.mxu0 0.0
    %1705 = vmatpush1.msra.mxu0 0.0
    %1706 = vmatprep.subr.mxu0 0.0
    %1707 = vmatpush1.msra.mxu0 0.0
    %1708 = vmatprep.subr.mxu0 0.0
    %1709 = vmatpush1.msra.mxu0 0.0
    %1710 = vmatprep.subr.mxu0 0.0
    %1711 = vmatpush1.msra.mxu0 0.0
    %1712 = vmatprep.subr.mxu0 0.0
    %1713 = vmatpush1.msra.mxu0 0.0
    %1714 = vmatprep.subr.mxu0 0.0
    %1715 = vmatpush1.msra.mxu0 0.0
    %1716 = vmatprep.subr.mxu0 0.0
    %1717 = vmatpush1.msra.mxu0 0.0
    %1718 = vmatprep.subr.mxu0 0.0
    %1719 = vmatpush1.msra.mxu0 0.0
    %1720 = vmatprep.subr.mxu0 0.0
    %1721 = vmatpush1.msra.mxu0 0.0
    %1722 = vmatprep.subr.mxu0 0.0
    %1723 = vmatpush1.msra.mxu0 0.0
    %1724 = vmatprep.subr.mxu0 0.0
    %1725 = vmatpush1.msra.mxu0 0.0
    %1726 = vmatprep.mubr.f32.mxu0 0.0
    %1727 = vmatmul.mubr.f32.gmra.mrb[0].mxu0 %v1595
    %v1728 = vpop.f32.mrb[0].mxu0
    %v1729 = vadd.f32 0.0, %v1728
    %v1730 = vpop.f32.mrb[0].mxu0
    %v1731 = vadd.f32 0.0, %v1730
    %1732 = vdwg.mxu0
    %1733 = vmatprep.subr.mxu0 %v1601
    %1734 = vmatpush1.msra.mxu0 %v1600
    %1735 = vmatprep.subr.mxu0 %v1605
    %1736 = vmatpush1.msra.mxu0 %v1604
    %1737 = vmatprep.subr.mxu0 %v1609
    %1738 = vmatpush1.msra.mxu0 %v1608
    %1739 = vmatprep.subr.mxu0 %v1613
    %1740 = vmatpush1.msra.mxu0 %v1612
    %1741 = vmatprep.subr.mxu0 %v1617
    %1742 = vmatpush1.msra.mxu0 %v1616
    %1743 = vmatprep.subr.mxu0 %v1621
    %1744 = vmatpush1.msra.mxu0 %v1620
    %1745 = vmatprep.subr.mxu0 %v1625
    %1746 = vmatpush1.msra.mxu0 %v1624
    %1747 = vmatprep.subr.mxu0 %v1629
    %1748 = vmatpush1.msra.mxu0 %v1628
    %1749 = vmatprep.subr.mxu0 %v1633
    %1750 = vmatpush1.msra.mxu0 %v1632
    %1751 = vmatprep.subr.mxu0 %v1637
    %1752 = vmatpush1.msra.mxu0 %v1636
    %1753 = vmatprep.subr.mxu0 %v1641
    %1754 = vmatpush1.msra.mxu0 %v1640
    %1755 = vmatprep.subr.mxu0 %v1645
    %1756 = vmatpush1.msra.mxu0 %v1644
    %1757 = vmatprep.subr.mxu0 %v1649
    %1758 = vmatpush1.msra.mxu0 %v1648
    %1759 = vmatprep.subr.mxu0 %v1653
    %1760 = vmatpush1.msra.mxu0 %v1652
    %1761 = vmatprep.subr.mxu0 %v1657
    %1762 = vmatpush1.msra.mxu0 %v1656
    %1763 = vmatprep.subr.mxu0 %v1661
    %1764 = vmatpush1.msra.mxu0 %v1660
    %1765 = vmatprep.subr.mxu0 0.0
    %1766 = vmatpush1.msra.mxu0 0.0
    %1767 = vmatprep.subr.mxu0 0.0
    %1768 = vmatpush1.msra.mxu0 0.0
    %1769 = vmatprep.subr.mxu0 0.0
    %1770 = vmatpush1.msra.mxu0 0.0
    %1771 = vmatprep.subr.mxu0 0.0
    %1772 = vmatpush1.msra.mxu0 0.0
    %1773 = vmatprep.subr.mxu0 0.0
    %1774 = vmatpush1.msra.mxu0 0.0
    %1775 = vmatprep.subr.mxu0 0.0
    %1776 = vmatpush1.msra.mxu0 0.0
    %1777 = vmatprep.subr.mxu0 0.0
    %1778 = vmatpush1.msra.mxu0 0.0
    %1779 = vmatprep.subr.mxu0 0.0
    %1780 = vmatpush1.msra.mxu0 0.0
    %1781 = vmatprep.subr.mxu0 0.0
    %1782 = vmatpush1.msra.mxu0 0.0
    %1783 = vmatprep.subr.mxu0 0.0
    %1784 = vmatpush1.msra.mxu0 0.0
    %1785 = vmatprep.subr.mxu0 0.0
    %1786 = vmatpush1.msra.mxu0 0.0
    %1787 = vmatprep.subr.mxu0 0.0
    %1788 = vmatpush1.msra.mxu0 0.0
    %1789 = vmatprep.subr.mxu0 0.0
    %1790 = vmatpush1.msra.mxu0 0.0
    %1791 = vmatprep.subr.mxu0 0.0
    %1792 = vmatpush1.msra.mxu0 0.0
    %1793 = vmatprep.subr.mxu0 0.0
    %1794 = vmatpush1.msra.mxu0 0.0
    %1795 = vmatprep.subr.mxu0 0.0
    %1796 = vmatpush1.msra.mxu0 0.0
    %1797 = vmatprep.mubr.f32.mxu0 0.0
    %1798 = vmatmul.mubr.f32.gmra.mrb[0].mxu0 %v1595
    %v1799 = vpop.f32.mrb[0].mxu0
    %v1800 = vadd.f32 0.0, %v1799
    %v1801 = vpop.f32.mrb[0].mxu0
    %v1802 = vadd.f32 0.0, %v1801
    %1803 = vdwg.mxu0
    %v1808 = vrot.slane %v1729, 6
    %v1809 = vrot.slane %v1731, 6
    %v1810 = vrot.slane %v1800, 6
    %v1811 = vrot.slane %v1802, 6
    %v1816 = vadd.f32 %v280, %v1808
    %v1817 = vadd.f32 %v282, %v1809
    %v1818 = vadd.f32 %v357, %v1810
    %v1819 = vadd.f32 %v359, %v1811
    %v1820 = vxor.u32 %v1816, 2147483648
    %v1821 = vxor.u32 %v1817, 2147483648
    %v1822 = vxor.u32 %v1818, 2147483648
    %v1823 = vmul.f32 %v1820, 1.442695
    %v1824 = vpow.pop %v1823
    %v1825 = vmul.f32 %v1821, 1.442695
    %v1826 = vpow.pop %v1825
    %v1827 = vmul.f32 %v1822, 1.442695
    %v1828 = vpow.pop %v1827
    %v1829 = vadd.f32 %v1824, 1.0
    %v1830 = vadd.f32 %v1826, 1.0
    %v1831 = vadd.f32 %v1828, 1.0
    %v1832 = vrcp.pop %v1829
    %v1833 = vmul.f32 1.0, %v1832
    %v1834 = vrcp.pop %v1830
    %v1835 = vmul.f32 1.0, %v1834
    %v1836 = vrcp.pop %v1831
    %v1837 = vmul.f32 1.0, %v1836
    %v1838 = vtanh.pop %v1819
    %v1840 = vrot.slane %v1593, 6
    %v1842 = vmul.f32 %v1835, %v1840
    %v1843 = vmul.f32 %v1833, %v1838
    %v1844 = vadd.f32 %v1842, %v1843
    %v1845 = vtanh.pop %v1844
    %v1846 = vmul.f32 %v1837, %v1845
    %v1847 = vtanh.pop %v1846
    %1848 = vst [vmem:[#allocation2 + $0x8] sm:$0xc] %v1847
    %v1849 = vld [vmem:[#allocation6] sm:$0xff]
    %v1850 = vld [vmem:[#allocation6 + $0x8] sm:$0xff]
    %v1851 = vld [vmem:[#allocation6 + $0x10] sm:$0xff]
    %v1852 = vld [vmem:[#allocation6 + $0x18] sm:$0xff]
    %v1853 = vld [vmem:[#allocation6 + $0x20] sm:$0xff]
    %v1854 = vld [vmem:[#allocation6 + $0x28] sm:$0xff]
    %v1855 = vld [vmem:[#allocation6 + $0x30] sm:$0xff]
    %v1856 = vld [vmem:[#allocation6 + $0x38] sm:$0xff]
    %v1857 = vld [vmem:[#allocation6 + $0x40] sm:$0xff]
    %v1858 = vld [vmem:[#allocation6 + $0x48] sm:$0xff]
    %v1859 = vld [vmem:[#allocation6 + $0x50] sm:$0xff]
    %v1860 = vld [vmem:[#allocation6 + $0x58] sm:$0xff]
    %v1861 = vld [vmem:[#allocation6 + $0x60] sm:$0xff]
    %v1862 = vld [vmem:[#allocation6 + $0x68] sm:$0xff]
    %v1863 = vld [vmem:[#allocation6 + $0x70] sm:$0xff]
    %v1864 = vld [vmem:[#allocation6 + $0x78] sm:$0xff]
    %v1865 = vld [vmem:[#allocation6 + $0x80] sm:$0xff]
    %v1866 = vld [vmem:[#allocation6 + $0x88] sm:$0xff]
    %v1867 = vld [vmem:[#allocation6 + $0x90] sm:$0xff]
    %v1868 = vld [vmem:[#allocation6 + $0x98] sm:$0xff]
    %v1869 = vld [vmem:[#allocation6 + $0xa0] sm:$0xff]
    %v1870 = vld [vmem:[#allocation6 + $0xa8] sm:$0xff]
    %v1871 = vld [vmem:[#allocation6 + $0xb0] sm:$0xff]
    %v1872 = vld [vmem:[#allocation6 + $0xb8] sm:$0xff]
    %v1873 = vld [vmem:[#allocation6 + $0xc0] sm:$0xff]
    %v1874 = vld [vmem:[#allocation6 + $0xc8] sm:$0xff]
    %v1875 = vld [vmem:[#allocation6 + $0xd0] sm:$0xff]
    %v1876 = vld [vmem:[#allocation6 + $0xd8] sm:$0xff]
    %v1877 = vld [vmem:[#allocation6 + $0xe0] sm:$0xff]
    %v1878 = vld [vmem:[#allocation6 + $0xe8] sm:$0xff]
    %v1879 = vld [vmem:[#allocation6 + $0xf0] sm:$0xff]
    %v1880 = vld [vmem:[#allocation6 + $0xf8] sm:$0xff]
    %v1881 = vld [vmem:[#allocation6 + $0x100] sm:$0xff]
    %v1882 = vld [vmem:[#allocation6 + $0x108] sm:$0xff]
    %v1883 = vld [vmem:[#allocation6 + $0x110] sm:$0xff]
    %v1884 = vld [vmem:[#allocation6 + $0x118] sm:$0xff]
    %v1885 = vld [vmem:[#allocation6 + $0x120] sm:$0xff]
    %v1886 = vld [vmem:[#allocation6 + $0x128] sm:$0xff]
    %v1887 = vld [vmem:[#allocation6 + $0x130] sm:$0xff]
    %v1888 = vld [vmem:[#allocation6 + $0x138] sm:$0xff]
    %v1889 = vld [vmem:[#allocation6 + $0x140] sm:$0xff]
    %v1890 = vld [vmem:[#allocation6 + $0x148] sm:$0xff]
    %v1891 = vld [vmem:[#allocation6 + $0x150] sm:$0xff]
    %v1892 = vld [vmem:[#allocation6 + $0x158] sm:$0xff]
    %v1893 = vld [vmem:[#allocation6 + $0x160] sm:$0xff]
    %v1894 = vld [vmem:[#allocation6 + $0x168] sm:$0xff]
    %v1895 = vld [vmem:[#allocation6 + $0x170] sm:$0xff]
    %v1896 = vld [vmem:[#allocation6 + $0x178] sm:$0xff]
    %v1897 = vld [vmem:[#allocation6 + $0x180] sm:$0xff]
    %v1898 = vld [vmem:[#allocation6 + $0x188] sm:$0xff]
    %v1899 = vld [vmem:[#allocation6 + $0x190] sm:$0xff]
    %v1900 = vld [vmem:[#allocation6 + $0x198] sm:$0xff]
    %v1901 = vld [vmem:[#allocation6 + $0x1a0] sm:$0xff]
    %v1902 = vld [vmem:[#allocation6 + $0x1a8] sm:$0xff]
    %v1903 = vld [vmem:[#allocation6 + $0x1b0] sm:$0xff]
    %v1904 = vld [vmem:[#allocation6 + $0x1b8] sm:$0xff]
    %v1905 = vld [vmem:[#allocation6 + $0x1c0] sm:$0xff]
    %v1906 = vld [vmem:[#allocation6 + $0x1c8] sm:$0xff]
    %v1907 = vld [vmem:[#allocation6 + $0x1d0] sm:$0xff]
    %v1908 = vld [vmem:[#allocation6 + $0x1d8] sm:$0xff]
    %v1909 = vld [vmem:[#allocation6 + $0x1e0] sm:$0xff]
    %v1910 = vld [vmem:[#allocation6 + $0x1e8] sm:$0xff]
    %v1911 = vld [vmem:[#allocation6 + $0x1f0] sm:$0xff]
    %v1912 = vld [vmem:[#allocation6 + $0x1f8] sm:$0xff]
    %v1914 = vrot.slane %v1846, 2
    %1916 = vmatprep.subr.mxu0 %v1850
    %1917 = vmatpush1.msra.mxu0 %v1849
    %1918 = vmatprep.subr.mxu0 %v1854
    %1919 = vmatpush1.msra.mxu0 %v1853
    %1920 = vmatprep.subr.mxu0 %v1858
    %1921 = vmatpush1.msra.mxu0 %v1857
    %1922 = vmatprep.subr.mxu0 %v1862
    %1923 = vmatpush1.msra.mxu0 %v1861
    %1924 = vmatprep.subr.mxu0 %v1866
    %1925 = vmatpush1.msra.mxu0 %v1865
    %1926 = vmatprep.subr.mxu0 %v1870
    %1927 = vmatpush1.msra.mxu0 %v1869
    %1928 = vmatprep.subr.mxu0 %v1874
    %1929 = vmatpush1.msra.mxu0 %v1873
    %1930 = vmatprep.subr.mxu0 %v1878
    %1931 = vmatpush1.msra.mxu0 %v1877
    %1932 = vmatprep.subr.mxu0 %v1882
    %1933 = vmatpush1.msra.mxu0 %v1881
    %1934 = vmatprep.subr.mxu0 %v1886
    %1935 = vmatpush1.msra.mxu0 %v1885
    %1936 = vmatprep.subr.mxu0 %v1890
    %1937 = vmatpush1.msra.mxu0 %v1889
    %1938 = vmatprep.subr.mxu0 %v1894
    %1939 = vmatpush1.msra.mxu0 %v1893
    %1940 = vmatprep.subr.mxu0 %v1898
    %1941 = vmatpush1.msra.mxu0 %v1897
    %1942 = vmatprep.subr.mxu0 %v1902
    %1943 = vmatpush1.msra.mxu0 %v1901
    %1944 = vmatprep.subr.mxu0 %v1906
    %1945 = vmatpush1.msra.mxu0 %v1905
    %1946 = vmatprep.subr.mxu0 %v1910
    %1947 = vmatpush1.msra.mxu0 %v1909
    %1948 = vmatprep.subr.mxu0 0.0
    %1949 = vmatpush1.msra.mxu0 0.0
    %1950 = vmatprep.subr.mxu0 0.0
    %1951 = vmatpush1.msra.mxu0 0.0
    %1952 = vmatprep.subr.mxu0 0.0
    %1953 = vmatpush1.msra.mxu0 0.0
    %1954 = vmatprep.subr.mxu0 0.0
    %1955 = vmatpush1.msra.mxu0 0.0
    %1956 = vmatprep.subr.mxu0 0.0
    %1957 = vmatpush1.msra.mxu0 0.0
    %1958 = vmatprep.subr.mxu0 0.0
    %1959 = vmatpush1.msra.mxu0 0.0
    %1960 = vmatprep.subr.mxu0 0.0
    %1961 = vmatpush1.msra.mxu0 0.0
    %1962 = vmatprep.subr.mxu0 0.0
    %1963 = vmatpush1.msra.mxu0 0.0
    %1964 = vmatprep.subr.mxu0 0.0
    %1965 = vmatpush1.msra.mxu0 0.0
    %1966 = vmatprep.subr.mxu0 0.0
    %1967 = vmatpush1.msra.mxu0 0.0
    %1968 = vmatprep.subr.mxu0 0.0
    %1969 = vmatpush1.msra.mxu0 0.0
    %1970 = vmatprep.subr.mxu0 0.0
    %1971 = vmatpush1.msra.mxu0 0.0
    %1972 = vmatprep.subr.mxu0 0.0
    %1973 = vmatpush1.msra.mxu0 0.0
    %1974 = vmatprep.subr.mxu0 0.0
    %1975 = vmatpush1.msra.mxu0 0.0
    %1976 = vmatprep.subr.mxu0 0.0
    %1977 = vmatpush1.msra.mxu0 0.0
    %1978 = vmatprep.subr.mxu0 0.0
    %1979 = vmatpush1.msra.mxu0 0.0
    %1980 = vmatprep.mubr.f32.mxu0 0.0
    %1981 = vmatmul.mubr.f32.gmra.mrb[0].mxu0 %v1914
    %v1982 = vpop.f32.mrb[0].mxu0
    %v1983 = vadd.f32 0.0, %v1982
    %v1984 = vpop.f32.mrb[0].mxu0
    %v1985 = vadd.f32 0.0, %v1984
    %1986 = vdwg.mxu0
    %1987 = vmatprep.subr.mxu0 %v1852
    %1988 = vmatpush1.msra.mxu0 %v1851
    %1989 = vmatprep.subr.mxu0 %v1856
    %1990 = vmatpush1.msra.mxu0 %v1855
    %1991 = vmatprep.subr.mxu0 %v1860
    %1992 = vmatpush1.msra.mxu0 %v1859
    %1993 = vmatprep.subr.mxu0 %v1864
    %1994 = vmatpush1.msra.mxu0 %v1863
    %1995 = vmatprep.subr.mxu0 %v1868
    %1996 = vmatpush1.msra.mxu0 %v1867
    %1997 = vmatprep.subr.mxu0 %v1872
    %1998 = vmatpush1.msra.mxu0 %v1871
    %1999 = vmatprep.subr.mxu0 %v1876
    %2000 = vmatpush1.msra.mxu0 %v1875
    %2001 = vmatprep.subr.mxu0 %v1880
    %2002 = vmatpush1.msra.mxu0 %v1879
    %2003 = vmatprep.subr.mxu0 %v1884
    %2004 = vmatpush1.msra.mxu0 %v1883
    %2005 = vmatprep.subr.mxu0 %v1888
    %2006 = vmatpush1.msra.mxu0 %v1887
    %2007 = vmatprep.subr.mxu0 %v1892
    %2008 = vmatpush1.msra.mxu0 %v1891
    %2009 = vmatprep.subr.mxu0 %v1896
    %2010 = vmatpush1.msra.mxu0 %v1895
    %2011 = vmatprep.subr.mxu0 %v1900
    %2012 = vmatpush1.msra.mxu0 %v1899
    %2013 = vmatprep.subr.mxu0 %v1904
    %2014 = vmatpush1.msra.mxu0 %v1903
    %2015 = vmatprep.subr.mxu0 %v1908
    %2016 = vmatpush1.msra.mxu0 %v1907
    %2017 = vmatprep.subr.mxu0 %v1912
    %2018 = vmatpush1.msra.mxu0 %v1911
    %2019 = vmatprep.subr.mxu0 0.0
    %2020 = vmatpush1.msra.mxu0 0.0
    %2021 = vmatprep.subr.mxu0 0.0
    %2022 = vmatpush1.msra.mxu0 0.0
    %2023 = vmatprep.subr.mxu0 0.0
    %2024 = vmatpush1.msra.mxu0 0.0
    %2025 = vmatprep.subr.mxu0 0.0
    %2026 = vmatpush1.msra.mxu0 0.0
    %2027 = vmatprep.subr.mxu0 0.0
    %2028 = vmatpush1.msra.mxu0 0.0
    %2029 = vmatprep.subr.mxu0 0.0
    %2030 = vmatpush1.msra.mxu0 0.0
    %2031 = vmatprep.subr.mxu0 0.0
    %2032 = vmatpush1.msra.mxu0 0.0
    %2033 = vmatprep.subr.mxu0 0.0
    %2034 = vmatpush1.msra.mxu0 0.0
    %2035 = vmatprep.subr.mxu0 0.0
    %2036 = vmatpush1.msra.mxu0 0.0
    %2037 = vmatprep.subr.mxu0 0.0
    %2038 = vmatpush1.msra.mxu0 0.0
    %2039 = vmatprep.subr.mxu0 0.0
    %2040 = vmatpush1.msra.mxu0 0.0
    %2041 = vmatprep.subr.mxu0 0.0
    %2042 = vmatpush1.msra.mxu0 0.0
    %2043 = vmatprep.subr.mxu0 0.0
    %2044 = vmatpush1.msra.mxu0 0.0
    %2045 = vmatprep.subr.mxu0 0.0
    %2046 = vmatpush1.msra.mxu0 0.0
    %2047 = vmatprep.subr.mxu0 0.0
    %2048 = vmatpush1.msra.mxu0 0.0
    %2049 = vmatprep.subr.mxu0 0.0
    %2050 = vmatpush1.msra.mxu0 0.0
    %2051 = vmatprep.mubr.f32.mxu0 0.0
    %2052 = vmatmul.mubr.f32.gmra.mrb[0].mxu0 %v1914
    %v2053 = vpop.f32.mrb[0].mxu0
    %v2054 = vadd.f32 0.0, %v2053
    %v2055 = vpop.f32.mrb[0].mxu0
    %v2056 = vadd.f32 0.0, %v2055
    %2057 = vdwg.mxu0
    %v2062 = vrot.slane %v1983, 4
    %v2063 = vrot.slane %v1985, 4
    %v2064 = vrot.slane %v2054, 4
    %v2065 = vrot.slane %v2056, 4
    %v2070 = vadd.f32 %v280, %v2062
    %v2071 = vadd.f32 %v282, %v2063
    %v2072 = vadd.f32 %v357, %v2064
    %v2073 = vadd.f32 %v359, %v2065
    %v2074 = vxor.u32 %v2070, 2147483648
    %v2075 = vxor.u32 %v2071, 2147483648
    %v2076 = vxor.u32 %v2072, 2147483648
    %v2077 = vmul.f32 %v2074, 1.442695
    %v2078 = vpow.pop %v2077
    %v2079 = vmul.f32 %v2075, 1.442695
    %v2080 = vpow.pop %v2079
    %v2081 = vmul.f32 %v2076, 1.442695
    %v2082 = vpow.pop %v2081
    %v2083 = vadd.f32 %v2078, 1.0
    %v2084 = vadd.f32 %v2080, 1.0
    %v2085 = vadd.f32 %v2082, 1.0
    %v2086 = vrcp.pop %v2083
    %v2087 = vmul.f32 1.0, %v2086
    %v2088 = vrcp.pop %v2084
    %v2089 = vmul.f32 1.0, %v2088
    %v2090 = vrcp.pop %v2085
    %v2091 = vmul.f32 1.0, %v2090
    %v2092 = vtanh.pop %v2073
    %v2094 = vrot.slane %v1844, 6
    %v2096 = vmul.f32 %v2089, %v2094
    %v2097 = vmul.f32 %v2087, %v2092
    %v2098 = vadd.f32 %v2096, %v2097
    %v2099 = vtanh.pop %v2098
    %v2100 = vmul.f32 %v2091, %v2099
    %v2101 = vtanh.pop %v2100
    %2102 = vst [vmem:[#allocation2 + $0x8] sm:$0x30] %v2101
    %v2103 = vld [vmem:[#allocation6] sm:$0xff]
    %v2104 = vld [vmem:[#allocation6 + $0x8] sm:$0xff]
    %v2105 = vld [vmem:[#allocation6 + $0x10] sm:$0xff]
    %v2106 = vld [vmem:[#allocation6 + $0x18] sm:$0xff]
    %v2107 = vld [vmem:[#allocation6 + $0x20] sm:$0xff]
    %v2108 = vld [vmem:[#allocation6 + $0x28] sm:$0xff]
    %v2109 = vld [vmem:[#allocation6 + $0x30] sm:$0xff]
    %v2110 = vld [vmem:[#allocation6 + $0x38] sm:$0xff]
    %v2111 = vld [vmem:[#allocation6 + $0x40] sm:$0xff]
    %v2112 = vld [vmem:[#allocation6 + $0x48] sm:$0xff]
    %v2113 = vld [vmem:[#allocation6 + $0x50] sm:$0xff]
    %v2114 = vld [vmem:[#allocation6 + $0x58] sm:$0xff]
    %v2115 = vld [vmem:[#allocation6 + $0x60] sm:$0xff]
    %v2116 = vld [vmem:[#allocation6 + $0x68] sm:$0xff]
    %v2117 = vld [vmem:[#allocation6 + $0x70] sm:$0xff]
    %v2118 = vld [vmem:[#allocation6 + $0x78] sm:$0xff]
    %v2119 = vld [vmem:[#allocation6 + $0x80] sm:$0xff]
    %v2120 = vld [vmem:[#allocation6 + $0x88] sm:$0xff]
    %v2121 = vld [vmem:[#allocation6 + $0x90] sm:$0xff]
    %v2122 = vld [vmem:[#allocation6 + $0x98] sm:$0xff]
    %v2123 = vld [vmem:[#allocation6 + $0xa0] sm:$0xff]
    %v2124 = vld [vmem:[#allocation6 + $0xa8] sm:$0xff]
    %v2125 = vld [vmem:[#allocation6 + $0xb0] sm:$0xff]
    %v2126 = vld [vmem:[#allocation6 + $0xb8] sm:$0xff]
    %v2127 = vld [vmem:[#allocation6 + $0xc0] sm:$0xff]
    %v2128 = vld [vmem:[#allocation6 + $0xc8] sm:$0xff]
    %v2129 = vld [vmem:[#allocation6 + $0xd0] sm:$0xff]
    %v2130 = vld [vmem:[#allocation6 + $0xd8] sm:$0xff]
    %v2131 = vld [vmem:[#allocation6 + $0xe0] sm:$0xff]
    %v2132 = vld [vmem:[#allocation6 + $0xe8] sm:$0xff]
    %v2133 = vld [vmem:[#allocation6 + $0xf0] sm:$0xff]
    %v2134 = vld [vmem:[#allocation6 + $0xf8] sm:$0xff]
    %v2135 = vld [vmem:[#allocation6 + $0x100] sm:$0xff]
    %v2136 = vld [vmem:[#allocation6 + $0x108] sm:$0xff]
    %v2137 = vld [vmem:[#allocation6 + $0x110] sm:$0xff]
    %v2138 = vld [vmem:[#allocation6 + $0x118] sm:$0xff]
    %v2139 = vld [vmem:[#allocation6 + $0x120] sm:$0xff]
    %v2140 = vld [vmem:[#allocation6 + $0x128] sm:$0xff]
    %v2141 = vld [vmem:[#allocation6 + $0x130] sm:$0xff]
    %v2142 = vld [vmem:[#allocation6 + $0x138] sm:$0xff]
    %v2143 = vld [vmem:[#allocation6 + $0x140] sm:$0xff]
    %v2144 = vld [vmem:[#allocation6 + $0x148] sm:$0xff]
    %v2145 = vld [vmem:[#allocation6 + $0x150] sm:$0xff]
    %v2146 = vld [vmem:[#allocation6 + $0x158] sm:$0xff]
    %v2147 = vld [vmem:[#allocation6 + $0x160] sm:$0xff]
    %v2148 = vld [vmem:[#allocation6 + $0x168] sm:$0xff]
    %v2149 = vld [vmem:[#allocation6 + $0x170] sm:$0xff]
    %v2150 = vld [vmem:[#allocation6 + $0x178] sm:$0xff]
    %v2151 = vld [vmem:[#allocation6 + $0x180] sm:$0xff]
    %v2152 = vld [vmem:[#allocation6 + $0x188] sm:$0xff]
    %v2153 = vld [vmem:[#allocation6 + $0x190] sm:$0xff]
    %v2154 = vld [vmem:[#allocation6 + $0x198] sm:$0xff]
    %v2155 = vld [vmem:[#allocation6 + $0x1a0] sm:$0xff]
    %v2156 = vld [vmem:[#allocation6 + $0x1a8] sm:$0xff]
    %v2157 = vld [vmem:[#allocation6 + $0x1b0] sm:$0xff]
    %v2158 = vld [vmem:[#allocation6 + $0x1b8] sm:$0xff]
    %v2159 = vld [vmem:[#allocation6 + $0x1c0] sm:$0xff]
    %v2160 = vld [vmem:[#allocation6 + $0x1c8] sm:$0xff]
    %v2161 = vld [vmem:[#allocation6 + $0x1d0] sm:$0xff]
    %v2162 = vld [vmem:[#allocation6 + $0x1d8] sm:$0xff]
    %v2163 = vld [vmem:[#allocation6 + $0x1e0] sm:$0xff]
    %v2164 = vld [vmem:[#allocation6 + $0x1e8] sm:$0xff]
    %v2165 = vld [vmem:[#allocation6 + $0x1f0] sm:$0xff]
    %v2166 = vld [vmem:[#allocation6 + $0x1f8] sm:$0xff]
    %v2168 = vrot.slane %v2100, 4
    %2170 = vmatprep.subr.mxu0 %v2104
    %2171 = vmatpush1.msra.mxu0 %v2103
    %2172 = vmatprep.subr.mxu0 %v2108
    %2173 = vmatpush1.msra.mxu0 %v2107
    %2174 = vmatprep.subr.mxu0 %v2112
    %2175 = vmatpush1.msra.mxu0 %v2111
    %2176 = vmatprep.subr.mxu0 %v2116
    %2177 = vmatpush1.msra.mxu0 %v2115
    %2178 = vmatprep.subr.mxu0 %v2120
    %2179 = vmatpush1.msra.mxu0 %v2119
    %2180 = vmatprep.subr.mxu0 %v2124
    %2181 = vmatpush1.msra.mxu0 %v2123
    %2182 = vmatprep.subr.mxu0 %v2128
    %2183 = vmatpush1.msra.mxu0 %v2127
    %2184 = vmatprep.subr.mxu0 %v2132
    %2185 = vmatpush1.msra.mxu0 %v2131
    %2186 = vmatprep.subr.mxu0 %v2136
    %2187 = vmatpush1.msra.mxu0 %v2135
    %2188 = vmatprep.subr.mxu0 %v2140
    %2189 = vmatpush1.msra.mxu0 %v2139
    %2190 = vmatprep.subr.mxu0 %v2144
    %2191 = vmatpush1.msra.mxu0 %v2143
    %2192 = vmatprep.subr.mxu0 %v2148
    %2193 = vmatpush1.msra.mxu0 %v2147
    %2194 = vmatprep.subr.mxu0 %v2152
    %2195 = vmatpush1.msra.mxu0 %v2151
    %2196 = vmatprep.subr.mxu0 %v2156
    %2197 = vmatpush1.msra.mxu0 %v2155
    %2198 = vmatprep.subr.mxu0 %v2160
    %2199 = vmatpush1.msra.mxu0 %v2159
    %2200 = vmatprep.subr.mxu0 %v2164
    %2201 = vmatpush1.msra.mxu0 %v2163
    %2202 = vmatprep.subr.mxu0 0.0
    %2203 = vmatpush1.msra.mxu0 0.0
    %2204 = vmatprep.subr.mxu0 0.0
    %2205 = vmatpush1.msra.mxu0 0.0
    %2206 = vmatprep.subr.mxu0 0.0
    %2207 = vmatpush1.msra.mxu0 0.0
    %2208 = vmatprep.subr.mxu0 0.0
    %2209 = vmatpush1.msra.mxu0 0.0
    %2210 = vmatprep.subr.mxu0 0.0
    %2211 = vmatpush1.msra.mxu0 0.0
    %2212 = vmatprep.subr.mxu0 0.0
    %2213 = vmatpush1.msra.mxu0 0.0
    %2214 = vmatprep.subr.mxu0 0.0
    %2215 = vmatpush1.msra.mxu0 0.0
    %2216 = vmatprep.subr.mxu0 0.0
    %2217 = vmatpush1.msra.mxu0 0.0
    %2218 = vmatprep.subr.mxu0 0.0
    %2219 = vmatpush1.msra.mxu0 0.0
    %2220 = vmatprep.subr.mxu0 0.0
    %2221 = vmatpush1.msra.mxu0 0.0
    %2222 = vmatprep.subr.mxu0 0.0
    %2223 = vmatpush1.msra.mxu0 0.0
    %2224 = vmatprep.subr.mxu0 0.0
    %2225 = vmatpush1.msra.mxu0 0.0
    %2226 = vmatprep.subr.mxu0 0.0
    %2227 = vmatpush1.msra.mxu0 0.0
    %2228 = vmatprep.subr.mxu0 0.0
    %2229 = vmatpush1.msra.mxu0 0.0
    %2230 = vmatprep.subr.mxu0 0.0
    %2231 = vmatpush1.msra.mxu0 0.0
    %2232 = vmatprep.subr.mxu0 0.0
    %2233 = vmatpush1.msra.mxu0 0.0
    %2234 = vmatprep.mubr.f32.mxu0 0.0
    %2235 = vmatmul.mubr.f32.gmra.mrb[0].mxu0 %v2168
    %v2236 = vpop.f32.mrb[0].mxu0
    %v2237 = vadd.f32 0.0, %v2236
    %v2238 = vpop.f32.mrb[0].mxu0
    %v2239 = vadd.f32 0.0, %v2238
    %2240 = vdwg.mxu0
    %2241 = vmatprep.subr.mxu0 %v2106
    %2242 = vmatpush1.msra.mxu0 %v2105
    %2243 = vmatprep.subr.mxu0 %v2110
    %2244 = vmatpush1.msra.mxu0 %v2109
    %2245 = vmatprep.subr.mxu0 %v2114
    %2246 = vmatpush1.msra.mxu0 %v2113
    %2247 = vmatprep.subr.mxu0 %v2118
    %2248 = vmatpush1.msra.mxu0 %v2117
    %2249 = vmatprep.subr.mxu0 %v2122
    %2250 = vmatpush1.msra.mxu0 %v2121
    %2251 = vmatprep.subr.mxu0 %v2126
    %2252 = vmatpush1.msra.mxu0 %v2125
    %2253 = vmatprep.subr.mxu0 %v2130
    %2254 = vmatpush1.msra.mxu0 %v2129
    %2255 = vmatprep.subr.mxu0 %v2134
    %2256 = vmatpush1.msra.mxu0 %v2133
    %2257 = vmatprep.subr.mxu0 %v2138
    %2258 = vmatpush1.msra.mxu0 %v2137
    %2259 = vmatprep.subr.mxu0 %v2142
    %2260 = vmatpush1.msra.mxu0 %v2141
    %2261 = vmatprep.subr.mxu0 %v2146
    %2262 = vmatpush1.msra.mxu0 %v2145
    %2263 = vmatprep.subr.mxu0 %v2150
    %2264 = vmatpush1.msra.mxu0 %v2149
    %2265 = vmatprep.subr.mxu0 %v2154
    %2266 = vmatpush1.msra.mxu0 %v2153
    %2267 = vmatprep.subr.mxu0 %v2158
    %2268 = vmatpush1.msra.mxu0 %v2157
    %2269 = vmatprep.subr.mxu0 %v2162
    %2270 = vmatpush1.msra.mxu0 %v2161
    %2271 = vmatprep.subr.mxu0 %v2166
    %2272 = vmatpush1.msra.mxu0 %v2165
    %2273 = vmatprep.subr.mxu0 0.0
    %2274 = vmatpush1.msra.mxu0 0.0
    %2275 = vmatprep.subr.mxu0 0.0
    %2276 = vmatpush1.msra.mxu0 0.0
    %2277 = vmatprep.subr.mxu0 0.0
    %2278 = vmatpush1.msra.mxu0 0.0
    %2279 = vmatprep.subr.mxu0 0.0
    %2280 = vmatpush1.msra.mxu0 0.0
    %2281 = vmatprep.subr.mxu0 0.0
    %2282 = vmatpush1.msra.mxu0 0.0
    %2283 = vmatprep.subr.mxu0 0.0
    %2284 = vmatpush1.msra.mxu0 0.0
    %2285 = vmatprep.subr.mxu0 0.0
    %2286 = vmatpush1.msra.mxu0 0.0
    %2287 = vmatprep.subr.mxu0 0.0
    %2288 = vmatpush1.msra.mxu0 0.0
    %2289 = vmatprep.subr.mxu0 0.0
    %2290 = vmatpush1.msra.mxu0 0.0
    %2291 = vmatprep.subr.mxu0 0.0
    %2292 = vmatpush1.msra.mxu0 0.0
    %2293 = vmatprep.subr.mxu0 0.0
    %2294 = vmatpush1.msra.mxu0 0.0
    %2295 = vmatprep.subr.mxu0 0.0
    %2296 = vmatpush1.msra.mxu0 0.0
    %2297 = vmatprep.subr.mxu0 0.0
    %2298 = vmatpush1.msra.mxu0 0.0
    %2299 = vmatprep.subr.mxu0 0.0
    %2300 = vmatpush1.msra.mxu0 0.0
    %2301 = vmatprep.subr.mxu0 0.0
    %2302 = vmatpush1.msra.mxu0 0.0
    %2303 = vmatprep.subr.mxu0 0.0
    %2304 = vmatpush1.msra.mxu0 0.0
    %2305 = vmatprep.mubr.f32.mxu0 0.0
    %2306 = vmatmul.mubr.f32.gmra.mrb[0].mxu0 %v2168
    %v2307 = vpop.f32.mrb[0].mxu0
    %v2308 = vadd.f32 0.0, %v2307
    %v2309 = vpop.f32.mrb[0].mxu0
    %v2310 = vadd.f32 0.0, %v2309
    %2311 = vdwg.mxu0
    %v2316 = vrot.slane %v2237, 2
    %v2317 = vrot.slane %v2239, 2
    %v2318 = vrot.slane %v2308, 2
    %v2319 = vrot.slane %v2310, 2
    %v2324 = vadd.f32 %v280, %v2316
    %v2325 = vadd.f32 %v282, %v2317
    %v2326 = vadd.f32 %v357, %v2318
    %v2327 = vadd.f32 %v359, %v2319
    %v2328 = vxor.u32 %v2324, 2147483648
    %v2329 = vxor.u32 %v2325, 2147483648
    %v2330 = vxor.u32 %v2326, 2147483648
    %v2331 = vmul.f32 %v2328, 1.442695
    %v2332 = vpow.pop %v2331
    %v2333 = vmul.f32 %v2329, 1.442695
    %v2334 = vpow.pop %v2333
    %v2335 = vmul.f32 %v2330, 1.442695
    %v2336 = vpow.pop %v2335
    %v2337 = vadd.f32 %v2332, 1.0
    %v2338 = vadd.f32 %v2334, 1.0
    %v2339 = vadd.f32 %v2336, 1.0
    %v2340 = vrcp.pop %v2337
    %v2341 = vmul.f32 1.0, %v2340
    %v2342 = vrcp.pop %v2338
    %v2343 = vmul.f32 1.0, %v2342
    %v2344 = vrcp.pop %v2339
    %v2345 = vmul.f32 1.0, %v2344
    %v2346 = vtanh.pop %v2327
    %v2348 = vrot.slane %v2098, 6
    %v2350 = vmul.f32 %v2343, %v2348
    %v2351 = vmul.f32 %v2341, %v2346
    %v2352 = vadd.f32 %v2350, %v2351
    %v2353 = vtanh.pop %v2352
    %v2354 = vmul.f32 %v2345, %v2353
    %v2355 = vtanh.pop %v2354
    %2356 = vst [vmem:[#allocation2 + $0x8] sm:$0xc0] %v2355
    %v2357 = vld [vmem:[#allocation2] sm:$0xff]
    %v2358 = vld [vmem:[#allocation2 + $0x8] sm:$0xff]
    %v2359 = vld [vmem:[#allocation8] sm:$0xff]
    %v2360 = vld [vmem:[#allocation8 + $0x8] sm:$0xff]
    %v2361 = vld [vmem:[#allocation8 + $0x10] sm:$0xff]
    %v2362 = vld [vmem:[#allocation8 + $0x18] sm:$0xff]
    %v2363 = vld [vmem:[#allocation8 + $0x20] sm:$0xff]
    %v2364 = vld [vmem:[#allocation8 + $0x28] sm:$0xff]
    %v2365 = vld [vmem:[#allocation8 + $0x30] sm:$0xff]
    %v2366 = vld [vmem:[#allocation8 + $0x38] sm:$0xff]
    %v2367 = vld [vmem:[#allocation8 + $0x40] sm:$0xff]
    %v2368 = vld [vmem:[#allocation8 + $0x48] sm:$0xff]
    %v2369 = vld [vmem:[#allocation8 + $0x50] sm:$0xff]
    %v2370 = vld [vmem:[#allocation8 + $0x58] sm:$0xff]
    %v2371 = vld [vmem:[#allocation8 + $0x60] sm:$0xff]
    %v2372 = vld [vmem:[#allocation8 + $0x68] sm:$0xff]
    %v2373 = vld [vmem:[#allocation8 + $0x70] sm:$0xff]
    %v2374 = vld [vmem:[#allocation8 + $0x78] sm:$0xff]
    %v2375 = vld [vmem:[#allocation8 + $0x80] sm:$0xff]
    %v2376 = vld [vmem:[#allocation8 + $0x88] sm:$0xff]
    %v2377 = vld [vmem:[#allocation8 + $0x90] sm:$0xff]
    %v2378 = vld [vmem:[#allocation8 + $0x98] sm:$0xff]
    %v2379 = vld [vmem:[#allocation8 + $0xa0] sm:$0xff]
    %v2380 = vld [vmem:[#allocation8 + $0xa8] sm:$0xff]
    %v2381 = vld [vmem:[#allocation8 + $0xb0] sm:$0xff]
    %v2382 = vld [vmem:[#allocation8 + $0xb8] sm:$0xff]
    %v2383 = vld [vmem:[#allocation8 + $0xc0] sm:$0xff]
    %v2384 = vld [vmem:[#allocation8 + $0xc8] sm:$0xff]
    %v2385 = vld [vmem:[#allocation8 + $0xd0] sm:$0xff]
    %v2386 = vld [vmem:[#allocation8 + $0xd8] sm:$0xff]
    %v2387 = vld [vmem:[#allocation8 + $0xe0] sm:$0xff]
    %v2388 = vld [vmem:[#allocation8 + $0xe8] sm:$0xff]
    %v2389 = vld [vmem:[#allocation8 + $0xf0] sm:$0xff]
    %v2390 = vld [vmem:[#allocation8 + $0xf8] sm:$0xff]
    %v2391 = vld [vmem:[#allocation8 + $0x100] sm:$0xff]
    %v2392 = vld [vmem:[#allocation8 + $0x108] sm:$0xff]
    %v2393 = vld [vmem:[#allocation8 + $0x110] sm:$0xff]
    %v2394 = vld [vmem:[#allocation8 + $0x118] sm:$0xff]
    %v2395 = vld [vmem:[#allocation8 + $0x120] sm:$0xff]
    %v2396 = vld [vmem:[#allocation8 + $0x128] sm:$0xff]
    %v2397 = vld [vmem:[#allocation8 + $0x130] sm:$0xff]
    %v2398 = vld [vmem:[#allocation8 + $0x138] sm:$0xff]
    %v2399 = vld [vmem:[#allocation8 + $0x140] sm:$0xff]
    %v2400 = vld [vmem:[#allocation8 + $0x148] sm:$0xff]
    %v2401 = vld [vmem:[#allocation8 + $0x150] sm:$0xff]
    %v2402 = vld [vmem:[#allocation8 + $0x158] sm:$0xff]
    %v2403 = vld [vmem:[#allocation8 + $0x160] sm:$0xff]
    %v2404 = vld [vmem:[#allocation8 + $0x168] sm:$0xff]
    %v2405 = vld [vmem:[#allocation8 + $0x170] sm:$0xff]
    %v2406 = vld [vmem:[#allocation8 + $0x178] sm:$0xff]
    %v2407 = vld [vmem:[#allocation8 + $0x180] sm:$0xff]
    %v2408 = vld [vmem:[#allocation8 + $0x188] sm:$0xff]
    %v2409 = vld [vmem:[#allocation8 + $0x190] sm:$0xff]
    %v2410 = vld [vmem:[#allocation8 + $0x198] sm:$0xff]
    %v2411 = vld [vmem:[#allocation8 + $0x1a0] sm:$0xff]
    %v2412 = vld [vmem:[#allocation8 + $0x1a8] sm:$0xff]
    %v2413 = vld [vmem:[#allocation8 + $0x1b0] sm:$0xff]
    %v2414 = vld [vmem:[#allocation8 + $0x1b8] sm:$0xff]
    %v2415 = vld [vmem:[#allocation8 + $0x1c0] sm:$0xff]
    %v2416 = vld [vmem:[#allocation8 + $0x1c8] sm:$0xff]
    %v2417 = vld [vmem:[#allocation8 + $0x1d0] sm:$0xff]
    %v2418 = vld [vmem:[#allocation8 + $0x1d8] sm:$0xff]
    %v2419 = vld [vmem:[#allocation8 + $0x1e0] sm:$0xff]
    %v2420 = vld [vmem:[#allocation8 + $0x1e8] sm:$0xff]
    %v2421 = vld [vmem:[#allocation8 + $0x1f0] sm:$0xff]
    %v2422 = vld [vmem:[#allocation8 + $0x1f8] sm:$0xff]
    %v2423 = vld [vmem:[%s6] sm:$0xf]
    %v2425 = vlaneseq
    %v2426 = vshrl.u32 %v2425, 7
    %v2427 = vsub.s32 0, %v2426
    %v2428 = vrot.slane %v2423, %v2427
    %v2429 = vlaneseq
    %v2430 = vshrl.u32 %v2429, 7
    %v2431 = vsub.s32 1, %v2430
    %v2432 = vrot.slane %v2423, %v2431
    %v2433 = vlaneseq
    %v2434 = vshrl.u32 %v2433, 7
    %v2435 = vsub.s32 2, %v2434
    %v2436 = vrot.slane %v2423, %v2435
    %v2437 = vlaneseq
    %v2438 = vshrl.u32 %v2437, 7
    %v2439 = vsub.s32 3, %v2438
    %v2440 = vrot.slane %v2423, %v2439
    %2445 = vmatprep.subr.mxu0 %v2360
    %2446 = vmatpush1.msra.mxu0 %v2359
    %2447 = vmatprep.subr.mxu0 %v2364
    %2448 = vmatpush1.msra.mxu0 %v2363
    %2449 = vmatprep.subr.mxu0 %v2368
    %2450 = vmatpush1.msra.mxu0 %v2367
    %2451 = vmatprep.subr.mxu0 %v2372
    %2452 = vmatpush1.msra.mxu0 %v2371
    %2453 = vmatprep.subr.mxu0 %v2376
    %2454 = vmatpush1.msra.mxu0 %v2375
    %2455 = vmatprep.subr.mxu0 %v2380
    %2456 = vmatpush1.msra.mxu0 %v2379
    %2457 = vmatprep.subr.mxu0 %v2384
    %2458 = vmatpush1.msra.mxu0 %v2383
    %2459 = vmatprep.subr.mxu0 %v2388
    %2460 = vmatpush1.msra.mxu0 %v2387
    %2461 = vmatprep.subr.mxu0 %v2392
    %2462 = vmatpush1.msra.mxu0 %v2391
    %2463 = vmatprep.subr.mxu0 %v2396
    %2464 = vmatpush1.msra.mxu0 %v2395
    %2465 = vmatprep.subr.mxu0 %v2400
    %2466 = vmatpush1.msra.mxu0 %v2399
    %2467 = vmatprep.subr.mxu0 %v2404
    %2468 = vmatpush1.msra.mxu0 %v2403
    %2469 = vmatprep.subr.mxu0 %v2408
    %2470 = vmatpush1.msra.mxu0 %v2407
    %2471 = vmatprep.subr.mxu0 %v2412
    %2472 = vmatpush1.msra.mxu0 %v2411
    %2473 = vmatprep.subr.mxu0 %v2416
    %2474 = vmatpush1.msra.mxu0 %v2415
    %2475 = vmatprep.subr.mxu0 %v2420
    %2476 = vmatpush1.msra.mxu0 %v2419
    %2477 = vmatprep.subr.mxu0 0.0
    %2478 = vmatpush1.msra.mxu0 0.0
    %2479 = vmatprep.subr.mxu0 0.0
    %2480 = vmatpush1.msra.mxu0 0.0
    %2481 = vmatprep.subr.mxu0 0.0
    %2482 = vmatpush1.msra.mxu0 0.0
    %2483 = vmatprep.subr.mxu0 0.0
    %2484 = vmatpush1.msra.mxu0 0.0
    %2485 = vmatprep.subr.mxu0 0.0
    %2486 = vmatpush1.msra.mxu0 0.0
    %2487 = vmatprep.subr.mxu0 0.0
    %2488 = vmatpush1.msra.mxu0 0.0
    %2489 = vmatprep.subr.mxu0 0.0
    %2490 = vmatpush1.msra.mxu0 0.0
    %2491 = vmatprep.subr.mxu0 0.0
    %2492 = vmatpush1.msra.mxu0 0.0
    %2493 = vmatprep.subr.mxu0 0.0
    %2494 = vmatpush1.msra.mxu0 0.0
    %2495 = vmatprep.subr.mxu0 0.0
    %2496 = vmatpush1.msra.mxu0 0.0
    %2497 = vmatprep.subr.mxu0 0.0
    %2498 = vmatpush1.msra.mxu0 0.0
    %2499 = vmatprep.subr.mxu0 0.0
    %2500 = vmatpush1.msra.mxu0 0.0
    %2501 = vmatprep.subr.mxu0 0.0
    %2502 = vmatpush1.msra.mxu0 0.0
    %2503 = vmatprep.subr.mxu0 0.0
    %2504 = vmatpush1.msra.mxu0 0.0
    %2505 = vmatprep.subr.mxu0 0.0
    %2506 = vmatpush1.msra.mxu0 0.0
    %2507 = vmatprep.subr.mxu0 0.0
    %2508 = vmatpush1.msra.mxu0 0.0
    %2509 = vmatprep.mubr.f32.mxu0 0.0
    %2510 = vmatmul.mubr.f32.gmra.mrb[0].mxu0 %v2357
    %v2511 = vpop.f32.mrb[0].mxu0
    %v2512 = vadd.f32 %v2428, %v2511
    %v2513 = vpop.f32.mrb[0].mxu0
    %v2514 = vadd.f32 %v2432, %v2513
    %2515 = vmatprep.mubr.f32.mxu0 0.0
    %2516 = vmatmul.mubr.f32.gmra.mrb[0].mxu0 %v2358
    %v2517 = vpop.f32.mrb[0].mxu0
    %v2518 = vadd.f32 %v2428, %v2517
    %v2519 = vpop.f32.mrb[0].mxu0
    %v2520 = vadd.f32 %v2432, %v2519
    %2521 = vdwg.mxu0
    %2522 = vmatprep.subr.mxu0 %v2362
    %2523 = vmatpush1.msra.mxu0 %v2361
    %2524 = vmatprep.subr.mxu0 %v2366
    %2525 = vmatpush1.msra.mxu0 %v2365
    %2526 = vmatprep.subr.mxu0 %v2370
    %2527 = vmatpush1.msra.mxu0 %v2369
    %2528 = vmatprep.subr.mxu0 %v2374
    %2529 = vmatpush1.msra.mxu0 %v2373
    %2530 = vmatprep.subr.mxu0 %v2378
    %2531 = vmatpush1.msra.mxu0 %v2377
    %2532 = vmatprep.subr.mxu0 %v2382
    %2533 = vmatpush1.msra.mxu0 %v2381
    %2534 = vmatprep.subr.mxu0 %v2386
    %2535 = vmatpush1.msra.mxu0 %v2385
    %2536 = vmatprep.subr.mxu0 %v2390
    %2537 = vmatpush1.msra.mxu0 %v2389
    %2538 = vmatprep.subr.mxu0 %v2394
    %2539 = vmatpush1.msra.mxu0 %v2393
    %2540 = vmatprep.subr.mxu0 %v2398
    %2541 = vmatpush1.msra.mxu0 %v2397
    %2542 = vmatprep.subr.mxu0 %v2402
    %2543 = vmatpush1.msra.mxu0 %v2401
    %2544 = vmatprep.subr.mxu0 %v2406
    %2545 = vmatpush1.msra.mxu0 %v2405
    %2546 = vmatprep.subr.mxu0 %v2410
    %2547 = vmatpush1.msra.mxu0 %v2409
    %2548 = vmatprep.subr.mxu0 %v2414
    %2549 = vmatpush1.msra.mxu0 %v2413
    %2550 = vmatprep.subr.mxu0 %v2418
    %2551 = vmatpush1.msra.mxu0 %v2417
    %2552 = vmatprep.subr.mxu0 %v2422
    %2553 = vmatpush1.msra.mxu0 %v2421
    %2554 = vmatprep.subr.mxu0 0.0
    %2555 = vmatpush1.msra.mxu0 0.0
    %2556 = vmatprep.subr.mxu0 0.0
    %2557 = vmatpush1.msra.mxu0 0.0
    %2558 = vmatprep.subr.mxu0 0.0
    %2559 = vmatpush1.msra.mxu0 0.0
    %2560 = vmatprep.subr.mxu0 0.0
    %2561 = vmatpush1.msra.mxu0 0.0
    %2562 = vmatprep.subr.mxu0 0.0
    %2563 = vmatpush1.msra.mxu0 0.0
    %2564 = vmatprep.subr.mxu0 0.0
    %2565 = vmatpush1.msra.mxu0 0.0
    %2566 = vmatprep.subr.mxu0 0.0
    %2567 = vmatpush1.msra.mxu0 0.0
    %2568 = vmatprep.subr.mxu0 0.0
    %2569 = vmatpush1.msra.mxu0 0.0
    %2570 = vmatprep.subr.mxu0 0.0
    %2571 = vmatpush1.msra.mxu0 0.0
    %2572 = vmatprep.subr.mxu0 0.0
    %2573 = vmatpush1.msra.mxu0 0.0
    %2574 = vmatprep.subr.mxu0 0.0
    %2575 = vmatpush1.msra.mxu0 0.0
    %2576 = vmatprep.subr.mxu0 0.0
    %2577 = vmatpush1.msra.mxu0 0.0
    %2578 = vmatprep.subr.mxu0 0.0
    %2579 = vmatpush1.msra.mxu0 0.0
    %2580 = vmatprep.subr.mxu0 0.0
    %2581 = vmatpush1.msra.mxu0 0.0
    %2582 = vmatprep.subr.mxu0 0.0
    %2583 = vmatpush1.msra.mxu0 0.0
    %2584 = vmatprep.subr.mxu0 0.0
    %2585 = vmatpush1.msra.mxu0 0.0
    %2586 = vmatprep.mubr.f32.mxu0 0.0
    %2587 = vmatmul.mubr.f32.gmra.mrb[0].mxu0 %v2357
    %v2588 = vpop.f32.mrb[0].mxu0
    %v2589 = vadd.f32 %v2436, %v2588
    %v2590 = vpop.f32.mrb[0].mxu0
    %v2591 = vadd.f32 %v2440, %v2590
    %2592 = vmatprep.mubr.f32.mxu0 0.0
    %2593 = vmatmul.mubr.f32.gmra.mrb[0].mxu0 %v2358
    %v2594 = vpop.f32.mrb[0].mxu0
    %v2595 = vadd.f32 %v2436, %v2594
    %v2596 = vpop.f32.mrb[0].mxu0
    %v2597 = vadd.f32 %v2440, %v2596
    %2598 = vdwg.mxu0
    %v2599 = vld [vmem:[#allocation9] sm:$0xff]
    %v2600 = vld [vmem:[#allocation9 + $0x8] sm:$0xff]
    %v2601 = vld [vmem:[#allocation9 + $0x10] sm:$0xff]
    %v2602 = vld [vmem:[#allocation9 + $0x18] sm:$0xff]
    %v2603 = vld [vmem:[#allocation9 + $0x20] sm:$0xff]
    %v2604 = vld [vmem:[#allocation9 + $0x28] sm:$0xff]
    %v2605 = vld [vmem:[#allocation9 + $0x30] sm:$0xff]
    %v2606 = vld [vmem:[#allocation9 + $0x38] sm:$0xff]
    %v2607 = vld [vmem:[#allocation9 + $0x40] sm:$0xff]
    %v2608 = vld [vmem:[#allocation9 + $0x48] sm:$0xff]
    %v2609 = vld [vmem:[#allocation9 + $0x50] sm:$0xff]
    %v2610 = vld [vmem:[#allocation9 + $0x58] sm:$0xff]
    %v2611 = vld [vmem:[#allocation9 + $0x60] sm:$0xff]
    %v2612 = vld [vmem:[#allocation9 + $0x68] sm:$0xff]
    %v2613 = vld [vmem:[#allocation9 + $0x70] sm:$0xff]
    %v2614 = vld [vmem:[#allocation9 + $0x78] sm:$0xff]
    %v2615 = vld [vmem:[#allocation9 + $0x80] sm:$0xff]
    %v2616 = vld [vmem:[#allocation9 + $0x88] sm:$0xff]
    %v2617 = vld [vmem:[#allocation9 + $0x90] sm:$0xff]
    %v2618 = vld [vmem:[#allocation9 + $0x98] sm:$0xff]
    %v2619 = vld [vmem:[#allocation9 + $0xa0] sm:$0xff]
    %v2620 = vld [vmem:[#allocation9 + $0xa8] sm:$0xff]
    %v2621 = vld [vmem:[#allocation9 + $0xb0] sm:$0xff]
    %v2622 = vld [vmem:[#allocation9 + $0xb8] sm:$0xff]
    %v2623 = vld [vmem:[#allocation9 + $0xc0] sm:$0xff]
    %v2624 = vld [vmem:[#allocation9 + $0xc8] sm:$0xff]
    %v2625 = vld [vmem:[#allocation9 + $0xd0] sm:$0xff]
    %v2626 = vld [vmem:[#allocation9 + $0xd8] sm:$0xff]
    %v2627 = vld [vmem:[#allocation9 + $0xe0] sm:$0xff]
    %v2628 = vld [vmem:[#allocation9 + $0xe8] sm:$0xff]
    %v2629 = vld [vmem:[#allocation9 + $0xf0] sm:$0xff]
    %v2630 = vld [vmem:[#allocation9 + $0xf8] sm:$0xff]
    %v2631 = vld [vmem:[#allocation9 + $0x100] sm:$0xff]
    %v2632 = vld [vmem:[#allocation9 + $0x108] sm:$0xff]
    %v2633 = vld [vmem:[#allocation9 + $0x110] sm:$0xff]
    %v2634 = vld [vmem:[#allocation9 + $0x118] sm:$0xff]
    %v2635 = vld [vmem:[#allocation9 + $0x120] sm:$0xff]
    %v2636 = vld [vmem:[#allocation9 + $0x128] sm:$0xff]
    %v2637 = vld [vmem:[#allocation9 + $0x130] sm:$0xff]
    %v2638 = vld [vmem:[#allocation9 + $0x138] sm:$0xff]
    %v2639 = vld [vmem:[#allocation9 + $0x140] sm:$0xff]
    %v2640 = vld [vmem:[#allocation9 + $0x148] sm:$0xff]
    %v2641 = vld [vmem:[#allocation9 + $0x150] sm:$0xff]
    %v2642 = vld [vmem:[#allocation9 + $0x158] sm:$0xff]
    %v2643 = vld [vmem:[#allocation9 + $0x160] sm:$0xff]
    %v2644 = vld [vmem:[#allocation9 + $0x168] sm:$0xff]
    %v2645 = vld [vmem:[#allocation9 + $0x170] sm:$0xff]
    %v2646 = vld [vmem:[#allocation9 + $0x178] sm:$0xff]
    %v2647 = vld [vmem:[#allocation9 + $0x180] sm:$0xff]
    %v2648 = vld [vmem:[#allocation9 + $0x188] sm:$0xff]
    %v2649 = vld [vmem:[#allocation9 + $0x190] sm:$0xff]
    %v2650 = vld [vmem:[#allocation9 + $0x198] sm:$0xff]
    %v2651 = vld [vmem:[#allocation9 + $0x1a0] sm:$0xff]
    %v2652 = vld [vmem:[#allocation9 + $0x1a8] sm:$0xff]
    %v2653 = vld [vmem:[#allocation9 + $0x1b0] sm:$0xff]
    %v2654 = vld [vmem:[#allocation9 + $0x1b8] sm:$0xff]
    %v2655 = vld [vmem:[#allocation9 + $0x1c0] sm:$0xff]
    %v2656 = vld [vmem:[#allocation9 + $0x1c8] sm:$0xff]
    %v2657 = vld [vmem:[#allocation9 + $0x1d0] sm:$0xff]
    %v2658 = vld [vmem:[#allocation9 + $0x1d8] sm:$0xff]
    %v2659 = vld [vmem:[#allocation9 + $0x1e0] sm:$0xff]
    %v2660 = vld [vmem:[#allocation9 + $0x1e8] sm:$0xff]
    %v2661 = vld [vmem:[#allocation9 + $0x1f0] sm:$0xff]
    %v2662 = vld [vmem:[#allocation9 + $0x1f8] sm:$0xff]
    %2663 = vmatprep.subr.mxu0 %v2600
    %2664 = vmatpush1.msra.mxu0 %v2599
    %2665 = vmatprep.subr.mxu0 %v2604
    %2666 = vmatpush1.msra.mxu0 %v2603
    %2667 = vmatprep.subr.mxu0 %v2608
    %2668 = vmatpush1.msra.mxu0 %v2607
    %2669 = vmatprep.subr.mxu0 %v2612
    %2670 = vmatpush1.msra.mxu0 %v2611
    %2671 = vmatprep.subr.mxu0 %v2616
    %2672 = vmatpush1.msra.mxu0 %v2615
    %2673 = vmatprep.subr.mxu0 %v2620
    %2674 = vmatpush1.msra.mxu0 %v2619
    %2675 = vmatprep.subr.mxu0 %v2624
    %2676 = vmatpush1.msra.mxu0 %v2623
    %2677 = vmatprep.subr.mxu0 %v2628
    %2678 = vmatpush1.msra.mxu0 %v2627
    %2679 = vmatprep.subr.mxu0 %v2632
    %2680 = vmatpush1.msra.mxu0 %v2631
    %2681 = vmatprep.subr.mxu0 %v2636
    %2682 = vmatpush1.msra.mxu0 %v2635
    %2683 = vmatprep.subr.mxu0 %v2640
    %2684 = vmatpush1.msra.mxu0 %v2639
    %2685 = vmatprep.subr.mxu0 %v2644
    %2686 = vmatpush1.msra.mxu0 %v2643
    %2687 = vmatprep.subr.mxu0 %v2648
    %2688 = vmatpush1.msra.mxu0 %v2647
    %2689 = vmatprep.subr.mxu0 %v2652
    %2690 = vmatpush1.msra.mxu0 %v2651
    %2691 = vmatprep.subr.mxu0 %v2656
    %2692 = vmatpush1.msra.mxu0 %v2655
    %2693 = vmatprep.subr.mxu0 %v2660
    %2694 = vmatpush1.msra.mxu0 %v2659
    %2695 = vmatprep.subr.mxu0 0.0
    %2696 = vmatpush1.msra.mxu0 0.0
    %2697 = vmatprep.subr.mxu0 0.0
    %2698 = vmatpush1.msra.mxu0 0.0
    %2699 = vmatprep.subr.mxu0 0.0
    %2700 = vmatpush1.msra.mxu0 0.0
    %2701 = vmatprep.subr.mxu0 0.0
    %2702 = vmatpush1.msra.mxu0 0.0
    %2703 = vmatprep.subr.mxu0 0.0
    %2704 = vmatpush1.msra.mxu0 0.0
    %2705 = vmatprep.subr.mxu0 0.0
    %2706 = vmatpush1.msra.mxu0 0.0
    %2707 = vmatprep.subr.mxu0 0.0
    %2708 = vmatpush1.msra.mxu0 0.0
    %2709 = vmatprep.subr.mxu0 0.0
    %2710 = vmatpush1.msra.mxu0 0.0
    %2711 = vmatprep.subr.mxu0 0.0
    %2712 = vmatpush1.msra.mxu0 0.0
    %2713 = vmatprep.subr.mxu0 0.0
    %2714 = vmatpush1.msra.mxu0 0.0
    %2715 = vmatprep.subr.mxu0 0.0
    %2716 = vmatpush1.msra.mxu0 0.0
    %2717 = vmatprep.subr.mxu0 0.0
    %2718 = vmatpush1.msra.mxu0 0.0
    %2719 = vmatprep.subr.mxu0 0.0
    %2720 = vmatpush1.msra.mxu0 0.0
    %2721 = vmatprep.subr.mxu0 0.0
    %2722 = vmatpush1.msra.mxu0 0.0
    %2723 = vmatprep.subr.mxu0 0.0
    %2724 = vmatpush1.msra.mxu0 0.0
    %2725 = vmatprep.subr.mxu0 0.0
    %2726 = vmatpush1.msra.mxu0 0.0
    %2727 = vmatprep.mubr.f32.mxu0 0.0
    %2728 = vmatmul.mubr.f32.gmra.mrb[0].mxu0 0.0
    %v2729 = vpop.f32.mrb[0].mxu0
    %v2730 = vadd.f32 0.0, %v2729
    %v2731 = vpop.f32.mrb[0].mxu0
    %v2732 = vadd.f32 0.0, %v2731
    %2733 = vdwg.mxu0
    %2734 = vmatprep.subr.mxu0 %v2602
    %2735 = vmatpush1.msra.mxu0 %v2601
    %2736 = vmatprep.subr.mxu0 %v2606
    %2737 = vmatpush1.msra.mxu0 %v2605
    %2738 = vmatprep.subr.mxu0 %v2610
    %2739 = vmatpush1.msra.mxu0 %v2609
    %2740 = vmatprep.subr.mxu0 %v2614
    %2741 = vmatpush1.msra.mxu0 %v2613
    %2742 = vmatprep.subr.mxu0 %v2618
    %2743 = vmatpush1.msra.mxu0 %v2617
    %2744 = vmatprep.subr.mxu0 %v2622
    %2745 = vmatpush1.msra.mxu0 %v2621
    %2746 = vmatprep.subr.mxu0 %v2626
    %2747 = vmatpush1.msra.mxu0 %v2625
    %2748 = vmatprep.subr.mxu0 %v2630
    %2749 = vmatpush1.msra.mxu0 %v2629
    %2750 = vmatprep.subr.mxu0 %v2634
    %2751 = vmatpush1.msra.mxu0 %v2633
    %2752 = vmatprep.subr.mxu0 %v2638
    %2753 = vmatpush1.msra.mxu0 %v2637
    %2754 = vmatprep.subr.mxu0 %v2642
    %2755 = vmatpush1.msra.mxu0 %v2641
    %2756 = vmatprep.subr.mxu0 %v2646
    %2757 = vmatpush1.msra.mxu0 %v2645
    %2758 = vmatprep.subr.mxu0 %v2650
    %2759 = vmatpush1.msra.mxu0 %v2649
    %2760 = vmatprep.subr.mxu0 %v2654
    %2761 = vmatpush1.msra.mxu0 %v2653
    %2762 = vmatprep.subr.mxu0 %v2658
    %2763 = vmatpush1.msra.mxu0 %v2657
    %2764 = vmatprep.subr.mxu0 %v2662
    %2765 = vmatpush1.msra.mxu0 %v2661
    %2766 = vmatprep.subr.mxu0 0.0
    %2767 = vmatpush1.msra.mxu0 0.0
    %2768 = vmatprep.subr.mxu0 0.0
    %2769 = vmatpush1.msra.mxu0 0.0
    %2770 = vmatprep.subr.mxu0 0.0
    %2771 = vmatpush1.msra.mxu0 0.0
    %2772 = vmatprep.subr.mxu0 0.0
    %2773 = vmatpush1.msra.mxu0 0.0
    %2774 = vmatprep.subr.mxu0 0.0
    %2775 = vmatpush1.msra.mxu0 0.0
    %2776 = vmatprep.subr.mxu0 0.0
    %2777 = vmatpush1.msra.mxu0 0.0
    %2778 = vmatprep.subr.mxu0 0.0
    %2779 = vmatpush1.msra.mxu0 0.0
    %2780 = vmatprep.subr.mxu0 0.0
    %2781 = vmatpush1.msra.mxu0 0.0
    %2782 = vmatprep.subr.mxu0 0.0
    %2783 = vmatpush1.msra.mxu0 0.0
    %2784 = vmatprep.subr.mxu0 0.0
    %2785 = vmatpush1.msra.mxu0 0.0
    %2786 = vmatprep.subr.mxu0 0.0
    %2787 = vmatpush1.msra.mxu0 0.0
    %2788 = vmatprep.subr.mxu0 0.0
    %2789 = vmatpush1.msra.mxu0 0.0
    %2790 = vmatprep.subr.mxu0 0.0
    %2791 = vmatpush1.msra.mxu0 0.0
    %2792 = vmatprep.subr.mxu0 0.0
    %2793 = vmatpush1.msra.mxu0 0.0
    %2794 = vmatprep.subr.mxu0 0.0
    %2795 = vmatpush1.msra.mxu0 0.0
    %2796 = vmatprep.subr.mxu0 0.0
    %2797 = vmatpush1.msra.mxu0 0.0
    %2798 = vmatprep.mubr.f32.mxu0 0.0
    %2799 = vmatmul.mubr.f32.gmra.mrb[0].mxu0 0.0
    %v2800 = vpop.f32.mrb[0].mxu0
    %v2801 = vadd.f32 0.0, %v2800
    %v2802 = vpop.f32.mrb[0].mxu0
    %v2803 = vadd.f32 0.0, %v2802
    %2804 = vdwg.mxu0
    %v2805 = vadd.f32 %v2512, %v2730
    %v2806 = vadd.f32 %v2514, %v2732
    %v2807 = vadd.f32 %v2589, %v2801
    %v2808 = vadd.f32 %v2591, %v2803
    %v2809 = vxor.u32 %v2805, 2147483648
    %v2810 = vxor.u32 %v2806, 2147483648
    %v2811 = vxor.u32 %v2807, 2147483648
    %v2812 = vmul.f32 %v2809, 1.442695
    %v2813 = vpow.pop %v2812
    %v2814 = vmul.f32 %v2810, 1.442695
    %v2815 = vpow.pop %v2814
    %v2816 = vmul.f32 %v2811, 1.442695
    %v2817 = vpow.pop %v2816
    %v2818 = vadd.f32 %v2813, 1.0
    %v2819 = vadd.f32 %v2815, 1.0
    %v2820 = vadd.f32 %v2817, 1.0
    %v2821 = vrcp.pop %v2818
    %v2822 = vmul.f32 1.0, %v2821
    %v2823 = vrcp.pop %v2819
    %v2824 = vmul.f32 1.0, %v2823
    %v2825 = vrcp.pop %v2820
    %v2826 = vmul.f32 1.0, %v2825
    %v2827 = vtanh.pop %v2808
    %v2828 = vmul.f32 %v2824, 0.0
    %v2829 = vmul.f32 %v2822, %v2827
    %v2830 = vadd.f32 %v2828, %v2829
    %v2831 = vtanh.pop %v2830
    %v2832 = vmul.f32 %v2826, %v2831
    %v2833 = vtanh.pop %v2832
    %2834 = vst [vmem:[#allocation3] sm:$0x3] %v2833
    %v2835 = vld [vmem:[#allocation9] sm:$0xff]
    %v2836 = vld [vmem:[#allocation9 + $0x8] sm:$0xff]
    %v2837 = vld [vmem:[#allocation9 + $0x10] sm:$0xff]
    %v2838 = vld [vmem:[#allocation9 + $0x18] sm:$0xff]
    %v2839 = vld [vmem:[#allocation9 + $0x20] sm:$0xff]
    %v2840 = vld [vmem:[#allocation9 + $0x28] sm:$0xff]
    %v2841 = vld [vmem:[#allocation9 + $0x30] sm:$0xff]
    %v2842 = vld [vmem:[#allocation9 + $0x38] sm:$0xff]
    %v2843 = vld [vmem:[#allocation9 + $0x40] sm:$0xff]
    %v2844 = vld [vmem:[#allocation9 + $0x48] sm:$0xff]
    %v2845 = vld [vmem:[#allocation9 + $0x50] sm:$0xff]
    %v2846 = vld [vmem:[#allocation9 + $0x58] sm:$0xff]
    %v2847 = vld [vmem:[#allocation9 + $0x60] sm:$0xff]
    %v2848 = vld [vmem:[#allocation9 + $0x68] sm:$0xff]
    %v2849 = vld [vmem:[#allocation9 + $0x70] sm:$0xff]
    %v2850 = vld [vmem:[#allocation9 + $0x78] sm:$0xff]
    %v2851 = vld [vmem:[#allocation9 + $0x80] sm:$0xff]
    %v2852 = vld [vmem:[#allocation9 + $0x88] sm:$0xff]
    %v2853 = vld [vmem:[#allocation9 + $0x90] sm:$0xff]
    %v2854 = vld [vmem:[#allocation9 + $0x98] sm:$0xff]
    %v2855 = vld [vmem:[#allocation9 + $0xa0] sm:$0xff]
    %v2856 = vld [vmem:[#allocation9 + $0xa8] sm:$0xff]
    %v2857 = vld [vmem:[#allocation9 + $0xb0] sm:$0xff]
    %v2858 = vld [vmem:[#allocation9 + $0xb8] sm:$0xff]
    %v2859 = vld [vmem:[#allocation9 + $0xc0] sm:$0xff]
    %v2860 = vld [vmem:[#allocation9 + $0xc8] sm:$0xff]
    %v2861 = vld [vmem:[#allocation9 + $0xd0] sm:$0xff]
    %v2862 = vld [vmem:[#allocation9 + $0xd8] sm:$0xff]
    %v2863 = vld [vmem:[#allocation9 + $0xe0] sm:$0xff]
    %v2864 = vld [vmem:[#allocation9 + $0xe8] sm:$0xff]
    %v2865 = vld [vmem:[#allocation9 + $0xf0] sm:$0xff]
    %v2866 = vld [vmem:[#allocation9 + $0xf8] sm:$0xff]
    %v2867 = vld [vmem:[#allocation9 + $0x100] sm:$0xff]
    %v2868 = vld [vmem:[#allocation9 + $0x108] sm:$0xff]
    %v2869 = vld [vmem:[#allocation9 + $0x110] sm:$0xff]
    %v2870 = vld [vmem:[#allocation9 + $0x118] sm:$0xff]
    %v2871 = vld [vmem:[#allocation9 + $0x120] sm:$0xff]
    %v2872 = vld [vmem:[#allocation9 + $0x128] sm:$0xff]
    %v2873 = vld [vmem:[#allocation9 + $0x130] sm:$0xff]
    %v2874 = vld [vmem:[#allocation9 + $0x138] sm:$0xff]
    %v2875 = vld [vmem:[#allocation9 + $0x140] sm:$0xff]
    %v2876 = vld [vmem:[#allocation9 + $0x148] sm:$0xff]
    %v2877 = vld [vmem:[#allocation9 + $0x150] sm:$0xff]
    %v2878 = vld [vmem:[#allocation9 + $0x158] sm:$0xff]
    %v2879 = vld [vmem:[#allocation9 + $0x160] sm:$0xff]
    %v2880 = vld [vmem:[#allocation9 + $0x168] sm:$0xff]
    %v2881 = vld [vmem:[#allocation9 + $0x170] sm:$0xff]
    %v2882 = vld [vmem:[#allocation9 + $0x178] sm:$0xff]
    %v2883 = vld [vmem:[#allocation9 + $0x180] sm:$0xff]
    %v2884 = vld [vmem:[#allocation9 + $0x188] sm:$0xff]
    %v2885 = vld [vmem:[#allocation9 + $0x190] sm:$0xff]
    %v2886 = vld [vmem:[#allocation9 + $0x198] sm:$0xff]
    %v2887 = vld [vmem:[#allocation9 + $0x1a0] sm:$0xff]
    %v2888 = vld [vmem:[#allocation9 + $0x1a8] sm:$0xff]
    %v2889 = vld [vmem:[#allocation9 + $0x1b0] sm:$0xff]
    %v2890 = vld [vmem:[#allocation9 + $0x1b8] sm:$0xff]
    %v2891 = vld [vmem:[#allocation9 + $0x1c0] sm:$0xff]
    %v2892 = vld [vmem:[#allocation9 + $0x1c8] sm:$0xff]
    %v2893 = vld [vmem:[#allocation9 + $0x1d0] sm:$0xff]
    %v2894 = vld [vmem:[#allocation9 + $0x1d8] sm:$0xff]
    %v2895 = vld [vmem:[#allocation9 + $0x1e0] sm:$0xff]
    %v2896 = vld [vmem:[#allocation9 + $0x1e8] sm:$0xff]
    %v2897 = vld [vmem:[#allocation9 + $0x1f0] sm:$0xff]
    %v2898 = vld [vmem:[#allocation9 + $0x1f8] sm:$0xff]
    %2899 = vmatprep.subr.mxu0 %v2836
    %2900 = vmatpush1.msra.mxu0 %v2835
    %2901 = vmatprep.subr.mxu0 %v2840
    %2902 = vmatpush1.msra.mxu0 %v2839
    %2903 = vmatprep.subr.mxu0 %v2844
    %2904 = vmatpush1.msra.mxu0 %v2843
    %2905 = vmatprep.subr.mxu0 %v2848
    %2906 = vmatpush1.msra.mxu0 %v2847
    %2907 = vmatprep.subr.mxu0 %v2852
    %2908 = vmatpush1.msra.mxu0 %v2851
    %2909 = vmatprep.subr.mxu0 %v2856
    %2910 = vmatpush1.msra.mxu0 %v2855
    %2911 = vmatprep.subr.mxu0 %v2860
    %2912 = vmatpush1.msra.mxu0 %v2859
    %2913 = vmatprep.subr.mxu0 %v2864
    %2914 = vmatpush1.msra.mxu0 %v2863
    %2915 = vmatprep.subr.mxu0 %v2868
    %2916 = vmatpush1.msra.mxu0 %v2867
    %2917 = vmatprep.subr.mxu0 %v2872
    %2918 = vmatpush1.msra.mxu0 %v2871
    %2919 = vmatprep.subr.mxu0 %v2876
    %2920 = vmatpush1.msra.mxu0 %v2875
    %2921 = vmatprep.subr.mxu0 %v2880
    %2922 = vmatpush1.msra.mxu0 %v2879
    %2923 = vmatprep.subr.mxu0 %v2884
    %2924 = vmatpush1.msra.mxu0 %v2883
    %2925 = vmatprep.subr.mxu0 %v2888
    %2926 = vmatpush1.msra.mxu0 %v2887
    %2927 = vmatprep.subr.mxu0 %v2892
    %2928 = vmatpush1.msra.mxu0 %v2891
    %2929 = vmatprep.subr.mxu0 %v2896
    %2930 = vmatpush1.msra.mxu0 %v2895
    %2931 = vmatprep.subr.mxu0 0.0
    %2932 = vmatpush1.msra.mxu0 0.0
    %2933 = vmatprep.subr.mxu0 0.0
    %2934 = vmatpush1.msra.mxu0 0.0
    %2935 = vmatprep.subr.mxu0 0.0
    %2936 = vmatpush1.msra.mxu0 0.0
    %2937 = vmatprep.subr.mxu0 0.0
    %2938 = vmatpush1.msra.mxu0 0.0
    %2939 = vmatprep.subr.mxu0 0.0
    %2940 = vmatpush1.msra.mxu0 0.0
    %2941 = vmatprep.subr.mxu0 0.0
    %2942 = vmatpush1.msra.mxu0 0.0
    %2943 = vmatprep.subr.mxu0 0.0
    %2944 = vmatpush1.msra.mxu0 0.0
    %2945 = vmatprep.subr.mxu0 0.0
    %2946 = vmatpush1.msra.mxu0 0.0
    %2947 = vmatprep.subr.mxu0 0.0
    %2948 = vmatpush1.msra.mxu0 0.0
    %2949 = vmatprep.subr.mxu0 0.0
    %2950 = vmatpush1.msra.mxu0 0.0
    %2951 = vmatprep.subr.mxu0 0.0
    %2952 = vmatpush1.msra.mxu0 0.0
    %2953 = vmatprep.subr.mxu0 0.0
    %2954 = vmatpush1.msra.mxu0 0.0
    %2955 = vmatprep.subr.mxu0 0.0
    %2956 = vmatpush1.msra.mxu0 0.0
    %2957 = vmatprep.subr.mxu0 0.0
    %2958 = vmatpush1.msra.mxu0 0.0
    %2959 = vmatprep.subr.mxu0 0.0
    %2960 = vmatpush1.msra.mxu0 0.0
    %2961 = vmatprep.subr.mxu0 0.0
    %2962 = vmatpush1.msra.mxu0 0.0
    %2963 = vmatprep.mubr.f32.mxu0 0.0
    %2964 = vmatmul.mubr.f32.gmra.mrb[0].mxu0 %v2832
    %v2965 = vpop.f32.mrb[0].mxu0
    %v2966 = vadd.f32 0.0, %v2965
    %v2967 = vpop.f32.mrb[0].mxu0
    %v2968 = vadd.f32 0.0, %v2967
    %2969 = vdwg.mxu0
    %2970 = vmatprep.subr.mxu0 %v2838
    %2971 = vmatpush1.msra.mxu0 %v2837
    %2972 = vmatprep.subr.mxu0 %v2842
    %2973 = vmatpush1.msra.mxu0 %v2841
    %2974 = vmatprep.subr.mxu0 %v2846
    %2975 = vmatpush1.msra.mxu0 %v2845
    %2976 = vmatprep.subr.mxu0 %v2850
    %2977 = vmatpush1.msra.mxu0 %v2849
    %2978 = vmatprep.subr.mxu0 %v2854
    %2979 = vmatpush1.msra.mxu0 %v2853
    %2980 = vmatprep.subr.mxu0 %v2858
    %2981 = vmatpush1.msra.mxu0 %v2857
    %2982 = vmatprep.subr.mxu0 %v2862
    %2983 = vmatpush1.msra.mxu0 %v2861
    %2984 = vmatprep.subr.mxu0 %v2866
    %2985 = vmatpush1.msra.mxu0 %v2865
    %2986 = vmatprep.subr.mxu0 %v2870
    %2987 = vmatpush1.msra.mxu0 %v2869
    %2988 = vmatprep.subr.mxu0 %v2874
    %2989 = vmatpush1.msra.mxu0 %v2873
    %2990 = vmatprep.subr.mxu0 %v2878
    %2991 = vmatpush1.msra.mxu0 %v2877
    %2992 = vmatprep.subr.mxu0 %v2882
    %2993 = vmatpush1.msra.mxu0 %v2881
    %2994 = vmatprep.subr.mxu0 %v2886
    %2995 = vmatpush1.msra.mxu0 %v2885
    %2996 = vmatprep.subr.mxu0 %v2890
    %2997 = vmatpush1.msra.mxu0 %v2889
    %2998 = vmatprep.subr.mxu0 %v2894
    %2999 = vmatpush1.msra.mxu0 %v2893
    %3000 = vmatprep.subr.mxu0 %v2898
    %3001 = vmatpush1.msra.mxu0 %v2897
    %3002 = vmatprep.subr.mxu0 0.0
    %3003 = vmatpush1.msra.mxu0 0.0
    %3004 = vmatprep.subr.mxu0 0.0
    %3005 = vmatpush1.msra.mxu0 0.0
    %3006 = vmatprep.subr.mxu0 0.0
    %3007 = vmatpush1.msra.mxu0 0.0
    %3008 = vmatprep.subr.mxu0 0.0
    %3009 = vmatpush1.msra.mxu0 0.0
    %3010 = vmatprep.subr.mxu0 0.0
    %3011 = vmatpush1.msra.mxu0 0.0
    %3012 = vmatprep.subr.mxu0 0.0
    %3013 = vmatpush1.msra.mxu0 0.0
    %3014 = vmatprep.subr.mxu0 0.0
    %3015 = vmatpush1.msra.mxu0 0.0
    %3016 = vmatprep.subr.mxu0 0.0
    %3017 = vmatpush1.msra.mxu0 0.0
    %3018 = vmatprep.subr.mxu0 0.0
    %3019 = vmatpush1.msra.mxu0 0.0
    %3020 = vmatprep.subr.mxu0 0.0
    %3021 = vmatpush1.msra.mxu0 0.0
    %3022 = vmatprep.subr.mxu0 0.0
    %3023 = vmatpush1.msra.mxu0 0.0
    %3024 = vmatprep.subr.mxu0 0.0
    %3025 = vmatpush1.msra.mxu0 0.0
    %3026 = vmatprep.subr.mxu0 0.0
    %3027 = vmatpush1.msra.mxu0 0.0
    %3028 = vmatprep.subr.mxu0 0.0
    %3029 = vmatpush1.msra.mxu0 0.0
    %3030 = vmatprep.subr.mxu0 0.0
    %3031 = vmatpush1.msra.mxu0 0.0
    %3032 = vmatprep.subr.mxu0 0.0
    %3033 = vmatpush1.msra.mxu0 0.0
    %3034 = vmatprep.mubr.f32.mxu0 0.0
    %3035 = vmatmul.mubr.f32.gmra.mrb[0].mxu0 %v2832
    %v3036 = vpop.f32.mrb[0].mxu0
    %v3037 = vadd.f32 0.0, %v3036
    %v3038 = vpop.f32.mrb[0].mxu0
    %v3039 = vadd.f32 0.0, %v3038
    %3040 = vdwg.mxu0
    %v3045 = vrot.slane %v2966, 6
    %v3046 = vrot.slane %v2968, 6
    %v3047 = vrot.slane %v3037, 6
    %v3048 = vrot.slane %v3039, 6
    %v3053 = vadd.f32 %v2512, %v3045
    %v3054 = vadd.f32 %v2514, %v3046
    %v3055 = vadd.f32 %v2589, %v3047
    %v3056 = vadd.f32 %v2591, %v3048
    %v3057 = vxor.u32 %v3053, 2147483648
    %v3058 = vxor.u32 %v3054, 2147483648
    %v3059 = vxor.u32 %v3055, 2147483648
    %v3060 = vmul.f32 %v3057, 1.442695
    %v3061 = vpow.pop %v3060
    %v3062 = vmul.f32 %v3058, 1.442695
    %v3063 = vpow.pop %v3062
    %v3064 = vmul.f32 %v3059, 1.442695
    %v3065 = vpow.pop %v3064
    %v3066 = vadd.f32 %v3061, 1.0
    %v3067 = vadd.f32 %v3063, 1.0
    %v3068 = vadd.f32 %v3065, 1.0
    %v3069 = vrcp.pop %v3066
    %v3070 = vmul.f32 1.0, %v3069
    %v3071 = vrcp.pop %v3067
    %v3072 = vmul.f32 1.0, %v3071
    %v3073 = vrcp.pop %v3068
    %v3074 = vmul.f32 1.0, %v3073
    %v3075 = vtanh.pop %v3056
    %v3077 = vrot.slane %v2830, 6
    %v3079 = vmul.f32 %v3072, %v3077
    %v3080 = vmul.f32 %v3070, %v3075
    %v3081 = vadd.f32 %v3079, %v3080
    %v3082 = vtanh.pop %v3081
    %v3083 = vmul.f32 %v3074, %v3082
    %v3084 = vtanh.pop %v3083
    %3085 = vst [vmem:[#allocation3] sm:$0xc] %v3084
    %v3086 = vld [vmem:[#allocation9] sm:$0xff]
    %v3087 = vld [vmem:[#allocation9 + $0x8] sm:$0xff]
    %v3088 = vld [vmem:[#allocation9 + $0x10] sm:$0xff]
    %v3089 = vld [vmem:[#allocation9 + $0x18] sm:$0xff]
    %v3090 = vld [vmem:[#allocation9 + $0x20] sm:$0xff]
    %v3091 = vld [vmem:[#allocation9 + $0x28] sm:$0xff]
    %v3092 = vld [vmem:[#allocation9 + $0x30] sm:$0xff]
    %v3093 = vld [vmem:[#allocation9 + $0x38] sm:$0xff]
    %v3094 = vld [vmem:[#allocation9 + $0x40] sm:$0xff]
    %v3095 = vld [vmem:[#allocation9 + $0x48] sm:$0xff]
    %v3096 = vld [vmem:[#allocation9 + $0x50] sm:$0xff]
    %v3097 = vld [vmem:[#allocation9 + $0x58] sm:$0xff]
    %v3098 = vld [vmem:[#allocation9 + $0x60] sm:$0xff]
    %v3099 = vld [vmem:[#allocation9 + $0x68] sm:$0xff]
    %v3100 = vld [vmem:[#allocation9 + $0x70] sm:$0xff]
    %v3101 = vld [vmem:[#allocation9 + $0x78] sm:$0xff]
    %v3102 = vld [vmem:[#allocation9 + $0x80] sm:$0xff]
    %v3103 = vld [vmem:[#allocation9 + $0x88] sm:$0xff]
    %v3104 = vld [vmem:[#allocation9 + $0x90] sm:$0xff]
    %v3105 = vld [vmem:[#allocation9 + $0x98] sm:$0xff]
    %v3106 = vld [vmem:[#allocation9 + $0xa0] sm:$0xff]
    %v3107 = vld [vmem:[#allocation9 + $0xa8] sm:$0xff]
    %v3108 = vld [vmem:[#allocation9 + $0xb0] sm:$0xff]
    %v3109 = vld [vmem:[#allocation9 + $0xb8] sm:$0xff]
    %v3110 = vld [vmem:[#allocation9 + $0xc0] sm:$0xff]
    %v3111 = vld [vmem:[#allocation9 + $0xc8] sm:$0xff]
    %v3112 = vld [vmem:[#allocation9 + $0xd0] sm:$0xff]
    %v3113 = vld [vmem:[#allocation9 + $0xd8] sm:$0xff]
    %v3114 = vld [vmem:[#allocation9 + $0xe0] sm:$0xff]
    %v3115 = vld [vmem:[#allocation9 + $0xe8] sm:$0xff]
    %v3116 = vld [vmem:[#allocation9 + $0xf0] sm:$0xff]
    %v3117 = vld [vmem:[#allocation9 + $0xf8] sm:$0xff]
    %v3118 = vld [vmem:[#allocation9 + $0x100] sm:$0xff]
    %v3119 = vld [vmem:[#allocation9 + $0x108] sm:$0xff]
    %v3120 = vld [vmem:[#allocation9 + $0x110] sm:$0xff]
    %v3121 = vld [vmem:[#allocation9 + $0x118] sm:$0xff]
    %v3122 = vld [vmem:[#allocation9 + $0x120] sm:$0xff]
    %v3123 = vld [vmem:[#allocation9 + $0x128] sm:$0xff]
    %v3124 = vld [vmem:[#allocation9 + $0x130] sm:$0xff]
    %v3125 = vld [vmem:[#allocation9 + $0x138] sm:$0xff]
    %v3126 = vld [vmem:[#allocation9 + $0x140] sm:$0xff]
    %v3127 = vld [vmem:[#allocation9 + $0x148] sm:$0xff]
    %v3128 = vld [vmem:[#allocation9 + $0x150] sm:$0xff]
    %v3129 = vld [vmem:[#allocation9 + $0x158] sm:$0xff]
    %v3130 = vld [vmem:[#allocation9 + $0x160] sm:$0xff]
    %v3131 = vld [vmem:[#allocation9 + $0x168] sm:$0xff]
    %v3132 = vld [vmem:[#allocation9 + $0x170] sm:$0xff]
    %v3133 = vld [vmem:[#allocation9 + $0x178] sm:$0xff]
    %v3134 = vld [vmem:[#allocation9 + $0x180] sm:$0xff]
    %v3135 = vld [vmem:[#allocation9 + $0x188] sm:$0xff]
    %v3136 = vld [vmem:[#allocation9 + $0x190] sm:$0xff]
    %v3137 = vld [vmem:[#allocation9 + $0x198] sm:$0xff]
    %v3138 = vld [vmem:[#allocation9 + $0x1a0] sm:$0xff]
    %v3139 = vld [vmem:[#allocation9 + $0x1a8] sm:$0xff]
    %v3140 = vld [vmem:[#allocation9 + $0x1b0] sm:$0xff]
    %v3141 = vld [vmem:[#allocation9 + $0x1b8] sm:$0xff]
    %v3142 = vld [vmem:[#allocation9 + $0x1c0] sm:$0xff]
    %v3143 = vld [vmem:[#allocation9 + $0x1c8] sm:$0xff]
    %v3144 = vld [vmem:[#allocation9 + $0x1d0] sm:$0xff]
    %v3145 = vld [vmem:[#allocation9 + $0x1d8] sm:$0xff]
    %v3146 = vld [vmem:[#allocation9 + $0x1e0] sm:$0xff]
    %v3147 = vld [vmem:[#allocation9 + $0x1e8] sm:$0xff]
    %v3148 = vld [vmem:[#allocation9 + $0x1f0] sm:$0xff]
    %v3149 = vld [vmem:[#allocation9 + $0x1f8] sm:$0xff]
    %v3151 = vrot.slane %v3083, 2
    %3153 = vmatprep.subr.mxu0 %v3087
    %3154 = vmatpush1.msra.mxu0 %v3086
    %3155 = vmatprep.subr.mxu0 %v3091
    %3156 = vmatpush1.msra.mxu0 %v3090
    %3157 = vmatprep.subr.mxu0 %v3095
    %3158 = vmatpush1.msra.mxu0 %v3094
    %3159 = vmatprep.subr.mxu0 %v3099
    %3160 = vmatpush1.msra.mxu0 %v3098
    %3161 = vmatprep.subr.mxu0 %v3103
    %3162 = vmatpush1.msra.mxu0 %v3102
    %3163 = vmatprep.subr.mxu0 %v3107
    %3164 = vmatpush1.msra.mxu0 %v3106
    %3165 = vmatprep.subr.mxu0 %v3111
    %3166 = vmatpush1.msra.mxu0 %v3110
    %3167 = vmatprep.subr.mxu0 %v3115
    %3168 = vmatpush1.msra.mxu0 %v3114
    %3169 = vmatprep.subr.mxu0 %v3119
    %3170 = vmatpush1.msra.mxu0 %v3118
    %3171 = vmatprep.subr.mxu0 %v3123
    %3172 = vmatpush1.msra.mxu0 %v3122
    %3173 = vmatprep.subr.mxu0 %v3127
    %3174 = vmatpush1.msra.mxu0 %v3126
    %3175 = vmatprep.subr.mxu0 %v3131
    %3176 = vmatpush1.msra.mxu0 %v3130
    %3177 = vmatprep.subr.mxu0 %v3135
    %3178 = vmatpush1.msra.mxu0 %v3134
    %3179 = vmatprep.subr.mxu0 %v3139
    %3180 = vmatpush1.msra.mxu0 %v3138
    %3181 = vmatprep.subr.mxu0 %v3143
    %3182 = vmatpush1.msra.mxu0 %v3142
    %3183 = vmatprep.subr.mxu0 %v3147
    %3184 = vmatpush1.msra.mxu0 %v3146
    %3185 = vmatprep.subr.mxu0 0.0
    %3186 = vmatpush1.msra.mxu0 0.0
    %3187 = vmatprep.subr.mxu0 0.0
    %3188 = vmatpush1.msra.mxu0 0.0
    %3189 = vmatprep.subr.mxu0 0.0
    %3190 = vmatpush1.msra.mxu0 0.0
    %3191 = vmatprep.subr.mxu0 0.0
    %3192 = vmatpush1.msra.mxu0 0.0
    %3193 = vmatprep.subr.mxu0 0.0
    %3194 = vmatpush1.msra.mxu0 0.0
    %3195 = vmatprep.subr.mxu0 0.0
    %3196 = vmatpush1.msra.mxu0 0.0
    %3197 = vmatprep.subr.mxu0 0.0
    %3198 = vmatpush1.msra.mxu0 0.0
    %3199 = vmatprep.subr.mxu0 0.0
    %3200 = vmatpush1.msra.mxu0 0.0
    %3201 = vmatprep.subr.mxu0 0.0
    %3202 = vmatpush1.msra.mxu0 0.0
    %3203 = vmatprep.subr.mxu0 0.0
    %3204 = vmatpush1.msra.mxu0 0.0
    %3205 = vmatprep.subr.mxu0 0.0
    %3206 = vmatpush1.msra.mxu0 0.0
    %3207 = vmatprep.subr.mxu0 0.0
    %3208 = vmatpush1.msra.mxu0 0.0
    %3209 = vmatprep.subr.mxu0 0.0
    %3210 = vmatpush1.msra.mxu0 0.0
    %3211 = vmatprep.subr.mxu0 0.0
    %3212 = vmatpush1.msra.mxu0 0.0
    %3213 = vmatprep.subr.mxu0 0.0
    %3214 = vmatpush1.msra.mxu0 0.0
    %3215 = vmatprep.subr.mxu0 0.0
    %3216 = vmatpush1.msra.mxu0 0.0
    %3217 = vmatprep.mubr.f32.mxu0 0.0
    %3218 = vmatmul.mubr.f32.gmra.mrb[0].mxu0 %v3151
    %v3219 = vpop.f32.mrb[0].mxu0
    %v3220 = vadd.f32 0.0, %v3219
    %v3221 = vpop.f32.mrb[0].mxu0
    %v3222 = vadd.f32 0.0, %v3221
    %3223 = vdwg.mxu0
    %3224 = vmatprep.subr.mxu0 %v3089
    %3225 = vmatpush1.msra.mxu0 %v3088
    %3226 = vmatprep.subr.mxu0 %v3093
    %3227 = vmatpush1.msra.mxu0 %v3092
    %3228 = vmatprep.subr.mxu0 %v3097
    %3229 = vmatpush1.msra.mxu0 %v3096
    %3230 = vmatprep.subr.mxu0 %v3101
    %3231 = vmatpush1.msra.mxu0 %v3100
    %3232 = vmatprep.subr.mxu0 %v3105
    %3233 = vmatpush1.msra.mxu0 %v3104
    %3234 = vmatprep.subr.mxu0 %v3109
    %3235 = vmatpush1.msra.mxu0 %v3108
    %3236 = vmatprep.subr.mxu0 %v3113
    %3237 = vmatpush1.msra.mxu0 %v3112
    %3238 = vmatprep.subr.mxu0 %v3117
    %3239 = vmatpush1.msra.mxu0 %v3116
    %3240 = vmatprep.subr.mxu0 %v3121
    %3241 = vmatpush1.msra.mxu0 %v3120
    %3242 = vmatprep.subr.mxu0 %v3125
    %3243 = vmatpush1.msra.mxu0 %v3124
    %3244 = vmatprep.subr.mxu0 %v3129
    %3245 = vmatpush1.msra.mxu0 %v3128
    %3246 = vmatprep.subr.mxu0 %v3133
    %3247 = vmatpush1.msra.mxu0 %v3132
    %3248 = vmatprep.subr.mxu0 %v3137
    %3249 = vmatpush1.msra.mxu0 %v3136
    %3250 = vmatprep.subr.mxu0 %v3141
    %3251 = vmatpush1.msra.mxu0 %v3140
    %3252 = vmatprep.subr.mxu0 %v3145
    %3253 = vmatpush1.msra.mxu0 %v3144
    %3254 = vmatprep.subr.mxu0 %v3149
    %3255 = vmatpush1.msra.mxu0 %v3148
    %3256 = vmatprep.subr.mxu0 0.0
    %3257 = vmatpush1.msra.mxu0 0.0
    %3258 = vmatprep.subr.mxu0 0.0
    %3259 = vmatpush1.msra.mxu0 0.0
    %3260 = vmatprep.subr.mxu0 0.0
    %3261 = vmatpush1.msra.mxu0 0.0
    %3262 = vmatprep.subr.mxu0 0.0
    %3263 = vmatpush1.msra.mxu0 0.0
    %3264 = vmatprep.subr.mxu0 0.0
    %3265 = vmatpush1.msra.mxu0 0.0
    %3266 = vmatprep.subr.mxu0 0.0
    %3267 = vmatpush1.msra.mxu0 0.0
    %3268 = vmatprep.subr.mxu0 0.0
    %3269 = vmatpush1.msra.mxu0 0.0
    %3270 = vmatprep.subr.mxu0 0.0
    %3271 = vmatpush1.msra.mxu0 0.0
    %3272 = vmatprep.subr.mxu0 0.0
    %3273 = vmatpush1.msra.mxu0 0.0
    %3274 = vmatprep.subr.mxu0 0.0
    %3275 = vmatpush1.msra.mxu0 0.0
    %3276 = vmatprep.subr.mxu0 0.0
    %3277 = vmatpush1.msra.mxu0 0.0
    %3278 = vmatprep.subr.mxu0 0.0
    %3279 = vmatpush1.msra.mxu0 0.0
    %3280 = vmatprep.subr.mxu0 0.0
    %3281 = vmatpush1.msra.mxu0 0.0
    %3282 = vmatprep.subr.mxu0 0.0
    %3283 = vmatpush1.msra.mxu0 0.0
    %3284 = vmatprep.subr.mxu0 0.0
    %3285 = vmatpush1.msra.mxu0 0.0
    %3286 = vmatprep.subr.mxu0 0.0
    %3287 = vmatpush1.msra.mxu0 0.0
    %3288 = vmatprep.mubr.f32.mxu0 0.0
    %3289 = vmatmul.mubr.f32.gmra.mrb[0].mxu0 %v3151
    %v3290 = vpop.f32.mrb[0].mxu0
    %v3291 = vadd.f32 0.0, %v3290
    %v3292 = vpop.f32.mrb[0].mxu0
    %v3293 = vadd.f32 0.0, %v3292
    %3294 = vdwg.mxu0
    %v3299 = vrot.slane %v3220, 4
    %v3300 = vrot.slane %v3222, 4
    %v3301 = vrot.slane %v3291, 4
    %v3302 = vrot.slane %v3293, 4
    %v3307 = vadd.f32 %v2512, %v3299
    %v3308 = vadd.f32 %v2514, %v3300
    %v3309 = vadd.f32 %v2589, %v3301
    %v3310 = vadd.f32 %v2591, %v3302
    %v3311 = vxor.u32 %v3307, 2147483648
    %v3312 = vxor.u32 %v3308, 2147483648
    %v3313 = vxor.u32 %v3309, 2147483648
    %v3314 = vmul.f32 %v3311, 1.442695
    %v3315 = vpow.pop %v3314
    %v3316 = vmul.f32 %v3312, 1.442695
    %v3317 = vpow.pop %v3316
    %v3318 = vmul.f32 %v3313, 1.442695
    %v3319 = vpow.pop %v3318
    %v3320 = vadd.f32 %v3315, 1.0
    %v3321 = vadd.f32 %v3317, 1.0
    %v3322 = vadd.f32 %v3319, 1.0
    %v3323 = vrcp.pop %v3320
    %v3324 = vmul.f32 1.0, %v3323
    %v3325 = vrcp.pop %v3321
    %v3326 = vmul.f32 1.0, %v3325
    %v3327 = vrcp.pop %v3322
    %v3328 = vmul.f32 1.0, %v3327
    %v3329 = vtanh.pop %v3310
    %v3331 = vrot.slane %v3081, 6
    %v3333 = vmul.f32 %v3326, %v3331
    %v3334 = vmul.f32 %v3324, %v3329
    %v3335 = vadd.f32 %v3333, %v3334
    %v3336 = vtanh.pop %v3335
    %v3337 = vmul.f32 %v3328, %v3336
    %v3338 = vtanh.pop %v3337
    %3339 = vst [vmem:[#allocation3] sm:$0x30] %v3338
    %v3340 = vld [vmem:[#allocation9] sm:$0xff]
    %v3341 = vld [vmem:[#allocation9 + $0x8] sm:$0xff]
    %v3342 = vld [vmem:[#allocation9 + $0x10] sm:$0xff]
    %v3343 = vld [vmem:[#allocation9 + $0x18] sm:$0xff]
    %v3344 = vld [vmem:[#allocation9 + $0x20] sm:$0xff]
    %v3345 = vld [vmem:[#allocation9 + $0x28] sm:$0xff]
    %v3346 = vld [vmem:[#allocation9 + $0x30] sm:$0xff]
    %v3347 = vld [vmem:[#allocation9 + $0x38] sm:$0xff]
    %v3348 = vld [vmem:[#allocation9 + $0x40] sm:$0xff]
    %v3349 = vld [vmem:[#allocation9 + $0x48] sm:$0xff]
    %v3350 = vld [vmem:[#allocation9 + $0x50] sm:$0xff]
    %v3351 = vld [vmem:[#allocation9 + $0x58] sm:$0xff]
    %v3352 = vld [vmem:[#allocation9 + $0x60] sm:$0xff]
    %v3353 = vld [vmem:[#allocation9 + $0x68] sm:$0xff]
    %v3354 = vld [vmem:[#allocation9 + $0x70] sm:$0xff]
    %v3355 = vld [vmem:[#allocation9 + $0x78] sm:$0xff]
    %v3356 = vld [vmem:[#allocation9 + $0x80] sm:$0xff]
    %v3357 = vld [vmem:[#allocation9 + $0x88] sm:$0xff]
    %v3358 = vld [vmem:[#allocation9 + $0x90] sm:$0xff]
    %v3359 = vld [vmem:[#allocation9 + $0x98] sm:$0xff]
    %v3360 = vld [vmem:[#allocation9 + $0xa0] sm:$0xff]
    %v3361 = vld [vmem:[#allocation9 + $0xa8] sm:$0xff]
    %v3362 = vld [vmem:[#allocation9 + $0xb0] sm:$0xff]
    %v3363 = vld [vmem:[#allocation9 + $0xb8] sm:$0xff]
    %v3364 = vld [vmem:[#allocation9 + $0xc0] sm:$0xff]
    %v3365 = vld [vmem:[#allocation9 + $0xc8] sm:$0xff]
    %v3366 = vld [vmem:[#allocation9 + $0xd0] sm:$0xff]
    %v3367 = vld [vmem:[#allocation9 + $0xd8] sm:$0xff]
    %v3368 = vld [vmem:[#allocation9 + $0xe0] sm:$0xff]
    %v3369 = vld [vmem:[#allocation9 + $0xe8] sm:$0xff]
    %v3370 = vld [vmem:[#allocation9 + $0xf0] sm:$0xff]
    %v3371 = vld [vmem:[#allocation9 + $0xf8] sm:$0xff]
    %v3372 = vld [vmem:[#allocation9 + $0x100] sm:$0xff]
    %v3373 = vld [vmem:[#allocation9 + $0x108] sm:$0xff]
    %v3374 = vld [vmem:[#allocation9 + $0x110] sm:$0xff]
    %v3375 = vld [vmem:[#allocation9 + $0x118] sm:$0xff]
    %v3376 = vld [vmem:[#allocation9 + $0x120] sm:$0xff]
    %v3377 = vld [vmem:[#allocation9 + $0x128] sm:$0xff]
    %v3378 = vld [vmem:[#allocation9 + $0x130] sm:$0xff]
    %v3379 = vld [vmem:[#allocation9 + $0x138] sm:$0xff]
    %v3380 = vld [vmem:[#allocation9 + $0x140] sm:$0xff]
    %v3381 = vld [vmem:[#allocation9 + $0x148] sm:$0xff]
    %v3382 = vld [vmem:[#allocation9 + $0x150] sm:$0xff]
    %v3383 = vld [vmem:[#allocation9 + $0x158] sm:$0xff]
    %v3384 = vld [vmem:[#allocation9 + $0x160] sm:$0xff]
    %v3385 = vld [vmem:[#allocation9 + $0x168] sm:$0xff]
    %v3386 = vld [vmem:[#allocation9 + $0x170] sm:$0xff]
    %v3387 = vld [vmem:[#allocation9 + $0x178] sm:$0xff]
    %v3388 = vld [vmem:[#allocation9 + $0x180] sm:$0xff]
    %v3389 = vld [vmem:[#allocation9 + $0x188] sm:$0xff]
    %v3390 = vld [vmem:[#allocation9 + $0x190] sm:$0xff]
    %v3391 = vld [vmem:[#allocation9 + $0x198] sm:$0xff]
    %v3392 = vld [vmem:[#allocation9 + $0x1a0] sm:$0xff]
    %v3393 = vld [vmem:[#allocation9 + $0x1a8] sm:$0xff]
    %v3394 = vld [vmem:[#allocation9 + $0x1b0] sm:$0xff]
    %v3395 = vld [vmem:[#allocation9 + $0x1b8] sm:$0xff]
    %v3396 = vld [vmem:[#allocation9 + $0x1c0] sm:$0xff]
    %v3397 = vld [vmem:[#allocation9 + $0x1c8] sm:$0xff]
    %v3398 = vld [vmem:[#allocation9 + $0x1d0] sm:$0xff]
    %v3399 = vld [vmem:[#allocation9 + $0x1d8] sm:$0xff]
    %v3400 = vld [vmem:[#allocation9 + $0x1e0] sm:$0xff]
    %v3401 = vld [vmem:[#allocation9 + $0x1e8] sm:$0xff]
    %v3402 = vld [vmem:[#allocation9 + $0x1f0] sm:$0xff]
    %v3403 = vld [vmem:[#allocation9 + $0x1f8] sm:$0xff]
    %v3405 = vrot.slane %v3337, 4
    %3407 = vmatprep.subr.mxu0 %v3341
    %3408 = vmatpush1.msra.mxu0 %v3340
    %3409 = vmatprep.subr.mxu0 %v3345
    %3410 = vmatpush1.msra.mxu0 %v3344
    %3411 = vmatprep.subr.mxu0 %v3349
    %3412 = vmatpush1.msra.mxu0 %v3348
    %3413 = vmatprep.subr.mxu0 %v3353
    %3414 = vmatpush1.msra.mxu0 %v3352
    %3415 = vmatprep.subr.mxu0 %v3357
    %3416 = vmatpush1.msra.mxu0 %v3356
    %3417 = vmatprep.subr.mxu0 %v3361
    %3418 = vmatpush1.msra.mxu0 %v3360
    %3419 = vmatprep.subr.mxu0 %v3365
    %3420 = vmatpush1.msra.mxu0 %v3364
    %3421 = vmatprep.subr.mxu0 %v3369
    %3422 = vmatpush1.msra.mxu0 %v3368
    %3423 = vmatprep.subr.mxu0 %v3373
    %3424 = vmatpush1.msra.mxu0 %v3372
    %3425 = vmatprep.subr.mxu0 %v3377
    %3426 = vmatpush1.msra.mxu0 %v3376
    %3427 = vmatprep.subr.mxu0 %v3381
    %3428 = vmatpush1.msra.mxu0 %v3380
    %3429 = vmatprep.subr.mxu0 %v3385
    %3430 = vmatpush1.msra.mxu0 %v3384
    %3431 = vmatprep.subr.mxu0 %v3389
    %3432 = vmatpush1.msra.mxu0 %v3388
    %3433 = vmatprep.subr.mxu0 %v3393
    %3434 = vmatpush1.msra.mxu0 %v3392
    %3435 = vmatprep.subr.mxu0 %v3397
    %3436 = vmatpush1.msra.mxu0 %v3396
    %3437 = vmatprep.subr.mxu0 %v3401
    %3438 = vmatpush1.msra.mxu0 %v3400
    %3439 = vmatprep.subr.mxu0 0.0
    %3440 = vmatpush1.msra.mxu0 0.0
    %3441 = vmatprep.subr.mxu0 0.0
    %3442 = vmatpush1.msra.mxu0 0.0
    %3443 = vmatprep.subr.mxu0 0.0
    %3444 = vmatpush1.msra.mxu0 0.0
    %3445 = vmatprep.subr.mxu0 0.0
    %3446 = vmatpush1.msra.mxu0 0.0
    %3447 = vmatprep.subr.mxu0 0.0
    %3448 = vmatpush1.msra.mxu0 0.0
    %3449 = vmatprep.subr.mxu0 0.0
    %3450 = vmatpush1.msra.mxu0 0.0
    %3451 = vmatprep.subr.mxu0 0.0
    %3452 = vmatpush1.msra.mxu0 0.0
    %3453 = vmatprep.subr.mxu0 0.0
    %3454 = vmatpush1.msra.mxu0 0.0
    %3455 = vmatprep.subr.mxu0 0.0
    %3456 = vmatpush1.msra.mxu0 0.0
    %3457 = vmatprep.subr.mxu0 0.0
    %3458 = vmatpush1.msra.mxu0 0.0
    %3459 = vmatprep.subr.mxu0 0.0
    %3460 = vmatpush1.msra.mxu0 0.0
    %3461 = vmatprep.subr.mxu0 0.0
    %3462 = vmatpush1.msra.mxu0 0.0
    %3463 = vmatprep.subr.mxu0 0.0
    %3464 = vmatpush1.msra.mxu0 0.0
    %3465 = vmatprep.subr.mxu0 0.0
    %3466 = vmatpush1.msra.mxu0 0.0
    %3467 = vmatprep.subr.mxu0 0.0
    %3468 = vmatpush1.msra.mxu0 0.0
    %3469 = vmatprep.subr.mxu0 0.0
    %3470 = vmatpush1.msra.mxu0 0.0
    %3471 = vmatprep.mubr.f32.mxu0 0.0
    %3472 = vmatmul.mubr.f32.gmra.mrb[0].mxu0 %v3405
    %v3473 = vpop.f32.mrb[0].mxu0
    %v3474 = vadd.f32 0.0, %v3473
    %v3475 = vpop.f32.mrb[0].mxu0
    %v3476 = vadd.f32 0.0, %v3475
    %3477 = vdwg.mxu0
    %3478 = vmatprep.subr.mxu0 %v3343
    %3479 = vmatpush1.msra.mxu0 %v3342
    %3480 = vmatprep.subr.mxu0 %v3347
    %3481 = vmatpush1.msra.mxu0 %v3346
    %3482 = vmatprep.subr.mxu0 %v3351
    %3483 = vmatpush1.msra.mxu0 %v3350
    %3484 = vmatprep.subr.mxu0 %v3355
    %3485 = vmatpush1.msra.mxu0 %v3354
    %3486 = vmatprep.subr.mxu0 %v3359
    %3487 = vmatpush1.msra.mxu0 %v3358
    %3488 = vmatprep.subr.mxu0 %v3363
    %3489 = vmatpush1.msra.mxu0 %v3362
    %3490 = vmatprep.subr.mxu0 %v3367
    %3491 = vmatpush1.msra.mxu0 %v3366
    %3492 = vmatprep.subr.mxu0 %v3371
    %3493 = vmatpush1.msra.mxu0 %v3370
    %3494 = vmatprep.subr.mxu0 %v3375
    %3495 = vmatpush1.msra.mxu0 %v3374
    %3496 = vmatprep.subr.mxu0 %v3379
    %3497 = vmatpush1.msra.mxu0 %v3378
    %3498 = vmatprep.subr.mxu0 %v3383
    %3499 = vmatpush1.msra.mxu0 %v3382
    %3500 = vmatprep.subr.mxu0 %v3387
    %3501 = vmatpush1.msra.mxu0 %v3386
    %3502 = vmatprep.subr.mxu0 %v3391
    %3503 = vmatpush1.msra.mxu0 %v3390
    %3504 = vmatprep.subr.mxu0 %v3395
    %3505 = vmatpush1.msra.mxu0 %v3394
    %3506 = vmatprep.subr.mxu0 %v3399
    %3507 = vmatpush1.msra.mxu0 %v3398
    %3508 = vmatprep.subr.mxu0 %v3403
    %3509 = vmatpush1.msra.mxu0 %v3402
    %3510 = vmatprep.subr.mxu0 0.0
    %3511 = vmatpush1.msra.mxu0 0.0
    %3512 = vmatprep.subr.mxu0 0.0
    %3513 = vmatpush1.msra.mxu0 0.0
    %3514 = vmatprep.subr.mxu0 0.0
    %3515 = vmatpush1.msra.mxu0 0.0
    %3516 = vmatprep.subr.mxu0 0.0
    %3517 = vmatpush1.msra.mxu0 0.0
    %3518 = vmatprep.subr.mxu0 0.0
    %3519 = vmatpush1.msra.mxu0 0.0
    %3520 = vmatprep.subr.mxu0 0.0
    %3521 = vmatpush1.msra.mxu0 0.0
    %3522 = vmatprep.subr.mxu0 0.0
    %3523 = vmatpush1.msra.mxu0 0.0
    %3524 = vmatprep.subr.mxu0 0.0
    %3525 = vmatpush1.msra.mxu0 0.0
    %3526 = vmatprep.subr.mxu0 0.0
    %3527 = vmatpush1.msra.mxu0 0.0
    %3528 = vmatprep.subr.mxu0 0.0
    %3529 = vmatpush1.msra.mxu0 0.0
    %3530 = vmatprep.subr.mxu0 0.0
    %3531 = vmatpush1.msra.mxu0 0.0
    %3532 = vmatprep.subr.mxu0 0.0
    %3533 = vmatpush1.msra.mxu0 0.0
    %3534 = vmatprep.subr.mxu0 0.0
    %3535 = vmatpush1.msra.mxu0 0.0
    %3536 = vmatprep.subr.mxu0 0.0
    %3537 = vmatpush1.msra.mxu0 0.0
    %3538 = vmatprep.subr.mxu0 0.0
    %3539 = vmatpush1.msra.mxu0 0.0
    %3540 = vmatprep.subr.mxu0 0.0
    %3541 = vmatpush1.msra.mxu0 0.0
    %3542 = vmatprep.mubr.f32.mxu0 0.0
    %3543 = vmatmul.mubr.f32.gmra.mrb[0].mxu0 %v3405
    %v3544 = vpop.f32.mrb[0].mxu0
    %v3545 = vadd.f32 0.0, %v3544
    %v3546 = vpop.f32.mrb[0].mxu0
    %v3547 = vadd.f32 0.0, %v3546
    %3548 = vdwg.mxu0
    %v3553 = vrot.slane %v3474, 2
    %v3554 = vrot.slane %v3476, 2
    %v3555 = vrot.slane %v3545, 2
    %v3556 = vrot.slane %v3547, 2
    %v3561 = vadd.f32 %v2512, %v3553
    %v3562 = vadd.f32 %v2514, %v3554
    %v3563 = vadd.f32 %v2589, %v3555
    %v3564 = vadd.f32 %v2591, %v3556
    %v3565 = vxor.u32 %v3561, 2147483648
    %v3566 = vxor.u32 %v3562, 2147483648
    %v3567 = vxor.u32 %v3563, 2147483648
    %v3568 = vmul.f32 %v3565, 1.442695
    %v3569 = vpow.pop %v3568
    %v3570 = vmul.f32 %v3566, 1.442695
    %v3571 = vpow.pop %v3570
    %v3572 = vmul.f32 %v3567, 1.442695
    %v3573 = vpow.pop %v3572
    %v3574 = vadd.f32 %v3569, 1.0
    %v3575 = vadd.f32 %v3571, 1.0
    %v3576 = vadd.f32 %v3573, 1.0
    %v3577 = vrcp.pop %v3574
    %v3578 = vmul.f32 1.0, %v3577
    %v3579 = vrcp.pop %v3575
    %v3580 = vmul.f32 1.0, %v3579
    %v3581 = vrcp.pop %v3576
    %v3582 = vmul.f32 1.0, %v3581
    %v3583 = vtanh.pop %v3564
    %v3585 = vrot.slane %v3335, 6
    %v3587 = vmul.f32 %v3580, %v3585
    %v3588 = vmul.f32 %v3578, %v3583
    %v3589 = vadd.f32 %v3587, %v3588
    %v3590 = vtanh.pop %v3589
    %v3591 = vmul.f32 %v3582, %v3590
    %v3592 = vtanh.pop %v3591
    %3593 = vst [vmem:[#allocation3] sm:$0xc0] %v3592
    %v3594 = vld [vmem:[#allocation9] sm:$0xff]
    %v3595 = vld [vmem:[#allocation9 + $0x8] sm:$0xff]
    %v3596 = vld [vmem:[#allocation9 + $0x10] sm:$0xff]
    %v3597 = vld [vmem:[#allocation9 + $0x18] sm:$0xff]
    %v3598 = vld [vmem:[#allocation9 + $0x20] sm:$0xff]
    %v3599 = vld [vmem:[#allocation9 + $0x28] sm:$0xff]
    %v3600 = vld [vmem:[#allocation9 + $0x30] sm:$0xff]
    %v3601 = vld [vmem:[#allocation9 + $0x38] sm:$0xff]
    %v3602 = vld [vmem:[#allocation9 + $0x40] sm:$0xff]
    %v3603 = vld [vmem:[#allocation9 + $0x48] sm:$0xff]
    %v3604 = vld [vmem:[#allocation9 + $0x50] sm:$0xff]
    %v3605 = vld [vmem:[#allocation9 + $0x58] sm:$0xff]
    %v3606 = vld [vmem:[#allocation9 + $0x60] sm:$0xff]
    %v3607 = vld [vmem:[#allocation9 + $0x68] sm:$0xff]
    %v3608 = vld [vmem:[#allocation9 + $0x70] sm:$0xff]
    %v3609 = vld [vmem:[#allocation9 + $0x78] sm:$0xff]
    %v3610 = vld [vmem:[#allocation9 + $0x80] sm:$0xff]
    %v3611 = vld [vmem:[#allocation9 + $0x88] sm:$0xff]
    %v3612 = vld [vmem:[#allocation9 + $0x90] sm:$0xff]
    %v3613 = vld [vmem:[#allocation9 + $0x98] sm:$0xff]
    %v3614 = vld [vmem:[#allocation9 + $0xa0] sm:$0xff]
    %v3615 = vld [vmem:[#allocation9 + $0xa8] sm:$0xff]
    %v3616 = vld [vmem:[#allocation9 + $0xb0] sm:$0xff]
    %v3617 = vld [vmem:[#allocation9 + $0xb8] sm:$0xff]
    %v3618 = vld [vmem:[#allocation9 + $0xc0] sm:$0xff]
    %v3619 = vld [vmem:[#allocation9 + $0xc8] sm:$0xff]
    %v3620 = vld [vmem:[#allocation9 + $0xd0] sm:$0xff]
    %v3621 = vld [vmem:[#allocation9 + $0xd8] sm:$0xff]
    %v3622 = vld [vmem:[#allocation9 + $0xe0] sm:$0xff]
    %v3623 = vld [vmem:[#allocation9 + $0xe8] sm:$0xff]
    %v3624 = vld [vmem:[#allocation9 + $0xf0] sm:$0xff]
    %v3625 = vld [vmem:[#allocation9 + $0xf8] sm:$0xff]
    %v3626 = vld [vmem:[#allocation9 + $0x100] sm:$0xff]
    %v3627 = vld [vmem:[#allocation9 + $0x108] sm:$0xff]
    %v3628 = vld [vmem:[#allocation9 + $0x110] sm:$0xff]
    %v3629 = vld [vmem:[#allocation9 + $0x118] sm:$0xff]
    %v3630 = vld [vmem:[#allocation9 + $0x120] sm:$0xff]
    %v3631 = vld [vmem:[#allocation9 + $0x128] sm:$0xff]
    %v3632 = vld [vmem:[#allocation9 + $0x130] sm:$0xff]
    %v3633 = vld [vmem:[#allocation9 + $0x138] sm:$0xff]
    %v3634 = vld [vmem:[#allocation9 + $0x140] sm:$0xff]
    %v3635 = vld [vmem:[#allocation9 + $0x148] sm:$0xff]
    %v3636 = vld [vmem:[#allocation9 + $0x150] sm:$0xff]
    %v3637 = vld [vmem:[#allocation9 + $0x158] sm:$0xff]
    %v3638 = vld [vmem:[#allocation9 + $0x160] sm:$0xff]
    %v3639 = vld [vmem:[#allocation9 + $0x168] sm:$0xff]
    %v3640 = vld [vmem:[#allocation9 + $0x170] sm:$0xff]
    %v3641 = vld [vmem:[#allocation9 + $0x178] sm:$0xff]
    %v3642 = vld [vmem:[#allocation9 + $0x180] sm:$0xff]
    %v3643 = vld [vmem:[#allocation9 + $0x188] sm:$0xff]
    %v3644 = vld [vmem:[#allocation9 + $0x190] sm:$0xff]
    %v3645 = vld [vmem:[#allocation9 + $0x198] sm:$0xff]
    %v3646 = vld [vmem:[#allocation9 + $0x1a0] sm:$0xff]
    %v3647 = vld [vmem:[#allocation9 + $0x1a8] sm:$0xff]
    %v3648 = vld [vmem:[#allocation9 + $0x1b0] sm:$0xff]
    %v3649 = vld [vmem:[#allocation9 + $0x1b8] sm:$0xff]
    %v3650 = vld [vmem:[#allocation9 + $0x1c0] sm:$0xff]
    %v3651 = vld [vmem:[#allocation9 + $0x1c8] sm:$0xff]
    %v3652 = vld [vmem:[#allocation9 + $0x1d0] sm:$0xff]
    %v3653 = vld [vmem:[#allocation9 + $0x1d8] sm:$0xff]
    %v3654 = vld [vmem:[#allocation9 + $0x1e0] sm:$0xff]
    %v3655 = vld [vmem:[#allocation9 + $0x1e8] sm:$0xff]
    %v3656 = vld [vmem:[#allocation9 + $0x1f0] sm:$0xff]
    %v3657 = vld [vmem:[#allocation9 + $0x1f8] sm:$0xff]
    %v3659 = vrot.slane %v3591, 6
    %3661 = vmatprep.subr.mxu0 %v3595
    %3662 = vmatpush1.msra.mxu0 %v3594
    %3663 = vmatprep.subr.mxu0 %v3599
    %3664 = vmatpush1.msra.mxu0 %v3598
    %3665 = vmatprep.subr.mxu0 %v3603
    %3666 = vmatpush1.msra.mxu0 %v3602
    %3667 = vmatprep.subr.mxu0 %v3607
    %3668 = vmatpush1.msra.mxu0 %v3606
    %3669 = vmatprep.subr.mxu0 %v3611
    %3670 = vmatpush1.msra.mxu0 %v3610
    %3671 = vmatprep.subr.mxu0 %v3615
    %3672 = vmatpush1.msra.mxu0 %v3614
    %3673 = vmatprep.subr.mxu0 %v3619
    %3674 = vmatpush1.msra.mxu0 %v3618
    %3675 = vmatprep.subr.mxu0 %v3623
    %3676 = vmatpush1.msra.mxu0 %v3622
    %3677 = vmatprep.subr.mxu0 %v3627
    %3678 = vmatpush1.msra.mxu0 %v3626
    %3679 = vmatprep.subr.mxu0 %v3631
    %3680 = vmatpush1.msra.mxu0 %v3630
    %3681 = vmatprep.subr.mxu0 %v3635
    %3682 = vmatpush1.msra.mxu0 %v3634
    %3683 = vmatprep.subr.mxu0 %v3639
    %3684 = vmatpush1.msra.mxu0 %v3638
    %3685 = vmatprep.subr.mxu0 %v3643
    %3686 = vmatpush1.msra.mxu0 %v3642
    %3687 = vmatprep.subr.mxu0 %v3647
    %3688 = vmatpush1.msra.mxu0 %v3646
    %3689 = vmatprep.subr.mxu0 %v3651
    %3690 = vmatpush1.msra.mxu0 %v3650
    %3691 = vmatprep.subr.mxu0 %v3655
    %3692 = vmatpush1.msra.mxu0 %v3654
    %3693 = vmatprep.subr.mxu0 0.0
    %3694 = vmatpush1.msra.mxu0 0.0
    %3695 = vmatprep.subr.mxu0 0.0
    %3696 = vmatpush1.msra.mxu0 0.0
    %3697 = vmatprep.subr.mxu0 0.0
    %3698 = vmatpush1.msra.mxu0 0.0
    %3699 = vmatprep.subr.mxu0 0.0
    %3700 = vmatpush1.msra.mxu0 0.0
    %3701 = vmatprep.subr.mxu0 0.0
    %3702 = vmatpush1.msra.mxu0 0.0
    %3703 = vmatprep.subr.mxu0 0.0
    %3704 = vmatpush1.msra.mxu0 0.0
    %3705 = vmatprep.subr.mxu0 0.0
    %3706 = vmatpush1.msra.mxu0 0.0
    %3707 = vmatprep.subr.mxu0 0.0
    %3708 = vmatpush1.msra.mxu0 0.0
    %3709 = vmatprep.subr.mxu0 0.0
    %3710 = vmatpush1.msra.mxu0 0.0
    %3711 = vmatprep.subr.mxu0 0.0
    %3712 = vmatpush1.msra.mxu0 0.0
    %3713 = vmatprep.subr.mxu0 0.0
    %3714 = vmatpush1.msra.mxu0 0.0
    %3715 = vmatprep.subr.mxu0 0.0
    %3716 = vmatpush1.msra.mxu0 0.0
    %3717 = vmatprep.subr.mxu0 0.0
    %3718 = vmatpush1.msra.mxu0 0.0
    %3719 = vmatprep.subr.mxu0 0.0
    %3720 = vmatpush1.msra.mxu0 0.0
    %3721 = vmatprep.subr.mxu0 0.0
    %3722 = vmatpush1.msra.mxu0 0.0
    %3723 = vmatprep.subr.mxu0 0.0
    %3724 = vmatpush1.msra.mxu0 0.0
    %3725 = vmatprep.mubr.f32.mxu0 0.0
    %3726 = vmatmul.mubr.f32.gmra.mrb[0].mxu0 %v3659
    %v3727 = vpop.f32.mrb[0].mxu0
    %v3728 = vadd.f32 0.0, %v3727
    %v3729 = vpop.f32.mrb[0].mxu0
    %v3730 = vadd.f32 0.0, %v3729
    %3731 = vdwg.mxu0
    %3732 = vmatprep.subr.mxu0 %v3597
    %3733 = vmatpush1.msra.mxu0 %v3596
    %3734 = vmatprep.subr.mxu0 %v3601
    %3735 = vmatpush1.msra.mxu0 %v3600
    %3736 = vmatprep.subr.mxu0 %v3605
    %3737 = vmatpush1.msra.mxu0 %v3604
    %3738 = vmatprep.subr.mxu0 %v3609
    %3739 = vmatpush1.msra.mxu0 %v3608
    %3740 = vmatprep.subr.mxu0 %v3613
    %3741 = vmatpush1.msra.mxu0 %v3612
    %3742 = vmatprep.subr.mxu0 %v3617
    %3743 = vmatpush1.msra.mxu0 %v3616
    %3744 = vmatprep.subr.mxu0 %v3621
    %3745 = vmatpush1.msra.mxu0 %v3620
    %3746 = vmatprep.subr.mxu0 %v3625
    %3747 = vmatpush1.msra.mxu0 %v3624
    %3748 = vmatprep.subr.mxu0 %v3629
    %3749 = vmatpush1.msra.mxu0 %v3628
    %3750 = vmatprep.subr.mxu0 %v3633
    %3751 = vmatpush1.msra.mxu0 %v3632
    %3752 = vmatprep.subr.mxu0 %v3637
    %3753 = vmatpush1.msra.mxu0 %v3636
    %3754 = vmatprep.subr.mxu0 %v3641
    %3755 = vmatpush1.msra.mxu0 %v3640
    %3756 = vmatprep.subr.mxu0 %v3645
    %3757 = vmatpush1.msra.mxu0 %v3644
    %3758 = vmatprep.subr.mxu0 %v3649
    %3759 = vmatpush1.msra.mxu0 %v3648
    %3760 = vmatprep.subr.mxu0 %v3653
    %3761 = vmatpush1.msra.mxu0 %v3652
    %3762 = vmatprep.subr.mxu0 %v3657
    %3763 = vmatpush1.msra.mxu0 %v3656
    %3764 = vmatprep.subr.mxu0 0.0
    %3765 = vmatpush1.msra.mxu0 0.0
    %3766 = vmatprep.subr.mxu0 0.0
    %3767 = vmatpush1.msra.mxu0 0.0
    %3768 = vmatprep.subr.mxu0 0.0
    %3769 = vmatpush1.msra.mxu0 0.0
    %3770 = vmatprep.subr.mxu0 0.0
    %3771 = vmatpush1.msra.mxu0 0.0
    %3772 = vmatprep.subr.mxu0 0.0
    %3773 = vmatpush1.msra.mxu0 0.0
    %3774 = vmatprep.subr.mxu0 0.0
    %3775 = vmatpush1.msra.mxu0 0.0
    %3776 = vmatprep.subr.mxu0 0.0
    %3777 = vmatpush1.msra.mxu0 0.0
    %3778 = vmatprep.subr.mxu0 0.0
    %3779 = vmatpush1.msra.mxu0 0.0
    %3780 = vmatprep.subr.mxu0 0.0
    %3781 = vmatpush1.msra.mxu0 0.0
    %3782 = vmatprep.subr.mxu0 0.0
    %3783 = vmatpush1.msra.mxu0 0.0
    %3784 = vmatprep.subr.mxu0 0.0
    %3785 = vmatpush1.msra.mxu0 0.0
    %3786 = vmatprep.subr.mxu0 0.0
    %3787 = vmatpush1.msra.mxu0 0.0
    %3788 = vmatprep.subr.mxu0 0.0
    %3789 = vmatpush1.msra.mxu0 0.0
    %3790 = vmatprep.subr.mxu0 0.0
    %3791 = vmatpush1.msra.mxu0 0.0
    %3792 = vmatprep.subr.mxu0 0.0
    %3793 = vmatpush1.msra.mxu0 0.0
    %3794 = vmatprep.subr.mxu0 0.0
    %3795 = vmatpush1.msra.mxu0 0.0
    %3796 = vmatprep.mubr.f32.mxu0 0.0
    %3797 = vmatmul.mubr.f32.gmra.mrb[0].mxu0 %v3659
    %v3798 = vpop.f32.mrb[0].mxu0
    %v3799 = vadd.f32 0.0, %v3798
    %v3800 = vpop.f32.mrb[0].mxu0
    %v3801 = vadd.f32 0.0, %v3800
    %3802 = vdwg.mxu0
    %v3803 = vadd.f32 %v2518, %v3728
    %v3804 = vadd.f32 %v2520, %v3730
    %v3805 = vadd.f32 %v2595, %v3799
    %v3806 = vadd.f32 %v2597, %v3801
    %v3807 = vxor.u32 %v3803, 2147483648
    %v3808 = vxor.u32 %v3804, 2147483648
    %v3809 = vxor.u32 %v3805, 2147483648
    %v3810 = vmul.f32 %v3807, 1.442695
    %v3811 = vpow.pop %v3810
    %v3812 = vmul.f32 %v3808, 1.442695
    %v3813 = vpow.pop %v3812
    %v3814 = vmul.f32 %v3809, 1.442695
    %v3815 = vpow.pop %v3814
    %v3816 = vadd.f32 %v3811, 1.0
    %v3817 = vadd.f32 %v3813, 1.0
    %v3818 = vadd.f32 %v3815, 1.0
    %v3819 = vrcp.pop %v3816
    %v3820 = vmul.f32 1.0, %v3819
    %v3821 = vrcp.pop %v3817
    %v3822 = vmul.f32 1.0, %v3821
    %v3823 = vrcp.pop %v3818
    %v3824 = vmul.f32 1.0, %v3823
    %v3825 = vtanh.pop %v3806
    %v3827 = vrot.slane %v3589, 6
    %v3829 = vmul.f32 %v3822, %v3827
    %v3830 = vmul.f32 %v3820, %v3825
    %v3831 = vadd.f32 %v3829, %v3830
    %v3832 = vtanh.pop %v3831
    %v3833 = vmul.f32 %v3824, %v3832
    %v3834 = vtanh.pop %v3833
    %3835 = vst [vmem:[#allocation3 + $0x8] sm:$0x3] %v3834
    %v3836 = vld [vmem:[#allocation9] sm:$0xff]
    %v3837 = vld [vmem:[#allocation9 + $0x8] sm:$0xff]
    %v3838 = vld [vmem:[#allocation9 + $0x10] sm:$0xff]
    %v3839 = vld [vmem:[#allocation9 + $0x18] sm:$0xff]
    %v3840 = vld [vmem:[#allocation9 + $0x20] sm:$0xff]
    %v3841 = vld [vmem:[#allocation9 + $0x28] sm:$0xff]
    %v3842 = vld [vmem:[#allocation9 + $0x30] sm:$0xff]
    %v3843 = vld [vmem:[#allocation9 + $0x38] sm:$0xff]
    %v3844 = vld [vmem:[#allocation9 + $0x40] sm:$0xff]
    %v3845 = vld [vmem:[#allocation9 + $0x48] sm:$0xff]
    %v3846 = vld [vmem:[#allocation9 + $0x50] sm:$0xff]
    %v3847 = vld [vmem:[#allocation9 + $0x58] sm:$0xff]
    %v3848 = vld [vmem:[#allocation9 + $0x60] sm:$0xff]
    %v3849 = vld [vmem:[#allocation9 + $0x68] sm:$0xff]
    %v3850 = vld [vmem:[#allocation9 + $0x70] sm:$0xff]
    %v3851 = vld [vmem:[#allocation9 + $0x78] sm:$0xff]
    %v3852 = vld [vmem:[#allocation9 + $0x80] sm:$0xff]
    %v3853 = vld [vmem:[#allocation9 + $0x88] sm:$0xff]
    %v3854 = vld [vmem:[#allocation9 + $0x90] sm:$0xff]
    %v3855 = vld [vmem:[#allocation9 + $0x98] sm:$0xff]
    %v3856 = vld [vmem:[#allocation9 + $0xa0] sm:$0xff]
    %v3857 = vld [vmem:[#allocation9 + $0xa8] sm:$0xff]
    %v3858 = vld [vmem:[#allocation9 + $0xb0] sm:$0xff]
    %v3859 = vld [vmem:[#allocation9 + $0xb8] sm:$0xff]
    %v3860 = vld [vmem:[#allocation9 + $0xc0] sm:$0xff]
    %v3861 = vld [vmem:[#allocation9 + $0xc8] sm:$0xff]
    %v3862 = vld [vmem:[#allocation9 + $0xd0] sm:$0xff]
    %v3863 = vld [vmem:[#allocation9 + $0xd8] sm:$0xff]
    %v3864 = vld [vmem:[#allocation9 + $0xe0] sm:$0xff]
    %v3865 = vld [vmem:[#allocation9 + $0xe8] sm:$0xff]
    %v3866 = vld [vmem:[#allocation9 + $0xf0] sm:$0xff]
    %v3867 = vld [vmem:[#allocation9 + $0xf8] sm:$0xff]
    %v3868 = vld [vmem:[#allocation9 + $0x100] sm:$0xff]
    %v3869 = vld [vmem:[#allocation9 + $0x108] sm:$0xff]
    %v3870 = vld [vmem:[#allocation9 + $0x110] sm:$0xff]
    %v3871 = vld [vmem:[#allocation9 + $0x118] sm:$0xff]
    %v3872 = vld [vmem:[#allocation9 + $0x120] sm:$0xff]
    %v3873 = vld [vmem:[#allocation9 + $0x128] sm:$0xff]
    %v3874 = vld [vmem:[#allocation9 + $0x130] sm:$0xff]
    %v3875 = vld [vmem:[#allocation9 + $0x138] sm:$0xff]
    %v3876 = vld [vmem:[#allocation9 + $0x140] sm:$0xff]
    %v3877 = vld [vmem:[#allocation9 + $0x148] sm:$0xff]
    %v3878 = vld [vmem:[#allocation9 + $0x150] sm:$0xff]
    %v3879 = vld [vmem:[#allocation9 + $0x158] sm:$0xff]
    %v3880 = vld [vmem:[#allocation9 + $0x160] sm:$0xff]
    %v3881 = vld [vmem:[#allocation9 + $0x168] sm:$0xff]
    %v3882 = vld [vmem:[#allocation9 + $0x170] sm:$0xff]
    %v3883 = vld [vmem:[#allocation9 + $0x178] sm:$0xff]
    %v3884 = vld [vmem:[#allocation9 + $0x180] sm:$0xff]
    %v3885 = vld [vmem:[#allocation9 + $0x188] sm:$0xff]
    %v3886 = vld [vmem:[#allocation9 + $0x190] sm:$0xff]
    %v3887 = vld [vmem:[#allocation9 + $0x198] sm:$0xff]
    %v3888 = vld [vmem:[#allocation9 + $0x1a0] sm:$0xff]
    %v3889 = vld [vmem:[#allocation9 + $0x1a8] sm:$0xff]
    %v3890 = vld [vmem:[#allocation9 + $0x1b0] sm:$0xff]
    %v3891 = vld [vmem:[#allocation9 + $0x1b8] sm:$0xff]
    %v3892 = vld [vmem:[#allocation9 + $0x1c0] sm:$0xff]
    %v3893 = vld [vmem:[#allocation9 + $0x1c8] sm:$0xff]
    %v3894 = vld [vmem:[#allocation9 + $0x1d0] sm:$0xff]
    %v3895 = vld [vmem:[#allocation9 + $0x1d8] sm:$0xff]
    %v3896 = vld [vmem:[#allocation9 + $0x1e0] sm:$0xff]
    %v3897 = vld [vmem:[#allocation9 + $0x1e8] sm:$0xff]
    %v3898 = vld [vmem:[#allocation9 + $0x1f0] sm:$0xff]
    %v3899 = vld [vmem:[#allocation9 + $0x1f8] sm:$0xff]
    %3900 = vmatprep.subr.mxu0 %v3837
    %3901 = vmatpush1.msra.mxu0 %v3836
    %3902 = vmatprep.subr.mxu0 %v3841
    %3903 = vmatpush1.msra.mxu0 %v3840
    %3904 = vmatprep.subr.mxu0 %v3845
    %3905 = vmatpush1.msra.mxu0 %v3844
    %3906 = vmatprep.subr.mxu0 %v3849
    %3907 = vmatpush1.msra.mxu0 %v3848
    %3908 = vmatprep.subr.mxu0 %v3853
    %3909 = vmatpush1.msra.mxu0 %v3852
    %3910 = vmatprep.subr.mxu0 %v3857
    %3911 = vmatpush1.msra.mxu0 %v3856
    %3912 = vmatprep.subr.mxu0 %v3861
    %3913 = vmatpush1.msra.mxu0 %v3860
    %3914 = vmatprep.subr.mxu0 %v3865
    %3915 = vmatpush1.msra.mxu0 %v3864
    %3916 = vmatprep.subr.mxu0 %v3869
    %3917 = vmatpush1.msra.mxu0 %v3868
    %3918 = vmatprep.subr.mxu0 %v3873
    %3919 = vmatpush1.msra.mxu0 %v3872
    %3920 = vmatprep.subr.mxu0 %v3877
    %3921 = vmatpush1.msra.mxu0 %v3876
    %3922 = vmatprep.subr.mxu0 %v3881
    %3923 = vmatpush1.msra.mxu0 %v3880
    %3924 = vmatprep.subr.mxu0 %v3885
    %3925 = vmatpush1.msra.mxu0 %v3884
    %3926 = vmatprep.subr.mxu0 %v3889
    %3927 = vmatpush1.msra.mxu0 %v3888
    %3928 = vmatprep.subr.mxu0 %v3893
    %3929 = vmatpush1.msra.mxu0 %v3892
    %3930 = vmatprep.subr.mxu0 %v3897
    %3931 = vmatpush1.msra.mxu0 %v3896
    %3932 = vmatprep.subr.mxu0 0.0
    %3933 = vmatpush1.msra.mxu0 0.0
    %3934 = vmatprep.subr.mxu0 0.0
    %3935 = vmatpush1.msra.mxu0 0.0
    %3936 = vmatprep.subr.mxu0 0.0
    %3937 = vmatpush1.msra.mxu0 0.0
    %3938 = vmatprep.subr.mxu0 0.0
    %3939 = vmatpush1.msra.mxu0 0.0
    %3940 = vmatprep.subr.mxu0 0.0
    %3941 = vmatpush1.msra.mxu0 0.0
    %3942 = vmatprep.subr.mxu0 0.0
    %3943 = vmatpush1.msra.mxu0 0.0
    %3944 = vmatprep.subr.mxu0 0.0
    %3945 = vmatpush1.msra.mxu0 0.0
    %3946 = vmatprep.subr.mxu0 0.0
    %3947 = vmatpush1.msra.mxu0 0.0
    %3948 = vmatprep.subr.mxu0 0.0
    %3949 = vmatpush1.msra.mxu0 0.0
    %3950 = vmatprep.subr.mxu0 0.0
    %3951 = vmatpush1.msra.mxu0 0.0
    %3952 = vmatprep.subr.mxu0 0.0
    %3953 = vmatpush1.msra.mxu0 0.0
    %3954 = vmatprep.subr.mxu0 0.0
    %3955 = vmatpush1.msra.mxu0 0.0
    %3956 = vmatprep.subr.mxu0 0.0
    %3957 = vmatpush1.msra.mxu0 0.0
    %3958 = vmatprep.subr.mxu0 0.0
    %3959 = vmatpush1.msra.mxu0 0.0
    %3960 = vmatprep.subr.mxu0 0.0
    %3961 = vmatpush1.msra.mxu0 0.0
    %3962 = vmatprep.subr.mxu0 0.0
    %3963 = vmatpush1.msra.mxu0 0.0
    %3964 = vmatprep.mubr.f32.mxu0 0.0
    %3965 = vmatmul.mubr.f32.gmra.mrb[0].mxu0 %v3833
    %v3966 = vpop.f32.mrb[0].mxu0
    %v3967 = vadd.f32 0.0, %v3966
    %v3968 = vpop.f32.mrb[0].mxu0
    %v3969 = vadd.f32 0.0, %v3968
    %3970 = vdwg.mxu0
    %3971 = vmatprep.subr.mxu0 %v3839
    %3972 = vmatpush1.msra.mxu0 %v3838
    %3973 = vmatprep.subr.mxu0 %v3843
    %3974 = vmatpush1.msra.mxu0 %v3842
    %3975 = vmatprep.subr.mxu0 %v3847
    %3976 = vmatpush1.msra.mxu0 %v3846
    %3977 = vmatprep.subr.mxu0 %v3851
    %3978 = vmatpush1.msra.mxu0 %v3850
    %3979 = vmatprep.subr.mxu0 %v3855
    %3980 = vmatpush1.msra.mxu0 %v3854
    %3981 = vmatprep.subr.mxu0 %v3859
    %3982 = vmatpush1.msra.mxu0 %v3858
    %3983 = vmatprep.subr.mxu0 %v3863
    %3984 = vmatpush1.msra.mxu0 %v3862
    %3985 = vmatprep.subr.mxu0 %v3867
    %3986 = vmatpush1.msra.mxu0 %v3866
    %3987 = vmatprep.subr.mxu0 %v3871
    %3988 = vmatpush1.msra.mxu0 %v3870
    %3989 = vmatprep.subr.mxu0 %v3875
    %3990 = vmatpush1.msra.mxu0 %v3874
    %3991 = vmatprep.subr.mxu0 %v3879
    %3992 = vmatpush1.msra.mxu0 %v3878
    %3993 = vmatprep.subr.mxu0 %v3883
    %3994 = vmatpush1.msra.mxu0 %v3882
    %3995 = vmatprep.subr.mxu0 %v3887
    %3996 = vmatpush1.msra.mxu0 %v3886
    %3997 = vmatprep.subr.mxu0 %v3891
    %3998 = vmatpush1.msra.mxu0 %v3890
    %3999 = vmatprep.subr.mxu0 %v3895
    %4000 = vmatpush1.msra.mxu0 %v3894
    %4001 = vmatprep.subr.mxu0 %v3899
    %4002 = vmatpush1.msra.mxu0 %v3898
    %4003 = vmatprep.subr.mxu0 0.0
    %4004 = vmatpush1.msra.mxu0 0.0
    %4005 = vmatprep.subr.mxu0 0.0
    %4006 = vmatpush1.msra.mxu0 0.0
    %4007 = vmatprep.subr.mxu0 0.0
    %4008 = vmatpush1.msra.mxu0 0.0
    %4009 = vmatprep.subr.mxu0 0.0
    %4010 = vmatpush1.msra.mxu0 0.0
    %4011 = vmatprep.subr.mxu0 0.0
    %4012 = vmatpush1.msra.mxu0 0.0
    %4013 = vmatprep.subr.mxu0 0.0
    %4014 = vmatpush1.msra.mxu0 0.0
    %4015 = vmatprep.subr.mxu0 0.0
    %4016 = vmatpush1.msra.mxu0 0.0
    %4017 = vmatprep.subr.mxu0 0.0
    %4018 = vmatpush1.msra.mxu0 0.0
    %4019 = vmatprep.subr.mxu0 0.0
    %4020 = vmatpush1.msra.mxu0 0.0
    %4021 = vmatprep.subr.mxu0 0.0
    %4022 = vmatpush1.msra.mxu0 0.0
    %4023 = vmatprep.subr.mxu0 0.0
    %4024 = vmatpush1.msra.mxu0 0.0
    %4025 = vmatprep.subr.mxu0 0.0
    %4026 = vmatpush1.msra.mxu0 0.0
    %4027 = vmatprep.subr.mxu0 0.0
    %4028 = vmatpush1.msra.mxu0 0.0
    %4029 = vmatprep.subr.mxu0 0.0
    %4030 = vmatpush1.msra.mxu0 0.0
    %4031 = vmatprep.subr.mxu0 0.0
    %4032 = vmatpush1.msra.mxu0 0.0
    %4033 = vmatprep.subr.mxu0 0.0
    %4034 = vmatpush1.msra.mxu0 0.0
    %4035 = vmatprep.mubr.f32.mxu0 0.0
    %4036 = vmatmul.mubr.f32.gmra.mrb[0].mxu0 %v3833
    %v4037 = vpop.f32.mrb[0].mxu0
    %v4038 = vadd.f32 0.0, %v4037
    %v4039 = vpop.f32.mrb[0].mxu0
    %v4040 = vadd.f32 0.0, %v4039
    %4041 = vdwg.mxu0
    %v4046 = vrot.slane %v3967, 6
    %v4047 = vrot.slane %v3969, 6
    %v4048 = vrot.slane %v4038, 6
    %v4049 = vrot.slane %v4040, 6
    %v4054 = vadd.f32 %v2518, %v4046
    %v4055 = vadd.f32 %v2520, %v4047
    %v4056 = vadd.f32 %v2595, %v4048
    %v4057 = vadd.f32 %v2597, %v4049
    %v4058 = vxor.u32 %v4054, 2147483648
    %v4059 = vxor.u32 %v4055, 2147483648
    %v4060 = vxor.u32 %v4056, 2147483648
    %v4061 = vmul.f32 %v4058, 1.442695
    %v4062 = vpow.pop %v4061
    %v4063 = vmul.f32 %v4059, 1.442695
    %v4064 = vpow.pop %v4063
    %v4065 = vmul.f32 %v4060, 1.442695
    %v4066 = vpow.pop %v4065
    %v4067 = vadd.f32 %v4062, 1.0
    %v4068 = vadd.f32 %v4064, 1.0
    %v4069 = vadd.f32 %v4066, 1.0
    %v4070 = vrcp.pop %v4067
    %v4071 = vmul.f32 1.0, %v4070
    %v4072 = vrcp.pop %v4068
    %v4073 = vmul.f32 1.0, %v4072
    %v4074 = vrcp.pop %v4069
    %v4075 = vmul.f32 1.0, %v4074
    %v4076 = vtanh.pop %v4057
    %v4078 = vrot.slane %v3831, 6
    %v4080 = vmul.f32 %v4073, %v4078
    %v4081 = vmul.f32 %v4071, %v4076
    %v4082 = vadd.f32 %v4080, %v4081
    %v4083 = vtanh.pop %v4082
    %v4084 = vmul.f32 %v4075, %v4083
    %v4085 = vtanh.pop %v4084
    %4086 = vst [vmem:[#allocation3 + $0x8] sm:$0xc] %v4085
    %v4087 = vld [vmem:[#allocation9] sm:$0xff]
    %v4088 = vld [vmem:[#allocation9 + $0x8] sm:$0xff]
    %v4089 = vld [vmem:[#allocation9 + $0x10] sm:$0xff]
    %v4090 = vld [vmem:[#allocation9 + $0x18] sm:$0xff]
    %v4091 = vld [vmem:[#allocation9 + $0x20] sm:$0xff]
    %v4092 = vld [vmem:[#allocation9 + $0x28] sm:$0xff]
    %v4093 = vld [vmem:[#allocation9 + $0x30] sm:$0xff]
    %v4094 = vld [vmem:[#allocation9 + $0x38] sm:$0xff]
    %v4095 = vld [vmem:[#allocation9 + $0x40] sm:$0xff]
    %v4096 = vld [vmem:[#allocation9 + $0x48] sm:$0xff]
    %v4097 = vld [vmem:[#allocation9 + $0x50] sm:$0xff]
    %v4098 = vld [vmem:[#allocation9 + $0x58] sm:$0xff]
    %v4099 = vld [vmem:[#allocation9 + $0x60] sm:$0xff]
    %v4100 = vld [vmem:[#allocation9 + $0x68] sm:$0xff]
    %v4101 = vld [vmem:[#allocation9 + $0x70] sm:$0xff]
    %v4102 = vld [vmem:[#allocation9 + $0x78] sm:$0xff]
    %v4103 = vld [vmem:[#allocation9 + $0x80] sm:$0xff]
    %v4104 = vld [vmem:[#allocation9 + $0x88] sm:$0xff]
    %v4105 = vld [vmem:[#allocation9 + $0x90] sm:$0xff]
    %v4106 = vld [vmem:[#allocation9 + $0x98] sm:$0xff]
    %v4107 = vld [vmem:[#allocation9 + $0xa0] sm:$0xff]
    %v4108 = vld [vmem:[#allocation9 + $0xa8] sm:$0xff]
    %v4109 = vld [vmem:[#allocation9 + $0xb0] sm:$0xff]
    %v4110 = vld [vmem:[#allocation9 + $0xb8] sm:$0xff]
    %v4111 = vld [vmem:[#allocation9 + $0xc0] sm:$0xff]
    %v4112 = vld [vmem:[#allocation9 + $0xc8] sm:$0xff]
    %v4113 = vld [vmem:[#allocation9 + $0xd0] sm:$0xff]
    %v4114 = vld [vmem:[#allocation9 + $0xd8] sm:$0xff]
    %v4115 = vld [vmem:[#allocation9 + $0xe0] sm:$0xff]
    %v4116 = vld [vmem:[#allocation9 + $0xe8] sm:$0xff]
    %v4117 = vld [vmem:[#allocation9 + $0xf0] sm:$0xff]
    %v4118 = vld [vmem:[#allocation9 + $0xf8] sm:$0xff]
    %v4119 = vld [vmem:[#allocation9 + $0x100] sm:$0xff]
    %v4120 = vld [vmem:[#allocation9 + $0x108] sm:$0xff]
    %v4121 = vld [vmem:[#allocation9 + $0x110] sm:$0xff]
    %v4122 = vld [vmem:[#allocation9 + $0x118] sm:$0xff]
    %v4123 = vld [vmem:[#allocation9 + $0x120] sm:$0xff]
    %v4124 = vld [vmem:[#allocation9 + $0x128] sm:$0xff]
    %v4125 = vld [vmem:[#allocation9 + $0x130] sm:$0xff]
    %v4126 = vld [vmem:[#allocation9 + $0x138] sm:$0xff]
    %v4127 = vld [vmem:[#allocation9 + $0x140] sm:$0xff]
    %v4128 = vld [vmem:[#allocation9 + $0x148] sm:$0xff]
    %v4129 = vld [vmem:[#allocation9 + $0x150] sm:$0xff]
    %v4130 = vld [vmem:[#allocation9 + $0x158] sm:$0xff]
    %v4131 = vld [vmem:[#allocation9 + $0x160] sm:$0xff]
    %v4132 = vld [vmem:[#allocation9 + $0x168] sm:$0xff]
    %v4133 = vld [vmem:[#allocation9 + $0x170] sm:$0xff]
    %v4134 = vld [vmem:[#allocation9 + $0x178] sm:$0xff]
    %v4135 = vld [vmem:[#allocation9 + $0x180] sm:$0xff]
    %v4136 = vld [vmem:[#allocation9 + $0x188] sm:$0xff]
    %v4137 = vld [vmem:[#allocation9 + $0x190] sm:$0xff]
    %v4138 = vld [vmem:[#allocation9 + $0x198] sm:$0xff]
    %v4139 = vld [vmem:[#allocation9 + $0x1a0] sm:$0xff]
    %v4140 = vld [vmem:[#allocation9 + $0x1a8] sm:$0xff]
    %v4141 = vld [vmem:[#allocation9 + $0x1b0] sm:$0xff]
    %v4142 = vld [vmem:[#allocation9 + $0x1b8] sm:$0xff]
    %v4143 = vld [vmem:[#allocation9 + $0x1c0] sm:$0xff]
    %v4144 = vld [vmem:[#allocation9 + $0x1c8] sm:$0xff]
    %v4145 = vld [vmem:[#allocation9 + $0x1d0] sm:$0xff]
    %v4146 = vld [vmem:[#allocation9 + $0x1d8] sm:$0xff]
    %v4147 = vld [vmem:[#allocation9 + $0x1e0] sm:$0xff]
    %v4148 = vld [vmem:[#allocation9 + $0x1e8] sm:$0xff]
    %v4149 = vld [vmem:[#allocation9 + $0x1f0] sm:$0xff]
    %v4150 = vld [vmem:[#allocation9 + $0x1f8] sm:$0xff]
    %v4152 = vrot.slane %v4084, 2
    %4154 = vmatprep.subr.mxu0 %v4088
    %4155 = vmatpush1.msra.mxu0 %v4087
    %4156 = vmatprep.subr.mxu0 %v4092
    %4157 = vmatpush1.msra.mxu0 %v4091
    %4158 = vmatprep.subr.mxu0 %v4096
    %4159 = vmatpush1.msra.mxu0 %v4095
    %4160 = vmatprep.subr.mxu0 %v4100
    %4161 = vmatpush1.msra.mxu0 %v4099
    %4162 = vmatprep.subr.mxu0 %v4104
    %4163 = vmatpush1.msra.mxu0 %v4103
    %4164 = vmatprep.subr.mxu0 %v4108
    %4165 = vmatpush1.msra.mxu0 %v4107
    %4166 = vmatprep.subr.mxu0 %v4112
    %4167 = vmatpush1.msra.mxu0 %v4111
    %4168 = vmatprep.subr.mxu0 %v4116
    %4169 = vmatpush1.msra.mxu0 %v4115
    %4170 = vmatprep.subr.mxu0 %v4120
    %4171 = vmatpush1.msra.mxu0 %v4119
    %4172 = vmatprep.subr.mxu0 %v4124
    %4173 = vmatpush1.msra.mxu0 %v4123
    %4174 = vmatprep.subr.mxu0 %v4128
    %4175 = vmatpush1.msra.mxu0 %v4127
    %4176 = vmatprep.subr.mxu0 %v4132
    %4177 = vmatpush1.msra.mxu0 %v4131
    %4178 = vmatprep.subr.mxu0 %v4136
    %4179 = vmatpush1.msra.mxu0 %v4135
    %4180 = vmatprep.subr.mxu0 %v4140
    %4181 = vmatpush1.msra.mxu0 %v4139
    %4182 = vmatprep.subr.mxu0 %v4144
    %4183 = vmatpush1.msra.mxu0 %v4143
    %4184 = vmatprep.subr.mxu0 %v4148
    %4185 = vmatpush1.msra.mxu0 %v4147
    %4186 = vmatprep.subr.mxu0 0.0
    %4187 = vmatpush1.msra.mxu0 0.0
    %4188 = vmatprep.subr.mxu0 0.0
    %4189 = vmatpush1.msra.mxu0 0.0
    %4190 = vmatprep.subr.mxu0 0.0
    %4191 = vmatpush1.msra.mxu0 0.0
    %4192 = vmatprep.subr.mxu0 0.0
    %4193 = vmatpush1.msra.mxu0 0.0
    %4194 = vmatprep.subr.mxu0 0.0
    %4195 = vmatpush1.msra.mxu0 0.0
    %4196 = vmatprep.subr.mxu0 0.0
    %4197 = vmatpush1.msra.mxu0 0.0
    %4198 = vmatprep.subr.mxu0 0.0
    %4199 = vmatpush1.msra.mxu0 0.0
    %4200 = vmatprep.subr.mxu0 0.0
    %4201 = vmatpush1.msra.mxu0 0.0
    %4202 = vmatprep.subr.mxu0 0.0
    %4203 = vmatpush1.msra.mxu0 0.0
    %4204 = vmatprep.subr.mxu0 0.0
    %4205 = vmatpush1.msra.mxu0 0.0
    %4206 = vmatprep.subr.mxu0 0.0
    %4207 = vmatpush1.msra.mxu0 0.0
    %4208 = vmatprep.subr.mxu0 0.0
    %4209 = vmatpush1.msra.mxu0 0.0
    %4210 = vmatprep.subr.mxu0 0.0
    %4211 = vmatpush1.msra.mxu0 0.0
    %4212 = vmatprep.subr.mxu0 0.0
    %4213 = vmatpush1.msra.mxu0 0.0
    %4214 = vmatprep.subr.mxu0 0.0
    %4215 = vmatpush1.msra.mxu0 0.0
    %4216 = vmatprep.subr.mxu0 0.0
    %4217 = vmatpush1.msra.mxu0 0.0
    %4218 = vmatprep.mubr.f32.mxu0 0.0
    %4219 = vmatmul.mubr.f32.gmra.mrb[0].mxu0 %v4152
    %v4220 = vpop.f32.mrb[0].mxu0
    %v4221 = vadd.f32 0.0, %v4220
    %v4222 = vpop.f32.mrb[0].mxu0
    %v4223 = vadd.f32 0.0, %v4222
    %4224 = vdwg.mxu0
    %4225 = vmatprep.subr.mxu0 %v4090
    %4226 = vmatpush1.msra.mxu0 %v4089
    %4227 = vmatprep.subr.mxu0 %v4094
    %4228 = vmatpush1.msra.mxu0 %v4093
    %4229 = vmatprep.subr.mxu0 %v4098
    %4230 = vmatpush1.msra.mxu0 %v4097
    %4231 = vmatprep.subr.mxu0 %v4102
    %4232 = vmatpush1.msra.mxu0 %v4101
    %4233 = vmatprep.subr.mxu0 %v4106
    %4234 = vmatpush1.msra.mxu0 %v4105
    %4235 = vmatprep.subr.mxu0 %v4110
    %4236 = vmatpush1.msra.mxu0 %v4109
    %4237 = vmatprep.subr.mxu0 %v4114
    %4238 = vmatpush1.msra.mxu0 %v4113
    %4239 = vmatprep.subr.mxu0 %v4118
    %4240 = vmatpush1.msra.mxu0 %v4117
    %4241 = vmatprep.subr.mxu0 %v4122
    %4242 = vmatpush1.msra.mxu0 %v4121
    %4243 = vmatprep.subr.mxu0 %v4126
    %4244 = vmatpush1.msra.mxu0 %v4125
    %4245 = vmatprep.subr.mxu0 %v4130
    %4246 = vmatpush1.msra.mxu0 %v4129
    %4247 = vmatprep.subr.mxu0 %v4134
    %4248 = vmatpush1.msra.mxu0 %v4133
    %4249 = vmatprep.subr.mxu0 %v4138
    %4250 = vmatpush1.msra.mxu0 %v4137
    %4251 = vmatprep.subr.mxu0 %v4142
    %4252 = vmatpush1.msra.mxu0 %v4141
    %4253 = vmatprep.subr.mxu0 %v4146
    %4254 = vmatpush1.msra.mxu0 %v4145
    %4255 = vmatprep.subr.mxu0 %v4150
    %4256 = vmatpush1.msra.mxu0 %v4149
    %4257 = vmatprep.subr.mxu0 0.0
    %4258 = vmatpush1.msra.mxu0 0.0
    %4259 = vmatprep.subr.mxu0 0.0
    %4260 = vmatpush1.msra.mxu0 0.0
    %4261 = vmatprep.subr.mxu0 0.0
    %4262 = vmatpush1.msra.mxu0 0.0
    %4263 = vmatprep.subr.mxu0 0.0
    %4264 = vmatpush1.msra.mxu0 0.0
    %4265 = vmatprep.subr.mxu0 0.0
    %4266 = vmatpush1.msra.mxu0 0.0
    %4267 = vmatprep.subr.mxu0 0.0
    %4268 = vmatpush1.msra.mxu0 0.0
    %4269 = vmatprep.subr.mxu0 0.0
    %4270 = vmatpush1.msra.mxu0 0.0
    %4271 = vmatprep.subr.mxu0 0.0
    %4272 = vmatpush1.msra.mxu0 0.0
    %4273 = vmatprep.subr.mxu0 0.0
    %4274 = vmatpush1.msra.mxu0 0.0
    %4275 = vmatprep.subr.mxu0 0.0
    %4276 = vmatpush1.msra.mxu0 0.0
    %4277 = vmatprep.subr.mxu0 0.0
    %4278 = vmatpush1.msra.mxu0 0.0
    %4279 = vmatprep.subr.mxu0 0.0
    %4280 = vmatpush1.msra.mxu0 0.0
    %4281 = vmatprep.subr.mxu0 0.0
    %4282 = vmatpush1.msra.mxu0 0.0
    %4283 = vmatprep.subr.mxu0 0.0
    %4284 = vmatpush1.msra.mxu0 0.0
    %4285 = vmatprep.subr.mxu0 0.0
    %4286 = vmatpush1.msra.mxu0 0.0
    %4287 = vmatprep.subr.mxu0 0.0
    %4288 = vmatpush1.msra.mxu0 0.0
    %4289 = vmatprep.mubr.f32.mxu0 0.0
    %4290 = vmatmul.mubr.f32.gmra.mrb[0].mxu0 %v4152
    %v4291 = vpop.f32.mrb[0].mxu0
    %v4292 = vadd.f32 0.0, %v4291
    %v4293 = vpop.f32.mrb[0].mxu0
    %v4294 = vadd.f32 0.0, %v4293
    %4295 = vdwg.mxu0
    %v4300 = vrot.slane %v4221, 4
    %v4301 = vrot.slane %v4223, 4
    %v4302 = vrot.slane %v4292, 4
    %v4303 = vrot.slane %v4294, 4
    %v4308 = vadd.f32 %v2518, %v4300
    %v4309 = vadd.f32 %v2520, %v4301
    %v4310 = vadd.f32 %v2595, %v4302
    %v4311 = vadd.f32 %v2597, %v4303
    %v4312 = vxor.u32 %v4308, 2147483648
    %v4313 = vxor.u32 %v4309, 2147483648
    %v4314 = vxor.u32 %v4310, 2147483648
    %v4315 = vmul.f32 %v4312, 1.442695
    %v4316 = vpow.pop %v4315
    %v4317 = vmul.f32 %v4313, 1.442695
    %v4318 = vpow.pop %v4317
    %v4319 = vmul.f32 %v4314, 1.442695
    %v4320 = vpow.pop %v4319
    %v4321 = vadd.f32 %v4316, 1.0
    %v4322 = vadd.f32 %v4318, 1.0
    %v4323 = vadd.f32 %v4320, 1.0
    %v4324 = vrcp.pop %v4321
    %v4325 = vmul.f32 1.0, %v4324
    %v4326 = vrcp.pop %v4322
    %v4327 = vmul.f32 1.0, %v4326
    %v4328 = vrcp.pop %v4323
    %v4329 = vmul.f32 1.0, %v4328
    %v4330 = vtanh.pop %v4311
    %v4332 = vrot.slane %v4082, 6
    %v4334 = vmul.f32 %v4327, %v4332
    %v4335 = vmul.f32 %v4325, %v4330
    %v4336 = vadd.f32 %v4334, %v4335
    %v4337 = vtanh.pop %v4336
    %v4338 = vmul.f32 %v4329, %v4337
    %v4339 = vtanh.pop %v4338
    %4340 = vst [vmem:[#allocation3 + $0x8] sm:$0x30] %v4339
    %v4341 = vld [vmem:[#allocation9] sm:$0xff]
    %v4342 = vld [vmem:[#allocation9 + $0x8] sm:$0xff]
    %v4343 = vld [vmem:[#allocation9 + $0x10] sm:$0xff]
    %v4344 = vld [vmem:[#allocation9 + $0x18] sm:$0xff]
    %v4345 = vld [vmem:[#allocation9 + $0x20] sm:$0xff]
    %v4346 = vld [vmem:[#allocation9 + $0x28] sm:$0xff]
    %v4347 = vld [vmem:[#allocation9 + $0x30] sm:$0xff]
    %v4348 = vld [vmem:[#allocation9 + $0x38] sm:$0xff]
    %v4349 = vld [vmem:[#allocation9 + $0x40] sm:$0xff]
    %v4350 = vld [vmem:[#allocation9 + $0x48] sm:$0xff]
    %v4351 = vld [vmem:[#allocation9 + $0x50] sm:$0xff]
    %v4352 = vld [vmem:[#allocation9 + $0x58] sm:$0xff]
    %v4353 = vld [vmem:[#allocation9 + $0x60] sm:$0xff]
    %v4354 = vld [vmem:[#allocation9 + $0x68] sm:$0xff]
    %v4355 = vld [vmem:[#allocation9 + $0x70] sm:$0xff]
    %v4356 = vld [vmem:[#allocation9 + $0x78] sm:$0xff]
    %v4357 = vld [vmem:[#allocation9 + $0x80] sm:$0xff]
    %v4358 = vld [vmem:[#allocation9 + $0x88] sm:$0xff]
    %v4359 = vld [vmem:[#allocation9 + $0x90] sm:$0xff]
    %v4360 = vld [vmem:[#allocation9 + $0x98] sm:$0xff]
    %v4361 = vld [vmem:[#allocation9 + $0xa0] sm:$0xff]
    %v4362 = vld [vmem:[#allocation9 + $0xa8] sm:$0xff]
    %v4363 = vld [vmem:[#allocation9 + $0xb0] sm:$0xff]
    %v4364 = vld [vmem:[#allocation9 + $0xb8] sm:$0xff]
    %v4365 = vld [vmem:[#allocation9 + $0xc0] sm:$0xff]
    %v4366 = vld [vmem:[#allocation9 + $0xc8] sm:$0xff]
    %v4367 = vld [vmem:[#allocation9 + $0xd0] sm:$0xff]
    %v4368 = vld [vmem:[#allocation9 + $0xd8] sm:$0xff]
    %v4369 = vld [vmem:[#allocation9 + $0xe0] sm:$0xff]
    %v4370 = vld [vmem:[#allocation9 + $0xe8] sm:$0xff]
    %v4371 = vld [vmem:[#allocation9 + $0xf0] sm:$0xff]
    %v4372 = vld [vmem:[#allocation9 + $0xf8] sm:$0xff]
    %v4373 = vld [vmem:[#allocation9 + $0x100] sm:$0xff]
    %v4374 = vld [vmem:[#allocation9 + $0x108] sm:$0xff]
    %v4375 = vld [vmem:[#allocation9 + $0x110] sm:$0xff]
    %v4376 = vld [vmem:[#allocation9 + $0x118] sm:$0xff]
    %v4377 = vld [vmem:[#allocation9 + $0x120] sm:$0xff]
    %v4378 = vld [vmem:[#allocation9 + $0x128] sm:$0xff]
    %v4379 = vld [vmem:[#allocation9 + $0x130] sm:$0xff]
    %v4380 = vld [vmem:[#allocation9 + $0x138] sm:$0xff]
    %v4381 = vld [vmem:[#allocation9 + $0x140] sm:$0xff]
    %v4382 = vld [vmem:[#allocation9 + $0x148] sm:$0xff]
    %v4383 = vld [vmem:[#allocation9 + $0x150] sm:$0xff]
    %v4384 = vld [vmem:[#allocation9 + $0x158] sm:$0xff]
    %v4385 = vld [vmem:[#allocation9 + $0x160] sm:$0xff]
    %v4386 = vld [vmem:[#allocation9 + $0x168] sm:$0xff]
    %v4387 = vld [vmem:[#allocation9 + $0x170] sm:$0xff]
    %v4388 = vld [vmem:[#allocation9 + $0x178] sm:$0xff]
    %v4389 = vld [vmem:[#allocation9 + $0x180] sm:$0xff]
    %v4390 = vld [vmem:[#allocation9 + $0x188] sm:$0xff]
    %v4391 = vld [vmem:[#allocation9 + $0x190] sm:$0xff]
    %v4392 = vld [vmem:[#allocation9 + $0x198] sm:$0xff]
    %v4393 = vld [vmem:[#allocation9 + $0x1a0] sm:$0xff]
    %v4394 = vld [vmem:[#allocation9 + $0x1a8] sm:$0xff]
    %v4395 = vld [vmem:[#allocation9 + $0x1b0] sm:$0xff]
    %v4396 = vld [vmem:[#allocation9 + $0x1b8] sm:$0xff]
    %v4397 = vld [vmem:[#allocation9 + $0x1c0] sm:$0xff]
    %v4398 = vld [vmem:[#allocation9 + $0x1c8] sm:$0xff]
    %v4399 = vld [vmem:[#allocation9 + $0x1d0] sm:$0xff]
    %v4400 = vld [vmem:[#allocation9 + $0x1d8] sm:$0xff]
    %v4401 = vld [vmem:[#allocation9 + $0x1e0] sm:$0xff]
    %v4402 = vld [vmem:[#allocation9 + $0x1e8] sm:$0xff]
    %v4403 = vld [vmem:[#allocation9 + $0x1f0] sm:$0xff]
    %v4404 = vld [vmem:[#allocation9 + $0x1f8] sm:$0xff]
    %v4406 = vrot.slane %v4338, 4
    %4408 = vmatprep.subr.mxu0 %v4342
    %4409 = vmatpush1.msra.mxu0 %v4341
    %4410 = vmatprep.subr.mxu0 %v4346
    %4411 = vmatpush1.msra.mxu0 %v4345
    %4412 = vmatprep.subr.mxu0 %v4350
    %4413 = vmatpush1.msra.mxu0 %v4349
    %4414 = vmatprep.subr.mxu0 %v4354
    %4415 = vmatpush1.msra.mxu0 %v4353
    %4416 = vmatprep.subr.mxu0 %v4358
    %4417 = vmatpush1.msra.mxu0 %v4357
    %4418 = vmatprep.subr.mxu0 %v4362
    %4419 = vmatpush1.msra.mxu0 %v4361
    %4420 = vmatprep.subr.mxu0 %v4366
    %4421 = vmatpush1.msra.mxu0 %v4365
    %4422 = vmatprep.subr.mxu0 %v4370
    %4423 = vmatpush1.msra.mxu0 %v4369
    %4424 = vmatprep.subr.mxu0 %v4374
    %4425 = vmatpush1.msra.mxu0 %v4373
    %4426 = vmatprep.subr.mxu0 %v4378
    %4427 = vmatpush1.msra.mxu0 %v4377
    %4428 = vmatprep.subr.mxu0 %v4382
    %4429 = vmatpush1.msra.mxu0 %v4381
    %4430 = vmatprep.subr.mxu0 %v4386
    %4431 = vmatpush1.msra.mxu0 %v4385
    %4432 = vmatprep.subr.mxu0 %v4390
    %4433 = vmatpush1.msra.mxu0 %v4389
    %4434 = vmatprep.subr.mxu0 %v4394
    %4435 = vmatpush1.msra.mxu0 %v4393
    %4436 = vmatprep.subr.mxu0 %v4398
    %4437 = vmatpush1.msra.mxu0 %v4397
    %4438 = vmatprep.subr.mxu0 %v4402
    %4439 = vmatpush1.msra.mxu0 %v4401
    %4440 = vmatprep.subr.mxu0 0.0
    %4441 = vmatpush1.msra.mxu0 0.0
    %4442 = vmatprep.subr.mxu0 0.0
    %4443 = vmatpush1.msra.mxu0 0.0
    %4444 = vmatprep.subr.mxu0 0.0
    %4445 = vmatpush1.msra.mxu0 0.0
    %4446 = vmatprep.subr.mxu0 0.0
    %4447 = vmatpush1.msra.mxu0 0.0
    %4448 = vmatprep.subr.mxu0 0.0
    %4449 = vmatpush1.msra.mxu0 0.0
    %4450 = vmatprep.subr.mxu0 0.0
    %4451 = vmatpush1.msra.mxu0 0.0
    %4452 = vmatprep.subr.mxu0 0.0
    %4453 = vmatpush1.msra.mxu0 0.0
    %4454 = vmatprep.subr.mxu0 0.0
    %4455 = vmatpush1.msra.mxu0 0.0
    %4456 = vmatprep.subr.mxu0 0.0
    %4457 = vmatpush1.msra.mxu0 0.0
    %4458 = vmatprep.subr.mxu0 0.0
    %4459 = vmatpush1.msra.mxu0 0.0
    %4460 = vmatprep.subr.mxu0 0.0
    %4461 = vmatpush1.msra.mxu0 0.0
    %4462 = vmatprep.subr.mxu0 0.0
    %4463 = vmatpush1.msra.mxu0 0.0
    %4464 = vmatprep.subr.mxu0 0.0
    %4465 = vmatpush1.msra.mxu0 0.0
    %4466 = vmatprep.subr.mxu0 0.0
    %4467 = vmatpush1.msra.mxu0 0.0
    %4468 = vmatprep.subr.mxu0 0.0
    %4469 = vmatpush1.msra.mxu0 0.0
    %4470 = vmatprep.subr.mxu0 0.0
    %4471 = vmatpush1.msra.mxu0 0.0
    %4472 = vmatprep.mubr.f32.mxu0 0.0
    %4473 = vmatmul.mubr.f32.gmra.mrb[0].mxu0 %v4406
    %v4474 = vpop.f32.mrb[0].mxu0
    %v4475 = vadd.f32 0.0, %v4474
    %v4476 = vpop.f32.mrb[0].mxu0
    %v4477 = vadd.f32 0.0, %v4476
    %4478 = vdwg.mxu0
    %4479 = vmatprep.subr.mxu0 %v4344
    %4480 = vmatpush1.msra.mxu0 %v4343
    %4481 = vmatprep.subr.mxu0 %v4348
    %4482 = vmatpush1.msra.mxu0 %v4347
    %4483 = vmatprep.subr.mxu0 %v4352
    %4484 = vmatpush1.msra.mxu0 %v4351
    %4485 = vmatprep.subr.mxu0 %v4356
    %4486 = vmatpush1.msra.mxu0 %v4355
    %4487 = vmatprep.subr.mxu0 %v4360
    %4488 = vmatpush1.msra.mxu0 %v4359
    %4489 = vmatprep.subr.mxu0 %v4364
    %4490 = vmatpush1.msra.mxu0 %v4363
    %4491 = vmatprep.subr.mxu0 %v4368
    %4492 = vmatpush1.msra.mxu0 %v4367
    %4493 = vmatprep.subr.mxu0 %v4372
    %4494 = vmatpush1.msra.mxu0 %v4371
    %4495 = vmatprep.subr.mxu0 %v4376
    %4496 = vmatpush1.msra.mxu0 %v4375
    %4497 = vmatprep.subr.mxu0 %v4380
    %4498 = vmatpush1.msra.mxu0 %v4379
    %4499 = vmatprep.subr.mxu0 %v4384
    %4500 = vmatpush1.msra.mxu0 %v4383
    %4501 = vmatprep.subr.mxu0 %v4388
    %4502 = vmatpush1.msra.mxu0 %v4387
    %4503 = vmatprep.subr.mxu0 %v4392
    %4504 = vmatpush1.msra.mxu0 %v4391
    %4505 = vmatprep.subr.mxu0 %v4396
    %4506 = vmatpush1.msra.mxu0 %v4395
    %4507 = vmatprep.subr.mxu0 %v4400
    %4508 = vmatpush1.msra.mxu0 %v4399
    %4509 = vmatprep.subr.mxu0 %v4404
    %4510 = vmatpush1.msra.mxu0 %v4403
    %4511 = vmatprep.subr.mxu0 0.0
    %4512 = vmatpush1.msra.mxu0 0.0
    %4513 = vmatprep.subr.mxu0 0.0
    %4514 = vmatpush1.msra.mxu0 0.0
    %4515 = vmatprep.subr.mxu0 0.0
    %4516 = vmatpush1.msra.mxu0 0.0
    %4517 = vmatprep.subr.mxu0 0.0
    %4518 = vmatpush1.msra.mxu0 0.0
    %4519 = vmatprep.subr.mxu0 0.0
    %4520 = vmatpush1.msra.mxu0 0.0
    %4521 = vmatprep.subr.mxu0 0.0
    %4522 = vmatpush1.msra.mxu0 0.0
    %4523 = vmatprep.subr.mxu0 0.0
    %4524 = vmatpush1.msra.mxu0 0.0
    %4525 = vmatprep.subr.mxu0 0.0
    %4526 = vmatpush1.msra.mxu0 0.0
    %4527 = vmatprep.subr.mxu0 0.0
    %4528 = vmatpush1.msra.mxu0 0.0
    %4529 = vmatprep.subr.mxu0 0.0
    %4530 = vmatpush1.msra.mxu0 0.0
    %4531 = vmatprep.subr.mxu0 0.0
    %4532 = vmatpush1.msra.mxu0 0.0
    %4533 = vmatprep.subr.mxu0 0.0
    %4534 = vmatpush1.msra.mxu0 0.0
    %4535 = vmatprep.subr.mxu0 0.0
    %4536 = vmatpush1.msra.mxu0 0.0
    %4537 = vmatprep.subr.mxu0 0.0
    %4538 = vmatpush1.msra.mxu0 0.0
    %4539 = vmatprep.subr.mxu0 0.0
    %4540 = vmatpush1.msra.mxu0 0.0
    %4541 = vmatprep.subr.mxu0 0.0
    %4542 = vmatpush1.msra.mxu0 0.0
    %4543 = vmatprep.mubr.f32.mxu0 0.0
    %4544 = vmatmul.mubr.f32.gmra.mrb[0].mxu0 %v4406
    %v4545 = vpop.f32.mrb[0].mxu0
    %v4546 = vadd.f32 0.0, %v4545
    %v4547 = vpop.f32.mrb[0].mxu0
    %v4548 = vadd.f32 0.0, %v4547
    %4549 = vdwg.mxu0
    %v4554 = vrot.slane %v4475, 2
    %v4555 = vrot.slane %v4477, 2
    %v4556 = vrot.slane %v4546, 2
    %v4557 = vrot.slane %v4548, 2
    %v4562 = vadd.f32 %v2518, %v4554
    %v4563 = vadd.f32 %v2520, %v4555
    %v4564 = vadd.f32 %v2595, %v4556
    %v4565 = vadd.f32 %v2597, %v4557
    %v4566 = vxor.u32 %v4562, 2147483648
    %v4567 = vxor.u32 %v4563, 2147483648
    %v4568 = vxor.u32 %v4564, 2147483648
    %v4569 = vmul.f32 %v4566, 1.442695
    %v4570 = vpow.pop %v4569
    %v4571 = vmul.f32 %v4567, 1.442695
    %v4572 = vpow.pop %v4571
    %v4573 = vmul.f32 %v4568, 1.442695
    %v4574 = vpow.pop %v4573
    %v4575 = vadd.f32 %v4570, 1.0
    %v4576 = vadd.f32 %v4572, 1.0
    %v4577 = vadd.f32 %v4574, 1.0
    %v4578 = vrcp.pop %v4575
    %v4579 = vmul.f32 1.0, %v4578
    %v4580 = vrcp.pop %v4576
    %v4581 = vmul.f32 1.0, %v4580
    %v4582 = vrcp.pop %v4577
    %v4583 = vmul.f32 1.0, %v4582
    %v4584 = vtanh.pop %v4565
    %v4586 = vrot.slane %v4336, 6
    %v4588 = vmul.f32 %v4581, %v4586
    %v4589 = vmul.f32 %v4579, %v4584
    %v4590 = vadd.f32 %v4588, %v4589
    %v4591 = vtanh.pop %v4590
    %v4592 = vmul.f32 %v4583, %v4591
    %v4593 = vtanh.pop %v4592
    %4594 = vst [vmem:[#allocation3 + $0x8] sm:$0xc0] %v4593
    %v4595 = vld [vmem:[#allocation3] sm:$0xff]
    %v4596 = vld [vmem:[#allocation3 + $0x8] sm:$0xff]
    %v4597 = vld [vmem:[#allocation11] sm:$0xff]
    %v4598 = vld [vmem:[#allocation11 + $0x8] sm:$0xff]
    %v4599 = vld [vmem:[#allocation11 + $0x10] sm:$0xff]
    %v4600 = vld [vmem:[#allocation11 + $0x18] sm:$0xff]
    %v4601 = vld [vmem:[#allocation11 + $0x20] sm:$0xff]
    %v4602 = vld [vmem:[#allocation11 + $0x28] sm:$0xff]
    %v4603 = vld [vmem:[#allocation11 + $0x30] sm:$0xff]
    %v4604 = vld [vmem:[#allocation11 + $0x38] sm:$0xff]
    %v4605 = vld [vmem:[#allocation11 + $0x40] sm:$0xff]
    %v4606 = vld [vmem:[#allocation11 + $0x48] sm:$0xff]
    %v4607 = vld [vmem:[#allocation11 + $0x50] sm:$0xff]
    %v4608 = vld [vmem:[#allocation11 + $0x58] sm:$0xff]
    %v4609 = vld [vmem:[#allocation11 + $0x60] sm:$0xff]
    %v4610 = vld [vmem:[#allocation11 + $0x68] sm:$0xff]
    %v4611 = vld [vmem:[#allocation11 + $0x70] sm:$0xff]
    %v4612 = vld [vmem:[#allocation11 + $0x78] sm:$0xff]
    %v4613 = vld [vmem:[#allocation11 + $0x80] sm:$0xff]
    %v4614 = vld [vmem:[#allocation11 + $0x88] sm:$0xff]
    %v4615 = vld [vmem:[#allocation11 + $0x90] sm:$0xff]
    %v4616 = vld [vmem:[#allocation11 + $0x98] sm:$0xff]
    %v4617 = vld [vmem:[#allocation11 + $0xa0] sm:$0xff]
    %v4618 = vld [vmem:[#allocation11 + $0xa8] sm:$0xff]
    %v4619 = vld [vmem:[#allocation11 + $0xb0] sm:$0xff]
    %v4620 = vld [vmem:[#allocation11 + $0xb8] sm:$0xff]
    %v4621 = vld [vmem:[#allocation11 + $0xc0] sm:$0xff]
    %v4622 = vld [vmem:[#allocation11 + $0xc8] sm:$0xff]
    %v4623 = vld [vmem:[#allocation11 + $0xd0] sm:$0xff]
    %v4624 = vld [vmem:[#allocation11 + $0xd8] sm:$0xff]
    %v4625 = vld [vmem:[#allocation11 + $0xe0] sm:$0xff]
    %v4626 = vld [vmem:[#allocation11 + $0xe8] sm:$0xff]
    %v4627 = vld [vmem:[#allocation11 + $0xf0] sm:$0xff]
    %v4628 = vld [vmem:[#allocation11 + $0xf8] sm:$0xff]
    %v4629 = vld [vmem:[#allocation11 + $0x100] sm:$0xff]
    %v4630 = vld [vmem:[#allocation11 + $0x108] sm:$0xff]
    %v4631 = vld [vmem:[#allocation11 + $0x110] sm:$0xff]
    %v4632 = vld [vmem:[#allocation11 + $0x118] sm:$0xff]
    %v4633 = vld [vmem:[#allocation11 + $0x120] sm:$0xff]
    %v4634 = vld [vmem:[#allocation11 + $0x128] sm:$0xff]
    %v4635 = vld [vmem:[#allocation11 + $0x130] sm:$0xff]
    %v4636 = vld [vmem:[#allocation11 + $0x138] sm:$0xff]
    %v4637 = vld [vmem:[#allocation11 + $0x140] sm:$0xff]
    %v4638 = vld [vmem:[#allocation11 + $0x148] sm:$0xff]
    %v4639 = vld [vmem:[#allocation11 + $0x150] sm:$0xff]
    %v4640 = vld [vmem:[#allocation11 + $0x158] sm:$0xff]
    %v4641 = vld [vmem:[#allocation11 + $0x160] sm:$0xff]
    %v4642 = vld [vmem:[#allocation11 + $0x168] sm:$0xff]
    %v4643 = vld [vmem:[#allocation11 + $0x170] sm:$0xff]
    %v4644 = vld [vmem:[#allocation11 + $0x178] sm:$0xff]
    %v4645 = vld [vmem:[#allocation11 + $0x180] sm:$0xff]
    %v4646 = vld [vmem:[#allocation11 + $0x188] sm:$0xff]
    %v4647 = vld [vmem:[#allocation11 + $0x190] sm:$0xff]
    %v4648 = vld [vmem:[#allocation11 + $0x198] sm:$0xff]
    %v4649 = vld [vmem:[#allocation11 + $0x1a0] sm:$0xff]
    %v4650 = vld [vmem:[#allocation11 + $0x1a8] sm:$0xff]
    %v4651 = vld [vmem:[#allocation11 + $0x1b0] sm:$0xff]
    %v4652 = vld [vmem:[#allocation11 + $0x1b8] sm:$0xff]
    %v4653 = vld [vmem:[#allocation11 + $0x1c0] sm:$0xff]
    %v4654 = vld [vmem:[#allocation11 + $0x1c8] sm:$0xff]
    %v4655 = vld [vmem:[#allocation11 + $0x1d0] sm:$0xff]
    %v4656 = vld [vmem:[#allocation11 + $0x1d8] sm:$0xff]
    %v4657 = vld [vmem:[#allocation11 + $0x1e0] sm:$0xff]
    %v4658 = vld [vmem:[#allocation11 + $0x1e8] sm:$0xff]
    %v4659 = vld [vmem:[#allocation11 + $0x1f0] sm:$0xff]
    %v4660 = vld [vmem:[#allocation11 + $0x1f8] sm:$0xff]
    %v4661 = vld [vmem:[%s9] sm:$0xf]
    %v4663 = vlaneseq
    %v4664 = vshrl.u32 %v4663, 7
    %v4665 = vsub.s32 0, %v4664
    %v4666 = vrot.slane %v4661, %v4665
    %v4667 = vlaneseq
    %v4668 = vshrl.u32 %v4667, 7
    %v4669 = vsub.s32 1, %v4668
    %v4670 = vrot.slane %v4661, %v4669
    %v4671 = vlaneseq
    %v4672 = vshrl.u32 %v4671, 7
    %v4673 = vsub.s32 2, %v4672
    %v4674 = vrot.slane %v4661, %v4673
    %v4675 = vlaneseq
    %v4676 = vshrl.u32 %v4675, 7
    %v4677 = vsub.s32 3, %v4676
    %v4678 = vrot.slane %v4661, %v4677
    %4683 = vmatprep.subr.mxu0 %v4598
    %4684 = vmatpush1.msra.mxu0 %v4597
    %4685 = vmatprep.subr.mxu0 %v4602
    %4686 = vmatpush1.msra.mxu0 %v4601
    %4687 = vmatprep.subr.mxu0 %v4606
    %4688 = vmatpush1.msra.mxu0 %v4605
    %4689 = vmatprep.subr.mxu0 %v4610
    %4690 = vmatpush1.msra.mxu0 %v4609
    %4691 = vmatprep.subr.mxu0 %v4614
    %4692 = vmatpush1.msra.mxu0 %v4613
    %4693 = vmatprep.subr.mxu0 %v4618
    %4694 = vmatpush1.msra.mxu0 %v4617
    %4695 = vmatprep.subr.mxu0 %v4622
    %4696 = vmatpush1.msra.mxu0 %v4621
    %4697 = vmatprep.subr.mxu0 %v4626
    %4698 = vmatpush1.msra.mxu0 %v4625
    %4699 = vmatprep.subr.mxu0 %v4630
    %4700 = vmatpush1.msra.mxu0 %v4629
    %4701 = vmatprep.subr.mxu0 %v4634
    %4702 = vmatpush1.msra.mxu0 %v4633
    %4703 = vmatprep.subr.mxu0 %v4638
    %4704 = vmatpush1.msra.mxu0 %v4637
    %4705 = vmatprep.subr.mxu0 %v4642
    %4706 = vmatpush1.msra.mxu0 %v4641
    %4707 = vmatprep.subr.mxu0 %v4646
    %4708 = vmatpush1.msra.mxu0 %v4645
    %4709 = vmatprep.subr.mxu0 %v4650
    %4710 = vmatpush1.msra.mxu0 %v4649
    %4711 = vmatprep.subr.mxu0 %v4654
    %4712 = vmatpush1.msra.mxu0 %v4653
    %4713 = vmatprep.subr.mxu0 %v4658
    %4714 = vmatpush1.msra.mxu0 %v4657
    %4715 = vmatprep.subr.mxu0 0.0
    %4716 = vmatpush1.msra.mxu0 0.0
    %4717 = vmatprep.subr.mxu0 0.0
    %4718 = vmatpush1.msra.mxu0 0.0
    %4719 = vmatprep.subr.mxu0 0.0
    %4720 = vmatpush1.msra.mxu0 0.0
    %4721 = vmatprep.subr.mxu0 0.0
    %4722 = vmatpush1.msra.mxu0 0.0
    %4723 = vmatprep.subr.mxu0 0.0
    %4724 = vmatpush1.msra.mxu0 0.0
    %4725 = vmatprep.subr.mxu0 0.0
    %4726 = vmatpush1.msra.mxu0 0.0
    %4727 = vmatprep.subr.mxu0 0.0
    %4728 = vmatpush1.msra.mxu0 0.0
    %4729 = vmatprep.subr.mxu0 0.0
    %4730 = vmatpush1.msra.mxu0 0.0
    %4731 = vmatprep.subr.mxu0 0.0
    %4732 = vmatpush1.msra.mxu0 0.0
    %4733 = vmatprep.subr.mxu0 0.0
    %4734 = vmatpush1.msra.mxu0 0.0
    %4735 = vmatprep.subr.mxu0 0.0
    %4736 = vmatpush1.msra.mxu0 0.0
    %4737 = vmatprep.subr.mxu0 0.0
    %4738 = vmatpush1.msra.mxu0 0.0
    %4739 = vmatprep.subr.mxu0 0.0
    %4740 = vmatpush1.msra.mxu0 0.0
    %4741 = vmatprep.subr.mxu0 0.0
    %4742 = vmatpush1.msra.mxu0 0.0
    %4743 = vmatprep.subr.mxu0 0.0
    %4744 = vmatpush1.msra.mxu0 0.0
    %4745 = vmatprep.subr.mxu0 0.0
    %4746 = vmatpush1.msra.mxu0 0.0
    %4747 = vmatprep.mubr.f32.mxu0 0.0
    %4748 = vmatmul.mubr.f32.gmra.mrb[0].mxu0 %v4595
    %v4749 = vpop.f32.mrb[0].mxu0
    %v4750 = vadd.f32 %v4666, %v4749
    %v4751 = vpop.f32.mrb[0].mxu0
    %v4752 = vadd.f32 %v4670, %v4751
    %4753 = vmatprep.mubr.f32.mxu0 0.0
    %4754 = vmatmul.mubr.f32.gmra.mrb[0].mxu0 %v4596
    %v4755 = vpop.f32.mrb[0].mxu0
    %v4756 = vadd.f32 %v4666, %v4755
    %v4757 = vpop.f32.mrb[0].mxu0
    %v4758 = vadd.f32 %v4670, %v4757
    %4759 = vdwg.mxu0
    %4760 = vmatprep.subr.mxu0 %v4600
    %4761 = vmatpush1.msra.mxu0 %v4599
    %4762 = vmatprep.subr.mxu0 %v4604
    %4763 = vmatpush1.msra.mxu0 %v4603
    %4764 = vmatprep.subr.mxu0 %v4608
    %4765 = vmatpush1.msra.mxu0 %v4607
    %4766 = vmatprep.subr.mxu0 %v4612
    %4767 = vmatpush1.msra.mxu0 %v4611
    %4768 = vmatprep.subr.mxu0 %v4616
    %4769 = vmatpush1.msra.mxu0 %v4615
    %4770 = vmatprep.subr.mxu0 %v4620
    %4771 = vmatpush1.msra.mxu0 %v4619
    %4772 = vmatprep.subr.mxu0 %v4624
    %4773 = vmatpush1.msra.mxu0 %v4623
    %4774 = vmatprep.subr.mxu0 %v4628
    %4775 = vmatpush1.msra.mxu0 %v4627
    %4776 = vmatprep.subr.mxu0 %v4632
    %4777 = vmatpush1.msra.mxu0 %v4631
    %4778 = vmatprep.subr.mxu0 %v4636
    %4779 = vmatpush1.msra.mxu0 %v4635
    %4780 = vmatprep.subr.mxu0 %v4640
    %4781 = vmatpush1.msra.mxu0 %v4639
    %4782 = vmatprep.subr.mxu0 %v4644
    %4783 = vmatpush1.msra.mxu0 %v4643
    %4784 = vmatprep.subr.mxu0 %v4648
    %4785 = vmatpush1.msra.mxu0 %v4647
    %4786 = vmatprep.subr.mxu0 %v4652
    %4787 = vmatpush1.msra.mxu0 %v4651
    %4788 = vmatprep.subr.mxu0 %v4656
    %4789 = vmatpush1.msra.mxu0 %v4655
    %4790 = vmatprep.subr.mxu0 %v4660
    %4791 = vmatpush1.msra.mxu0 %v4659
    %4792 = vmatprep.subr.mxu0 0.0
    %4793 = vmatpush1.msra.mxu0 0.0
    %4794 = vmatprep.subr.mxu0 0.0
    %4795 = vmatpush1.msra.mxu0 0.0
    %4796 = vmatprep.subr.mxu0 0.0
    %4797 = vmatpush1.msra.mxu0 0.0
    %4798 = vmatprep.subr.mxu0 0.0
    %4799 = vmatpush1.msra.mxu0 0.0
    %4800 = vmatprep.subr.mxu0 0.0
    %4801 = vmatpush1.msra.mxu0 0.0
    %4802 = vmatprep.subr.mxu0 0.0
    %4803 = vmatpush1.msra.mxu0 0.0
    %4804 = vmatprep.subr.mxu0 0.0
    %4805 = vmatpush1.msra.mxu0 0.0
    %4806 = vmatprep.subr.mxu0 0.0
    %4807 = vmatpush1.msra.mxu0 0.0
    %4808 = vmatprep.subr.mxu0 0.0
    %4809 = vmatpush1.msra.mxu0 0.0
    %4810 = vmatprep.subr.mxu0 0.0
    %4811 = vmatpush1.msra.mxu0 0.0
    %4812 = vmatprep.subr.mxu0 0.0
    %4813 = vmatpush1.msra.mxu0 0.0
    %4814 = vmatprep.subr.mxu0 0.0
    %4815 = vmatpush1.msra.mxu0 0.0
    %4816 = vmatprep.subr.mxu0 0.0
    %4817 = vmatpush1.msra.mxu0 0.0
    %4818 = vmatprep.subr.mxu0 0.0
    %4819 = vmatpush1.msra.mxu0 0.0
    %4820 = vmatprep.subr.mxu0 0.0
    %4821 = vmatpush1.msra.mxu0 0.0
    %4822 = vmatprep.subr.mxu0 0.0
    %4823 = vmatpush1.msra.mxu0 0.0
    %4824 = vmatprep.mubr.f32.mxu0 0.0
    %4825 = vmatmul.mubr.f32.gmra.mrb[0].mxu0 %v4595
    %v4826 = vpop.f32.mrb[0].mxu0
    %v4827 = vadd.f32 %v4674, %v4826
    %v4828 = vpop.f32.mrb[0].mxu0
    %v4829 = vadd.f32 %v4678, %v4828
    %4830 = vmatprep.mubr.f32.mxu0 0.0
    %4831 = vmatmul.mubr.f32.gmra.mrb[0].mxu0 %v4596
    %v4832 = vpop.f32.mrb[0].mxu0
    %v4833 = vadd.f32 %v4674, %v4832
    %v4834 = vpop.f32.mrb[0].mxu0
    %v4835 = vadd.f32 %v4678, %v4834
    %4836 = vdwg.mxu0
    %v4837 = vld [vmem:[#allocation12] sm:$0xff]
    %v4838 = vld [vmem:[#allocation12 + $0x8] sm:$0xff]
    %v4839 = vld [vmem:[#allocation12 + $0x10] sm:$0xff]
    %v4840 = vld [vmem:[#allocation12 + $0x18] sm:$0xff]
    %v4841 = vld [vmem:[#allocation12 + $0x20] sm:$0xff]
    %v4842 = vld [vmem:[#allocation12 + $0x28] sm:$0xff]
    %v4843 = vld [vmem:[#allocation12 + $0x30] sm:$0xff]
    %v4844 = vld [vmem:[#allocation12 + $0x38] sm:$0xff]
    %v4845 = vld [vmem:[#allocation12 + $0x40] sm:$0xff]
    %v4846 = vld [vmem:[#allocation12 + $0x48] sm:$0xff]
    %v4847 = vld [vmem:[#allocation12 + $0x50] sm:$0xff]
    %v4848 = vld [vmem:[#allocation12 + $0x58] sm:$0xff]
    %v4849 = vld [vmem:[#allocation12 + $0x60] sm:$0xff]
    %v4850 = vld [vmem:[#allocation12 + $0x68] sm:$0xff]
    %v4851 = vld [vmem:[#allocation12 + $0x70] sm:$0xff]
    %v4852 = vld [vmem:[#allocation12 + $0x78] sm:$0xff]
    %v4853 = vld [vmem:[#allocation12 + $0x80] sm:$0xff]
    %v4854 = vld [vmem:[#allocation12 + $0x88] sm:$0xff]
    %v4855 = vld [vmem:[#allocation12 + $0x90] sm:$0xff]
    %v4856 = vld [vmem:[#allocation12 + $0x98] sm:$0xff]
    %v4857 = vld [vmem:[#allocation12 + $0xa0] sm:$0xff]
    %v4858 = vld [vmem:[#allocation12 + $0xa8] sm:$0xff]
    %v4859 = vld [vmem:[#allocation12 + $0xb0] sm:$0xff]
    %v4860 = vld [vmem:[#allocation12 + $0xb8] sm:$0xff]
    %v4861 = vld [vmem:[#allocation12 + $0xc0] sm:$0xff]
    %v4862 = vld [vmem:[#allocation12 + $0xc8] sm:$0xff]
    %v4863 = vld [vmem:[#allocation12 + $0xd0] sm:$0xff]
    %v4864 = vld [vmem:[#allocation12 + $0xd8] sm:$0xff]
    %v4865 = vld [vmem:[#allocation12 + $0xe0] sm:$0xff]
    %v4866 = vld [vmem:[#allocation12 + $0xe8] sm:$0xff]
    %v4867 = vld [vmem:[#allocation12 + $0xf0] sm:$0xff]
    %v4868 = vld [vmem:[#allocation12 + $0xf8] sm:$0xff]
    %v4869 = vld [vmem:[#allocation12 + $0x100] sm:$0xff]
    %v4870 = vld [vmem:[#allocation12 + $0x108] sm:$0xff]
    %v4871 = vld [vmem:[#allocation12 + $0x110] sm:$0xff]
    %v4872 = vld [vmem:[#allocation12 + $0x118] sm:$0xff]
    %v4873 = vld [vmem:[#allocation12 + $0x120] sm:$0xff]
    %v4874 = vld [vmem:[#allocation12 + $0x128] sm:$0xff]
    %v4875 = vld [vmem:[#allocation12 + $0x130] sm:$0xff]
    %v4876 = vld [vmem:[#allocation12 + $0x138] sm:$0xff]
    %v4877 = vld [vmem:[#allocation12 + $0x140] sm:$0xff]
    %v4878 = vld [vmem:[#allocation12 + $0x148] sm:$0xff]
    %v4879 = vld [vmem:[#allocation12 + $0x150] sm:$0xff]
    %v4880 = vld [vmem:[#allocation12 + $0x158] sm:$0xff]
    %v4881 = vld [vmem:[#allocation12 + $0x160] sm:$0xff]
    %v4882 = vld [vmem:[#allocation12 + $0x168] sm:$0xff]
    %v4883 = vld [vmem:[#allocation12 + $0x170] sm:$0xff]
    %v4884 = vld [vmem:[#allocation12 + $0x178] sm:$0xff]
    %v4885 = vld [vmem:[#allocation12 + $0x180] sm:$0xff]
    %v4886 = vld [vmem:[#allocation12 + $0x188] sm:$0xff]
    %v4887 = vld [vmem:[#allocation12 + $0x190] sm:$0xff]
    %v4888 = vld [vmem:[#allocation12 + $0x198] sm:$0xff]
    %v4889 = vld [vmem:[#allocation12 + $0x1a0] sm:$0xff]
    %v4890 = vld [vmem:[#allocation12 + $0x1a8] sm:$0xff]
    %v4891 = vld [vmem:[#allocation12 + $0x1b0] sm:$0xff]
    %v4892 = vld [vmem:[#allocation12 + $0x1b8] sm:$0xff]
    %v4893 = vld [vmem:[#allocation12 + $0x1c0] sm:$0xff]
    %v4894 = vld [vmem:[#allocation12 + $0x1c8] sm:$0xff]
    %v4895 = vld [vmem:[#allocation12 + $0x1d0] sm:$0xff]
    %v4896 = vld [vmem:[#allocation12 + $0x1d8] sm:$0xff]
    %v4897 = vld [vmem:[#allocation12 + $0x1e0] sm:$0xff]
    %v4898 = vld [vmem:[#allocation12 + $0x1e8] sm:$0xff]
    %v4899 = vld [vmem:[#allocation12 + $0x1f0] sm:$0xff]
    %v4900 = vld [vmem:[#allocation12 + $0x1f8] sm:$0xff]
    %4901 = vmatprep.subr.mxu0 %v4838
    %4902 = vmatpush1.msra.mxu0 %v4837
    %4903 = vmatprep.subr.mxu0 %v4842
    %4904 = vmatpush1.msra.mxu0 %v4841
    %4905 = vmatprep.subr.mxu0 %v4846
    %4906 = vmatpush1.msra.mxu0 %v4845
    %4907 = vmatprep.subr.mxu0 %v4850
    %4908 = vmatpush1.msra.mxu0 %v4849
    %4909 = vmatprep.subr.mxu0 %v4854
    %4910 = vmatpush1.msra.mxu0 %v4853
    %4911 = vmatprep.subr.mxu0 %v4858
    %4912 = vmatpush1.msra.mxu0 %v4857
    %4913 = vmatprep.subr.mxu0 %v4862
    %4914 = vmatpush1.msra.mxu0 %v4861
    %4915 = vmatprep.subr.mxu0 %v4866
    %4916 = vmatpush1.msra.mxu0 %v4865
    %4917 = vmatprep.subr.mxu0 %v4870
    %4918 = vmatpush1.msra.mxu0 %v4869
    %4919 = vmatprep.subr.mxu0 %v4874
    %4920 = vmatpush1.msra.mxu0 %v4873
    %4921 = vmatprep.subr.mxu0 %v4878
    %4922 = vmatpush1.msra.mxu0 %v4877
    %4923 = vmatprep.subr.mxu0 %v4882
    %4924 = vmatpush1.msra.mxu0 %v4881
    %4925 = vmatprep.subr.mxu0 %v4886
    %4926 = vmatpush1.msra.mxu0 %v4885
    %4927 = vmatprep.subr.mxu0 %v4890
    %4928 = vmatpush1.msra.mxu0 %v4889
    %4929 = vmatprep.subr.mxu0 %v4894
    %4930 = vmatpush1.msra.mxu0 %v4893
    %4931 = vmatprep.subr.mxu0 %v4898
    %4932 = vmatpush1.msra.mxu0 %v4897
    %4933 = vmatprep.subr.mxu0 0.0
    %4934 = vmatpush1.msra.mxu0 0.0
    %4935 = vmatprep.subr.mxu0 0.0
    %4936 = vmatpush1.msra.mxu0 0.0
    %4937 = vmatprep.subr.mxu0 0.0
    %4938 = vmatpush1.msra.mxu0 0.0
    %4939 = vmatprep.subr.mxu0 0.0
    %4940 = vmatpush1.msra.mxu0 0.0
    %4941 = vmatprep.subr.mxu0 0.0
    %4942 = vmatpush1.msra.mxu0 0.0
    %4943 = vmatprep.subr.mxu0 0.0
    %4944 = vmatpush1.msra.mxu0 0.0
    %4945 = vmatprep.subr.mxu0 0.0
    %4946 = vmatpush1.msra.mxu0 0.0
    %4947 = vmatprep.subr.mxu0 0.0
    %4948 = vmatpush1.msra.mxu0 0.0
    %4949 = vmatprep.subr.mxu0 0.0
    %4950 = vmatpush1.msra.mxu0 0.0
    %4951 = vmatprep.subr.mxu0 0.0
    %4952 = vmatpush1.msra.mxu0 0.0
    %4953 = vmatprep.subr.mxu0 0.0
    %4954 = vmatpush1.msra.mxu0 0.0
    %4955 = vmatprep.subr.mxu0 0.0
    %4956 = vmatpush1.msra.mxu0 0.0
    %4957 = vmatprep.subr.mxu0 0.0
    %4958 = vmatpush1.msra.mxu0 0.0
    %4959 = vmatprep.subr.mxu0 0.0
    %4960 = vmatpush1.msra.mxu0 0.0
    %4961 = vmatprep.subr.mxu0 0.0
    %4962 = vmatpush1.msra.mxu0 0.0
    %4963 = vmatprep.subr.mxu0 0.0
    %4964 = vmatpush1.msra.mxu0 0.0
    %4965 = vmatprep.mubr.f32.mxu0 0.0
    %4966 = vmatmul.mubr.f32.gmra.mrb[0].mxu0 0.0
    %v4967 = vpop.f32.mrb[0].mxu0
    %v4968 = vadd.f32 0.0, %v4967
    %v4969 = vpop.f32.mrb[0].mxu0
    %v4970 = vadd.f32 0.0, %v4969
    %4971 = vdwg.mxu0
    %4972 = vmatprep.subr.mxu0 %v4840
    %4973 = vmatpush1.msra.mxu0 %v4839
    %4974 = vmatprep.subr.mxu0 %v4844
    %4975 = vmatpush1.msra.mxu0 %v4843
    %4976 = vmatprep.subr.mxu0 %v4848
    %4977 = vmatpush1.msra.mxu0 %v4847
    %4978 = vmatprep.subr.mxu0 %v4852
    %4979 = vmatpush1.msra.mxu0 %v4851
    %4980 = vmatprep.subr.mxu0 %v4856
    %4981 = vmatpush1.msra.mxu0 %v4855
    %4982 = vmatprep.subr.mxu0 %v4860
    %4983 = vmatpush1.msra.mxu0 %v4859
    %4984 = vmatprep.subr.mxu0 %v4864
    %4985 = vmatpush1.msra.mxu0 %v4863
    %4986 = vmatprep.subr.mxu0 %v4868
    %4987 = vmatpush1.msra.mxu0 %v4867
    %4988 = vmatprep.subr.mxu0 %v4872
    %4989 = vmatpush1.msra.mxu0 %v4871
    %4990 = vmatprep.subr.mxu0 %v4876
    %4991 = vmatpush1.msra.mxu0 %v4875
    %4992 = vmatprep.subr.mxu0 %v4880
    %4993 = vmatpush1.msra.mxu0 %v4879
    %4994 = vmatprep.subr.mxu0 %v4884
    %4995 = vmatpush1.msra.mxu0 %v4883
    %4996 = vmatprep.subr.mxu0 %v4888
    %4997 = vmatpush1.msra.mxu0 %v4887
    %4998 = vmatprep.subr.mxu0 %v4892
    %4999 = vmatpush1.msra.mxu0 %v4891
    %5000 = vmatprep.subr.mxu0 %v4896
    %5001 = vmatpush1.msra.mxu0 %v4895
    %5002 = vmatprep.subr.mxu0 %v4900
    %5003 = vmatpush1.msra.mxu0 %v4899
    %5004 = vmatprep.subr.mxu0 0.0
    %5005 = vmatpush1.msra.mxu0 0.0
    %5006 = vmatprep.subr.mxu0 0.0
    %5007 = vmatpush1.msra.mxu0 0.0
    %5008 = vmatprep.subr.mxu0 0.0
    %5009 = vmatpush1.msra.mxu0 0.0
    %5010 = vmatprep.subr.mxu0 0.0
    %5011 = vmatpush1.msra.mxu0 0.0
    %5012 = vmatprep.subr.mxu0 0.0
    %5013 = vmatpush1.msra.mxu0 0.0
    %5014 = vmatprep.subr.mxu0 0.0
    %5015 = vmatpush1.msra.mxu0 0.0
    %5016 = vmatprep.subr.mxu0 0.0
    %5017 = vmatpush1.msra.mxu0 0.0
    %5018 = vmatprep.subr.mxu0 0.0
    %5019 = vmatpush1.msra.mxu0 0.0
    %5020 = vmatprep.subr.mxu0 0.0
    %5021 = vmatpush1.msra.mxu0 0.0
    %5022 = vmatprep.subr.mxu0 0.0
    %5023 = vmatpush1.msra.mxu0 0.0
    %5024 = vmatprep.subr.mxu0 0.0
    %5025 = vmatpush1.msra.mxu0 0.0
    %5026 = vmatprep.subr.mxu0 0.0
    %5027 = vmatpush1.msra.mxu0 0.0
    %5028 = vmatprep.subr.mxu0 0.0
    %5029 = vmatpush1.msra.mxu0 0.0
    %5030 = vmatprep.subr.mxu0 0.0
    %5031 = vmatpush1.msra.mxu0 0.0
    %5032 = vmatprep.subr.mxu0 0.0
    %5033 = vmatpush1.msra.mxu0 0.0
    %5034 = vmatprep.subr.mxu0 0.0
    %5035 = vmatpush1.msra.mxu0 0.0
    %5036 = vmatprep.mubr.f32.mxu0 0.0
    %5037 = vmatmul.mubr.f32.gmra.mrb[0].mxu0 0.0
    %v5038 = vpop.f32.mrb[0].mxu0
    %v5039 = vadd.f32 0.0, %v5038
    %v5040 = vpop.f32.mrb[0].mxu0
    %v5041 = vadd.f32 0.0, %v5040
    %5042 = vdwg.mxu0
    %v5043 = vadd.f32 %v4750, %v4968
    %v5044 = vadd.f32 %v4752, %v4970
    %v5045 = vadd.f32 %v4827, %v5039
    %v5046 = vadd.f32 %v4829, %v5041
    %v5047 = vxor.u32 %v5043, 2147483648
    %v5048 = vxor.u32 %v5044, 2147483648
    %v5049 = vxor.u32 %v5045, 2147483648
    %v5050 = vmul.f32 %v5047, 1.442695
    %v5051 = vpow.pop %v5050
    %v5052 = vmul.f32 %v5048, 1.442695
    %v5053 = vpow.pop %v5052
    %v5054 = vmul.f32 %v5049, 1.442695
    %v5055 = vpow.pop %v5054
    %v5056 = vadd.f32 %v5051, 1.0
    %v5057 = vadd.f32 %v5053, 1.0
    %v5058 = vadd.f32 %v5055, 1.0
    %v5059 = vrcp.pop %v5056
    %v5060 = vmul.f32 1.0, %v5059
    %v5061 = vrcp.pop %v5057
    %v5062 = vmul.f32 1.0, %v5061
    %v5063 = vrcp.pop %v5058
    %v5064 = vmul.f32 1.0, %v5063
    %v5065 = vtanh.pop %v5046
    %v5066 = vmul.f32 %v5062, 0.0
    %v5067 = vmul.f32 %v5060, %v5065
    %v5068 = vadd.f32 %v5066, %v5067
    %v5069 = vtanh.pop %v5068
    %v5070 = vmul.f32 %v5064, %v5069
    %v5071 = vtanh.pop %v5070
    %5072 = vst [vmem:[%s10] sm:$0x3] %v5071
    %v5073 = vld [vmem:[#allocation12] sm:$0xff]
    %v5074 = vld [vmem:[#allocation12 + $0x8] sm:$0xff]
    %v5075 = vld [vmem:[#allocation12 + $0x10] sm:$0xff]
    %v5076 = vld [vmem:[#allocation12 + $0x18] sm:$0xff]
    %v5077 = vld [vmem:[#allocation12 + $0x20] sm:$0xff]
    %v5078 = vld [vmem:[#allocation12 + $0x28] sm:$0xff]
    %v5079 = vld [vmem:[#allocation12 + $0x30] sm:$0xff]
    %v5080 = vld [vmem:[#allocation12 + $0x38] sm:$0xff]
    %v5081 = vld [vmem:[#allocation12 + $0x40] sm:$0xff]
    %v5082 = vld [vmem:[#allocation12 + $0x48] sm:$0xff]
    %v5083 = vld [vmem:[#allocation12 + $0x50] sm:$0xff]
    %v5084 = vld [vmem:[#allocation12 + $0x58] sm:$0xff]
    %v5085 = vld [vmem:[#allocation12 + $0x60] sm:$0xff]
    %v5086 = vld [vmem:[#allocation12 + $0x68] sm:$0xff]
    %v5087 = vld [vmem:[#allocation12 + $0x70] sm:$0xff]
    %v5088 = vld [vmem:[#allocation12 + $0x78] sm:$0xff]
    %v5089 = vld [vmem:[#allocation12 + $0x80] sm:$0xff]
    %v5090 = vld [vmem:[#allocation12 + $0x88] sm:$0xff]
    %v5091 = vld [vmem:[#allocation12 + $0x90] sm:$0xff]
    %v5092 = vld [vmem:[#allocation12 + $0x98] sm:$0xff]
    %v5093 = vld [vmem:[#allocation12 + $0xa0] sm:$0xff]
    %v5094 = vld [vmem:[#allocation12 + $0xa8] sm:$0xff]
    %v5095 = vld [vmem:[#allocation12 + $0xb0] sm:$0xff]
    %v5096 = vld [vmem:[#allocation12 + $0xb8] sm:$0xff]
    %v5097 = vld [vmem:[#allocation12 + $0xc0] sm:$0xff]
    %v5098 = vld [vmem:[#allocation12 + $0xc8] sm:$0xff]
    %v5099 = vld [vmem:[#allocation12 + $0xd0] sm:$0xff]
    %v5100 = vld [vmem:[#allocation12 + $0xd8] sm:$0xff]
    %v5101 = vld [vmem:[#allocation12 + $0xe0] sm:$0xff]
    %v5102 = vld [vmem:[#allocation12 + $0xe8] sm:$0xff]
    %v5103 = vld [vmem:[#allocation12 + $0xf0] sm:$0xff]
    %v5104 = vld [vmem:[#allocation12 + $0xf8] sm:$0xff]
    %v5105 = vld [vmem:[#allocation12 + $0x100] sm:$0xff]
    %v5106 = vld [vmem:[#allocation12 + $0x108] sm:$0xff]
    %v5107 = vld [vmem:[#allocation12 + $0x110] sm:$0xff]
    %v5108 = vld [vmem:[#allocation12 + $0x118] sm:$0xff]
    %v5109 = vld [vmem:[#allocation12 + $0x120] sm:$0xff]
    %v5110 = vld [vmem:[#allocation12 + $0x128] sm:$0xff]
    %v5111 = vld [vmem:[#allocation12 + $0x130] sm:$0xff]
    %v5112 = vld [vmem:[#allocation12 + $0x138] sm:$0xff]
    %v5113 = vld [vmem:[#allocation12 + $0x140] sm:$0xff]
    %v5114 = vld [vmem:[#allocation12 + $0x148] sm:$0xff]
    %v5115 = vld [vmem:[#allocation12 + $0x150] sm:$0xff]
    %v5116 = vld [vmem:[#allocation12 + $0x158] sm:$0xff]
    %v5117 = vld [vmem:[#allocation12 + $0x160] sm:$0xff]
    %v5118 = vld [vmem:[#allocation12 + $0x168] sm:$0xff]
    %v5119 = vld [vmem:[#allocation12 + $0x170] sm:$0xff]
    %v5120 = vld [vmem:[#allocation12 + $0x178] sm:$0xff]
    %v5121 = vld [vmem:[#allocation12 + $0x180] sm:$0xff]
    %v5122 = vld [vmem:[#allocation12 + $0x188] sm:$0xff]
    %v5123 = vld [vmem:[#allocation12 + $0x190] sm:$0xff]
    %v5124 = vld [vmem:[#allocation12 + $0x198] sm:$0xff]
    %v5125 = vld [vmem:[#allocation12 + $0x1a0] sm:$0xff]
    %v5126 = vld [vmem:[#allocation12 + $0x1a8] sm:$0xff]
    %v5127 = vld [vmem:[#allocation12 + $0x1b0] sm:$0xff]
    %v5128 = vld [vmem:[#allocation12 + $0x1b8] sm:$0xff]
    %v5129 = vld [vmem:[#allocation12 + $0x1c0] sm:$0xff]
    %v5130 = vld [vmem:[#allocation12 + $0x1c8] sm:$0xff]
    %v5131 = vld [vmem:[#allocation12 + $0x1d0] sm:$0xff]
    %v5132 = vld [vmem:[#allocation12 + $0x1d8] sm:$0xff]
    %v5133 = vld [vmem:[#allocation12 + $0x1e0] sm:$0xff]
    %v5134 = vld [vmem:[#allocation12 + $0x1e8] sm:$0xff]
    %v5135 = vld [vmem:[#allocation12 + $0x1f0] sm:$0xff]
    %v5136 = vld [vmem:[#allocation12 + $0x1f8] sm:$0xff]
    %5137 = vmatprep.subr.mxu0 %v5074
    %5138 = vmatpush1.msra.mxu0 %v5073
    %5139 = vmatprep.subr.mxu0 %v5078
    %5140 = vmatpush1.msra.mxu0 %v5077
    %5141 = vmatprep.subr.mxu0 %v5082
    %5142 = vmatpush1.msra.mxu0 %v5081
    %5143 = vmatprep.subr.mxu0 %v5086
    %5144 = vmatpush1.msra.mxu0 %v5085
    %5145 = vmatprep.subr.mxu0 %v5090
    %5146 = vmatpush1.msra.mxu0 %v5089
    %5147 = vmatprep.subr.mxu0 %v5094
    %5148 = vmatpush1.msra.mxu0 %v5093
    %5149 = vmatprep.subr.mxu0 %v5098
    %5150 = vmatpush1.msra.mxu0 %v5097
    %5151 = vmatprep.subr.mxu0 %v5102
    %5152 = vmatpush1.msra.mxu0 %v5101
    %5153 = vmatprep.subr.mxu0 %v5106
    %5154 = vmatpush1.msra.mxu0 %v5105
    %5155 = vmatprep.subr.mxu0 %v5110
    %5156 = vmatpush1.msra.mxu0 %v5109
    %5157 = vmatprep.subr.mxu0 %v5114
    %5158 = vmatpush1.msra.mxu0 %v5113
    %5159 = vmatprep.subr.mxu0 %v5118
    %5160 = vmatpush1.msra.mxu0 %v5117
    %5161 = vmatprep.subr.mxu0 %v5122
    %5162 = vmatpush1.msra.mxu0 %v5121
    %5163 = vmatprep.subr.mxu0 %v5126
    %5164 = vmatpush1.msra.mxu0 %v5125
    %5165 = vmatprep.subr.mxu0 %v5130
    %5166 = vmatpush1.msra.mxu0 %v5129
    %5167 = vmatprep.subr.mxu0 %v5134
    %5168 = vmatpush1.msra.mxu0 %v5133
    %5169 = vmatprep.subr.mxu0 0.0
    %5170 = vmatpush1.msra.mxu0 0.0
    %5171 = vmatprep.subr.mxu0 0.0
    %5172 = vmatpush1.msra.mxu0 0.0
    %5173 = vmatprep.subr.mxu0 0.0
    %5174 = vmatpush1.msra.mxu0 0.0
    %5175 = vmatprep.subr.mxu0 0.0
    %5176 = vmatpush1.msra.mxu0 0.0
    %5177 = vmatprep.subr.mxu0 0.0
    %5178 = vmatpush1.msra.mxu0 0.0
    %5179 = vmatprep.subr.mxu0 0.0
    %5180 = vmatpush1.msra.mxu0 0.0
    %5181 = vmatprep.subr.mxu0 0.0
    %5182 = vmatpush1.msra.mxu0 0.0
    %5183 = vmatprep.subr.mxu0 0.0
    %5184 = vmatpush1.msra.mxu0 0.0
    %5185 = vmatprep.subr.mxu0 0.0
    %5186 = vmatpush1.msra.mxu0 0.0
    %5187 = vmatprep.subr.mxu0 0.0
    %5188 = vmatpush1.msra.mxu0 0.0
    %5189 = vmatprep.subr.mxu0 0.0
    %5190 = vmatpush1.msra.mxu0 0.0
    %5191 = vmatprep.subr.mxu0 0.0
    %5192 = vmatpush1.msra.mxu0 0.0
    %5193 = vmatprep.subr.mxu0 0.0
    %5194 = vmatpush1.msra.mxu0 0.0
    %5195 = vmatprep.subr.mxu0 0.0
    %5196 = vmatpush1.msra.mxu0 0.0
    %5197 = vmatprep.subr.mxu0 0.0
    %5198 = vmatpush1.msra.mxu0 0.0
    %5199 = vmatprep.subr.mxu0 0.0
    %5200 = vmatpush1.msra.mxu0 0.0
    %5201 = vmatprep.mubr.f32.mxu0 0.0
    %5202 = vmatmul.mubr.f32.gmra.mrb[0].mxu0 %v5070
    %v5203 = vpop.f32.mrb[0].mxu0
    %v5204 = vadd.f32 0.0, %v5203
    %v5205 = vpop.f32.mrb[0].mxu0
    %v5206 = vadd.f32 0.0, %v5205
    %5207 = vdwg.mxu0
    %5208 = vmatprep.subr.mxu0 %v5076
    %5209 = vmatpush1.msra.mxu0 %v5075
    %5210 = vmatprep.subr.mxu0 %v5080
    %5211 = vmatpush1.msra.mxu0 %v5079
    %5212 = vmatprep.subr.mxu0 %v5084
    %5213 = vmatpush1.msra.mxu0 %v5083
    %5214 = vmatprep.subr.mxu0 %v5088
    %5215 = vmatpush1.msra.mxu0 %v5087
    %5216 = vmatprep.subr.mxu0 %v5092
    %5217 = vmatpush1.msra.mxu0 %v5091
    %5218 = vmatprep.subr.mxu0 %v5096
    %5219 = vmatpush1.msra.mxu0 %v5095
    %5220 = vmatprep.subr.mxu0 %v5100
    %5221 = vmatpush1.msra.mxu0 %v5099
    %5222 = vmatprep.subr.mxu0 %v5104
    %5223 = vmatpush1.msra.mxu0 %v5103
    %5224 = vmatprep.subr.mxu0 %v5108
    %5225 = vmatpush1.msra.mxu0 %v5107
    %5226 = vmatprep.subr.mxu0 %v5112
    %5227 = vmatpush1.msra.mxu0 %v5111
    %5228 = vmatprep.subr.mxu0 %v5116
    %5229 = vmatpush1.msra.mxu0 %v5115
    %5230 = vmatprep.subr.mxu0 %v5120
    %5231 = vmatpush1.msra.mxu0 %v5119
    %5232 = vmatprep.subr.mxu0 %v5124
    %5233 = vmatpush1.msra.mxu0 %v5123
    %5234 = vmatprep.subr.mxu0 %v5128
    %5235 = vmatpush1.msra.mxu0 %v5127
    %5236 = vmatprep.subr.mxu0 %v5132
    %5237 = vmatpush1.msra.mxu0 %v5131
    %5238 = vmatprep.subr.mxu0 %v5136
    %5239 = vmatpush1.msra.mxu0 %v5135
    %5240 = vmatprep.subr.mxu0 0.0
    %5241 = vmatpush1.msra.mxu0 0.0
    %5242 = vmatprep.subr.mxu0 0.0
    %5243 = vmatpush1.msra.mxu0 0.0
    %5244 = vmatprep.subr.mxu0 0.0
    %5245 = vmatpush1.msra.mxu0 0.0
    %5246 = vmatprep.subr.mxu0 0.0
    %5247 = vmatpush1.msra.mxu0 0.0
    %5248 = vmatprep.subr.mxu0 0.0
    %5249 = vmatpush1.msra.mxu0 0.0
    %5250 = vmatprep.subr.mxu0 0.0
    %5251 = vmatpush1.msra.mxu0 0.0
    %5252 = vmatprep.subr.mxu0 0.0
    %5253 = vmatpush1.msra.mxu0 0.0
    %5254 = vmatprep.subr.mxu0 0.0
    %5255 = vmatpush1.msra.mxu0 0.0
    %5256 = vmatprep.subr.mxu0 0.0
    %5257 = vmatpush1.msra.mxu0 0.0
    %5258 = vmatprep.subr.mxu0 0.0
    %5259 = vmatpush1.msra.mxu0 0.0
    %5260 = vmatprep.subr.mxu0 0.0
    %5261 = vmatpush1.msra.mxu0 0.0
    %5262 = vmatprep.subr.mxu0 0.0
    %5263 = vmatpush1.msra.mxu0 0.0
    %5264 = vmatprep.subr.mxu0 0.0
    %5265 = vmatpush1.msra.mxu0 0.0
    %5266 = vmatprep.subr.mxu0 0.0
    %5267 = vmatpush1.msra.mxu0 0.0
    %5268 = vmatprep.subr.mxu0 0.0
    %5269 = vmatpush1.msra.mxu0 0.0
    %5270 = vmatprep.subr.mxu0 0.0
    %5271 = vmatpush1.msra.mxu0 0.0
    %5272 = vmatprep.mubr.f32.mxu0 0.0
    %5273 = vmatmul.mubr.f32.gmra.mrb[0].mxu0 %v5070
    %v5274 = vpop.f32.mrb[0].mxu0
    %v5275 = vadd.f32 0.0, %v5274
    %v5276 = vpop.f32.mrb[0].mxu0
    %v5277 = vadd.f32 0.0, %v5276
    %5278 = vdwg.mxu0
    %v5283 = vrot.slane %v5204, 6
    %v5284 = vrot.slane %v5206, 6
    %v5285 = vrot.slane %v5275, 6
    %v5286 = vrot.slane %v5277, 6
    %v5291 = vadd.f32 %v4750, %v5283
    %v5292 = vadd.f32 %v4752, %v5284
    %v5293 = vadd.f32 %v4827, %v5285
    %v5294 = vadd.f32 %v4829, %v5286
    %v5295 = vxor.u32 %v5291, 2147483648
    %v5296 = vxor.u32 %v5292, 2147483648
    %v5297 = vxor.u32 %v5293, 2147483648
    %v5298 = vmul.f32 %v5295, 1.442695
    %v5299 = vpow.pop %v5298
    %v5300 = vmul.f32 %v5296, 1.442695
    %v5301 = vpow.pop %v5300
    %v5302 = vmul.f32 %v5297, 1.442695
    %v5303 = vpow.pop %v5302
    %v5304 = vadd.f32 %v5299, 1.0
    %v5305 = vadd.f32 %v5301, 1.0
    %v5306 = vadd.f32 %v5303, 1.0
    %v5307 = vrcp.pop %v5304
    %v5308 = vmul.f32 1.0, %v5307
    %v5309 = vrcp.pop %v5305
    %v5310 = vmul.f32 1.0, %v5309
    %v5311 = vrcp.pop %v5306
    %v5312 = vmul.f32 1.0, %v5311
    %v5313 = vtanh.pop %v5294
    %v5315 = vrot.slane %v5068, 6
    %v5317 = vmul.f32 %v5310, %v5315
    %v5318 = vmul.f32 %v5308, %v5313
    %v5319 = vadd.f32 %v5317, %v5318
    %v5320 = vtanh.pop %v5319
    %v5321 = vmul.f32 %v5312, %v5320
    %v5322 = vtanh.pop %v5321
    %5323 = vst [vmem:[%s10] sm:$0xc] %v5322
    %v5324 = vld [vmem:[#allocation12] sm:$0xff]
    %v5325 = vld [vmem:[#allocation12 + $0x8] sm:$0xff]
    %v5326 = vld [vmem:[#allocation12 + $0x10] sm:$0xff]
    %v5327 = vld [vmem:[#allocation12 + $0x18] sm:$0xff]
    %v5328 = vld [vmem:[#allocation12 + $0x20] sm:$0xff]
    %v5329 = vld [vmem:[#allocation12 + $0x28] sm:$0xff]
    %v5330 = vld [vmem:[#allocation12 + $0x30] sm:$0xff]
    %v5331 = vld [vmem:[#allocation12 + $0x38] sm:$0xff]
    %v5332 = vld [vmem:[#allocation12 + $0x40] sm:$0xff]
    %v5333 = vld [vmem:[#allocation12 + $0x48] sm:$0xff]
    %v5334 = vld [vmem:[#allocation12 + $0x50] sm:$0xff]
    %v5335 = vld [vmem:[#allocation12 + $0x58] sm:$0xff]
    %v5336 = vld [vmem:[#allocation12 + $0x60] sm:$0xff]
    %v5337 = vld [vmem:[#allocation12 + $0x68] sm:$0xff]
    %v5338 = vld [vmem:[#allocation12 + $0x70] sm:$0xff]
    %v5339 = vld [vmem:[#allocation12 + $0x78] sm:$0xff]
    %v5340 = vld [vmem:[#allocation12 + $0x80] sm:$0xff]
    %v5341 = vld [vmem:[#allocation12 + $0x88] sm:$0xff]
    %v5342 = vld [vmem:[#allocation12 + $0x90] sm:$0xff]
    %v5343 = vld [vmem:[#allocation12 + $0x98] sm:$0xff]
    %v5344 = vld [vmem:[#allocation12 + $0xa0] sm:$0xff]
    %v5345 = vld [vmem:[#allocation12 + $0xa8] sm:$0xff]
    %v5346 = vld [vmem:[#allocation12 + $0xb0] sm:$0xff]
    %v5347 = vld [vmem:[#allocation12 + $0xb8] sm:$0xff]
    %v5348 = vld [vmem:[#allocation12 + $0xc0] sm:$0xff]
    %v5349 = vld [vmem:[#allocation12 + $0xc8] sm:$0xff]
    %v5350 = vld [vmem:[#allocation12 + $0xd0] sm:$0xff]
    %v5351 = vld [vmem:[#allocation12 + $0xd8] sm:$0xff]
    %v5352 = vld [vmem:[#allocation12 + $0xe0] sm:$0xff]
    %v5353 = vld [vmem:[#allocation12 + $0xe8] sm:$0xff]
    %v5354 = vld [vmem:[#allocation12 + $0xf0] sm:$0xff]
    %v5355 = vld [vmem:[#allocation12 + $0xf8] sm:$0xff]
    %v5356 = vld [vmem:[#allocation12 + $0x100] sm:$0xff]
    %v5357 = vld [vmem:[#allocation12 + $0x108] sm:$0xff]
    %v5358 = vld [vmem:[#allocation12 + $0x110] sm:$0xff]
    %v5359 = vld [vmem:[#allocation12 + $0x118] sm:$0xff]
    %v5360 = vld [vmem:[#allocation12 + $0x120] sm:$0xff]
    %v5361 = vld [vmem:[#allocation12 + $0x128] sm:$0xff]
    %v5362 = vld [vmem:[#allocation12 + $0x130] sm:$0xff]
    %v5363 = vld [vmem:[#allocation12 + $0x138] sm:$0xff]
    %v5364 = vld [vmem:[#allocation12 + $0x140] sm:$0xff]
    %v5365 = vld [vmem:[#allocation12 + $0x148] sm:$0xff]
    %v5366 = vld [vmem:[#allocation12 + $0x150] sm:$0xff]
    %v5367 = vld [vmem:[#allocation12 + $0x158] sm:$0xff]
    %v5368 = vld [vmem:[#allocation12 + $0x160] sm:$0xff]
    %v5369 = vld [vmem:[#allocation12 + $0x168] sm:$0xff]
    %v5370 = vld [vmem:[#allocation12 + $0x170] sm:$0xff]
    %v5371 = vld [vmem:[#allocation12 + $0x178] sm:$0xff]
    %v5372 = vld [vmem:[#allocation12 + $0x180] sm:$0xff]
    %v5373 = vld [vmem:[#allocation12 + $0x188] sm:$0xff]
    %v5374 = vld [vmem:[#allocation12 + $0x190] sm:$0xff]
    %v5375 = vld [vmem:[#allocation12 + $0x198] sm:$0xff]
    %v5376 = vld [vmem:[#allocation12 + $0x1a0] sm:$0xff]
    %v5377 = vld [vmem:[#allocation12 + $0x1a8] sm:$0xff]
    %v5378 = vld [vmem:[#allocation12 + $0x1b0] sm:$0xff]
    %v5379 = vld [vmem:[#allocation12 + $0x1b8] sm:$0xff]
    %v5380 = vld [vmem:[#allocation12 + $0x1c0] sm:$0xff]
    %v5381 = vld [vmem:[#allocation12 + $0x1c8] sm:$0xff]
    %v5382 = vld [vmem:[#allocation12 + $0x1d0] sm:$0xff]
    %v5383 = vld [vmem:[#allocation12 + $0x1d8] sm:$0xff]
    %v5384 = vld [vmem:[#allocation12 + $0x1e0] sm:$0xff]
    %v5385 = vld [vmem:[#allocation12 + $0x1e8] sm:$0xff]
    %v5386 = vld [vmem:[#allocation12 + $0x1f0] sm:$0xff]
    %v5387 = vld [vmem:[#allocation12 + $0x1f8] sm:$0xff]
    %v5389 = vrot.slane %v5321, 2
    %5391 = vmatprep.subr.mxu0 %v5325
    %5392 = vmatpush1.msra.mxu0 %v5324
    %5393 = vmatprep.subr.mxu0 %v5329
    %5394 = vmatpush1.msra.mxu0 %v5328
    %5395 = vmatprep.subr.mxu0 %v5333
    %5396 = vmatpush1.msra.mxu0 %v5332
    %5397 = vmatprep.subr.mxu0 %v5337
    %5398 = vmatpush1.msra.mxu0 %v5336
    %5399 = vmatprep.subr.mxu0 %v5341
    %5400 = vmatpush1.msra.mxu0 %v5340
    %5401 = vmatprep.subr.mxu0 %v5345
    %5402 = vmatpush1.msra.mxu0 %v5344
    %5403 = vmatprep.subr.mxu0 %v5349
    %5404 = vmatpush1.msra.mxu0 %v5348
    %5405 = vmatprep.subr.mxu0 %v5353
    %5406 = vmatpush1.msra.mxu0 %v5352
    %5407 = vmatprep.subr.mxu0 %v5357
    %5408 = vmatpush1.msra.mxu0 %v5356
    %5409 = vmatprep.subr.mxu0 %v5361
    %5410 = vmatpush1.msra.mxu0 %v5360
    %5411 = vmatprep.subr.mxu0 %v5365
    %5412 = vmatpush1.msra.mxu0 %v5364
    %5413 = vmatprep.subr.mxu0 %v5369
    %5414 = vmatpush1.msra.mxu0 %v5368
    %5415 = vmatprep.subr.mxu0 %v5373
    %5416 = vmatpush1.msra.mxu0 %v5372
    %5417 = vmatprep.subr.mxu0 %v5377
    %5418 = vmatpush1.msra.mxu0 %v5376
    %5419 = vmatprep.subr.mxu0 %v5381
    %5420 = vmatpush1.msra.mxu0 %v5380
    %5421 = vmatprep.subr.mxu0 %v5385
    %5422 = vmatpush1.msra.mxu0 %v5384
    %5423 = vmatprep.subr.mxu0 0.0
    %5424 = vmatpush1.msra.mxu0 0.0
    %5425 = vmatprep.subr.mxu0 0.0
    %5426 = vmatpush1.msra.mxu0 0.0
    %5427 = vmatprep.subr.mxu0 0.0
    %5428 = vmatpush1.msra.mxu0 0.0
    %5429 = vmatprep.subr.mxu0 0.0
    %5430 = vmatpush1.msra.mxu0 0.0
    %5431 = vmatprep.subr.mxu0 0.0
    %5432 = vmatpush1.msra.mxu0 0.0
    %5433 = vmatprep.subr.mxu0 0.0
    %5434 = vmatpush1.msra.mxu0 0.0
    %5435 = vmatprep.subr.mxu0 0.0
    %5436 = vmatpush1.msra.mxu0 0.0
    %5437 = vmatprep.subr.mxu0 0.0
    %5438 = vmatpush1.msra.mxu0 0.0
    %5439 = vmatprep.subr.mxu0 0.0
    %5440 = vmatpush1.msra.mxu0 0.0
    %5441 = vmatprep.subr.mxu0 0.0
    %5442 = vmatpush1.msra.mxu0 0.0
    %5443 = vmatprep.subr.mxu0 0.0
    %5444 = vmatpush1.msra.mxu0 0.0
    %5445 = vmatprep.subr.mxu0 0.0
    %5446 = vmatpush1.msra.mxu0 0.0
    %5447 = vmatprep.subr.mxu0 0.0
    %5448 = vmatpush1.msra.mxu0 0.0
    %5449 = vmatprep.subr.mxu0 0.0
    %5450 = vmatpush1.msra.mxu0 0.0
    %5451 = vmatprep.subr.mxu0 0.0
    %5452 = vmatpush1.msra.mxu0 0.0
    %5453 = vmatprep.subr.mxu0 0.0
    %5454 = vmatpush1.msra.mxu0 0.0
    %5455 = vmatprep.mubr.f32.mxu0 0.0
    %5456 = vmatmul.mubr.f32.gmra.mrb[0].mxu0 %v5389
    %v5457 = vpop.f32.mrb[0].mxu0
    %v5458 = vadd.f32 0.0, %v5457
    %v5459 = vpop.f32.mrb[0].mxu0
    %v5460 = vadd.f32 0.0, %v5459
    %5461 = vdwg.mxu0
    %5462 = vmatprep.subr.mxu0 %v5327
    %5463 = vmatpush1.msra.mxu0 %v5326
    %5464 = vmatprep.subr.mxu0 %v5331
    %5465 = vmatpush1.msra.mxu0 %v5330
    %5466 = vmatprep.subr.mxu0 %v5335
    %5467 = vmatpush1.msra.mxu0 %v5334
    %5468 = vmatprep.subr.mxu0 %v5339
    %5469 = vmatpush1.msra.mxu0 %v5338
    %5470 = vmatprep.subr.mxu0 %v5343
    %5471 = vmatpush1.msra.mxu0 %v5342
    %5472 = vmatprep.subr.mxu0 %v5347
    %5473 = vmatpush1.msra.mxu0 %v5346
    %5474 = vmatprep.subr.mxu0 %v5351
    %5475 = vmatpush1.msra.mxu0 %v5350
    %5476 = vmatprep.subr.mxu0 %v5355
    %5477 = vmatpush1.msra.mxu0 %v5354
    %5478 = vmatprep.subr.mxu0 %v5359
    %5479 = vmatpush1.msra.mxu0 %v5358
    %5480 = vmatprep.subr.mxu0 %v5363
    %5481 = vmatpush1.msra.mxu0 %v5362
    %5482 = vmatprep.subr.mxu0 %v5367
    %5483 = vmatpush1.msra.mxu0 %v5366
    %5484 = vmatprep.subr.mxu0 %v5371
    %5485 = vmatpush1.msra.mxu0 %v5370
    %5486 = vmatprep.subr.mxu0 %v5375
    %5487 = vmatpush1.msra.mxu0 %v5374
    %5488 = vmatprep.subr.mxu0 %v5379
    %5489 = vmatpush1.msra.mxu0 %v5378
    %5490 = vmatprep.subr.mxu0 %v5383
    %5491 = vmatpush1.msra.mxu0 %v5382
    %5492 = vmatprep.subr.mxu0 %v5387
    %5493 = vmatpush1.msra.mxu0 %v5386
    %5494 = vmatprep.subr.mxu0 0.0
    %5495 = vmatpush1.msra.mxu0 0.0
    %5496 = vmatprep.subr.mxu0 0.0
    %5497 = vmatpush1.msra.mxu0 0.0
    %5498 = vmatprep.subr.mxu0 0.0
    %5499 = vmatpush1.msra.mxu0 0.0
    %5500 = vmatprep.subr.mxu0 0.0
    %5501 = vmatpush1.msra.mxu0 0.0
    %5502 = vmatprep.subr.mxu0 0.0
    %5503 = vmatpush1.msra.mxu0 0.0
    %5504 = vmatprep.subr.mxu0 0.0
    %5505 = vmatpush1.msra.mxu0 0.0
    %5506 = vmatprep.subr.mxu0 0.0
    %5507 = vmatpush1.msra.mxu0 0.0
    %5508 = vmatprep.subr.mxu0 0.0
    %5509 = vmatpush1.msra.mxu0 0.0
    %5510 = vmatprep.subr.mxu0 0.0
    %5511 = vmatpush1.msra.mxu0 0.0
    %5512 = vmatprep.subr.mxu0 0.0
    %5513 = vmatpush1.msra.mxu0 0.0
    %5514 = vmatprep.subr.mxu0 0.0
    %5515 = vmatpush1.msra.mxu0 0.0
    %5516 = vmatprep.subr.mxu0 0.0
    %5517 = vmatpush1.msra.mxu0 0.0
    %5518 = vmatprep.subr.mxu0 0.0
    %5519 = vmatpush1.msra.mxu0 0.0
    %5520 = vmatprep.subr.mxu0 0.0
    %5521 = vmatpush1.msra.mxu0 0.0
    %5522 = vmatprep.subr.mxu0 0.0
    %5523 = vmatpush1.msra.mxu0 0.0
    %5524 = vmatprep.subr.mxu0 0.0
    %5525 = vmatpush1.msra.mxu0 0.0
    %5526 = vmatprep.mubr.f32.mxu0 0.0
    %5527 = vmatmul.mubr.f32.gmra.mrb[0].mxu0 %v5389
    %v5528 = vpop.f32.mrb[0].mxu0
    %v5529 = vadd.f32 0.0, %v5528
    %v5530 = vpop.f32.mrb[0].mxu0
    %v5531 = vadd.f32 0.0, %v5530
    %5532 = vdwg.mxu0
    %v5537 = vrot.slane %v5458, 4
    %v5538 = vrot.slane %v5460, 4
    %v5539 = vrot.slane %v5529, 4
    %v5540 = vrot.slane %v5531, 4
    %v5545 = vadd.f32 %v4750, %v5537
    %v5546 = vadd.f32 %v4752, %v5538
    %v5547 = vadd.f32 %v4827, %v5539
    %v5548 = vadd.f32 %v4829, %v5540
    %v5549 = vxor.u32 %v5545, 2147483648
    %v5550 = vxor.u32 %v5546, 2147483648
    %v5551 = vxor.u32 %v5547, 2147483648
    %v5552 = vmul.f32 %v5549, 1.442695
    %v5553 = vpow.pop %v5552
    %v5554 = vmul.f32 %v5550, 1.442695
    %v5555 = vpow.pop %v5554
    %v5556 = vmul.f32 %v5551, 1.442695
    %v5557 = vpow.pop %v5556
    %v5558 = vadd.f32 %v5553, 1.0
    %v5559 = vadd.f32 %v5555, 1.0
    %v5560 = vadd.f32 %v5557, 1.0
    %v5561 = vrcp.pop %v5558
    %v5562 = vmul.f32 1.0, %v5561
    %v5563 = vrcp.pop %v5559
    %v5564 = vmul.f32 1.0, %v5563
    %v5565 = vrcp.pop %v5560
    %v5566 = vmul.f32 1.0, %v5565
    %v5567 = vtanh.pop %v5548
    %v5569 = vrot.slane %v5319, 6
    %v5571 = vmul.f32 %v5564, %v5569
    %v5572 = vmul.f32 %v5562, %v5567
    %v5573 = vadd.f32 %v5571, %v5572
    %v5574 = vtanh.pop %v5573
    %v5575 = vmul.f32 %v5566, %v5574
    %v5576 = vtanh.pop %v5575
    %5577 = vst [vmem:[%s10] sm:$0x30] %v5576
    %v5578 = vld [vmem:[#allocation12] sm:$0xff]
    %v5579 = vld [vmem:[#allocation12 + $0x8] sm:$0xff]
    %v5580 = vld [vmem:[#allocation12 + $0x10] sm:$0xff]
    %v5581 = vld [vmem:[#allocation12 + $0x18] sm:$0xff]
    %v5582 = vld [vmem:[#allocation12 + $0x20] sm:$0xff]
    %v5583 = vld [vmem:[#allocation12 + $0x28] sm:$0xff]
    %v5584 = vld [vmem:[#allocation12 + $0x30] sm:$0xff]
    %v5585 = vld [vmem:[#allocation12 + $0x38] sm:$0xff]
    %v5586 = vld [vmem:[#allocation12 + $0x40] sm:$0xff]
    %v5587 = vld [vmem:[#allocation12 + $0x48] sm:$0xff]
    %v5588 = vld [vmem:[#allocation12 + $0x50] sm:$0xff]
    %v5589 = vld [vmem:[#allocation12 + $0x58] sm:$0xff]
    %v5590 = vld [vmem:[#allocation12 + $0x60] sm:$0xff]
    %v5591 = vld [vmem:[#allocation12 + $0x68] sm:$0xff]
    %v5592 = vld [vmem:[#allocation12 + $0x70] sm:$0xff]
    %v5593 = vld [vmem:[#allocation12 + $0x78] sm:$0xff]
    %v5594 = vld [vmem:[#allocation12 + $0x80] sm:$0xff]
    %v5595 = vld [vmem:[#allocation12 + $0x88] sm:$0xff]
    %v5596 = vld [vmem:[#allocation12 + $0x90] sm:$0xff]
    %v5597 = vld [vmem:[#allocation12 + $0x98] sm:$0xff]
    %v5598 = vld [vmem:[#allocation12 + $0xa0] sm:$0xff]
    %v5599 = vld [vmem:[#allocation12 + $0xa8] sm:$0xff]
    %v5600 = vld [vmem:[#allocation12 + $0xb0] sm:$0xff]
    %v5601 = vld [vmem:[#allocation12 + $0xb8] sm:$0xff]
    %v5602 = vld [vmem:[#allocation12 + $0xc0] sm:$0xff]
    %v5603 = vld [vmem:[#allocation12 + $0xc8] sm:$0xff]
    %v5604 = vld [vmem:[#allocation12 + $0xd0] sm:$0xff]
    %v5605 = vld [vmem:[#allocation12 + $0xd8] sm:$0xff]
    %v5606 = vld [vmem:[#allocation12 + $0xe0] sm:$0xff]
    %v5607 = vld [vmem:[#allocation12 + $0xe8] sm:$0xff]
    %v5608 = vld [vmem:[#allocation12 + $0xf0] sm:$0xff]
    %v5609 = vld [vmem:[#allocation12 + $0xf8] sm:$0xff]
    %v5610 = vld [vmem:[#allocation12 + $0x100] sm:$0xff]
    %v5611 = vld [vmem:[#allocation12 + $0x108] sm:$0xff]
    %v5612 = vld [vmem:[#allocation12 + $0x110] sm:$0xff]
    %v5613 = vld [vmem:[#allocation12 + $0x118] sm:$0xff]
    %v5614 = vld [vmem:[#allocation12 + $0x120] sm:$0xff]
    %v5615 = vld [vmem:[#allocation12 + $0x128] sm:$0xff]
    %v5616 = vld [vmem:[#allocation12 + $0x130] sm:$0xff]
    %v5617 = vld [vmem:[#allocation12 + $0x138] sm:$0xff]
    %v5618 = vld [vmem:[#allocation12 + $0x140] sm:$0xff]
    %v5619 = vld [vmem:[#allocation12 + $0x148] sm:$0xff]
    %v5620 = vld [vmem:[#allocation12 + $0x150] sm:$0xff]
    %v5621 = vld [vmem:[#allocation12 + $0x158] sm:$0xff]
    %v5622 = vld [vmem:[#allocation12 + $0x160] sm:$0xff]
    %v5623 = vld [vmem:[#allocation12 + $0x168] sm:$0xff]
    %v5624 = vld [vmem:[#allocation12 + $0x170] sm:$0xff]
    %v5625 = vld [vmem:[#allocation12 + $0x178] sm:$0xff]
    %v5626 = vld [vmem:[#allocation12 + $0x180] sm:$0xff]
    %v5627 = vld [vmem:[#allocation12 + $0x188] sm:$0xff]
    %v5628 = vld [vmem:[#allocation12 + $0x190] sm:$0xff]
    %v5629 = vld [vmem:[#allocation12 + $0x198] sm:$0xff]
    %v5630 = vld [vmem:[#allocation12 + $0x1a0] sm:$0xff]
    %v5631 = vld [vmem:[#allocation12 + $0x1a8] sm:$0xff]
    %v5632 = vld [vmem:[#allocation12 + $0x1b0] sm:$0xff]
    %v5633 = vld [vmem:[#allocation12 + $0x1b8] sm:$0xff]
    %v5634 = vld [vmem:[#allocation12 + $0x1c0] sm:$0xff]
    %v5635 = vld [vmem:[#allocation12 + $0x1c8] sm:$0xff]
    %v5636 = vld [vmem:[#allocation12 + $0x1d0] sm:$0xff]
    %v5637 = vld [vmem:[#allocation12 + $0x1d8] sm:$0xff]
    %v5638 = vld [vmem:[#allocation12 + $0x1e0] sm:$0xff]
    %v5639 = vld [vmem:[#allocation12 + $0x1e8] sm:$0xff]
    %v5640 = vld [vmem:[#allocation12 + $0x1f0] sm:$0xff]
    %v5641 = vld [vmem:[#allocation12 + $0x1f8] sm:$0xff]
    %v5643 = vrot.slane %v5575, 4
    %5645 = vmatprep.subr.mxu0 %v5579
    %5646 = vmatpush1.msra.mxu0 %v5578
    %5647 = vmatprep.subr.mxu0 %v5583
    %5648 = vmatpush1.msra.mxu0 %v5582
    %5649 = vmatprep.subr.mxu0 %v5587
    %5650 = vmatpush1.msra.mxu0 %v5586
    %5651 = vmatprep.subr.mxu0 %v5591
    %5652 = vmatpush1.msra.mxu0 %v5590
    %5653 = vmatprep.subr.mxu0 %v5595
    %5654 = vmatpush1.msra.mxu0 %v5594
    %5655 = vmatprep.subr.mxu0 %v5599
    %5656 = vmatpush1.msra.mxu0 %v5598
    %5657 = vmatprep.subr.mxu0 %v5603
    %5658 = vmatpush1.msra.mxu0 %v5602
    %5659 = vmatprep.subr.mxu0 %v5607
    %5660 = vmatpush1.msra.mxu0 %v5606
    %5661 = vmatprep.subr.mxu0 %v5611
    %5662 = vmatpush1.msra.mxu0 %v5610
    %5663 = vmatprep.subr.mxu0 %v5615
    %5664 = vmatpush1.msra.mxu0 %v5614
    %5665 = vmatprep.subr.mxu0 %v5619
    %5666 = vmatpush1.msra.mxu0 %v5618
    %5667 = vmatprep.subr.mxu0 %v5623
    %5668 = vmatpush1.msra.mxu0 %v5622
    %5669 = vmatprep.subr.mxu0 %v5627
    %5670 = vmatpush1.msra.mxu0 %v5626
    %5671 = vmatprep.subr.mxu0 %v5631
    %5672 = vmatpush1.msra.mxu0 %v5630
    %5673 = vmatprep.subr.mxu0 %v5635
    %5674 = vmatpush1.msra.mxu0 %v5634
    %5675 = vmatprep.subr.mxu0 %v5639
    %5676 = vmatpush1.msra.mxu0 %v5638
    %5677 = vmatprep.subr.mxu0 0.0
    %5678 = vmatpush1.msra.mxu0 0.0
    %5679 = vmatprep.subr.mxu0 0.0
    %5680 = vmatpush1.msra.mxu0 0.0
    %5681 = vmatprep.subr.mxu0 0.0
    %5682 = vmatpush1.msra.mxu0 0.0
    %5683 = vmatprep.subr.mxu0 0.0
    %5684 = vmatpush1.msra.mxu0 0.0
    %5685 = vmatprep.subr.mxu0 0.0
    %5686 = vmatpush1.msra.mxu0 0.0
    %5687 = vmatprep.subr.mxu0 0.0
    %5688 = vmatpush1.msra.mxu0 0.0
    %5689 = vmatprep.subr.mxu0 0.0
    %5690 = vmatpush1.msra.mxu0 0.0
    %5691 = vmatprep.subr.mxu0 0.0
    %5692 = vmatpush1.msra.mxu0 0.0
    %5693 = vmatprep.subr.mxu0 0.0
    %5694 = vmatpush1.msra.mxu0 0.0
    %5695 = vmatprep.subr.mxu0 0.0
    %5696 = vmatpush1.msra.mxu0 0.0
    %5697 = vmatprep.subr.mxu0 0.0
    %5698 = vmatpush1.msra.mxu0 0.0
    %5699 = vmatprep.subr.mxu0 0.0
    %5700 = vmatpush1.msra.mxu0 0.0
    %5701 = vmatprep.subr.mxu0 0.0
    %5702 = vmatpush1.msra.mxu0 0.0
    %5703 = vmatprep.subr.mxu0 0.0
    %5704 = vmatpush1.msra.mxu0 0.0
    %5705 = vmatprep.subr.mxu0 0.0
    %5706 = vmatpush1.msra.mxu0 0.0
    %5707 = vmatprep.subr.mxu0 0.0
    %5708 = vmatpush1.msra.mxu0 0.0
    %5709 = vmatprep.mubr.f32.mxu0 0.0
    %5710 = vmatmul.mubr.f32.gmra.mrb[0].mxu0 %v5643
    %v5711 = vpop.f32.mrb[0].mxu0
    %v5712 = vadd.f32 0.0, %v5711
    %v5713 = vpop.f32.mrb[0].mxu0
    %v5714 = vadd.f32 0.0, %v5713
    %5715 = vdwg.mxu0
    %5716 = vmatprep.subr.mxu0 %v5581
    %5717 = vmatpush1.msra.mxu0 %v5580
    %5718 = vmatprep.subr.mxu0 %v5585
    %5719 = vmatpush1.msra.mxu0 %v5584
    %5720 = vmatprep.subr.mxu0 %v5589
    %5721 = vmatpush1.msra.mxu0 %v5588
    %5722 = vmatprep.subr.mxu0 %v5593
    %5723 = vmatpush1.msra.mxu0 %v5592
    %5724 = vmatprep.subr.mxu0 %v5597
    %5725 = vmatpush1.msra.mxu0 %v5596
    %5726 = vmatprep.subr.mxu0 %v5601
    %5727 = vmatpush1.msra.mxu0 %v5600
    %5728 = vmatprep.subr.mxu0 %v5605
    %5729 = vmatpush1.msra.mxu0 %v5604
    %5730 = vmatprep.subr.mxu0 %v5609
    %5731 = vmatpush1.msra.mxu0 %v5608
    %5732 = vmatprep.subr.mxu0 %v5613
    %5733 = vmatpush1.msra.mxu0 %v5612
    %5734 = vmatprep.subr.mxu0 %v5617
    %5735 = vmatpush1.msra.mxu0 %v5616
    %5736 = vmatprep.subr.mxu0 %v5621
    %5737 = vmatpush1.msra.mxu0 %v5620
    %5738 = vmatprep.subr.mxu0 %v5625
    %5739 = vmatpush1.msra.mxu0 %v5624
    %5740 = vmatprep.subr.mxu0 %v5629
    %5741 = vmatpush1.msra.mxu0 %v5628
    %5742 = vmatprep.subr.mxu0 %v5633
    %5743 = vmatpush1.msra.mxu0 %v5632
    %5744 = vmatprep.subr.mxu0 %v5637
    %5745 = vmatpush1.msra.mxu0 %v5636
    %5746 = vmatprep.subr.mxu0 %v5641
    %5747 = vmatpush1.msra.mxu0 %v5640
    %5748 = vmatprep.subr.mxu0 0.0
    %5749 = vmatpush1.msra.mxu0 0.0
    %5750 = vmatprep.subr.mxu0 0.0
    %5751 = vmatpush1.msra.mxu0 0.0
    %5752 = vmatprep.subr.mxu0 0.0
    %5753 = vmatpush1.msra.mxu0 0.0
    %5754 = vmatprep.subr.mxu0 0.0
    %5755 = vmatpush1.msra.mxu0 0.0
    %5756 = vmatprep.subr.mxu0 0.0
    %5757 = vmatpush1.msra.mxu0 0.0
    %5758 = vmatprep.subr.mxu0 0.0
    %5759 = vmatpush1.msra.mxu0 0.0
    %5760 = vmatprep.subr.mxu0 0.0
    %5761 = vmatpush1.msra.mxu0 0.0
    %5762 = vmatprep.subr.mxu0 0.0
    %5763 = vmatpush1.msra.mxu0 0.0
    %5764 = vmatprep.subr.mxu0 0.0
    %5765 = vmatpush1.msra.mxu0 0.0
    %5766 = vmatprep.subr.mxu0 0.0
    %5767 = vmatpush1.msra.mxu0 0.0
    %5768 = vmatprep.subr.mxu0 0.0
    %5769 = vmatpush1.msra.mxu0 0.0
    %5770 = vmatprep.subr.mxu0 0.0
    %5771 = vmatpush1.msra.mxu0 0.0
    %5772 = vmatprep.subr.mxu0 0.0
    %5773 = vmatpush1.msra.mxu0 0.0
    %5774 = vmatprep.subr.mxu0 0.0
    %5775 = vmatpush1.msra.mxu0 0.0
    %5776 = vmatprep.subr.mxu0 0.0
    %5777 = vmatpush1.msra.mxu0 0.0
    %5778 = vmatprep.subr.mxu0 0.0
    %5779 = vmatpush1.msra.mxu0 0.0
    %5780 = vmatprep.mubr.f32.mxu0 0.0
    %5781 = vmatmul.mubr.f32.gmra.mrb[0].mxu0 %v5643
    %v5782 = vpop.f32.mrb[0].mxu0
    %v5783 = vadd.f32 0.0, %v5782
    %v5784 = vpop.f32.mrb[0].mxu0
    %v5785 = vadd.f32 0.0, %v5784
    %5786 = vdwg.mxu0
    %v5791 = vrot.slane %v5712, 2
    %v5792 = vrot.slane %v5714, 2
    %v5793 = vrot.slane %v5783, 2
    %v5794 = vrot.slane %v5785, 2
    %v5799 = vadd.f32 %v4750, %v5791
    %v5800 = vadd.f32 %v4752, %v5792
    %v5801 = vadd.f32 %v4827, %v5793
    %v5802 = vadd.f32 %v4829, %v5794
    %v5803 = vxor.u32 %v5799, 2147483648
    %v5804 = vxor.u32 %v5800, 2147483648
    %v5805 = vxor.u32 %v5801, 2147483648
    %v5806 = vmul.f32 %v5803, 1.442695
    %v5807 = vpow.pop %v5806
    %v5808 = vmul.f32 %v5804, 1.442695
    %v5809 = vpow.pop %v5808
    %v5810 = vmul.f32 %v5805, 1.442695
    %v5811 = vpow.pop %v5810
    %v5812 = vadd.f32 %v5807, 1.0
    %v5813 = vadd.f32 %v5809, 1.0
    %v5814 = vadd.f32 %v5811, 1.0
    %v5815 = vrcp.pop %v5812
    %v5816 = vmul.f32 1.0, %v5815
    %v5817 = vrcp.pop %v5813
    %v5818 = vmul.f32 1.0, %v5817
    %v5819 = vrcp.pop %v5814
    %v5820 = vmul.f32 1.0, %v5819
    %v5821 = vtanh.pop %v5802
    %v5823 = vrot.slane %v5573, 6
    %v5825 = vmul.f32 %v5818, %v5823
    %v5826 = vmul.f32 %v5816, %v5821
    %v5827 = vadd.f32 %v5825, %v5826
    %v5828 = vtanh.pop %v5827
    %v5829 = vmul.f32 %v5820, %v5828
    %v5830 = vtanh.pop %v5829
    %5831 = vst [vmem:[%s10] sm:$0xc0] %v5830
    %v5832 = vld [vmem:[#allocation12] sm:$0xff]
    %v5833 = vld [vmem:[#allocation12 + $0x8] sm:$0xff]
    %v5834 = vld [vmem:[#allocation12 + $0x10] sm:$0xff]
    %v5835 = vld [vmem:[#allocation12 + $0x18] sm:$0xff]
    %v5836 = vld [vmem:[#allocation12 + $0x20] sm:$0xff]
    %v5837 = vld [vmem:[#allocation12 + $0x28] sm:$0xff]
    %v5838 = vld [vmem:[#allocation12 + $0x30] sm:$0xff]
    %v5839 = vld [vmem:[#allocation12 + $0x38] sm:$0xff]
    %v5840 = vld [vmem:[#allocation12 + $0x40] sm:$0xff]
    %v5841 = vld [vmem:[#allocation12 + $0x48] sm:$0xff]
    %v5842 = vld [vmem:[#allocation12 + $0x50] sm:$0xff]
    %v5843 = vld [vmem:[#allocation12 + $0x58] sm:$0xff]
    %v5844 = vld [vmem:[#allocation12 + $0x60] sm:$0xff]
    %v5845 = vld [vmem:[#allocation12 + $0x68] sm:$0xff]
    %v5846 = vld [vmem:[#allocation12 + $0x70] sm:$0xff]
    %v5847 = vld [vmem:[#allocation12 + $0x78] sm:$0xff]
    %v5848 = vld [vmem:[#allocation12 + $0x80] sm:$0xff]
    %v5849 = vld [vmem:[#allocation12 + $0x88] sm:$0xff]
    %v5850 = vld [vmem:[#allocation12 + $0x90] sm:$0xff]
    %v5851 = vld [vmem:[#allocation12 + $0x98] sm:$0xff]
    %v5852 = vld [vmem:[#allocation12 + $0xa0] sm:$0xff]
    %v5853 = vld [vmem:[#allocation12 + $0xa8] sm:$0xff]
    %v5854 = vld [vmem:[#allocation12 + $0xb0] sm:$0xff]
    %v5855 = vld [vmem:[#allocation12 + $0xb8] sm:$0xff]
    %v5856 = vld [vmem:[#allocation12 + $0xc0] sm:$0xff]
    %v5857 = vld [vmem:[#allocation12 + $0xc8] sm:$0xff]
    %v5858 = vld [vmem:[#allocation12 + $0xd0] sm:$0xff]
    %v5859 = vld [vmem:[#allocation12 + $0xd8] sm:$0xff]
    %v5860 = vld [vmem:[#allocation12 + $0xe0] sm:$0xff]
    %v5861 = vld [vmem:[#allocation12 + $0xe8] sm:$0xff]
    %v5862 = vld [vmem:[#allocation12 + $0xf0] sm:$0xff]
    %v5863 = vld [vmem:[#allocation12 + $0xf8] sm:$0xff]
    %v5864 = vld [vmem:[#allocation12 + $0x100] sm:$0xff]
    %v5865 = vld [vmem:[#allocation12 + $0x108] sm:$0xff]
    %v5866 = vld [vmem:[#allocation12 + $0x110] sm:$0xff]
    %v5867 = vld [vmem:[#allocation12 + $0x118] sm:$0xff]
    %v5868 = vld [vmem:[#allocation12 + $0x120] sm:$0xff]
    %v5869 = vld [vmem:[#allocation12 + $0x128] sm:$0xff]
    %v5870 = vld [vmem:[#allocation12 + $0x130] sm:$0xff]
    %v5871 = vld [vmem:[#allocation12 + $0x138] sm:$0xff]
    %v5872 = vld [vmem:[#allocation12 + $0x140] sm:$0xff]
    %v5873 = vld [vmem:[#allocation12 + $0x148] sm:$0xff]
    %v5874 = vld [vmem:[#allocation12 + $0x150] sm:$0xff]
    %v5875 = vld [vmem:[#allocation12 + $0x158] sm:$0xff]
    %v5876 = vld [vmem:[#allocation12 + $0x160] sm:$0xff]
    %v5877 = vld [vmem:[#allocation12 + $0x168] sm:$0xff]
    %v5878 = vld [vmem:[#allocation12 + $0x170] sm:$0xff]
    %v5879 = vld [vmem:[#allocation12 + $0x178] sm:$0xff]
    %v5880 = vld [vmem:[#allocation12 + $0x180] sm:$0xff]
    %v5881 = vld [vmem:[#allocation12 + $0x188] sm:$0xff]
    %v5882 = vld [vmem:[#allocation12 + $0x190] sm:$0xff]
    %v5883 = vld [vmem:[#allocation12 + $0x198] sm:$0xff]
    %v5884 = vld [vmem:[#allocation12 + $0x1a0] sm:$0xff]
    %v5885 = vld [vmem:[#allocation12 + $0x1a8] sm:$0xff]
    %v5886 = vld [vmem:[#allocation12 + $0x1b0] sm:$0xff]
    %v5887 = vld [vmem:[#allocation12 + $0x1b8] sm:$0xff]
    %v5888 = vld [vmem:[#allocation12 + $0x1c0] sm:$0xff]
    %v5889 = vld [vmem:[#allocation12 + $0x1c8] sm:$0xff]
    %v5890 = vld [vmem:[#allocation12 + $0x1d0] sm:$0xff]
    %v5891 = vld [vmem:[#allocation12 + $0x1d8] sm:$0xff]
    %v5892 = vld [vmem:[#allocation12 + $0x1e0] sm:$0xff]
    %v5893 = vld [vmem:[#allocation12 + $0x1e8] sm:$0xff]
    %v5894 = vld [vmem:[#allocation12 + $0x1f0] sm:$0xff]
    %v5895 = vld [vmem:[#allocation12 + $0x1f8] sm:$0xff]
    %v5897 = vrot.slane %v5829, 6
    %5899 = vmatprep.subr.mxu0 %v5833
    %5900 = vmatpush1.msra.mxu0 %v5832
    %5901 = vmatprep.subr.mxu0 %v5837
    %5902 = vmatpush1.msra.mxu0 %v5836
    %5903 = vmatprep.subr.mxu0 %v5841
    %5904 = vmatpush1.msra.mxu0 %v5840
    %5905 = vmatprep.subr.mxu0 %v5845
    %5906 = vmatpush1.msra.mxu0 %v5844
    %5907 = vmatprep.subr.mxu0 %v5849
    %5908 = vmatpush1.msra.mxu0 %v5848
    %5909 = vmatprep.subr.mxu0 %v5853
    %5910 = vmatpush1.msra.mxu0 %v5852
    %5911 = vmatprep.subr.mxu0 %v5857
    %5912 = vmatpush1.msra.mxu0 %v5856
    %5913 = vmatprep.subr.mxu0 %v5861
    %5914 = vmatpush1.msra.mxu0 %v5860
    %5915 = vmatprep.subr.mxu0 %v5865
    %5916 = vmatpush1.msra.mxu0 %v5864
    %5917 = vmatprep.subr.mxu0 %v5869
    %5918 = vmatpush1.msra.mxu0 %v5868
    %5919 = vmatprep.subr.mxu0 %v5873
    %5920 = vmatpush1.msra.mxu0 %v5872
    %5921 = vmatprep.subr.mxu0 %v5877
    %5922 = vmatpush1.msra.mxu0 %v5876
    %5923 = vmatprep.subr.mxu0 %v5881
    %5924 = vmatpush1.msra.mxu0 %v5880
    %5925 = vmatprep.subr.mxu0 %v5885
    %5926 = vmatpush1.msra.mxu0 %v5884
    %5927 = vmatprep.subr.mxu0 %v5889
    %5928 = vmatpush1.msra.mxu0 %v5888
    %5929 = vmatprep.subr.mxu0 %v5893
    %5930 = vmatpush1.msra.mxu0 %v5892
    %5931 = vmatprep.subr.mxu0 0.0
    %5932 = vmatpush1.msra.mxu0 0.0
    %5933 = vmatprep.subr.mxu0 0.0
    %5934 = vmatpush1.msra.mxu0 0.0
    %5935 = vmatprep.subr.mxu0 0.0
    %5936 = vmatpush1.msra.mxu0 0.0
    %5937 = vmatprep.subr.mxu0 0.0
    %5938 = vmatpush1.msra.mxu0 0.0
    %5939 = vmatprep.subr.mxu0 0.0
    %5940 = vmatpush1.msra.mxu0 0.0
    %5941 = vmatprep.subr.mxu0 0.0
    %5942 = vmatpush1.msra.mxu0 0.0
    %5943 = vmatprep.subr.mxu0 0.0
    %5944 = vmatpush1.msra.mxu0 0.0
    %5945 = vmatprep.subr.mxu0 0.0
    %5946 = vmatpush1.msra.mxu0 0.0
    %5947 = vmatprep.subr.mxu0 0.0
    %5948 = vmatpush1.msra.mxu0 0.0
    %5949 = vmatprep.subr.mxu0 0.0
    %5950 = vmatpush1.msra.mxu0 0.0
    %5951 = vmatprep.subr.mxu0 0.0
    %5952 = vmatpush1.msra.mxu0 0.0
    %5953 = vmatprep.subr.mxu0 0.0
    %5954 = vmatpush1.msra.mxu0 0.0
    %5955 = vmatprep.subr.mxu0 0.0
    %5956 = vmatpush1.msra.mxu0 0.0
    %5957 = vmatprep.subr.mxu0 0.0
    %5958 = vmatpush1.msra.mxu0 0.0
    %5959 = vmatprep.subr.mxu0 0.0
    %5960 = vmatpush1.msra.mxu0 0.0
    %5961 = vmatprep.subr.mxu0 0.0
    %5962 = vmatpush1.msra.mxu0 0.0
    %5963 = vmatprep.mubr.f32.mxu0 0.0
    %5964 = vmatmul.mubr.f32.gmra.mrb[0].mxu0 %v5897
    %v5965 = vpop.f32.mrb[0].mxu0
    %v5966 = vadd.f32 0.0, %v5965
    %v5967 = vpop.f32.mrb[0].mxu0
    %v5968 = vadd.f32 0.0, %v5967
    %5969 = vdwg.mxu0
    %5970 = vmatprep.subr.mxu0 %v5835
    %5971 = vmatpush1.msra.mxu0 %v5834
    %5972 = vmatprep.subr.mxu0 %v5839
    %5973 = vmatpush1.msra.mxu0 %v5838
    %5974 = vmatprep.subr.mxu0 %v5843
    %5975 = vmatpush1.msra.mxu0 %v5842
    %5976 = vmatprep.subr.mxu0 %v5847
    %5977 = vmatpush1.msra.mxu0 %v5846
    %5978 = vmatprep.subr.mxu0 %v5851
    %5979 = vmatpush1.msra.mxu0 %v5850
    %5980 = vmatprep.subr.mxu0 %v5855
    %5981 = vmatpush1.msra.mxu0 %v5854
    %5982 = vmatprep.subr.mxu0 %v5859
    %5983 = vmatpush1.msra.mxu0 %v5858
    %5984 = vmatprep.subr.mxu0 %v5863
    %5985 = vmatpush1.msra.mxu0 %v5862
    %5986 = vmatprep.subr.mxu0 %v5867
    %5987 = vmatpush1.msra.mxu0 %v5866
    %5988 = vmatprep.subr.mxu0 %v5871
    %5989 = vmatpush1.msra.mxu0 %v5870
    %5990 = vmatprep.subr.mxu0 %v5875
    %5991 = vmatpush1.msra.mxu0 %v5874
    %5992 = vmatprep.subr.mxu0 %v5879
    %5993 = vmatpush1.msra.mxu0 %v5878
    %5994 = vmatprep.subr.mxu0 %v5883
    %5995 = vmatpush1.msra.mxu0 %v5882
    %5996 = vmatprep.subr.mxu0 %v5887
    %5997 = vmatpush1.msra.mxu0 %v5886
    %5998 = vmatprep.subr.mxu0 %v5891
    %5999 = vmatpush1.msra.mxu0 %v5890
    %6000 = vmatprep.subr.mxu0 %v5895
    %6001 = vmatpush1.msra.mxu0 %v5894
    %6002 = vmatprep.subr.mxu0 0.0
    %6003 = vmatpush1.msra.mxu0 0.0
    %6004 = vmatprep.subr.mxu0 0.0
    %6005 = vmatpush1.msra.mxu0 0.0
    %6006 = vmatprep.subr.mxu0 0.0
    %6007 = vmatpush1.msra.mxu0 0.0
    %6008 = vmatprep.subr.mxu0 0.0
    %6009 = vmatpush1.msra.mxu0 0.0
    %6010 = vmatprep.subr.mxu0 0.0
    %6011 = vmatpush1.msra.mxu0 0.0
    %6012 = vmatprep.subr.mxu0 0.0
    %6013 = vmatpush1.msra.mxu0 0.0
    %6014 = vmatprep.subr.mxu0 0.0
    %6015 = vmatpush1.msra.mxu0 0.0
    %6016 = vmatprep.subr.mxu0 0.0
    %6017 = vmatpush1.msra.mxu0 0.0
    %6018 = vmatprep.subr.mxu0 0.0
    %6019 = vmatpush1.msra.mxu0 0.0
    %6020 = vmatprep.subr.mxu0 0.0
    %6021 = vmatpush1.msra.mxu0 0.0
    %6022 = vmatprep.subr.mxu0 0.0
    %6023 = vmatpush1.msra.mxu0 0.0
    %6024 = vmatprep.subr.mxu0 0.0
    %6025 = vmatpush1.msra.mxu0 0.0
    %6026 = vmatprep.subr.mxu0 0.0
    %6027 = vmatpush1.msra.mxu0 0.0
    %6028 = vmatprep.subr.mxu0 0.0
    %6029 = vmatpush1.msra.mxu0 0.0
    %6030 = vmatprep.subr.mxu0 0.0
    %6031 = vmatpush1.msra.mxu0 0.0
    %6032 = vmatprep.subr.mxu0 0.0
    %6033 = vmatpush1.msra.mxu0 0.0
    %6034 = vmatprep.mubr.f32.mxu0 0.0
    %6035 = vmatmul.mubr.f32.gmra.mrb[0].mxu0 %v5897
    %v6036 = vpop.f32.mrb[0].mxu0
    %v6037 = vadd.f32 0.0, %v6036
    %v6038 = vpop.f32.mrb[0].mxu0
    %v6039 = vadd.f32 0.0, %v6038
    %6040 = vdwg.mxu0
    %v6041 = vadd.f32 %v4756, %v5966
    %v6042 = vadd.f32 %v4758, %v5968
    %v6043 = vadd.f32 %v4833, %v6037
    %v6044 = vadd.f32 %v4835, %v6039
    %v6045 = vxor.u32 %v6041, 2147483648
    %v6046 = vxor.u32 %v6042, 2147483648
    %v6047 = vxor.u32 %v6043, 2147483648
    %v6048 = vmul.f32 %v6045, 1.442695
    %v6049 = vpow.pop %v6048
    %v6050 = vmul.f32 %v6046, 1.442695
    %v6051 = vpow.pop %v6050
    %v6052 = vmul.f32 %v6047, 1.442695
    %v6053 = vpow.pop %v6052
    %v6054 = vadd.f32 %v6049, 1.0
    %v6055 = vadd.f32 %v6051, 1.0
    %v6056 = vadd.f32 %v6053, 1.0
    %v6057 = vrcp.pop %v6054
    %v6058 = vmul.f32 1.0, %v6057
    %v6059 = vrcp.pop %v6055
    %v6060 = vmul.f32 1.0, %v6059
    %v6061 = vrcp.pop %v6056
    %v6062 = vmul.f32 1.0, %v6061
    %v6063 = vtanh.pop %v6044
    %v6065 = vrot.slane %v5827, 6
    %v6067 = vmul.f32 %v6060, %v6065
    %v6068 = vmul.f32 %v6058, %v6063
    %v6069 = vadd.f32 %v6067, %v6068
    %v6070 = vtanh.pop %v6069
    %v6071 = vmul.f32 %v6062, %v6070
    %v6072 = vtanh.pop %v6071
    %6073 = vst [vmem:[%s10 + $0x8] sm:$0x3] %v6072
    %v6074 = vld [vmem:[#allocation12] sm:$0xff]
    %v6075 = vld [vmem:[#allocation12 + $0x8] sm:$0xff]
    %v6076 = vld [vmem:[#allocation12 + $0x10] sm:$0xff]
    %v6077 = vld [vmem:[#allocation12 + $0x18] sm:$0xff]
    %v6078 = vld [vmem:[#allocation12 + $0x20] sm:$0xff]
    %v6079 = vld [vmem:[#allocation12 + $0x28] sm:$0xff]
    %v6080 = vld [vmem:[#allocation12 + $0x30] sm:$0xff]
    %v6081 = vld [vmem:[#allocation12 + $0x38] sm:$0xff]
    %v6082 = vld [vmem:[#allocation12 + $0x40] sm:$0xff]
    %v6083 = vld [vmem:[#allocation12 + $0x48] sm:$0xff]
    %v6084 = vld [vmem:[#allocation12 + $0x50] sm:$0xff]
    %v6085 = vld [vmem:[#allocation12 + $0x58] sm:$0xff]
    %v6086 = vld [vmem:[#allocation12 + $0x60] sm:$0xff]
    %v6087 = vld [vmem:[#allocation12 + $0x68] sm:$0xff]
    %v6088 = vld [vmem:[#allocation12 + $0x70] sm:$0xff]
    %v6089 = vld [vmem:[#allocation12 + $0x78] sm:$0xff]
    %v6090 = vld [vmem:[#allocation12 + $0x80] sm:$0xff]
    %v6091 = vld [vmem:[#allocation12 + $0x88] sm:$0xff]
    %v6092 = vld [vmem:[#allocation12 + $0x90] sm:$0xff]
    %v6093 = vld [vmem:[#allocation12 + $0x98] sm:$0xff]
    %v6094 = vld [vmem:[#allocation12 + $0xa0] sm:$0xff]
    %v6095 = vld [vmem:[#allocation12 + $0xa8] sm:$0xff]
    %v6096 = vld [vmem:[#allocation12 + $0xb0] sm:$0xff]
    %v6097 = vld [vmem:[#allocation12 + $0xb8] sm:$0xff]
    %v6098 = vld [vmem:[#allocation12 + $0xc0] sm:$0xff]
    %v6099 = vld [vmem:[#allocation12 + $0xc8] sm:$0xff]
    %v6100 = vld [vmem:[#allocation12 + $0xd0] sm:$0xff]
    %v6101 = vld [vmem:[#allocation12 + $0xd8] sm:$0xff]
    %v6102 = vld [vmem:[#allocation12 + $0xe0] sm:$0xff]
    %v6103 = vld [vmem:[#allocation12 + $0xe8] sm:$0xff]
    %v6104 = vld [vmem:[#allocation12 + $0xf0] sm:$0xff]
    %v6105 = vld [vmem:[#allocation12 + $0xf8] sm:$0xff]
    %v6106 = vld [vmem:[#allocation12 + $0x100] sm:$0xff]
    %v6107 = vld [vmem:[#allocation12 + $0x108] sm:$0xff]
    %v6108 = vld [vmem:[#allocation12 + $0x110] sm:$0xff]
    %v6109 = vld [vmem:[#allocation12 + $0x118] sm:$0xff]
    %v6110 = vld [vmem:[#allocation12 + $0x120] sm:$0xff]
    %v6111 = vld [vmem:[#allocation12 + $0x128] sm:$0xff]
    %v6112 = vld [vmem:[#allocation12 + $0x130] sm:$0xff]
    %v6113 = vld [vmem:[#allocation12 + $0x138] sm:$0xff]
    %v6114 = vld [vmem:[#allocation12 + $0x140] sm:$0xff]
    %v6115 = vld [vmem:[#allocation12 + $0x148] sm:$0xff]
    %v6116 = vld [vmem:[#allocation12 + $0x150] sm:$0xff]
    %v6117 = vld [vmem:[#allocation12 + $0x158] sm:$0xff]
    %v6118 = vld [vmem:[#allocation12 + $0x160] sm:$0xff]
    %v6119 = vld [vmem:[#allocation12 + $0x168] sm:$0xff]
    %v6120 = vld [vmem:[#allocation12 + $0x170] sm:$0xff]
    %v6121 = vld [vmem:[#allocation12 + $0x178] sm:$0xff]
    %v6122 = vld [vmem:[#allocation12 + $0x180] sm:$0xff]
    %v6123 = vld [vmem:[#allocation12 + $0x188] sm:$0xff]
    %v6124 = vld [vmem:[#allocation12 + $0x190] sm:$0xff]
    %v6125 = vld [vmem:[#allocation12 + $0x198] sm:$0xff]
    %v6126 = vld [vmem:[#allocation12 + $0x1a0] sm:$0xff]
    %v6127 = vld [vmem:[#allocation12 + $0x1a8] sm:$0xff]
    %v6128 = vld [vmem:[#allocation12 + $0x1b0] sm:$0xff]
    %v6129 = vld [vmem:[#allocation12 + $0x1b8] sm:$0xff]
    %v6130 = vld [vmem:[#allocation12 + $0x1c0] sm:$0xff]
    %v6131 = vld [vmem:[#allocation12 + $0x1c8] sm:$0xff]
    %v6132 = vld [vmem:[#allocation12 + $0x1d0] sm:$0xff]
    %v6133 = vld [vmem:[#allocation12 + $0x1d8] sm:$0xff]
    %v6134 = vld [vmem:[#allocation12 + $0x1e0] sm:$0xff]
    %v6135 = vld [vmem:[#allocation12 + $0x1e8] sm:$0xff]
    %v6136 = vld [vmem:[#allocation12 + $0x1f0] sm:$0xff]
    %v6137 = vld [vmem:[#allocation12 + $0x1f8] sm:$0xff]
    %6138 = vmatprep.subr.mxu0 %v6075
    %6139 = vmatpush1.msra.mxu0 %v6074
    %6140 = vmatprep.subr.mxu0 %v6079
    %6141 = vmatpush1.msra.mxu0 %v6078
    %6142 = vmatprep.subr.mxu0 %v6083
    %6143 = vmatpush1.msra.mxu0 %v6082
    %6144 = vmatprep.subr.mxu0 %v6087
    %6145 = vmatpush1.msra.mxu0 %v6086
    %6146 = vmatprep.subr.mxu0 %v6091
    %6147 = vmatpush1.msra.mxu0 %v6090
    %6148 = vmatprep.subr.mxu0 %v6095
    %6149 = vmatpush1.msra.mxu0 %v6094
    %6150 = vmatprep.subr.mxu0 %v6099
    %6151 = vmatpush1.msra.mxu0 %v6098
    %6152 = vmatprep.subr.mxu0 %v6103
    %6153 = vmatpush1.msra.mxu0 %v6102
    %6154 = vmatprep.subr.mxu0 %v6107
    %6155 = vmatpush1.msra.mxu0 %v6106
    %6156 = vmatprep.subr.mxu0 %v6111
    %6157 = vmatpush1.msra.mxu0 %v6110
    %6158 = vmatprep.subr.mxu0 %v6115
    %6159 = vmatpush1.msra.mxu0 %v6114
    %6160 = vmatprep.subr.mxu0 %v6119
    %6161 = vmatpush1.msra.mxu0 %v6118
    %6162 = vmatprep.subr.mxu0 %v6123
    %6163 = vmatpush1.msra.mxu0 %v6122
    %6164 = vmatprep.subr.mxu0 %v6127
    %6165 = vmatpush1.msra.mxu0 %v6126
    %6166 = vmatprep.subr.mxu0 %v6131
    %6167 = vmatpush1.msra.mxu0 %v6130
    %6168 = vmatprep.subr.mxu0 %v6135
    %6169 = vmatpush1.msra.mxu0 %v6134
    %6170 = vmatprep.subr.mxu0 0.0
    %6171 = vmatpush1.msra.mxu0 0.0
    %6172 = vmatprep.subr.mxu0 0.0
    %6173 = vmatpush1.msra.mxu0 0.0
    %6174 = vmatprep.subr.mxu0 0.0
    %6175 = vmatpush1.msra.mxu0 0.0
    %6176 = vmatprep.subr.mxu0 0.0
    %6177 = vmatpush1.msra.mxu0 0.0
    %6178 = vmatprep.subr.mxu0 0.0
    %6179 = vmatpush1.msra.mxu0 0.0
    %6180 = vmatprep.subr.mxu0 0.0
    %6181 = vmatpush1.msra.mxu0 0.0
    %6182 = vmatprep.subr.mxu0 0.0
    %6183 = vmatpush1.msra.mxu0 0.0
    %6184 = vmatprep.subr.mxu0 0.0
    %6185 = vmatpush1.msra.mxu0 0.0
    %6186 = vmatprep.subr.mxu0 0.0
    %6187 = vmatpush1.msra.mxu0 0.0
    %6188 = vmatprep.subr.mxu0 0.0
    %6189 = vmatpush1.msra.mxu0 0.0
    %6190 = vmatprep.subr.mxu0 0.0
    %6191 = vmatpush1.msra.mxu0 0.0
    %6192 = vmatprep.subr.mxu0 0.0
    %6193 = vmatpush1.msra.mxu0 0.0
    %6194 = vmatprep.subr.mxu0 0.0
    %6195 = vmatpush1.msra.mxu0 0.0
    %6196 = vmatprep.subr.mxu0 0.0
    %6197 = vmatpush1.msra.mxu0 0.0
    %6198 = vmatprep.subr.mxu0 0.0
    %6199 = vmatpush1.msra.mxu0 0.0
    %6200 = vmatprep.subr.mxu0 0.0
    %6201 = vmatpush1.msra.mxu0 0.0
    %6202 = vmatprep.mubr.f32.mxu0 0.0
    %6203 = vmatmul.mubr.f32.gmra.mrb[0].mxu0 %v6071
    %v6204 = vpop.f32.mrb[0].mxu0
    %v6205 = vadd.f32 0.0, %v6204
    %v6206 = vpop.f32.mrb[0].mxu0
    %v6207 = vadd.f32 0.0, %v6206
    %6208 = vdwg.mxu0
    %6209 = vmatprep.subr.mxu0 %v6077
    %6210 = vmatpush1.msra.mxu0 %v6076
    %6211 = vmatprep.subr.mxu0 %v6081
    %6212 = vmatpush1.msra.mxu0 %v6080
    %6213 = vmatprep.subr.mxu0 %v6085
    %6214 = vmatpush1.msra.mxu0 %v6084
    %6215 = vmatprep.subr.mxu0 %v6089
    %6216 = vmatpush1.msra.mxu0 %v6088
    %6217 = vmatprep.subr.mxu0 %v6093
    %6218 = vmatpush1.msra.mxu0 %v6092
    %6219 = vmatprep.subr.mxu0 %v6097
    %6220 = vmatpush1.msra.mxu0 %v6096
    %6221 = vmatprep.subr.mxu0 %v6101
    %6222 = vmatpush1.msra.mxu0 %v6100
    %6223 = vmatprep.subr.mxu0 %v6105
    %6224 = vmatpush1.msra.mxu0 %v6104
    %6225 = vmatprep.subr.mxu0 %v6109
    %6226 = vmatpush1.msra.mxu0 %v6108
    %6227 = vmatprep.subr.mxu0 %v6113
    %6228 = vmatpush1.msra.mxu0 %v6112
    %6229 = vmatprep.subr.mxu0 %v6117
    %6230 = vmatpush1.msra.mxu0 %v6116
    %6231 = vmatprep.subr.mxu0 %v6121
    %6232 = vmatpush1.msra.mxu0 %v6120
    %6233 = vmatprep.subr.mxu0 %v6125
    %6234 = vmatpush1.msra.mxu0 %v6124
    %6235 = vmatprep.subr.mxu0 %v6129
    %6236 = vmatpush1.msra.mxu0 %v6128
    %6237 = vmatprep.subr.mxu0 %v6133
    %6238 = vmatpush1.msra.mxu0 %v6132
    %6239 = vmatprep.subr.mxu0 %v6137
    %6240 = vmatpush1.msra.mxu0 %v6136
    %6241 = vmatprep.subr.mxu0 0.0
    %6242 = vmatpush1.msra.mxu0 0.0
    %6243 = vmatprep.subr.mxu0 0.0
    %6244 = vmatpush1.msra.mxu0 0.0
    %6245 = vmatprep.subr.mxu0 0.0
    %6246 = vmatpush1.msra.mxu0 0.0
    %6247 = vmatprep.subr.mxu0 0.0
    %6248 = vmatpush1.msra.mxu0 0.0
    %6249 = vmatprep.subr.mxu0 0.0
    %6250 = vmatpush1.msra.mxu0 0.0
    %6251 = vmatprep.subr.mxu0 0.0
    %6252 = vmatpush1.msra.mxu0 0.0
    %6253 = vmatprep.subr.mxu0 0.0
    %6254 = vmatpush1.msra.mxu0 0.0
    %6255 = vmatprep.subr.mxu0 0.0
    %6256 = vmatpush1.msra.mxu0 0.0
    %6257 = vmatprep.subr.mxu0 0.0
    %6258 = vmatpush1.msra.mxu0 0.0
    %6259 = vmatprep.subr.mxu0 0.0
    %6260 = vmatpush1.msra.mxu0 0.0
    %6261 = vmatprep.subr.mxu0 0.0
    %6262 = vmatpush1.msra.mxu0 0.0
    %6263 = vmatprep.subr.mxu0 0.0
    %6264 = vmatpush1.msra.mxu0 0.0
    %6265 = vmatprep.subr.mxu0 0.0
    %6266 = vmatpush1.msra.mxu0 0.0
    %6267 = vmatprep.subr.mxu0 0.0
    %6268 = vmatpush1.msra.mxu0 0.0
    %6269 = vmatprep.subr.mxu0 0.0
    %6270 = vmatpush1.msra.mxu0 0.0
    %6271 = vmatprep.subr.mxu0 0.0
    %6272 = vmatpush1.msra.mxu0 0.0
    %6273 = vmatprep.mubr.f32.mxu0 0.0
    %6274 = vmatmul.mubr.f32.gmra.mrb[0].mxu0 %v6071
    %v6275 = vpop.f32.mrb[0].mxu0
    %v6276 = vadd.f32 0.0, %v6275
    %v6277 = vpop.f32.mrb[0].mxu0
    %v6278 = vadd.f32 0.0, %v6277
    %6279 = vdwg.mxu0
    %v6284 = vrot.slane %v6205, 6
    %v6285 = vrot.slane %v6207, 6
    %v6286 = vrot.slane %v6276, 6
    %v6287 = vrot.slane %v6278, 6
    %v6292 = vadd.f32 %v4756, %v6284
    %v6293 = vadd.f32 %v4758, %v6285
    %v6294 = vadd.f32 %v4833, %v6286
    %v6295 = vadd.f32 %v4835, %v6287
    %v6296 = vxor.u32 %v6292, 2147483648
    %v6297 = vxor.u32 %v6293, 2147483648
    %v6298 = vxor.u32 %v6294, 2147483648
    %v6299 = vmul.f32 %v6296, 1.442695
    %v6300 = vpow.pop %v6299
    %v6301 = vmul.f32 %v6297, 1.442695
    %v6302 = vpow.pop %v6301
    %v6303 = vmul.f32 %v6298, 1.442695
    %v6304 = vpow.pop %v6303
    %v6305 = vadd.f32 %v6300, 1.0
    %v6306 = vadd.f32 %v6302, 1.0
    %v6307 = vadd.f32 %v6304, 1.0
    %v6308 = vrcp.pop %v6305
    %v6309 = vmul.f32 1.0, %v6308
    %v6310 = vrcp.pop %v6306
    %v6311 = vmul.f32 1.0, %v6310
    %v6312 = vrcp.pop %v6307
    %v6313 = vmul.f32 1.0, %v6312
    %v6314 = vtanh.pop %v6295
    %v6316 = vrot.slane %v6069, 6
    %v6318 = vmul.f32 %v6311, %v6316
    %v6319 = vmul.f32 %v6309, %v6314
    %v6320 = vadd.f32 %v6318, %v6319
    %v6321 = vtanh.pop %v6320
    %v6322 = vmul.f32 %v6313, %v6321
    %v6323 = vtanh.pop %v6322
    %6324 = vst [vmem:[%s10 + $0x8] sm:$0xc] %v6323
    %v6325 = vld [vmem:[#allocation12] sm:$0xff]
    %v6326 = vld [vmem:[#allocation12 + $0x8] sm:$0xff]
    %v6327 = vld [vmem:[#allocation12 + $0x10] sm:$0xff]
    %v6328 = vld [vmem:[#allocation12 + $0x18] sm:$0xff]
    %v6329 = vld [vmem:[#allocation12 + $0x20] sm:$0xff]
    %v6330 = vld [vmem:[#allocation12 + $0x28] sm:$0xff]
    %v6331 = vld [vmem:[#allocation12 + $0x30] sm:$0xff]
    %v6332 = vld [vmem:[#allocation12 + $0x38] sm:$0xff]
    %v6333 = vld [vmem:[#allocation12 + $0x40] sm:$0xff]
    %v6334 = vld [vmem:[#allocation12 + $0x48] sm:$0xff]
    %v6335 = vld [vmem:[#allocation12 + $0x50] sm:$0xff]
    %v6336 = vld [vmem:[#allocation12 + $0x58] sm:$0xff]
    %v6337 = vld [vmem:[#allocation12 + $0x60] sm:$0xff]
    %v6338 = vld [vmem:[#allocation12 + $0x68] sm:$0xff]
    %v6339 = vld [vmem:[#allocation12 + $0x70] sm:$0xff]
    %v6340 = vld [vmem:[#allocation12 + $0x78] sm:$0xff]
    %v6341 = vld [vmem:[#allocation12 + $0x80] sm:$0xff]
    %v6342 = vld [vmem:[#allocation12 + $0x88] sm:$0xff]
    %v6343 = vld [vmem:[#allocation12 + $0x90] sm:$0xff]
    %v6344 = vld [vmem:[#allocation12 + $0x98] sm:$0xff]
    %v6345 = vld [vmem:[#allocation12 + $0xa0] sm:$0xff]
    %v6346 = vld [vmem:[#allocation12 + $0xa8] sm:$0xff]
    %v6347 = vld [vmem:[#allocation12 + $0xb0] sm:$0xff]
    %v6348 = vld [vmem:[#allocation12 + $0xb8] sm:$0xff]
    %v6349 = vld [vmem:[#allocation12 + $0xc0] sm:$0xff]
    %v6350 = vld [vmem:[#allocation12 + $0xc8] sm:$0xff]
    %v6351 = vld [vmem:[#allocation12 + $0xd0] sm:$0xff]
    %v6352 = vld [vmem:[#allocation12 + $0xd8] sm:$0xff]
    %v6353 = vld [vmem:[#allocation12 + $0xe0] sm:$0xff]
    %v6354 = vld [vmem:[#allocation12 + $0xe8] sm:$0xff]
    %v6355 = vld [vmem:[#allocation12 + $0xf0] sm:$0xff]
    %v6356 = vld [vmem:[#allocation12 + $0xf8] sm:$0xff]
    %v6357 = vld [vmem:[#allocation12 + $0x100] sm:$0xff]
    %v6358 = vld [vmem:[#allocation12 + $0x108] sm:$0xff]
    %v6359 = vld [vmem:[#allocation12 + $0x110] sm:$0xff]
    %v6360 = vld [vmem:[#allocation12 + $0x118] sm:$0xff]
    %v6361 = vld [vmem:[#allocation12 + $0x120] sm:$0xff]
    %v6362 = vld [vmem:[#allocation12 + $0x128] sm:$0xff]
    %v6363 = vld [vmem:[#allocation12 + $0x130] sm:$0xff]
    %v6364 = vld [vmem:[#allocation12 + $0x138] sm:$0xff]
    %v6365 = vld [vmem:[#allocation12 + $0x140] sm:$0xff]
    %v6366 = vld [vmem:[#allocation12 + $0x148] sm:$0xff]
    %v6367 = vld [vmem:[#allocation12 + $0x150] sm:$0xff]
    %v6368 = vld [vmem:[#allocation12 + $0x158] sm:$0xff]
    %v6369 = vld [vmem:[#allocation12 + $0x160] sm:$0xff]
    %v6370 = vld [vmem:[#allocation12 + $0x168] sm:$0xff]
    %v6371 = vld [vmem:[#allocation12 + $0x170] sm:$0xff]
    %v6372 = vld [vmem:[#allocation12 + $0x178] sm:$0xff]
    %v6373 = vld [vmem:[#allocation12 + $0x180] sm:$0xff]
    %v6374 = vld [vmem:[#allocation12 + $0x188] sm:$0xff]
    %v6375 = vld [vmem:[#allocation12 + $0x190] sm:$0xff]
    %v6376 = vld [vmem:[#allocation12 + $0x198] sm:$0xff]
    %v6377 = vld [vmem:[#allocation12 + $0x1a0] sm:$0xff]
    %v6378 = vld [vmem:[#allocation12 + $0x1a8] sm:$0xff]
    %v6379 = vld [vmem:[#allocation12 + $0x1b0] sm:$0xff]
    %v6380 = vld [vmem:[#allocation12 + $0x1b8] sm:$0xff]
    %v6381 = vld [vmem:[#allocation12 + $0x1c0] sm:$0xff]
    %v6382 = vld [vmem:[#allocation12 + $0x1c8] sm:$0xff]
    %v6383 = vld [vmem:[#allocation12 + $0x1d0] sm:$0xff]
    %v6384 = vld [vmem:[#allocation12 + $0x1d8] sm:$0xff]
    %v6385 = vld [vmem:[#allocation12 + $0x1e0] sm:$0xff]
    %v6386 = vld [vmem:[#allocation12 + $0x1e8] sm:$0xff]
    %v6387 = vld [vmem:[#allocation12 + $0x1f0] sm:$0xff]
    %v6388 = vld [vmem:[#allocation12 + $0x1f8] sm:$0xff]
    %v6390 = vrot.slane %v6322, 2
    %6392 = vmatprep.subr.mxu0 %v6326
    %6393 = vmatpush1.msra.mxu0 %v6325
    %6394 = vmatprep.subr.mxu0 %v6330
    %6395 = vmatpush1.msra.mxu0 %v6329
    %6396 = vmatprep.subr.mxu0 %v6334
    %6397 = vmatpush1.msra.mxu0 %v6333
    %6398 = vmatprep.subr.mxu0 %v6338
    %6399 = vmatpush1.msra.mxu0 %v6337
    %6400 = vmatprep.subr.mxu0 %v6342
    %6401 = vmatpush1.msra.mxu0 %v6341
    %6402 = vmatprep.subr.mxu0 %v6346
    %6403 = vmatpush1.msra.mxu0 %v6345
    %6404 = vmatprep.subr.mxu0 %v6350
    %6405 = vmatpush1.msra.mxu0 %v6349
    %6406 = vmatprep.subr.mxu0 %v6354
    %6407 = vmatpush1.msra.mxu0 %v6353
    %6408 = vmatprep.subr.mxu0 %v6358
    %6409 = vmatpush1.msra.mxu0 %v6357
    %6410 = vmatprep.subr.mxu0 %v6362
    %6411 = vmatpush1.msra.mxu0 %v6361
    %6412 = vmatprep.subr.mxu0 %v6366
    %6413 = vmatpush1.msra.mxu0 %v6365
    %6414 = vmatprep.subr.mxu0 %v6370
    %6415 = vmatpush1.msra.mxu0 %v6369
    %6416 = vmatprep.subr.mxu0 %v6374
    %6417 = vmatpush1.msra.mxu0 %v6373
    %6418 = vmatprep.subr.mxu0 %v6378
    %6419 = vmatpush1.msra.mxu0 %v6377
    %6420 = vmatprep.subr.mxu0 %v6382
    %6421 = vmatpush1.msra.mxu0 %v6381
    %6422 = vmatprep.subr.mxu0 %v6386
    %6423 = vmatpush1.msra.mxu0 %v6385
    %6424 = vmatprep.subr.mxu0 0.0
    %6425 = vmatpush1.msra.mxu0 0.0
    %6426 = vmatprep.subr.mxu0 0.0
    %6427 = vmatpush1.msra.mxu0 0.0
    %6428 = vmatprep.subr.mxu0 0.0
    %6429 = vmatpush1.msra.mxu0 0.0
    %6430 = vmatprep.subr.mxu0 0.0
    %6431 = vmatpush1.msra.mxu0 0.0
    %6432 = vmatprep.subr.mxu0 0.0
    %6433 = vmatpush1.msra.mxu0 0.0
    %6434 = vmatprep.subr.mxu0 0.0
    %6435 = vmatpush1.msra.mxu0 0.0
    %6436 = vmatprep.subr.mxu0 0.0
    %6437 = vmatpush1.msra.mxu0 0.0
    %6438 = vmatprep.subr.mxu0 0.0
    %6439 = vmatpush1.msra.mxu0 0.0
    %6440 = vmatprep.subr.mxu0 0.0
    %6441 = vmatpush1.msra.mxu0 0.0
    %6442 = vmatprep.subr.mxu0 0.0
    %6443 = vmatpush1.msra.mxu0 0.0
    %6444 = vmatprep.subr.mxu0 0.0
    %6445 = vmatpush1.msra.mxu0 0.0
    %6446 = vmatprep.subr.mxu0 0.0
    %6447 = vmatpush1.msra.mxu0 0.0
    %6448 = vmatprep.subr.mxu0 0.0
    %6449 = vmatpush1.msra.mxu0 0.0
    %6450 = vmatprep.subr.mxu0 0.0
    %6451 = vmatpush1.msra.mxu0 0.0
    %6452 = vmatprep.subr.mxu0 0.0
    %6453 = vmatpush1.msra.mxu0 0.0
    %6454 = vmatprep.subr.mxu0 0.0
    %6455 = vmatpush1.msra.mxu0 0.0
    %6456 = vmatprep.mubr.f32.mxu0 0.0
    %6457 = vmatmul.mubr.f32.gmra.mrb[0].mxu0 %v6390
    %v6458 = vpop.f32.mrb[0].mxu0
    %v6459 = vadd.f32 0.0, %v6458
    %v6460 = vpop.f32.mrb[0].mxu0
    %v6461 = vadd.f32 0.0, %v6460
    %6462 = vdwg.mxu0
    %6463 = vmatprep.subr.mxu0 %v6328
    %6464 = vmatpush1.msra.mxu0 %v6327
    %6465 = vmatprep.subr.mxu0 %v6332
    %6466 = vmatpush1.msra.mxu0 %v6331
    %6467 = vmatprep.subr.mxu0 %v6336
    %6468 = vmatpush1.msra.mxu0 %v6335
    %6469 = vmatprep.subr.mxu0 %v6340
    %6470 = vmatpush1.msra.mxu0 %v6339
    %6471 = vmatprep.subr.mxu0 %v6344
    %6472 = vmatpush1.msra.mxu0 %v6343
    %6473 = vmatprep.subr.mxu0 %v6348
    %6474 = vmatpush1.msra.mxu0 %v6347
    %6475 = vmatprep.subr.mxu0 %v6352
    %6476 = vmatpush1.msra.mxu0 %v6351
    %6477 = vmatprep.subr.mxu0 %v6356
    %6478 = vmatpush1.msra.mxu0 %v6355
    %6479 = vmatprep.subr.mxu0 %v6360
    %6480 = vmatpush1.msra.mxu0 %v6359
    %6481 = vmatprep.subr.mxu0 %v6364
    %6482 = vmatpush1.msra.mxu0 %v6363
    %6483 = vmatprep.subr.mxu0 %v6368
    %6484 = vmatpush1.msra.mxu0 %v6367
    %6485 = vmatprep.subr.mxu0 %v6372
    %6486 = vmatpush1.msra.mxu0 %v6371
    %6487 = vmatprep.subr.mxu0 %v6376
    %6488 = vmatpush1.msra.mxu0 %v6375
    %6489 = vmatprep.subr.mxu0 %v6380
    %6490 = vmatpush1.msra.mxu0 %v6379
    %6491 = vmatprep.subr.mxu0 %v6384
    %6492 = vmatpush1.msra.mxu0 %v6383
    %6493 = vmatprep.subr.mxu0 %v6388
    %6494 = vmatpush1.msra.mxu0 %v6387
    %6495 = vmatprep.subr.mxu0 0.0
    %6496 = vmatpush1.msra.mxu0 0.0
    %6497 = vmatprep.subr.mxu0 0.0
    %6498 = vmatpush1.msra.mxu0 0.0
    %6499 = vmatprep.subr.mxu0 0.0
    %6500 = vmatpush1.msra.mxu0 0.0
    %6501 = vmatprep.subr.mxu0 0.0
    %6502 = vmatpush1.msra.mxu0 0.0
    %6503 = vmatprep.subr.mxu0 0.0
    %6504 = vmatpush1.msra.mxu0 0.0
    %6505 = vmatprep.subr.mxu0 0.0
    %6506 = vmatpush1.msra.mxu0 0.0
    %6507 = vmatprep.subr.mxu0 0.0
    %6508 = vmatpush1.msra.mxu0 0.0
    %6509 = vmatprep.subr.mxu0 0.0
    %6510 = vmatpush1.msra.mxu0 0.0
    %6511 = vmatprep.subr.mxu0 0.0
    %6512 = vmatpush1.msra.mxu0 0.0
    %6513 = vmatprep.subr.mxu0 0.0
    %6514 = vmatpush1.msra.mxu0 0.0
    %6515 = vmatprep.subr.mxu0 0.0
    %6516 = vmatpush1.msra.mxu0 0.0
    %6517 = vmatprep.subr.mxu0 0.0
    %6518 = vmatpush1.msra.mxu0 0.0
    %6519 = vmatprep.subr.mxu0 0.0
    %6520 = vmatpush1.msra.mxu0 0.0
    %6521 = vmatprep.subr.mxu0 0.0
    %6522 = vmatpush1.msra.mxu0 0.0
    %6523 = vmatprep.subr.mxu0 0.0
    %6524 = vmatpush1.msra.mxu0 0.0
    %6525 = vmatprep.subr.mxu0 0.0
    %6526 = vmatpush1.msra.mxu0 0.0
    %6527 = vmatprep.mubr.f32.mxu0 0.0
    %6528 = vmatmul.mubr.f32.gmra.mrb[0].mxu0 %v6390
    %v6529 = vpop.f32.mrb[0].mxu0
    %v6530 = vadd.f32 0.0, %v6529
    %v6531 = vpop.f32.mrb[0].mxu0
    %v6532 = vadd.f32 0.0, %v6531
    %6533 = vdwg.mxu0
    %v6538 = vrot.slane %v6459, 4
    %v6539 = vrot.slane %v6461, 4
    %v6540 = vrot.slane %v6530, 4
    %v6541 = vrot.slane %v6532, 4
    %v6546 = vadd.f32 %v4756, %v6538
    %v6547 = vadd.f32 %v4758, %v6539
    %v6548 = vadd.f32 %v4833, %v6540
    %v6549 = vadd.f32 %v4835, %v6541
    %v6550 = vxor.u32 %v6546, 2147483648
    %v6551 = vxor.u32 %v6547, 2147483648
    %v6552 = vxor.u32 %v6548, 2147483648
    %v6553 = vmul.f32 %v6550, 1.442695
    %v6554 = vpow.pop %v6553
    %v6555 = vmul.f32 %v6551, 1.442695
    %v6556 = vpow.pop %v6555
    %v6557 = vmul.f32 %v6552, 1.442695
    %v6558 = vpow.pop %v6557
    %v6559 = vadd.f32 %v6554, 1.0
    %v6560 = vadd.f32 %v6556, 1.0
    %v6561 = vadd.f32 %v6558, 1.0
    %v6562 = vrcp.pop %v6559
    %v6563 = vmul.f32 1.0, %v6562
    %v6564 = vrcp.pop %v6560
    %v6565 = vmul.f32 1.0, %v6564
    %v6566 = vrcp.pop %v6561
    %v6567 = vmul.f32 1.0, %v6566
    %v6568 = vtanh.pop %v6549
    %v6570 = vrot.slane %v6320, 6
    %v6572 = vmul.f32 %v6565, %v6570
    %v6573 = vmul.f32 %v6563, %v6568
    %v6574 = vadd.f32 %v6572, %v6573
    %v6575 = vtanh.pop %v6574
    %v6576 = vmul.f32 %v6567, %v6575
    %v6577 = vtanh.pop %v6576
    %6578 = vst [vmem:[%s10 + $0x8] sm:$0x30] %v6577
    %v6579 = vld [vmem:[#allocation12] sm:$0xff]
    %v6580 = vld [vmem:[#allocation12 + $0x8] sm:$0xff]
    %v6581 = vld [vmem:[#allocation12 + $0x10] sm:$0xff]
    %v6582 = vld [vmem:[#allocation12 + $0x18] sm:$0xff]
    %v6583 = vld [vmem:[#allocation12 + $0x20] sm:$0xff]
    %v6584 = vld [vmem:[#allocation12 + $0x28] sm:$0xff]
    %v6585 = vld [vmem:[#allocation12 + $0x30] sm:$0xff]
    %v6586 = vld [vmem:[#allocation12 + $0x38] sm:$0xff]
    %v6587 = vld [vmem:[#allocation12 + $0x40] sm:$0xff]
    %v6588 = vld [vmem:[#allocation12 + $0x48] sm:$0xff]
    %v6589 = vld [vmem:[#allocation12 + $0x50] sm:$0xff]
    %v6590 = vld [vmem:[#allocation12 + $0x58] sm:$0xff]
    %v6591 = vld [vmem:[#allocation12 + $0x60] sm:$0xff]
    %v6592 = vld [vmem:[#allocation12 + $0x68] sm:$0xff]
    %v6593 = vld [vmem:[#allocation12 + $0x70] sm:$0xff]
    %v6594 = vld [vmem:[#allocation12 + $0x78] sm:$0xff]
    %v6595 = vld [vmem:[#allocation12 + $0x80] sm:$0xff]
    %v6596 = vld [vmem:[#allocation12 + $0x88] sm:$0xff]
    %v6597 = vld [vmem:[#allocation12 + $0x90] sm:$0xff]
    %v6598 = vld [vmem:[#allocation12 + $0x98] sm:$0xff]
    %v6599 = vld [vmem:[#allocation12 + $0xa0] sm:$0xff]
    %v6600 = vld [vmem:[#allocation12 + $0xa8] sm:$0xff]
    %v6601 = vld [vmem:[#allocation12 + $0xb0] sm:$0xff]
    %v6602 = vld [vmem:[#allocation12 + $0xb8] sm:$0xff]
    %v6603 = vld [vmem:[#allocation12 + $0xc0] sm:$0xff]
    %v6604 = vld [vmem:[#allocation12 + $0xc8] sm:$0xff]
    %v6605 = vld [vmem:[#allocation12 + $0xd0] sm:$0xff]
    %v6606 = vld [vmem:[#allocation12 + $0xd8] sm:$0xff]
    %v6607 = vld [vmem:[#allocation12 + $0xe0] sm:$0xff]
    %v6608 = vld [vmem:[#allocation12 + $0xe8] sm:$0xff]
    %v6609 = vld [vmem:[#allocation12 + $0xf0] sm:$0xff]
    %v6610 = vld [vmem:[#allocation12 + $0xf8] sm:$0xff]
    %v6611 = vld [vmem:[#allocation12 + $0x100] sm:$0xff]
    %v6612 = vld [vmem:[#allocation12 + $0x108] sm:$0xff]
    %v6613 = vld [vmem:[#allocation12 + $0x110] sm:$0xff]
    %v6614 = vld [vmem:[#allocation12 + $0x118] sm:$0xff]
    %v6615 = vld [vmem:[#allocation12 + $0x120] sm:$0xff]
    %v6616 = vld [vmem:[#allocation12 + $0x128] sm:$0xff]
    %v6617 = vld [vmem:[#allocation12 + $0x130] sm:$0xff]
    %v6618 = vld [vmem:[#allocation12 + $0x138] sm:$0xff]
    %v6619 = vld [vmem:[#allocation12 + $0x140] sm:$0xff]
    %v6620 = vld [vmem:[#allocation12 + $0x148] sm:$0xff]
    %v6621 = vld [vmem:[#allocation12 + $0x150] sm:$0xff]
    %v6622 = vld [vmem:[#allocation12 + $0x158] sm:$0xff]
    %v6623 = vld [vmem:[#allocation12 + $0x160] sm:$0xff]
    %v6624 = vld [vmem:[#allocation12 + $0x168] sm:$0xff]
    %v6625 = vld [vmem:[#allocation12 + $0x170] sm:$0xff]
    %v6626 = vld [vmem:[#allocation12 + $0x178] sm:$0xff]
    %v6627 = vld [vmem:[#allocation12 + $0x180] sm:$0xff]
    %v6628 = vld [vmem:[#allocation12 + $0x188] sm:$0xff]
    %v6629 = vld [vmem:[#allocation12 + $0x190] sm:$0xff]
    %v6630 = vld [vmem:[#allocation12 + $0x198] sm:$0xff]
    %v6631 = vld [vmem:[#allocation12 + $0x1a0] sm:$0xff]
    %v6632 = vld [vmem:[#allocation12 + $0x1a8] sm:$0xff]
    %v6633 = vld [vmem:[#allocation12 + $0x1b0] sm:$0xff]
    %v6634 = vld [vmem:[#allocation12 + $0x1b8] sm:$0xff]
    %v6635 = vld [vmem:[#allocation12 + $0x1c0] sm:$0xff]
    %v6636 = vld [vmem:[#allocation12 + $0x1c8] sm:$0xff]
    %v6637 = vld [vmem:[#allocation12 + $0x1d0] sm:$0xff]
    %v6638 = vld [vmem:[#allocation12 + $0x1d8] sm:$0xff]
    %v6639 = vld [vmem:[#allocation12 + $0x1e0] sm:$0xff]
    %v6640 = vld [vmem:[#allocation12 + $0x1e8] sm:$0xff]
    %v6641 = vld [vmem:[#allocation12 + $0x1f0] sm:$0xff]
    %v6642 = vld [vmem:[#allocation12 + $0x1f8] sm:$0xff]
    %v6644 = vrot.slane %v6576, 4
    %6646 = vmatprep.subr.mxu0 %v6580
    %6647 = vmatpush1.msra.mxu0 %v6579
    %6648 = vmatprep.subr.mxu0 %v6584
    %6649 = vmatpush1.msra.mxu0 %v6583
    %6650 = vmatprep.subr.mxu0 %v6588
    %6651 = vmatpush1.msra.mxu0 %v6587
    %6652 = vmatprep.subr.mxu0 %v6592
    %6653 = vmatpush1.msra.mxu0 %v6591
    %6654 = vmatprep.subr.mxu0 %v6596
    %6655 = vmatpush1.msra.mxu0 %v6595
    %6656 = vmatprep.subr.mxu0 %v6600
    %6657 = vmatpush1.msra.mxu0 %v6599
    %6658 = vmatprep.subr.mxu0 %v6604
    %6659 = vmatpush1.msra.mxu0 %v6603
    %6660 = vmatprep.subr.mxu0 %v6608
    %6661 = vmatpush1.msra.mxu0 %v6607
    %6662 = vmatprep.subr.mxu0 %v6612
    %6663 = vmatpush1.msra.mxu0 %v6611
    %6664 = vmatprep.subr.mxu0 %v6616
    %6665 = vmatpush1.msra.mxu0 %v6615
    %6666 = vmatprep.subr.mxu0 %v6620
    %6667 = vmatpush1.msra.mxu0 %v6619
    %6668 = vmatprep.subr.mxu0 %v6624
    %6669 = vmatpush1.msra.mxu0 %v6623
    %6670 = vmatprep.subr.mxu0 %v6628
    %6671 = vmatpush1.msra.mxu0 %v6627
    %6672 = vmatprep.subr.mxu0 %v6632
    %6673 = vmatpush1.msra.mxu0 %v6631
    %6674 = vmatprep.subr.mxu0 %v6636
    %6675 = vmatpush1.msra.mxu0 %v6635
    %6676 = vmatprep.subr.mxu0 %v6640
    %6677 = vmatpush1.msra.mxu0 %v6639
    %6678 = vmatprep.subr.mxu0 0.0
    %6679 = vmatpush1.msra.mxu0 0.0
    %6680 = vmatprep.subr.mxu0 0.0
    %6681 = vmatpush1.msra.mxu0 0.0
    %6682 = vmatprep.subr.mxu0 0.0
    %6683 = vmatpush1.msra.mxu0 0.0
    %6684 = vmatprep.subr.mxu0 0.0
    %6685 = vmatpush1.msra.mxu0 0.0
    %6686 = vmatprep.subr.mxu0 0.0
    %6687 = vmatpush1.msra.mxu0 0.0
    %6688 = vmatprep.subr.mxu0 0.0
    %6689 = vmatpush1.msra.mxu0 0.0
    %6690 = vmatprep.subr.mxu0 0.0
    %6691 = vmatpush1.msra.mxu0 0.0
    %6692 = vmatprep.subr.mxu0 0.0
    %6693 = vmatpush1.msra.mxu0 0.0
    %6694 = vmatprep.subr.mxu0 0.0
    %6695 = vmatpush1.msra.mxu0 0.0
    %6696 = vmatprep.subr.mxu0 0.0
    %6697 = vmatpush1.msra.mxu0 0.0
    %6698 = vmatprep.subr.mxu0 0.0
    %6699 = vmatpush1.msra.mxu0 0.0
    %6700 = vmatprep.subr.mxu0 0.0
    %6701 = vmatpush1.msra.mxu0 0.0
    %6702 = vmatprep.subr.mxu0 0.0
    %6703 = vmatpush1.msra.mxu0 0.0
    %6704 = vmatprep.subr.mxu0 0.0
    %6705 = vmatpush1.msra.mxu0 0.0
    %6706 = vmatprep.subr.mxu0 0.0
    %6707 = vmatpush1.msra.mxu0 0.0
    %6708 = vmatprep.subr.mxu0 0.0
    %6709 = vmatpush1.msra.mxu0 0.0
    %6710 = vmatprep.mubr.f32.mxu0 0.0
    %6711 = vmatmul.mubr.f32.gmra.mrb[0].mxu0 %v6644
    %v6712 = vpop.f32.mrb[0].mxu0
    %v6713 = vadd.f32 0.0, %v6712
    %v6714 = vpop.f32.mrb[0].mxu0
    %v6715 = vadd.f32 0.0, %v6714
    %6716 = vdwg.mxu0
    %6717 = vmatprep.subr.mxu0 %v6582
    %6718 = vmatpush1.msra.mxu0 %v6581
    %6719 = vmatprep.subr.mxu0 %v6586
    %6720 = vmatpush1.msra.mxu0 %v6585
    %6721 = vmatprep.subr.mxu0 %v6590
    %6722 = vmatpush1.msra.mxu0 %v6589
    %6723 = vmatprep.subr.mxu0 %v6594
    %6724 = vmatpush1.msra.mxu0 %v6593
    %6725 = vmatprep.subr.mxu0 %v6598
    %6726 = vmatpush1.msra.mxu0 %v6597
    %6727 = vmatprep.subr.mxu0 %v6602
    %6728 = vmatpush1.msra.mxu0 %v6601
    %6729 = vmatprep.subr.mxu0 %v6606
    %6730 = vmatpush1.msra.mxu0 %v6605
    %6731 = vmatprep.subr.mxu0 %v6610
    %6732 = vmatpush1.msra.mxu0 %v6609
    %6733 = vmatprep.subr.mxu0 %v6614
    %6734 = vmatpush1.msra.mxu0 %v6613
    %6735 = vmatprep.subr.mxu0 %v6618
    %6736 = vmatpush1.msra.mxu0 %v6617
    %6737 = vmatprep.subr.mxu0 %v6622
    %6738 = vmatpush1.msra.mxu0 %v6621
    %6739 = vmatprep.subr.mxu0 %v6626
    %6740 = vmatpush1.msra.mxu0 %v6625
    %6741 = vmatprep.subr.mxu0 %v6630
    %6742 = vmatpush1.msra.mxu0 %v6629
    %6743 = vmatprep.subr.mxu0 %v6634
    %6744 = vmatpush1.msra.mxu0 %v6633
    %6745 = vmatprep.subr.mxu0 %v6638
    %6746 = vmatpush1.msra.mxu0 %v6637
    %6747 = vmatprep.subr.mxu0 %v6642
    %6748 = vmatpush1.msra.mxu0 %v6641
    %6749 = vmatprep.subr.mxu0 0.0
    %6750 = vmatpush1.msra.mxu0 0.0
    %6751 = vmatprep.subr.mxu0 0.0
    %6752 = vmatpush1.msra.mxu0 0.0
    %6753 = vmatprep.subr.mxu0 0.0
    %6754 = vmatpush1.msra.mxu0 0.0
    %6755 = vmatprep.subr.mxu0 0.0
    %6756 = vmatpush1.msra.mxu0 0.0
    %6757 = vmatprep.subr.mxu0 0.0
    %6758 = vmatpush1.msra.mxu0 0.0
    %6759 = vmatprep.subr.mxu0 0.0
    %6760 = vmatpush1.msra.mxu0 0.0
    %6761 = vmatprep.subr.mxu0 0.0
    %6762 = vmatpush1.msra.mxu0 0.0
    %6763 = vmatprep.subr.mxu0 0.0
    %6764 = vmatpush1.msra.mxu0 0.0
    %6765 = vmatprep.subr.mxu0 0.0
    %6766 = vmatpush1.msra.mxu0 0.0
    %6767 = vmatprep.subr.mxu0 0.0
    %6768 = vmatpush1.msra.mxu0 0.0
    %6769 = vmatprep.subr.mxu0 0.0
    %6770 = vmatpush1.msra.mxu0 0.0
    %6771 = vmatprep.subr.mxu0 0.0
    %6772 = vmatpush1.msra.mxu0 0.0
    %6773 = vmatprep.subr.mxu0 0.0
    %6774 = vmatpush1.msra.mxu0 0.0
    %6775 = vmatprep.subr.mxu0 0.0
    %6776 = vmatpush1.msra.mxu0 0.0
    %6777 = vmatprep.subr.mxu0 0.0
    %6778 = vmatpush1.msra.mxu0 0.0
    %6779 = vmatprep.subr.mxu0 0.0
    %6780 = vmatpush1.msra.mxu0 0.0
    %6781 = vmatprep.mubr.f32.mxu0 0.0
    %6782 = vmatmul.mubr.f32.gmra.mrb[0].mxu0 %v6644
    %v6783 = vpop.f32.mrb[0].mxu0
    %v6784 = vadd.f32 0.0, %v6783
    %v6785 = vpop.f32.mrb[0].mxu0
    %v6786 = vadd.f32 0.0, %v6785
    %6787 = vdwg.mxu0
    %v6792 = vrot.slane %v6713, 2
    %v6793 = vrot.slane %v6715, 2
    %v6794 = vrot.slane %v6784, 2
    %v6795 = vrot.slane %v6786, 2
    %v6800 = vadd.f32 %v4756, %v6792
    %v6801 = vadd.f32 %v4758, %v6793
    %v6802 = vadd.f32 %v4833, %v6794
    %v6803 = vadd.f32 %v4835, %v6795
    %v6804 = vxor.u32 %v6800, 2147483648
    %v6805 = vxor.u32 %v6801, 2147483648
    %v6806 = vxor.u32 %v6802, 2147483648
    %v6807 = vmul.f32 %v6804, 1.442695
    %v6808 = vpow.pop %v6807
    %v6809 = vmul.f32 %v6805, 1.442695
    %v6810 = vpow.pop %v6809
    %v6811 = vmul.f32 %v6806, 1.442695
    %v6812 = vpow.pop %v6811
    %v6813 = vadd.f32 %v6808, 1.0
    %v6814 = vadd.f32 %v6810, 1.0
    %v6815 = vadd.f32 %v6812, 1.0
    %v6816 = vrcp.pop %v6813
    %v6817 = vmul.f32 1.0, %v6816
    %v6818 = vrcp.pop %v6814
    %v6819 = vmul.f32 1.0, %v6818
    %v6820 = vrcp.pop %v6815
    %v6821 = vmul.f32 1.0, %v6820
    %v6822 = vtanh.pop %v6803
    %v6824 = vrot.slane %v6574, 6
    %v6826 = vmul.f32 %v6819, %v6824
    %v6827 = vmul.f32 %v6817, %v6822
    %v6828 = vadd.f32 %v6826, %v6827
    %v6829 = vtanh.pop %v6828
    %v6830 = vmul.f32 %v6821, %v6829
    %v6831 = vtanh.pop %v6830
    %6832 = vst [vmem:[%s10 + $0x8] sm:$0xc0] %v6831
    %6833 = vst [vmem:[%s11 - $0x6] sm:$0xc0] %v6830
    %6834 = vst [vmem:[%s11 - $0x4] sm:$0xc0] %v6828
    // Predicated region
    $region66: #{tae_encoder_forward.1} parent=1 // pred_check
      _
    $region67: #{tae_encoder_forward.1} parent=1 // pred_check_branch
      %6836 = sbr.rel (0) target = $region69
    $region68: #{tae_encoder_forward.1} parent=1 // pred_region
      _
    $region69: #{tae_encoder_forward.1} parent=1 // pred_fallthru
      _
    // Predicated region
    $region70: #{tae_encoder_forward.1} parent=1 // pred_check
      _
    $region71: #{tae_encoder_forward.1} parent=1 // pred_check_branch
      %6838 = sbr.rel (0) target = $region73
    $region72: #{tae_encoder_forward.1} parent=1 // pred_region
      _
    $region73: #{tae_encoder_forward.1} parent=1 // pred_fallthru
      _
    // Predicated region
    $region74: #{tae_encoder_forward.1} parent=1 // pred_check
      _
    $region75: #{tae_encoder_forward.1} parent=1 // pred_check_branch
      %6840 = sbr.rel (0) target = $region77
    $region76: #{tae_encoder_forward.1} parent=1 // pred_region
      _
    $region77: #{tae_encoder_forward.1} parent=1 // pred_fallthru
      _
    // Predicated region
    $region78: #{tae_encoder_forward.1} parent=1 // pred_check
      _
    $region79: #{tae_encoder_forward.1} parent=1 // pred_check_branch
      %6842 = sbr.rel (0) target = $region81
    $region80: #{tae_encoder_forward.1} parent=1 // pred_region
      _
    $region81: #{tae_encoder_forward.1} parent=1 // pred_fallthru
      _
    %6843 = vsyncpa [#allocation5], 1
    %6844 = vsyncpa [#allocation7], 1
    %6845 = vsyncpa [#allocation10], 1
    %6846 = vsyncpa [#allocation13], 1

</llo_original>
